<compile_context>
chip_gen: v6e
topology: v6e:2x2x1
jax: 0.10.0
libtpu: 0.0.40
codegen_flags: <defaults>
</compile_context>

<pallas_src>
import functools

import jax
import jax.numpy as jnp
import numpy as np
from jax.experimental import pallas as pl
from jax.experimental.pallas import tpu as pltpu


def gnn_conv_kernel(x_ref, a_ref, w1_ref, w2_ref, b_ref, o_ref, *, precision):
    # x_ref : [G*N, C_in]   G graphs' node features stacked along rows
    # a_ref : [G, N, N]     per-graph dense adjacency
    # w1_ref: [C_in, C_out] root projection
    # w2_ref: [C_in, C_out] message projection
    # b_ref : [1, C_out]    bias (f32)
    # o_ref : [G*N, C_out]  f32 output (true width, no lane padding)
    g, n, _ = a_ref.shape
    c_in = x_ref.shape[-1]

    x2 = x_ref[...]                                   # [G*N, C_in]
    # Split the leading dim at a sublane-tile boundary (N is a multiple of 8).
    x3 = x2.reshape(g, n, c_in)                       # [G, N, C_in]

    # Per-graph neighborhood aggregation A[g] @ X[g] as ONE batched MXU matmul
    # (no Python unroll, no concatenates).
    ax3 = jnp.einsum('gij,gjc->gic', a_ref[...], x3,
                     preferred_element_type=jnp.float32,
                     precision=precision)             # [G, N, C_in] f32
    ax2 = ax3.reshape(g * n, c_in).astype(x2.dtype)   # [G*N, C_in]

    # Two small-K projections accumulated in f32 (K << MXU depth, so this
    # costs the same as a fused K=2*C_in matmul but avoids the lane concat).
    root = jnp.dot(x2, w1_ref[...],
                   preferred_element_type=jnp.float32, precision=precision)
    msg = jnp.dot(ax2, w2_ref[...],
                  preferred_element_type=jnp.float32, precision=precision)

    # f32 epilogue: single broadcast bias add, true-width store.
    o_ref[...] = root + msg + b_ref[...]


def _pick_group_size(B, N):
    """Graphs per grid step: ~512 rows/step, >=2 steps for v7x megacore,
    and G*N a multiple of 8 for the (8,128) row-block constraint."""
    target_rows = 512
    G = max(1, min(B, target_rows // max(N, 1)))
    if B > 1 and pl.cdiv(B, G) < 2:       # keep the grid shardable over 2 TCs
        G = pl.cdiv(B, 2)
    while (G * N) % 8 != 0:               # sublane alignment of the row block
        G += 1
    return G


def basic_gnn_conv_batched(X, A, w1, w2, bias, *, compute_dtype=jnp.float32):
    """out[b] = X[b] @ w1 + (A[b] @ X[b]) @ w2 + bias for a batch of graphs."""
    B, N, C_in = X.shape
    C_out = w1.shape[1]

    G = _pick_group_size(B, N)
    num_steps = pl.cdiv(B, G)
    B_pad = num_steps * G

    # Pad the batch to whole grid steps (padded graphs are zeros; sliced off).
    if B_pad != B:
        X = jnp.concatenate([X, jnp.zeros((B_pad - B, N, C_in), X.dtype)], 0)
        A = jnp.concatenate([A, jnp.zeros((B_pad - B, N, N), A.dtype)], 0)

    x2d = X.reshape(B_pad * N, C_in).astype(compute_dtype)
    a3d = A.astype(compute_dtype)
    w1c = w1.astype(compute_dtype)
    w2c = w2.astype(compute_dtype)
    b2d = bias.reshape(1, C_out).astype(jnp.float32)

    # Exact f32 MXU matmuls when compute dtype is f32; bf16 path uses
    # MXU-native bf16 operands with f32 accumulation.
    precision = (jax.lax.Precision.HIGHEST
                 if compute_dtype == jnp.float32 else jax.lax.Precision.DEFAULT)

    itemsize = jnp.dtype(compute_dtype).itemsize
    flops = 2 * B_pad * N * (N * C_in + 2 * C_in * C_out)
    bytes_accessed = (
        B_pad * N * C_in * itemsize                         # X
        + B_pad * N * N * itemsize                          # A
        + num_steps * (2 * C_in * C_out * itemsize + C_out * 4)  # weights+bias
        + B_pad * N * C_out * 4                             # output (f32)
    )

    kernel = functools.partial(gnn_conv_kernel, precision=precision)

    out2d = pl.pallas_call(
        kernel,
        out_shape=jax.ShapeDtypeStruct((B_pad * N, C_out), jnp.float32),
        grid=(num_steps,),
        in_specs=[
            pl.BlockSpec((G * N, C_in), lambda i: (i, 0)),   # node features
            pl.BlockSpec((G, N, N), lambda i: (i, 0, 0)),    # adjacency
            pl.BlockSpec((C_in, C_out), lambda i: (0, 0)),   # w1
            pl.BlockSpec((C_in, C_out), lambda i: (0, 0)),   # w2
            pl.BlockSpec((1, C_out), lambda i: (0, 0)),      # bias
        ],
        out_specs=pl.BlockSpec((G * N, C_out), lambda i: (i, 0)),
        compiler_params=pltpu.CompilerParams(
            dimension_semantics=("parallel",)),              # v7x: 2 TCs
        cost_estimate=pl.CostEstimate(
            flops=int(flops), transcendentals=0,
            bytes_accessed=int(bytes_accessed)),
    )(x2d, a3d, w1c, w2c, b2d)

    out = out2d.reshape(B_pad, N, C_out)
    return out[:B] if B_pad != B else out


def basic_gnn_conv(X, A, w1, w2, bias, *, compute_dtype=jnp.float32):
    """Single-graph forward matching BasicGNNConv.forward(X, A)."""
    return basic_gnn_conv_batched(X[None], A[None], w1, w2, bias,
                                  compute_dtype=compute_dtype)[0]


if __name__ == "__main__":
    # Small shapes consistent with the module: N=16 nodes, C_in=8 -> C_out=32.
    # Batch of 32 graphs -> 2 parallel grid steps of 16 graphs (256 rows) each.
    B, N, C_in, C_out = 32, 16, 8, 32

    key = jax.random.PRNGKey(0)
    kx, ka, kw1, kw2, kb = jax.random.split(key, 5)

    X = jax.random.uniform(kx, (B, N, C_in), dtype=jnp.float32)
    A = jax.random.uniform(ka, (B, N, N), dtype=jnp.float32)
    w1 = jax.random.uniform(kw1, (C_in, C_out), dtype=jnp.float32)
    w2 = jax.random.uniform(kw2, (C_in, C_out), dtype=jnp.float32)
    bias = jax.random.uniform(kb, (C_out,), dtype=jnp.float32)

    # High-precision reference for the module's forward pass.
    Xn = np.asarray(X, dtype=np.float64)
    An = np.asarray(A, dtype=np.float64)
    w1n = np.asarray(w1, dtype=np.float64)
    w2n = np.asarray(w2, dtype=np.float64)
    bn = np.asarray(bias, dtype=np.float64)
    ref = Xn @ w1n + (An @ Xn) @ w2n + bn                    # [B, N, C_out]

    # Exact-semantics path (f32 MXU operands, HIGHEST precision).
    out_f32 = jax.block_until_ready(
        basic_gnn_conv_batched(X, A, w1, w2, bias, compute_dtype=jnp.float32))
    assert out_f32.shape == (B, N, C_out)
    np.testing.assert_allclose(np.asarray(out_f32), ref, rtol=1e-4, atol=1e-4)

    # MXU-native bf16-operand path (f32 accumulation); relaxed tolerance.
    out_bf16 = jax.block_until_ready(
        basic_gnn_conv_batched(X, A, w1, w2, bias, compute_dtype=jnp.bfloat16))
    np.testing.assert_allclose(np.asarray(out_bf16), ref, rtol=5e-2, atol=5e-2)

    # Single-graph API (signature of BasicGNNConv.forward).
    out_single = jax.block_until_ready(
        basic_gnn_conv(X[0], A[0], w1, w2, bias, compute_dtype=jnp.float32))
    np.testing.assert_allclose(np.asarray(out_single), ref[0],
                               rtol=1e-4, atol=1e-4)

    print("KERNEL_OK")
</pallas_src>

<mosaic_0001>
module attributes {stable_mosaic.version = 11 : i64} {
  func.func @gnn_conv_kernel(%arg0: i32, %arg1: memref<256x8xf32, #tpu.memory_space<vmem>>, %arg2: memref<16x16x16xf32, #tpu.memory_space<vmem>>, %arg3: memref<8x32xf32, #tpu.memory_space<vmem>>, %arg4: memref<8x32xf32, #tpu.memory_space<vmem>>, %arg5: memref<1x32xf32, #tpu.memory_space<vmem>>, %arg6: memref<256x32xf32, #tpu.memory_space<vmem>>) attributes {dimension_semantics = [#tpu.dimension_semantics<parallel>], iteration_bounds = array<i64: 2>, scalar_prefetch = 0 : i64, scratch_operands = 0 : i64, tpu.core_type = #tpu.core_type<tc>, window_params = [{transform_indices = @transform_0, window_bounds = array<i64: 256, 8>}, {transform_indices = @transform_1, window_bounds = array<i64: 16, 16, 16>}, {pipeline_mode = #tpu.pipeline_mode<synchronous>, transform_indices = @transform_2, window_bounds = array<i64: 8, 32>}, {pipeline_mode = #tpu.pipeline_mode<synchronous>, transform_indices = @transform_3, window_bounds = array<i64: 8, 32>}, {pipeline_mode = #tpu.pipeline_mode<synchronous>, transform_indices = @transform_4, window_bounds = array<i64: 1, 32>}, {transform_indices = @transform_5, window_bounds = array<i64: 256, 32>}]} {
    %c0 = arith.constant 0 : index
    %c0_0 = arith.constant 0 : index
    %0 = vector.load %arg1[%c0, %c0_0] : memref<256x8xf32, #tpu.memory_space<vmem>>, vector<256x8xf32>
    %1 = vector.shape_cast %0 : vector<256x8xf32> to vector<16x16x8xf32>
    %c0_1 = arith.constant 0 : index
    %c0_2 = arith.constant 0 : index
    %c0_3 = arith.constant 0 : index
    %2 = vector.load %arg2[%c0_1, %c0_2, %c0_3] : memref<16x16x16xf32, #tpu.memory_space<vmem>>, vector<16x16x16xf32>
    "tpu.trace_start"() <{level = 10 : i32, message = "gij,gjc->gic"}> : () -> ()
    %cst = arith.constant dense<0.000000e+00> : vector<16x16x8xf32>
    %3 = tpu.matmul %2, %1, %cst {dimension_numbers = #tpu.dot_dimension_numbers<[2], [1], [1], [2], [0, 0, 0, 1, 1, 2], [0], [0]>, precision = #tpu.contract_precision<fp32>} : vector<16x16x16xf32>, vector<16x16x8xf32>, vector<16x16x8xf32> -> vector<16x16x8xf32>
    "tpu.trace_stop"() : () -> ()
    %4 = vector.shape_cast %3 : vector<16x16x8xf32> to vector<256x8xf32>
    %c0_4 = arith.constant 0 : index
    %c0_5 = arith.constant 0 : index
    %5 = vector.load %arg3[%c0_4, %c0_5] : memref<8x32xf32, #tpu.memory_space<vmem>>, vector<8x32xf32>
    %cst_6 = arith.constant dense<0.000000e+00> : vector<256x32xf32>
    %6 = tpu.matmul %0, %5, %cst_6 {dimension_numbers = #tpu.dot_dimension_numbers<[1], [0], [0], [1], [0, 0, 1, 1], [], []>, precision = #tpu.contract_precision<fp32>} : vector<256x8xf32>, vector<8x32xf32>, vector<256x32xf32> -> vector<256x32xf32>
    %c0_7 = arith.constant 0 : index
    %c0_8 = arith.constant 0 : index
    %7 = vector.load %arg4[%c0_7, %c0_8] : memref<8x32xf32, #tpu.memory_space<vmem>>, vector<8x32xf32>
    %cst_9 = arith.constant dense<0.000000e+00> : vector<256x32xf32>
    %8 = tpu.matmul %4, %7, %cst_9 {dimension_numbers = #tpu.dot_dimension_numbers<[1], [0], [0], [1], [0, 0, 1, 1], [], []>, precision = #tpu.contract_precision<fp32>} : vector<256x8xf32>, vector<8x32xf32>, vector<256x32xf32> -> vector<256x32xf32>
    %9 = arith.addf %6, %8 : vector<256x32xf32>
    %c0_10 = arith.constant 0 : index
    %c0_11 = arith.constant 0 : index
    %10 = vector.load %arg5[%c0_10, %c0_11] : memref<1x32xf32, #tpu.memory_space<vmem>>, vector<1x32xf32>
    %11 = vector.broadcast %10 : vector<1x32xf32> to vector<256x32xf32>
    %12 = arith.addf %9, %11 : vector<256x32xf32>
    %c0_12 = arith.constant 0 : index
    %c0_13 = arith.constant 0 : index
    %13 = vector.load %arg6[%c0_12, %c0_13] : memref<256x32xf32, #tpu.memory_space<vmem>>, vector<256x32xf32>
    tpu.vector_store %arg6[%c0_12, %c0_13], %12 {strides = array<i32>} : memref<256x32xf32, #tpu.memory_space<vmem>>, vector<256x32xf32>,
    return
  }
  func.func @transform_0(%arg0: i32) -> (i32, i32) {
    %c0_i32 = arith.constant 0 : i32
    %c0_i32_0 = arith.constant 0 : i32
    return %arg0, %c0_i32 : i32, i32
  }
  func.func @transform_1(%arg0: i32) -> (i32, i32, i32) {
    %c0_i32 = arith.constant 0 : i32
    %c0_i32_0 = arith.constant 0 : i32
    %c0_i32_1 = arith.constant 0 : i32
    return %arg0, %c0_i32, %c0_i32_0 : i32, i32, i32
  }
  func.func @transform_2(%arg0: i32) -> (i32, i32) {
    %c0_i32 = arith.constant 0 : i32
    %c0_i32_0 = arith.constant 0 : i32
    %c0_i32_1 = arith.constant 0 : i32
    return %c0_i32, %c0_i32_0 : i32, i32
  }
  func.func @transform_3(%arg0: i32) -> (i32, i32) {
    %c0_i32 = arith.constant 0 : i32
    %c0_i32_0 = arith.constant 0 : i32
    %c0_i32_1 = arith.constant 0 : i32
    return %c0_i32, %c0_i32_0 : i32, i32
  }
  func.func @transform_4(%arg0: i32) -> (i32, i32) {
    %c0_i32 = arith.constant 0 : i32
    %c0_i32_0 = arith.constant 0 : i32
    %c0_i32_1 = arith.constant 0 : i32
    return %c0_i32, %c0_i32_0 : i32, i32
  }
  func.func @transform_5(%arg0: i32) -> (i32, i32) {
    %c0_i32 = arith.constant 0 : i32
    %c0_i32_0 = arith.constant 0 : i32
    return %arg0, %c0_i32 : i32, i32
  }
}

</mosaic_0001>

<llo_original>
// kernel: tpu_custom_call.1
$region0: #{tpu_custom_call.1}
  #allocation0 [shape = 'u32[]', space=smem, size = 0x4, offset = 0x4, fixed_abs, tag = 'smem constant byte address 0x4 - core index']
  #allocation1 [shape = 'u32[144,128]{1,0:T(1,128)}', space=vmem, size = 0x12000, scoped, tag = 'internal scratch']
  %s0 = inlined_call_operand.vmem [shape: f32[512,8], index: 0, kind: input, shape index: {}]
  %s1 = inlined_call_operand.vmem [shape: f32[32,16,16], index: 1, kind: input, shape index: {}]
  %s2 = inlined_call_operand.vmem [shape: f32[8,32], index: 2, kind: input, shape index: {}]
  %s3 = inlined_call_operand.vmem [shape: f32[8,32], index: 3, kind: input, shape index: {}]
  %s4 = inlined_call_operand.vmem [shape: f32[1,32], index: 4, kind: input, shape index: {}]
  %s5 = inlined_call_operand.vmem [shape: f32[512,32], index: 5, kind: output, shape index: {}]
  %s6 = sld [smem:[#allocation0]]
  $region53: #{tpu_custom_call.1} parent=0
    _
  %s8 = ssub.s32 1, %s6
  %s9 = scalar_select 0, %s8, %s6
  loop: start=0, step=1, limit=4
  $region2: #{tpu_custom_call.1} parent=0 // loop_pre_header
    _
  $region3: #{tpu_custom_call.1} parent=0 // loop_header
    %s11 = sphi 0, %s15
    %p12 = scmp.ge.s32.totalorder %s11, 4
    %s21 = sphi 0, %s23
    %s24 = sphi 0, %s21
    %s25 = sphi 0, %s24
    %s41 = sphi 0, %s25
    %s47 = sphi 0, %s49
    %s50 = sphi 0, %s47
    %s51 = sphi 0, %s50
    %s67 = sphi 0, %s51
    %s71 = sphi 0, %s71
    %s73 = sphi 0, %s71
    %s74 = sphi 0, %s73
    %s88 = sphi 0, %s74
    %s92 = sphi 0, %s92
    %s94 = sphi 0, %s92
    %s95 = sphi 0, %s94
    %s109 = sphi 0, %s95
    %s113 = sphi 0, %s113
    %s115 = sphi 0, %s113
    %s116 = sphi 0, %s115
    %s130 = sphi 0, %s116
    %s136 = sphi 0, %s138
    %s139 = sphi 0, %s136
    %s140 = sphi 0, %s139
    %s156 = sphi 0, %s140
  $region4: #{tpu_custom_call.1} parent=0 // loop_header_branch
    %14 = sbr.rel (%p12) target = $region8
  $region5: #{tpu_custom_call.1} parent=0 // loop_body
    %s16 = ssub.s32 %s11, 1
    %s17 = ssub.s32 %s11, 2
    %s18 = sadd.s32 %s11, 1
    %s19 = ssub.s32 %s11, %s18
    %p20 = scmp.eq.s32.totalorder %s19, 0
    %s22 = sadd.s32 %s21, 1
    %s23 = scalar_select %p20, %s21, %s22
    %p26 = pneg %p20
    %p27 = scmp.eq.s32.totalorder %s11, 1
    %p28 = por %p26, %p27
    %p29 = scmp.ne.s32.totalorder %s21, %s24
    %p30 = scmp.eq.s32.totalorder %s11, 0
    %p31 = por %p29, %p30
    %p32 = scmp.ne.s32.totalorder %s21, %s24
    %p33 = scmp.eq.s32.totalorder %s16, 1
    %p34 = por %p32, %p33
    %p35 = scmp.ne.s32.totalorder %s24, %s25
    %p36 = scmp.eq.s32.totalorder %s16, 0
    %p37 = por %p35, %p36
    %p38 = scmp.ne.s32.totalorder %s24, %s25
    %p39 = scmp.eq.s32.totalorder %s17, 1
    %p40 = por %p38, %p39
    %p42 = scmp.ne.s32.totalorder %s25, %s41
    %p43 = scmp.eq.s32.totalorder %s17, 0
    %p44 = por %p42, %p43
    %s45 = ssub.s32 %s11, %s18
    %p46 = scmp.eq.s32.totalorder %s45, 0
    %s48 = sadd.s32 %s47, 1
    %s49 = scalar_select %p46, %s47, %s48
    %p52 = pneg %p46
    %p53 = scmp.eq.s32.totalorder %s11, 1
    %p54 = por %p52, %p53
    %p55 = scmp.ne.s32.totalorder %s47, %s50
    %p56 = scmp.eq.s32.totalorder %s11, 0
    %p57 = por %p55, %p56
    %p58 = scmp.ne.s32.totalorder %s47, %s50
    %p59 = scmp.eq.s32.totalorder %s16, 1
    %p60 = por %p58, %p59
    %p61 = scmp.ne.s32.totalorder %s50, %s51
    %p62 = scmp.eq.s32.totalorder %s16, 0
    %p63 = por %p61, %p62
    %p64 = scmp.ne.s32.totalorder %s50, %s51
    %p65 = scmp.eq.s32.totalorder %s17, 1
    %p66 = por %p64, %p65
    %p68 = scmp.ne.s32.totalorder %s51, %s67
    %p69 = scmp.eq.s32.totalorder %s17, 0
    %p70 = por %p68, %p69
    %s72 = sadd.s32 %s71, 1
    %p75 = scmp.eq.s32.totalorder %s11, 1
    %p76 = scmp.ne.s32.totalorder %s71, %s73
    %p77 = scmp.eq.s32.totalorder %s11, 0
    %p78 = por %p76, %p77
    %p79 = scmp.ne.s32.totalorder %s71, %s73
    %p80 = scmp.eq.s32.totalorder %s16, 1
    %p81 = por %p79, %p80
    %p82 = scmp.ne.s32.totalorder %s73, %s74
    %p83 = scmp.eq.s32.totalorder %s16, 0
    %p84 = por %p82, %p83
    %p85 = scmp.ne.s32.totalorder %s73, %s74
    %p86 = scmp.eq.s32.totalorder %s17, 1
    %p87 = por %p85, %p86
    %p89 = scmp.ne.s32.totalorder %s74, %s88
    %p90 = scmp.eq.s32.totalorder %s17, 0
    %p91 = por %p89, %p90
    %s93 = sadd.s32 %s92, 1
    %p96 = scmp.eq.s32.totalorder %s11, 1
    %p97 = scmp.ne.s32.totalorder %s92, %s94
    %p98 = scmp.eq.s32.totalorder %s11, 0
    %p99 = por %p97, %p98
    %p100 = scmp.ne.s32.totalorder %s92, %s94
    %p101 = scmp.eq.s32.totalorder %s16, 1
    %p102 = por %p100, %p101
    %p103 = scmp.ne.s32.totalorder %s94, %s95
    %p104 = scmp.eq.s32.totalorder %s16, 0
    %p105 = por %p103, %p104
    %p106 = scmp.ne.s32.totalorder %s94, %s95
    %p107 = scmp.eq.s32.totalorder %s17, 1
    %p108 = por %p106, %p107
    %p110 = scmp.ne.s32.totalorder %s95, %s109
    %p111 = scmp.eq.s32.totalorder %s17, 0
    %p112 = por %p110, %p111
    %s114 = sadd.s32 %s113, 1
    %p117 = scmp.eq.s32.totalorder %s11, 1
    %p118 = scmp.ne.s32.totalorder %s113, %s115
    %p119 = scmp.eq.s32.totalorder %s11, 0
    %p120 = por %p118, %p119
    %p121 = scmp.ne.s32.totalorder %s113, %s115
    %p122 = scmp.eq.s32.totalorder %s16, 1
    %p123 = por %p121, %p122
    %p124 = scmp.ne.s32.totalorder %s115, %s116
    %p125 = scmp.eq.s32.totalorder %s16, 0
    %p126 = por %p124, %p125
    %p127 = scmp.ne.s32.totalorder %s115, %s116
    %p128 = scmp.eq.s32.totalorder %s17, 1
    %p129 = por %p127, %p128
    %p131 = scmp.ne.s32.totalorder %s116, %s130
    %p132 = scmp.eq.s32.totalorder %s17, 0
    %p133 = por %p131, %p132
    %s134 = ssub.s32 %s11, %s18
    %p135 = scmp.eq.s32.totalorder %s134, 0
    %s137 = sadd.s32 %s136, 1
    %s138 = scalar_select %p135, %s136, %s137
    %p141 = pneg %p135
    %p142 = scmp.eq.s32.totalorder %s11, 1
    %p143 = por %p141, %p142
    %p144 = scmp.ne.s32.totalorder %s136, %s139
    %p145 = scmp.eq.s32.totalorder %s11, 0
    %p146 = por %p144, %p145
    %p147 = scmp.ne.s32.totalorder %s136, %s139
    %p148 = scmp.eq.s32.totalorder %s16, 1
    %p149 = por %p147, %p148
    %p150 = scmp.ne.s32.totalorder %s139, %s140
    %p151 = scmp.eq.s32.totalorder %s16, 0
    %p152 = por %p150, %p151
    %p153 = scmp.ne.s32.totalorder %s139, %s140
    %p154 = scmp.eq.s32.totalorder %s17, 1
    %p155 = por %p153, %p154
    %p157 = scmp.ne.s32.totalorder %s140, %s156
    %p158 = scmp.eq.s32.totalorder %s17, 0
    %p159 = por %p157, %p158
    %p160 = scmp.le.s32.totalorder 1, %s11
    %p161 = scmp.lt.s32.totalorder %s11, 3
    %p162 = pnand %p160, %p161
    %p163 = pneg %p162
    // Predicated region
    $region9: #{tpu_custom_call.1} parent=5 // pred_check
      _
    $region10: #{tpu_custom_call.1} parent=5 // pred_check_branch
      %165 = sbr.rel (%p162) target = $region12
    $region11: #{tpu_custom_call.1} parent=5 // pred_region
      %s166 = ssub.s32 %s11, 1
      // Predicated region
      $region13: #{tpu_custom_call.1} parent=11 // pred_check
        %p167 = pneg %p84
      $region14: #{tpu_custom_call.1} parent=11 // pred_check_branch
        %169 = sbr.rel (%p167) target = $region16
      $region15: #{tpu_custom_call.1} parent=11 // pred_region
        _
      $region16: #{tpu_custom_call.1} parent=11 // pred_fallthru
        _
      // Predicated region
      $region17: #{tpu_custom_call.1} parent=11 // pred_check
        %p170 = pneg %p105
      $region18: #{tpu_custom_call.1} parent=11 // pred_check_branch
        %172 = sbr.rel (%p170) target = $region20
      $region19: #{tpu_custom_call.1} parent=11 // pred_region
        _
      $region20: #{tpu_custom_call.1} parent=11 // pred_fallthru
        _
      // Predicated region
      $region21: #{tpu_custom_call.1} parent=11 // pred_check
        %p173 = pneg %p126
      $region22: #{tpu_custom_call.1} parent=11 // pred_check_branch
        %175 = sbr.rel (%p173) target = $region24
      $region23: #{tpu_custom_call.1} parent=11 // pred_region
        _
      $region24: #{tpu_custom_call.1} parent=11 // pred_fallthru
        _
    $region12: #{tpu_custom_call.1} parent=5 // pred_fallthru
      _
    %p176 = scmp.lt.s32.totalorder %s11, 2
    // Predicated region
    $region25: #{tpu_custom_call.1} parent=5 // pred_check
      %p177 = pneg %p176
    $region26: #{tpu_custom_call.1} parent=5 // pred_check_branch
      %179 = sbr.rel (%p177) target = $region28
    $region27: #{tpu_custom_call.1} parent=5 // pred_region
      // Predicated region
      $region29: #{tpu_custom_call.1} parent=27 // pred_check
        %p180 = pneg %p31
      $region30: #{tpu_custom_call.1} parent=27 // pred_check_branch
        %182 = sbr.rel (%p180) target = $region32
      $region31: #{tpu_custom_call.1} parent=27 // pred_region
        %s183 = smul.u32 32, %s11
        %p184 = scmp.lt.s32.totalorder %s183, 63
        %s185 = scalar_select %p184, %s183, 63
        %s186 = smul.addr %s185, 8
        %s187 = scalar_lea.vmem %s0, %s186
        %s188 = smul.u32 32, %s11
      $region32: #{tpu_custom_call.1} parent=27 // pred_fallthru
        _
      // Predicated region
      $region33: #{tpu_custom_call.1} parent=27 // pred_check
        %p189 = pneg %p57
      $region34: #{tpu_custom_call.1} parent=27 // pred_check_branch
        %191 = sbr.rel (%p189) target = $region36
      $region35: #{tpu_custom_call.1} parent=27 // pred_region
        %s192 = smul.u32 16, %s11
        %p193 = scmp.lt.s32.totalorder %s192, 31
        %s194 = scalar_select %p193, %s192, 31
        %s195 = smul.addr %s194, 2
        %s196 = smul.addr %s195, 8
        %s197 = scalar_lea.vmem %s1, %s196
        %s198 = smul.u32 16, %s11
      $region36: #{tpu_custom_call.1} parent=27 // pred_fallthru
        _
    $region28: #{tpu_custom_call.1} parent=5 // pred_fallthru
      _
    %p199 = scmp.le.s32.totalorder 1, %s11
    %p200 = scmp.lt.s32.totalorder %s11, 3
    %p201 = pnand %p199, %p200
    %p202 = pneg %p201
    // Predicated region
    $region37: #{tpu_custom_call.1} parent=5 // pred_check
      _
    $region38: #{tpu_custom_call.1} parent=5 // pred_check_branch
      %204 = sbr.rel (%p201) target = $region40
    $region39: #{tpu_custom_call.1} parent=5 // pred_region
      %s205 = ssub.s32 %s11, 1
      %s206 = smul.u32 32, %s16
      %p207 = scmp.lt.s32.totalorder %s206, 63
      %s208 = scalar_select %p207, %s206, 63
      %s209 = smul.addr %s208, 8
      %s210 = scalar_lea.vmem %s0, %s209
      %p211 = pneg %p37
      %p212 = pneg %p34
      %s213 = smul.u32 16, %s16
      %p214 = scmp.lt.s32.totalorder %s213, 31
      %s215 = scalar_select %p214, %s213, 31
      %s216 = smul.addr %s215, 2
      %s217 = smul.addr %s216, 8
      %s218 = scalar_lea.vmem %s1, %s217
      %p219 = pneg %p63
      %p220 = pneg %p60
      %p221 = pneg %p84
      %p222 = pneg %p81
      %p223 = pneg %p105
      %p224 = pneg %p102
      %p225 = pneg %p126
      %p226 = pneg %p123
      %p227 = pneg %p152
      %p228 = pneg %p149
      %s229 = smul.u32 32, %s16
      %p230 = scmp.lt.s32.totalorder %s229, 63
      %s231 = scalar_select %p230, %s229, 63
      %s232 = smul.addr %s231, 8
      %s233 = scalar_lea.vmem %s5, %s232
      %s234 = smul.u32 32, %s16
      %p235 = scmp.lt.s32.totalorder %s234, 63
      %s236 = scalar_select %p235, %s234, 63
      %s237 = smul.addr %s236, 8
      %s238 = scalar_lea.vmem %s0, %s237
      %s239 = smul.u32 32, %s16
      %s240 = smul.u32 16, %s16
      %p241 = scmp.lt.s32.totalorder %s240, 31
      %s242 = scalar_select %p241, %s240, 31
      %s243 = smul.addr %s242, 2
      %s244 = smul.addr %s243, 8
      %s245 = scalar_lea.vmem %s1, %s244
      %s246 = smul.u32 16, %s16
      %s247 = smul.u32 32, %s16
      %p248 = scmp.lt.s32.totalorder %s247, 63
      %s249 = scalar_select %p248, %s247, 63
      %s250 = smul.addr %s249, 8
      %s251 = scalar_lea.vmem %s5, %s250
      %s252 = smul.u32 32, %s16
      %v253 = vld [vmem:[%s238] sm:$0xff]
      %v254 = vld [vmem:[%s238 + $0x8] sm:$0xff]
      %v255 = vld [vmem:[%s238 + $0x10] sm:$0xff]
      %v256 = vld [vmem:[%s238 + $0x18] sm:$0xff]
      %v257 = vld [vmem:[%s238 + $0x20] sm:$0xff]
      %v258 = vld [vmem:[%s238 + $0x28] sm:$0xff]
      %v259 = vld [vmem:[%s238 + $0x30] sm:$0xff]
      %v260 = vld [vmem:[%s238 + $0x38] sm:$0xff]
      %v261 = vld [vmem:[%s238 + $0x40] sm:$0xff]
      %v262 = vld [vmem:[%s238 + $0x48] sm:$0xff]
      %v263 = vld [vmem:[%s238 + $0x50] sm:$0xff]
      %v264 = vld [vmem:[%s238 + $0x58] sm:$0xff]
      %v265 = vld [vmem:[%s238 + $0x60] sm:$0xff]
      %v266 = vld [vmem:[%s238 + $0x68] sm:$0xff]
      %v267 = vld [vmem:[%s238 + $0x70] sm:$0xff]
      %v268 = vld [vmem:[%s238 + $0x78] sm:$0xff]
      %v269 = vld [vmem:[%s238 + $0x80] sm:$0xff]
      %v270 = vld [vmem:[%s238 + $0x88] sm:$0xff]
      %v271 = vld [vmem:[%s238 + $0x90] sm:$0xff]
      %v272 = vld [vmem:[%s238 + $0x98] sm:$0xff]
      %v273 = vld [vmem:[%s238 + $0xa0] sm:$0xff]
      %v274 = vld [vmem:[%s238 + $0xa8] sm:$0xff]
      %v275 = vld [vmem:[%s238 + $0xb0] sm:$0xff]
      %v276 = vld [vmem:[%s238 + $0xb8] sm:$0xff]
      %v277 = vld [vmem:[%s238 + $0xc0] sm:$0xff]
      %v278 = vld [vmem:[%s238 + $0xc8] sm:$0xff]
      %v279 = vld [vmem:[%s238 + $0xd0] sm:$0xff]
      %v280 = vld [vmem:[%s238 + $0xd8] sm:$0xff]
      %v281 = vld [vmem:[%s238 + $0xe0] sm:$0xff]
      %v282 = vld [vmem:[%s238 + $0xe8] sm:$0xff]
      %v283 = vld [vmem:[%s238 + $0xf0] sm:$0xff]
      %v284 = vld [vmem:[%s238 + $0xf8] sm:$0xff]
      %v285 = vld [vmem:[%s245] sm:$0xff]
      %v286 = vld [vmem:[%s245 + $0x8] sm:$0xff]
      %v287 = vld [vmem:[%s245 + $0x10] sm:$0xff]
      %v288 = vld [vmem:[%s245 + $0x18] sm:$0xff]
      %v289 = vld [vmem:[%s245 + $0x20] sm:$0xff]
      %v290 = vld [vmem:[%s245 + $0x28] sm:$0xff]
      %v291 = vld [vmem:[%s245 + $0x30] sm:$0xff]
      %v292 = vld [vmem:[%s245 + $0x38] sm:$0xff]
      %v293 = vld [vmem:[%s245 + $0x40] sm:$0xff]
      %v294 = vld [vmem:[%s245 + $0x48] sm:$0xff]
      %v295 = vld [vmem:[%s245 + $0x50] sm:$0xff]
      %v296 = vld [vmem:[%s245 + $0x58] sm:$0xff]
      %v297 = vld [vmem:[%s245 + $0x60] sm:$0xff]
      %v298 = vld [vmem:[%s245 + $0x68] sm:$0xff]
      %v299 = vld [vmem:[%s245 + $0x70] sm:$0xff]
      %v300 = vld [vmem:[%s245 + $0x78] sm:$0xff]
      %v301 = vld [vmem:[%s245 + $0x80] sm:$0xff]
      %v302 = vld [vmem:[%s245 + $0x88] sm:$0xff]
      %v303 = vld [vmem:[%s245 + $0x90] sm:$0xff]
      %v304 = vld [vmem:[%s245 + $0x98] sm:$0xff]
      %v305 = vld [vmem:[%s245 + $0xa0] sm:$0xff]
      %v306 = vld [vmem:[%s245 + $0xa8] sm:$0xff]
      %v307 = vld [vmem:[%s245 + $0xb0] sm:$0xff]
      %v308 = vld [vmem:[%s245 + $0xb8] sm:$0xff]
      %v309 = vld [vmem:[%s245 + $0xc0] sm:$0xff]
      %v310 = vld [vmem:[%s245 + $0xc8] sm:$0xff]
      %v311 = vld [vmem:[%s245 + $0xd0] sm:$0xff]
      %v312 = vld [vmem:[%s245 + $0xd8] sm:$0xff]
      %v313 = vld [vmem:[%s245 + $0xe0] sm:$0xff]
      %v314 = vld [vmem:[%s245 + $0xe8] sm:$0xff]
      %v315 = vld [vmem:[%s245 + $0xf0] sm:$0xff]
      %v316 = vld [vmem:[%s245 + $0xf8] sm:$0xff]
      %vm317 = vcmask 130048
      %v319 = vsel %vm317, %v285, 0
      %v322 = vsel %vm317, %v286, 0
      %324 = vmatprep.subr.mxu0 0.0
      %325 = vmatpush1.msra.mxu0 0.0
      %326 = vmatprep.subr.mxu0 0.0
      %327 = vmatpush1.msra.mxu0 0.0
      %328 = vmatprep.subr.mxu0 0.0
      %329 = vmatpush1.msra.mxu0 0.0
      %330 = vmatprep.subr.mxu0 0.0
      %331 = vmatpush1.msra.mxu0 0.0
      %332 = vmatprep.subr.mxu0 0.0
      %333 = vmatpush1.msra.mxu0 0.0
      %334 = vmatprep.subr.mxu0 0.0
      %335 = vmatpush1.msra.mxu0 0.0
      %336 = vmatprep.subr.mxu0 0.0
      %337 = vmatpush1.msra.mxu0 0.0
      %338 = vmatprep.subr.mxu0 0.0
      %339 = vmatpush1.msra.mxu0 0.0
      %340 = vmatprep.subr.mxu0 0.0
      %341 = vmatpush1.msra.mxu0 0.0
      %342 = vmatprep.subr.mxu0 0.0
      %343 = vmatpush1.msra.mxu0 0.0
      %344 = vmatprep.subr.mxu0 0.0
      %345 = vmatpush1.msra.mxu0 0.0
      %346 = vmatprep.subr.mxu0 0.0
      %347 = vmatpush1.msra.mxu0 0.0
      %348 = vmatprep.subr.mxu0 0.0
      %349 = vmatpush1.msra.mxu0 0.0
      %350 = vmatprep.subr.mxu0 0.0
      %351 = vmatpush1.msra.mxu0 0.0
      %352 = vmatprep.subr.mxu0 0.0
      %v353 = vand.u32 %v254, 4294901760
      %354 = vmatpush1.msra.mxu0 %v353
      %355 = vmatprep.subr.mxu0 0.0
      %v356 = vand.u32 %v253, 4294901760
      %357 = vmatpush1.msra.mxu0 %v356
      %358 = vmatprep.subr.mxu0 0.0
      %359 = vmatpush2.msra.mxu0 0.0
      %360 = vmatprep.subr.mxu0 0.0
      %361 = vmatpush2.msra.mxu0 0.0
      %362 = vmatprep.subr.mxu0 0.0
      %363 = vmatpush2.msra.mxu0 0.0
      %364 = vmatprep.subr.mxu0 0.0
      %365 = vmatpush2.msra.mxu0 0.0
      %366 = vmatprep.subr.mxu0 0.0
      %367 = vmatpush2.msra.mxu0 0.0
      %368 = vmatprep.subr.mxu0 0.0
      %369 = vmatpush2.msra.mxu0 0.0
      %370 = vmatprep.subr.mxu0 0.0
      %371 = vmatpush2.msra.mxu0 0.0
      %372 = vmatprep.subr.mxu0 0.0
      %373 = vmatpush2.msra.mxu0 0.0
      %374 = vmatprep.subr.mxu0 0.0
      %375 = vmatpush2.msra.mxu0 0.0
      %376 = vmatprep.subr.mxu0 0.0
      %377 = vmatpush2.msra.mxu0 0.0
      %378 = vmatprep.subr.mxu0 0.0
      %379 = vmatpush2.msra.mxu0 0.0
      %380 = vmatprep.subr.mxu0 0.0
      %381 = vmatpush2.msra.mxu0 0.0
      %382 = vmatprep.subr.mxu0 0.0
      %383 = vmatpush2.msra.mxu0 0.0
      %384 = vmatprep.subr.mxu0 0.0
      %385 = vmatpush2.msra.mxu0 0.0
      %386 = vmatprep.subr.mxu0 0.0
      %387 = vmatpush2.msra.mxu0 0.0
      %388 = vmatprep.subr.mxu0 0.0
      %389 = vmatpush2.msra.mxu0 0.0
      %390 = vmatprep.mubr.f32.mxu0 0.0
      %v391 = vand.u32 %v319, 4294901760
      %v392 = vsub.f32 %v319, %v391
      %v393 = vand.u32 %v392, 4294901760
      %v394 = vsub.f32 %v392, %v393
      %v395 = vand.u32 %v394, 4294901760
      %396 = vmatmul.mubr.f32.gmra.mxu0 %v395
      %v397 = vpop.f32.mrf.mxu0
      %v398 = vadd.f32 0.0, %v397
      %v399 = vpop.f32.mrf.mxu0
      %400 = vmatprep.mubr.f32.mxu0 0.0
      %v401 = vand.u32 %v322, 4294901760
      %v402 = vsub.f32 %v322, %v401
      %v403 = vand.u32 %v402, 4294901760
      %v404 = vsub.f32 %v402, %v403
      %v405 = vand.u32 %v404, 4294901760
      %406 = vmatmul.mubr.f32.gmra.mxu0 %v405
      %v407 = vpop.f32.mrf.mxu0
      %v408 = vadd.f32 0.0, %v407
      %v409 = vpop.f32.mrf.mxu0
      %410 = vdwg.mxu0
      %411 = vmatprep.subr.mxu0 0.0
      %412 = vmatpush1.msra.mxu0 0.0
      %413 = vmatprep.subr.mxu0 0.0
      %414 = vmatpush1.msra.mxu0 0.0
      %415 = vmatprep.subr.mxu0 0.0
      %416 = vmatpush1.msra.mxu0 0.0
      %417 = vmatprep.subr.mxu0 0.0
      %418 = vmatpush1.msra.mxu0 0.0
      %419 = vmatprep.subr.mxu0 0.0
      %420 = vmatpush1.msra.mxu0 0.0
      %421 = vmatprep.subr.mxu0 0.0
      %422 = vmatpush1.msra.mxu0 0.0
      %423 = vmatprep.subr.mxu0 0.0
      %424 = vmatpush1.msra.mxu0 0.0
      %425 = vmatprep.subr.mxu0 0.0
      %426 = vmatpush1.msra.mxu0 0.0
      %427 = vmatprep.subr.mxu0 0.0
      %428 = vmatpush1.msra.mxu0 0.0
      %429 = vmatprep.subr.mxu0 0.0
      %430 = vmatpush1.msra.mxu0 0.0
      %431 = vmatprep.subr.mxu0 0.0
      %432 = vmatpush1.msra.mxu0 0.0
      %433 = vmatprep.subr.mxu0 0.0
      %434 = vmatpush1.msra.mxu0 0.0
      %435 = vmatprep.subr.mxu0 0.0
      %436 = vmatpush1.msra.mxu0 0.0
      %437 = vmatprep.subr.mxu0 0.0
      %438 = vmatpush1.msra.mxu0 0.0
      %439 = vmatprep.subr.mxu0 0.0
      %v440 = vand.u32 %v254, 4294901760
      %v441 = vsub.f32 %v254, %v440
      %v442 = vand.u32 %v441, 4294901760
      %v443 = vsub.f32 %v441, %v442
      %v444 = vand.u32 %v443, 4294901760
      %445 = vmatpush1.msra.mxu0 %v444
      %446 = vmatprep.subr.mxu0 0.0
      %v447 = vand.u32 %v253, 4294901760
      %v448 = vsub.f32 %v253, %v447
      %v449 = vand.u32 %v448, 4294901760
      %v450 = vsub.f32 %v448, %v449
      %v451 = vand.u32 %v450, 4294901760
      %452 = vmatpush1.msra.mxu0 %v451
      %453 = vmatprep.subr.mxu0 0.0
      %454 = vmatpush2.msra.mxu0 0.0
      %455 = vmatprep.subr.mxu0 0.0
      %456 = vmatpush2.msra.mxu0 0.0
      %457 = vmatprep.subr.mxu0 0.0
      %458 = vmatpush2.msra.mxu0 0.0
      %459 = vmatprep.subr.mxu0 0.0
      %460 = vmatpush2.msra.mxu0 0.0
      %461 = vmatprep.subr.mxu0 0.0
      %462 = vmatpush2.msra.mxu0 0.0
      %463 = vmatprep.subr.mxu0 0.0
      %464 = vmatpush2.msra.mxu0 0.0
      %465 = vmatprep.subr.mxu0 0.0
      %466 = vmatpush2.msra.mxu0 0.0
      %467 = vmatprep.subr.mxu0 0.0
      %468 = vmatpush2.msra.mxu0 0.0
      %469 = vmatprep.subr.mxu0 0.0
      %470 = vmatpush2.msra.mxu0 0.0
      %471 = vmatprep.subr.mxu0 0.0
      %472 = vmatpush2.msra.mxu0 0.0
      %473 = vmatprep.subr.mxu0 0.0
      %474 = vmatpush2.msra.mxu0 0.0
      %475 = vmatprep.subr.mxu0 0.0
      %476 = vmatpush2.msra.mxu0 0.0
      %477 = vmatprep.subr.mxu0 0.0
      %478 = vmatpush2.msra.mxu0 0.0
      %479 = vmatprep.subr.mxu0 0.0
      %480 = vmatpush2.msra.mxu0 0.0
      %481 = vmatprep.subr.mxu0 0.0
      %482 = vmatpush2.msra.mxu0 0.0
      %483 = vmatprep.subr.mxu0 0.0
      %484 = vmatpush2.msra.mxu0 0.0
      %485 = vmatprep.mubr.f32.mxu0 0.0
      %v486 = vand.u32 %v319, 4294901760
      %487 = vmatmul.mubr.f32.gmra.mxu0 %v486
      %v488 = vpop.f32.mrf.mxu0
      %v489 = vadd.f32 %v398, %v488
      %v490 = vpop.f32.mrf.mxu0
      %491 = vmatprep.mubr.f32.mxu0 0.0
      %v492 = vand.u32 %v322, 4294901760
      %493 = vmatmul.mubr.f32.gmra.mxu0 %v492
      %v494 = vpop.f32.mrf.mxu0
      %v495 = vadd.f32 %v408, %v494
      %v496 = vpop.f32.mrf.mxu0
      %497 = vdwg.mxu0
      %498 = vmatprep.subr.mxu0 0.0
      %499 = vmatpush1.msra.mxu0 0.0
      %500 = vmatprep.subr.mxu0 0.0
      %501 = vmatpush1.msra.mxu0 0.0
      %502 = vmatprep.subr.mxu0 0.0
      %503 = vmatpush1.msra.mxu0 0.0
      %504 = vmatprep.subr.mxu0 0.0
      %505 = vmatpush1.msra.mxu0 0.0
      %506 = vmatprep.subr.mxu0 0.0
      %507 = vmatpush1.msra.mxu0 0.0
      %508 = vmatprep.subr.mxu0 0.0
      %509 = vmatpush1.msra.mxu0 0.0
      %510 = vmatprep.subr.mxu0 0.0
      %511 = vmatpush1.msra.mxu0 0.0
      %512 = vmatprep.subr.mxu0 0.0
      %513 = vmatpush1.msra.mxu0 0.0
      %514 = vmatprep.subr.mxu0 0.0
      %515 = vmatpush1.msra.mxu0 0.0
      %516 = vmatprep.subr.mxu0 0.0
      %517 = vmatpush1.msra.mxu0 0.0
      %518 = vmatprep.subr.mxu0 0.0
      %519 = vmatpush1.msra.mxu0 0.0
      %520 = vmatprep.subr.mxu0 0.0
      %521 = vmatpush1.msra.mxu0 0.0
      %522 = vmatprep.subr.mxu0 0.0
      %523 = vmatpush1.msra.mxu0 0.0
      %524 = vmatprep.subr.mxu0 0.0
      %525 = vmatpush1.msra.mxu0 0.0
      %526 = vmatprep.subr.mxu0 0.0
      %v527 = vand.u32 %v254, 4294901760
      %v528 = vsub.f32 %v254, %v527
      %529 = vmatpush1.msra.mxu0 %v528
      %530 = vmatprep.subr.mxu0 0.0
      %v531 = vand.u32 %v253, 4294901760
      %v532 = vsub.f32 %v253, %v531
      %533 = vmatpush1.msra.mxu0 %v532
      %534 = vmatprep.subr.mxu0 0.0
      %535 = vmatpush2.msra.mxu0 0.0
      %536 = vmatprep.subr.mxu0 0.0
      %537 = vmatpush2.msra.mxu0 0.0
      %538 = vmatprep.subr.mxu0 0.0
      %539 = vmatpush2.msra.mxu0 0.0
      %540 = vmatprep.subr.mxu0 0.0
      %541 = vmatpush2.msra.mxu0 0.0
      %542 = vmatprep.subr.mxu0 0.0
      %543 = vmatpush2.msra.mxu0 0.0
      %544 = vmatprep.subr.mxu0 0.0
      %545 = vmatpush2.msra.mxu0 0.0
      %546 = vmatprep.subr.mxu0 0.0
      %547 = vmatpush2.msra.mxu0 0.0
      %548 = vmatprep.subr.mxu0 0.0
      %549 = vmatpush2.msra.mxu0 0.0
      %550 = vmatprep.subr.mxu0 0.0
      %551 = vmatpush2.msra.mxu0 0.0
      %552 = vmatprep.subr.mxu0 0.0
      %553 = vmatpush2.msra.mxu0 0.0
      %554 = vmatprep.subr.mxu0 0.0
      %555 = vmatpush2.msra.mxu0 0.0
      %556 = vmatprep.subr.mxu0 0.0
      %557 = vmatpush2.msra.mxu0 0.0
      %558 = vmatprep.subr.mxu0 0.0
      %559 = vmatpush2.msra.mxu0 0.0
      %560 = vmatprep.subr.mxu0 0.0
      %561 = vmatpush2.msra.mxu0 0.0
      %562 = vmatprep.subr.mxu0 0.0
      %563 = vmatpush2.msra.mxu0 0.0
      %564 = vmatprep.subr.mxu0 0.0
      %565 = vmatpush2.msra.mxu0 0.0
      %566 = vmatprep.mubr.f32.mxu0 0.0
      %v567 = vand.u32 %v319, 4294901760
      %v568 = vsub.f32 %v319, %v567
      %569 = vmatmul.mubr.f32.gmra.mxu0 %v568
      %v570 = vpop.f32.mrf.mxu0
      %v571 = vadd.f32 %v489, %v570
      %v572 = vpop.f32.mrf.mxu0
      %573 = vmatprep.mubr.f32.mxu0 0.0
      %v574 = vand.u32 %v322, 4294901760
      %v575 = vsub.f32 %v322, %v574
      %576 = vmatmul.mubr.f32.gmra.mxu0 %v575
      %v577 = vpop.f32.mrf.mxu0
      %v578 = vadd.f32 %v495, %v577
      %v579 = vpop.f32.mrf.mxu0
      %580 = vdwg.mxu0
      %581 = vmatprep.subr.mxu0 0.0
      %582 = vmatpush1.msra.mxu0 0.0
      %583 = vmatprep.subr.mxu0 0.0
      %584 = vmatpush1.msra.mxu0 0.0
      %585 = vmatprep.subr.mxu0 0.0
      %586 = vmatpush1.msra.mxu0 0.0
      %587 = vmatprep.subr.mxu0 0.0
      %588 = vmatpush1.msra.mxu0 0.0
      %589 = vmatprep.subr.mxu0 0.0
      %590 = vmatpush1.msra.mxu0 0.0
      %591 = vmatprep.subr.mxu0 0.0
      %592 = vmatpush1.msra.mxu0 0.0
      %593 = vmatprep.subr.mxu0 0.0
      %594 = vmatpush1.msra.mxu0 0.0
      %595 = vmatprep.subr.mxu0 0.0
      %596 = vmatpush1.msra.mxu0 0.0
      %597 = vmatprep.subr.mxu0 0.0
      %598 = vmatpush1.msra.mxu0 0.0
      %599 = vmatprep.subr.mxu0 0.0
      %600 = vmatpush1.msra.mxu0 0.0
      %601 = vmatprep.subr.mxu0 0.0
      %602 = vmatpush1.msra.mxu0 0.0
      %603 = vmatprep.subr.mxu0 0.0
      %604 = vmatpush1.msra.mxu0 0.0
      %605 = vmatprep.subr.mxu0 0.0
      %606 = vmatpush1.msra.mxu0 0.0
      %607 = vmatprep.subr.mxu0 0.0
      %608 = vmatpush1.msra.mxu0 0.0
      %609 = vmatprep.subr.mxu0 0.0
      %v610 = vand.u32 %v254, 4294901760
      %611 = vmatpush1.msra.mxu0 %v610
      %612 = vmatprep.subr.mxu0 0.0
      %v613 = vand.u32 %v253, 4294901760
      %614 = vmatpush1.msra.mxu0 %v613
      %615 = vmatprep.subr.mxu0 0.0
      %616 = vmatpush2.msra.mxu0 0.0
      %617 = vmatprep.subr.mxu0 0.0
      %618 = vmatpush2.msra.mxu0 0.0
      %619 = vmatprep.subr.mxu0 0.0
      %620 = vmatpush2.msra.mxu0 0.0
      %621 = vmatprep.subr.mxu0 0.0
      %622 = vmatpush2.msra.mxu0 0.0
      %623 = vmatprep.subr.mxu0 0.0
      %624 = vmatpush2.msra.mxu0 0.0
      %625 = vmatprep.subr.mxu0 0.0
      %626 = vmatpush2.msra.mxu0 0.0
      %627 = vmatprep.subr.mxu0 0.0
      %628 = vmatpush2.msra.mxu0 0.0
      %629 = vmatprep.subr.mxu0 0.0
      %630 = vmatpush2.msra.mxu0 0.0
      %631 = vmatprep.subr.mxu0 0.0
      %632 = vmatpush2.msra.mxu0 0.0
      %633 = vmatprep.subr.mxu0 0.0
      %634 = vmatpush2.msra.mxu0 0.0
      %635 = vmatprep.subr.mxu0 0.0
      %636 = vmatpush2.msra.mxu0 0.0
      %637 = vmatprep.subr.mxu0 0.0
      %638 = vmatpush2.msra.mxu0 0.0
      %639 = vmatprep.subr.mxu0 0.0
      %640 = vmatpush2.msra.mxu0 0.0
      %641 = vmatprep.subr.mxu0 0.0
      %642 = vmatpush2.msra.mxu0 0.0
      %643 = vmatprep.subr.mxu0 0.0
      %644 = vmatpush2.msra.mxu0 0.0
      %645 = vmatprep.subr.mxu0 0.0
      %646 = vmatpush2.msra.mxu0 0.0
      %647 = vmatprep.mubr.f32.mxu0 0.0
      %v648 = vand.u32 %v319, 4294901760
      %v649 = vsub.f32 %v319, %v648
      %v650 = vand.u32 %v649, 4294901760
      %651 = vmatmul.mubr.f32.gmra.mxu0 %v650
      %v652 = vpop.f32.mrf.mxu0
      %v653 = vadd.f32 %v571, %v652
      %v654 = vpop.f32.mrf.mxu0
      %655 = vmatprep.mubr.f32.mxu0 0.0
      %v656 = vand.u32 %v322, 4294901760
      %v657 = vsub.f32 %v322, %v656
      %v658 = vand.u32 %v657, 4294901760
      %659 = vmatmul.mubr.f32.gmra.mxu0 %v658
      %v660 = vpop.f32.mrf.mxu0
      %v661 = vadd.f32 %v578, %v660
      %v662 = vpop.f32.mrf.mxu0
      %663 = vdwg.mxu0
      %664 = vmatprep.subr.mxu0 0.0
      %665 = vmatpush1.msra.mxu0 0.0
      %666 = vmatprep.subr.mxu0 0.0
      %667 = vmatpush1.msra.mxu0 0.0
      %668 = vmatprep.subr.mxu0 0.0
      %669 = vmatpush1.msra.mxu0 0.0
      %670 = vmatprep.subr.mxu0 0.0
      %671 = vmatpush1.msra.mxu0 0.0
      %672 = vmatprep.subr.mxu0 0.0
      %673 = vmatpush1.msra.mxu0 0.0
      %674 = vmatprep.subr.mxu0 0.0
      %675 = vmatpush1.msra.mxu0 0.0
      %676 = vmatprep.subr.mxu0 0.0
      %677 = vmatpush1.msra.mxu0 0.0
      %678 = vmatprep.subr.mxu0 0.0
      %679 = vmatpush1.msra.mxu0 0.0
      %680 = vmatprep.subr.mxu0 0.0
      %681 = vmatpush1.msra.mxu0 0.0
      %682 = vmatprep.subr.mxu0 0.0
      %683 = vmatpush1.msra.mxu0 0.0
      %684 = vmatprep.subr.mxu0 0.0
      %685 = vmatpush1.msra.mxu0 0.0
      %686 = vmatprep.subr.mxu0 0.0
      %687 = vmatpush1.msra.mxu0 0.0
      %688 = vmatprep.subr.mxu0 0.0
      %689 = vmatpush1.msra.mxu0 0.0
      %690 = vmatprep.subr.mxu0 0.0
      %691 = vmatpush1.msra.mxu0 0.0
      %692 = vmatprep.subr.mxu0 0.0
      %v693 = vand.u32 %v254, 4294901760
      %v694 = vsub.f32 %v254, %v693
      %v695 = vand.u32 %v694, 4294901760
      %696 = vmatpush1.msra.mxu0 %v695
      %697 = vmatprep.subr.mxu0 0.0
      %v698 = vand.u32 %v253, 4294901760
      %v699 = vsub.f32 %v253, %v698
      %v700 = vand.u32 %v699, 4294901760
      %701 = vmatpush1.msra.mxu0 %v700
      %702 = vmatprep.subr.mxu0 0.0
      %703 = vmatpush2.msra.mxu0 0.0
      %704 = vmatprep.subr.mxu0 0.0
      %705 = vmatpush2.msra.mxu0 0.0
      %706 = vmatprep.subr.mxu0 0.0
      %707 = vmatpush2.msra.mxu0 0.0
      %708 = vmatprep.subr.mxu0 0.0
      %709 = vmatpush2.msra.mxu0 0.0
      %710 = vmatprep.subr.mxu0 0.0
      %711 = vmatpush2.msra.mxu0 0.0
      %712 = vmatprep.subr.mxu0 0.0
      %713 = vmatpush2.msra.mxu0 0.0
      %714 = vmatprep.subr.mxu0 0.0
      %715 = vmatpush2.msra.mxu0 0.0
      %716 = vmatprep.subr.mxu0 0.0
      %717 = vmatpush2.msra.mxu0 0.0
      %718 = vmatprep.subr.mxu0 0.0
      %719 = vmatpush2.msra.mxu0 0.0
      %720 = vmatprep.subr.mxu0 0.0
      %721 = vmatpush2.msra.mxu0 0.0
      %722 = vmatprep.subr.mxu0 0.0
      %723 = vmatpush2.msra.mxu0 0.0
      %724 = vmatprep.subr.mxu0 0.0
      %725 = vmatpush2.msra.mxu0 0.0
      %726 = vmatprep.subr.mxu0 0.0
      %727 = vmatpush2.msra.mxu0 0.0
      %728 = vmatprep.subr.mxu0 0.0
      %729 = vmatpush2.msra.mxu0 0.0
      %730 = vmatprep.subr.mxu0 0.0
      %731 = vmatpush2.msra.mxu0 0.0
      %732 = vmatprep.subr.mxu0 0.0
      %733 = vmatpush2.msra.mxu0 0.0
      %734 = vmatprep.mubr.f32.mxu0 0.0
      %v735 = vand.u32 %v319, 4294901760
      %736 = vmatmul.mubr.f32.gmra.mxu0 %v735
      %v737 = vpop.f32.mrf.mxu0
      %v738 = vadd.f32 %v653, %v737
      %v739 = vpop.f32.mrf.mxu0
      %740 = vmatprep.mubr.f32.mxu0 0.0
      %v741 = vand.u32 %v322, 4294901760
      %742 = vmatmul.mubr.f32.gmra.mxu0 %v741
      %v743 = vpop.f32.mrf.mxu0
      %v744 = vadd.f32 %v661, %v743
      %v745 = vpop.f32.mrf.mxu0
      %746 = vdwg.mxu0
      %747 = vmatprep.subr.mxu0 0.0
      %748 = vmatpush1.msra.mxu0 0.0
      %749 = vmatprep.subr.mxu0 0.0
      %750 = vmatpush1.msra.mxu0 0.0
      %751 = vmatprep.subr.mxu0 0.0
      %752 = vmatpush1.msra.mxu0 0.0
      %753 = vmatprep.subr.mxu0 0.0
      %754 = vmatpush1.msra.mxu0 0.0
      %755 = vmatprep.subr.mxu0 0.0
      %756 = vmatpush1.msra.mxu0 0.0
      %757 = vmatprep.subr.mxu0 0.0
      %758 = vmatpush1.msra.mxu0 0.0
      %759 = vmatprep.subr.mxu0 0.0
      %760 = vmatpush1.msra.mxu0 0.0
      %761 = vmatprep.subr.mxu0 0.0
      %762 = vmatpush1.msra.mxu0 0.0
      %763 = vmatprep.subr.mxu0 0.0
      %764 = vmatpush1.msra.mxu0 0.0
      %765 = vmatprep.subr.mxu0 0.0
      %766 = vmatpush1.msra.mxu0 0.0
      %767 = vmatprep.subr.mxu0 0.0
      %768 = vmatpush1.msra.mxu0 0.0
      %769 = vmatprep.subr.mxu0 0.0
      %770 = vmatpush1.msra.mxu0 0.0
      %771 = vmatprep.subr.mxu0 0.0
      %772 = vmatpush1.msra.mxu0 0.0
      %773 = vmatprep.subr.mxu0 0.0
      %774 = vmatpush1.msra.mxu0 0.0
      %775 = vmatprep.subr.mxu0 0.0
      %v776 = vand.u32 %v254, 4294901760
      %777 = vmatpush1.msra.mxu0 %v776
      %778 = vmatprep.subr.mxu0 0.0
      %v779 = vand.u32 %v253, 4294901760
      %780 = vmatpush1.msra.mxu0 %v779
      %781 = vmatprep.subr.mxu0 0.0
      %782 = vmatpush2.msra.mxu0 0.0
      %783 = vmatprep.subr.mxu0 0.0
      %784 = vmatpush2.msra.mxu0 0.0
      %785 = vmatprep.subr.mxu0 0.0
      %786 = vmatpush2.msra.mxu0 0.0
      %787 = vmatprep.subr.mxu0 0.0
      %788 = vmatpush2.msra.mxu0 0.0
      %789 = vmatprep.subr.mxu0 0.0
      %790 = vmatpush2.msra.mxu0 0.0
      %791 = vmatprep.subr.mxu0 0.0
      %792 = vmatpush2.msra.mxu0 0.0
      %793 = vmatprep.subr.mxu0 0.0
      %794 = vmatpush2.msra.mxu0 0.0
      %795 = vmatprep.subr.mxu0 0.0
      %796 = vmatpush2.msra.mxu0 0.0
      %797 = vmatprep.subr.mxu0 0.0
      %798 = vmatpush2.msra.mxu0 0.0
      %799 = vmatprep.subr.mxu0 0.0
      %800 = vmatpush2.msra.mxu0 0.0
      %801 = vmatprep.subr.mxu0 0.0
      %802 = vmatpush2.msra.mxu0 0.0
      %803 = vmatprep.subr.mxu0 0.0
      %804 = vmatpush2.msra.mxu0 0.0
      %805 = vmatprep.subr.mxu0 0.0
      %806 = vmatpush2.msra.mxu0 0.0
      %807 = vmatprep.subr.mxu0 0.0
      %808 = vmatpush2.msra.mxu0 0.0
      %809 = vmatprep.subr.mxu0 0.0
      %810 = vmatpush2.msra.mxu0 0.0
      %811 = vmatprep.subr.mxu0 0.0
      %812 = vmatpush2.msra.mxu0 0.0
      %813 = vmatprep.mubr.f32.mxu0 0.0
      %v814 = vand.u32 %v319, 4294901760
      %815 = vmatmul.mubr.f32.gmra.mxu0 %v814
      %v816 = vpop.f32.mrf.mxu0
      %v817 = vadd.f32 %v738, %v816
      %v818 = vpop.f32.mrf.mxu0
      %819 = vmatprep.mubr.f32.mxu0 0.0
      %v820 = vand.u32 %v322, 4294901760
      %821 = vmatmul.mubr.f32.gmra.mxu0 %v820
      %v822 = vpop.f32.mrf.mxu0
      %v823 = vadd.f32 %v744, %v822
      %v824 = vpop.f32.mrf.mxu0
      %825 = vdwg.mxu0
      %v827 = vsel %vm317, %v287, 0
      %v830 = vsel %vm317, %v288, 0
      %832 = vmatprep.subr.mxu0 0.0
      %833 = vmatpush1.msra.mxu0 0.0
      %834 = vmatprep.subr.mxu0 0.0
      %835 = vmatpush1.msra.mxu0 0.0
      %836 = vmatprep.subr.mxu0 0.0
      %837 = vmatpush1.msra.mxu0 0.0
      %838 = vmatprep.subr.mxu0 0.0
      %839 = vmatpush1.msra.mxu0 0.0
      %840 = vmatprep.subr.mxu0 0.0
      %841 = vmatpush1.msra.mxu0 0.0
      %842 = vmatprep.subr.mxu0 0.0
      %843 = vmatpush1.msra.mxu0 0.0
      %844 = vmatprep.subr.mxu0 0.0
      %845 = vmatpush1.msra.mxu0 0.0
      %846 = vmatprep.subr.mxu0 0.0
      %847 = vmatpush1.msra.mxu0 0.0
      %848 = vmatprep.subr.mxu0 0.0
      %849 = vmatpush1.msra.mxu0 0.0
      %850 = vmatprep.subr.mxu0 0.0
      %851 = vmatpush1.msra.mxu0 0.0
      %852 = vmatprep.subr.mxu0 0.0
      %853 = vmatpush1.msra.mxu0 0.0
      %854 = vmatprep.subr.mxu0 0.0
      %855 = vmatpush1.msra.mxu0 0.0
      %856 = vmatprep.subr.mxu0 0.0
      %857 = vmatpush1.msra.mxu0 0.0
      %858 = vmatprep.subr.mxu0 0.0
      %859 = vmatpush1.msra.mxu0 0.0
      %860 = vmatprep.subr.mxu0 0.0
      %v861 = vand.u32 %v256, 4294901760
      %862 = vmatpush1.msra.mxu0 %v861
      %863 = vmatprep.subr.mxu0 0.0
      %v864 = vand.u32 %v255, 4294901760
      %865 = vmatpush1.msra.mxu0 %v864
      %866 = vmatprep.subr.mxu0 0.0
      %867 = vmatpush2.msra.mxu0 0.0
      %868 = vmatprep.subr.mxu0 0.0
      %869 = vmatpush2.msra.mxu0 0.0
      %870 = vmatprep.subr.mxu0 0.0
      %871 = vmatpush2.msra.mxu0 0.0
      %872 = vmatprep.subr.mxu0 0.0
      %873 = vmatpush2.msra.mxu0 0.0
      %874 = vmatprep.subr.mxu0 0.0
      %875 = vmatpush2.msra.mxu0 0.0
      %876 = vmatprep.subr.mxu0 0.0
      %877 = vmatpush2.msra.mxu0 0.0
      %878 = vmatprep.subr.mxu0 0.0
      %879 = vmatpush2.msra.mxu0 0.0
      %880 = vmatprep.subr.mxu0 0.0
      %881 = vmatpush2.msra.mxu0 0.0
      %882 = vmatprep.subr.mxu0 0.0
      %883 = vmatpush2.msra.mxu0 0.0
      %884 = vmatprep.subr.mxu0 0.0
      %885 = vmatpush2.msra.mxu0 0.0
      %886 = vmatprep.subr.mxu0 0.0
      %887 = vmatpush2.msra.mxu0 0.0
      %888 = vmatprep.subr.mxu0 0.0
      %889 = vmatpush2.msra.mxu0 0.0
      %890 = vmatprep.subr.mxu0 0.0
      %891 = vmatpush2.msra.mxu0 0.0
      %892 = vmatprep.subr.mxu0 0.0
      %893 = vmatpush2.msra.mxu0 0.0
      %894 = vmatprep.subr.mxu0 0.0
      %895 = vmatpush2.msra.mxu0 0.0
      %896 = vmatprep.subr.mxu0 0.0
      %897 = vmatpush2.msra.mxu0 0.0
      %898 = vmatprep.mubr.f32.mxu0 0.0
      %v899 = vand.u32 %v827, 4294901760
      %v900 = vsub.f32 %v827, %v899
      %v901 = vand.u32 %v900, 4294901760
      %v902 = vsub.f32 %v900, %v901
      %v903 = vand.u32 %v902, 4294901760
      %904 = vmatmul.mubr.f32.gmra.mxu0 %v903
      %v905 = vpop.f32.mrf.mxu0
      %v906 = vadd.f32 0.0, %v905
      %v907 = vpop.f32.mrf.mxu0
      %908 = vmatprep.mubr.f32.mxu0 0.0
      %v909 = vand.u32 %v830, 4294901760
      %v910 = vsub.f32 %v830, %v909
      %v911 = vand.u32 %v910, 4294901760
      %v912 = vsub.f32 %v910, %v911
      %v913 = vand.u32 %v912, 4294901760
      %914 = vmatmul.mubr.f32.gmra.mxu0 %v913
      %v915 = vpop.f32.mrf.mxu0
      %v916 = vadd.f32 0.0, %v915
      %v917 = vpop.f32.mrf.mxu0
      %918 = vdwg.mxu0
      %919 = vmatprep.subr.mxu0 0.0
      %920 = vmatpush1.msra.mxu0 0.0
      %921 = vmatprep.subr.mxu0 0.0
      %922 = vmatpush1.msra.mxu0 0.0
      %923 = vmatprep.subr.mxu0 0.0
      %924 = vmatpush1.msra.mxu0 0.0
      %925 = vmatprep.subr.mxu0 0.0
      %926 = vmatpush1.msra.mxu0 0.0
      %927 = vmatprep.subr.mxu0 0.0
      %928 = vmatpush1.msra.mxu0 0.0
      %929 = vmatprep.subr.mxu0 0.0
      %930 = vmatpush1.msra.mxu0 0.0
      %931 = vmatprep.subr.mxu0 0.0
      %932 = vmatpush1.msra.mxu0 0.0
      %933 = vmatprep.subr.mxu0 0.0
      %934 = vmatpush1.msra.mxu0 0.0
      %935 = vmatprep.subr.mxu0 0.0
      %936 = vmatpush1.msra.mxu0 0.0
      %937 = vmatprep.subr.mxu0 0.0
      %938 = vmatpush1.msra.mxu0 0.0
      %939 = vmatprep.subr.mxu0 0.0
      %940 = vmatpush1.msra.mxu0 0.0
      %941 = vmatprep.subr.mxu0 0.0
      %942 = vmatpush1.msra.mxu0 0.0
      %943 = vmatprep.subr.mxu0 0.0
      %944 = vmatpush1.msra.mxu0 0.0
      %945 = vmatprep.subr.mxu0 0.0
      %946 = vmatpush1.msra.mxu0 0.0
      %947 = vmatprep.subr.mxu0 0.0
      %v948 = vand.u32 %v256, 4294901760
      %v949 = vsub.f32 %v256, %v948
      %v950 = vand.u32 %v949, 4294901760
      %v951 = vsub.f32 %v949, %v950
      %v952 = vand.u32 %v951, 4294901760
      %953 = vmatpush1.msra.mxu0 %v952
      %954 = vmatprep.subr.mxu0 0.0
      %v955 = vand.u32 %v255, 4294901760
      %v956 = vsub.f32 %v255, %v955
      %v957 = vand.u32 %v956, 4294901760
      %v958 = vsub.f32 %v956, %v957
      %v959 = vand.u32 %v958, 4294901760
      %960 = vmatpush1.msra.mxu0 %v959
      %961 = vmatprep.subr.mxu0 0.0
      %962 = vmatpush2.msra.mxu0 0.0
      %963 = vmatprep.subr.mxu0 0.0
      %964 = vmatpush2.msra.mxu0 0.0
      %965 = vmatprep.subr.mxu0 0.0
      %966 = vmatpush2.msra.mxu0 0.0
      %967 = vmatprep.subr.mxu0 0.0
      %968 = vmatpush2.msra.mxu0 0.0
      %969 = vmatprep.subr.mxu0 0.0
      %970 = vmatpush2.msra.mxu0 0.0
      %971 = vmatprep.subr.mxu0 0.0
      %972 = vmatpush2.msra.mxu0 0.0
      %973 = vmatprep.subr.mxu0 0.0
      %974 = vmatpush2.msra.mxu0 0.0
      %975 = vmatprep.subr.mxu0 0.0
      %976 = vmatpush2.msra.mxu0 0.0
      %977 = vmatprep.subr.mxu0 0.0
      %978 = vmatpush2.msra.mxu0 0.0
      %979 = vmatprep.subr.mxu0 0.0
      %980 = vmatpush2.msra.mxu0 0.0
      %981 = vmatprep.subr.mxu0 0.0
      %982 = vmatpush2.msra.mxu0 0.0
      %983 = vmatprep.subr.mxu0 0.0
      %984 = vmatpush2.msra.mxu0 0.0
      %985 = vmatprep.subr.mxu0 0.0
      %986 = vmatpush2.msra.mxu0 0.0
      %987 = vmatprep.subr.mxu0 0.0
      %988 = vmatpush2.msra.mxu0 0.0
      %989 = vmatprep.subr.mxu0 0.0
      %990 = vmatpush2.msra.mxu0 0.0
      %991 = vmatprep.subr.mxu0 0.0
      %992 = vmatpush2.msra.mxu0 0.0
      %993 = vmatprep.mubr.f32.mxu0 0.0
      %v994 = vand.u32 %v827, 4294901760
      %995 = vmatmul.mubr.f32.gmra.mxu0 %v994
      %v996 = vpop.f32.mrf.mxu0
      %v997 = vadd.f32 %v906, %v996
      %v998 = vpop.f32.mrf.mxu0
      %999 = vmatprep.mubr.f32.mxu0 0.0
      %v1000 = vand.u32 %v830, 4294901760
      %1001 = vmatmul.mubr.f32.gmra.mxu0 %v1000
      %v1002 = vpop.f32.mrf.mxu0
      %v1003 = vadd.f32 %v916, %v1002
      %v1004 = vpop.f32.mrf.mxu0
      %1005 = vdwg.mxu0
      %1006 = vmatprep.subr.mxu0 0.0
      %1007 = vmatpush1.msra.mxu0 0.0
      %1008 = vmatprep.subr.mxu0 0.0
      %1009 = vmatpush1.msra.mxu0 0.0
      %1010 = vmatprep.subr.mxu0 0.0
      %1011 = vmatpush1.msra.mxu0 0.0
      %1012 = vmatprep.subr.mxu0 0.0
      %1013 = vmatpush1.msra.mxu0 0.0
      %1014 = vmatprep.subr.mxu0 0.0
      %1015 = vmatpush1.msra.mxu0 0.0
      %1016 = vmatprep.subr.mxu0 0.0
      %1017 = vmatpush1.msra.mxu0 0.0
      %1018 = vmatprep.subr.mxu0 0.0
      %1019 = vmatpush1.msra.mxu0 0.0
      %1020 = vmatprep.subr.mxu0 0.0
      %1021 = vmatpush1.msra.mxu0 0.0
      %1022 = vmatprep.subr.mxu0 0.0
      %1023 = vmatpush1.msra.mxu0 0.0
      %1024 = vmatprep.subr.mxu0 0.0
      %1025 = vmatpush1.msra.mxu0 0.0
      %1026 = vmatprep.subr.mxu0 0.0
      %1027 = vmatpush1.msra.mxu0 0.0
      %1028 = vmatprep.subr.mxu0 0.0
      %1029 = vmatpush1.msra.mxu0 0.0
      %1030 = vmatprep.subr.mxu0 0.0
      %1031 = vmatpush1.msra.mxu0 0.0
      %1032 = vmatprep.subr.mxu0 0.0
      %1033 = vmatpush1.msra.mxu0 0.0
      %1034 = vmatprep.subr.mxu0 0.0
      %v1035 = vand.u32 %v256, 4294901760
      %v1036 = vsub.f32 %v256, %v1035
      %1037 = vmatpush1.msra.mxu0 %v1036
      %1038 = vmatprep.subr.mxu0 0.0
      %v1039 = vand.u32 %v255, 4294901760
      %v1040 = vsub.f32 %v255, %v1039
      %1041 = vmatpush1.msra.mxu0 %v1040
      %1042 = vmatprep.subr.mxu0 0.0
      %1043 = vmatpush2.msra.mxu0 0.0
      %1044 = vmatprep.subr.mxu0 0.0
      %1045 = vmatpush2.msra.mxu0 0.0
      %1046 = vmatprep.subr.mxu0 0.0
      %1047 = vmatpush2.msra.mxu0 0.0
      %1048 = vmatprep.subr.mxu0 0.0
      %1049 = vmatpush2.msra.mxu0 0.0
      %1050 = vmatprep.subr.mxu0 0.0
      %1051 = vmatpush2.msra.mxu0 0.0
      %1052 = vmatprep.subr.mxu0 0.0
      %1053 = vmatpush2.msra.mxu0 0.0
      %1054 = vmatprep.subr.mxu0 0.0
      %1055 = vmatpush2.msra.mxu0 0.0
      %1056 = vmatprep.subr.mxu0 0.0
      %1057 = vmatpush2.msra.mxu0 0.0
      %1058 = vmatprep.subr.mxu0 0.0
      %1059 = vmatpush2.msra.mxu0 0.0
      %1060 = vmatprep.subr.mxu0 0.0
      %1061 = vmatpush2.msra.mxu0 0.0
      %1062 = vmatprep.subr.mxu0 0.0
      %1063 = vmatpush2.msra.mxu0 0.0
      %1064 = vmatprep.subr.mxu0 0.0
      %1065 = vmatpush2.msra.mxu0 0.0
      %1066 = vmatprep.subr.mxu0 0.0
      %1067 = vmatpush2.msra.mxu0 0.0
      %1068 = vmatprep.subr.mxu0 0.0
      %1069 = vmatpush2.msra.mxu0 0.0
      %1070 = vmatprep.subr.mxu0 0.0
      %1071 = vmatpush2.msra.mxu0 0.0
      %1072 = vmatprep.subr.mxu0 0.0
      %1073 = vmatpush2.msra.mxu0 0.0
      %1074 = vmatprep.mubr.f32.mxu0 0.0
      %v1075 = vand.u32 %v827, 4294901760
      %v1076 = vsub.f32 %v827, %v1075
      %1077 = vmatmul.mubr.f32.gmra.mxu0 %v1076
      %v1078 = vpop.f32.mrf.mxu0
      %v1079 = vadd.f32 %v997, %v1078
      %v1080 = vpop.f32.mrf.mxu0
      %1081 = vmatprep.mubr.f32.mxu0 0.0
      %v1082 = vand.u32 %v830, 4294901760
      %v1083 = vsub.f32 %v830, %v1082
      %1084 = vmatmul.mubr.f32.gmra.mxu0 %v1083
      %v1085 = vpop.f32.mrf.mxu0
      %v1086 = vadd.f32 %v1003, %v1085
      %v1087 = vpop.f32.mrf.mxu0
      %1088 = vdwg.mxu0
      %1089 = vmatprep.subr.mxu0 0.0
      %1090 = vmatpush1.msra.mxu0 0.0
      %1091 = vmatprep.subr.mxu0 0.0
      %1092 = vmatpush1.msra.mxu0 0.0
      %1093 = vmatprep.subr.mxu0 0.0
      %1094 = vmatpush1.msra.mxu0 0.0
      %1095 = vmatprep.subr.mxu0 0.0
      %1096 = vmatpush1.msra.mxu0 0.0
      %1097 = vmatprep.subr.mxu0 0.0
      %1098 = vmatpush1.msra.mxu0 0.0
      %1099 = vmatprep.subr.mxu0 0.0
      %1100 = vmatpush1.msra.mxu0 0.0
      %1101 = vmatprep.subr.mxu0 0.0
      %1102 = vmatpush1.msra.mxu0 0.0
      %1103 = vmatprep.subr.mxu0 0.0
      %1104 = vmatpush1.msra.mxu0 0.0
      %1105 = vmatprep.subr.mxu0 0.0
      %1106 = vmatpush1.msra.mxu0 0.0
      %1107 = vmatprep.subr.mxu0 0.0
      %1108 = vmatpush1.msra.mxu0 0.0
      %1109 = vmatprep.subr.mxu0 0.0
      %1110 = vmatpush1.msra.mxu0 0.0
      %1111 = vmatprep.subr.mxu0 0.0
      %1112 = vmatpush1.msra.mxu0 0.0
      %1113 = vmatprep.subr.mxu0 0.0
      %1114 = vmatpush1.msra.mxu0 0.0
      %1115 = vmatprep.subr.mxu0 0.0
      %1116 = vmatpush1.msra.mxu0 0.0
      %1117 = vmatprep.subr.mxu0 0.0
      %v1118 = vand.u32 %v256, 4294901760
      %1119 = vmatpush1.msra.mxu0 %v1118
      %1120 = vmatprep.subr.mxu0 0.0
      %v1121 = vand.u32 %v255, 4294901760
      %1122 = vmatpush1.msra.mxu0 %v1121
      %1123 = vmatprep.subr.mxu0 0.0
      %1124 = vmatpush2.msra.mxu0 0.0
      %1125 = vmatprep.subr.mxu0 0.0
      %1126 = vmatpush2.msra.mxu0 0.0
      %1127 = vmatprep.subr.mxu0 0.0
      %1128 = vmatpush2.msra.mxu0 0.0
      %1129 = vmatprep.subr.mxu0 0.0
      %1130 = vmatpush2.msra.mxu0 0.0
      %1131 = vmatprep.subr.mxu0 0.0
      %1132 = vmatpush2.msra.mxu0 0.0
      %1133 = vmatprep.subr.mxu0 0.0
      %1134 = vmatpush2.msra.mxu0 0.0
      %1135 = vmatprep.subr.mxu0 0.0
      %1136 = vmatpush2.msra.mxu0 0.0
      %1137 = vmatprep.subr.mxu0 0.0
      %1138 = vmatpush2.msra.mxu0 0.0
      %1139 = vmatprep.subr.mxu0 0.0
      %1140 = vmatpush2.msra.mxu0 0.0
      %1141 = vmatprep.subr.mxu0 0.0
      %1142 = vmatpush2.msra.mxu0 0.0
      %1143 = vmatprep.subr.mxu0 0.0
      %1144 = vmatpush2.msra.mxu0 0.0
      %1145 = vmatprep.subr.mxu0 0.0
      %1146 = vmatpush2.msra.mxu0 0.0
      %1147 = vmatprep.subr.mxu0 0.0
      %1148 = vmatpush2.msra.mxu0 0.0
      %1149 = vmatprep.subr.mxu0 0.0
      %1150 = vmatpush2.msra.mxu0 0.0
      %1151 = vmatprep.subr.mxu0 0.0
      %1152 = vmatpush2.msra.mxu0 0.0
      %1153 = vmatprep.subr.mxu0 0.0
      %1154 = vmatpush2.msra.mxu0 0.0
      %1155 = vmatprep.mubr.f32.mxu0 0.0
      %v1156 = vand.u32 %v827, 4294901760
      %v1157 = vsub.f32 %v827, %v1156
      %v1158 = vand.u32 %v1157, 4294901760
      %1159 = vmatmul.mubr.f32.gmra.mxu0 %v1158
      %v1160 = vpop.f32.mrf.mxu0
      %v1161 = vadd.f32 %v1079, %v1160
      %v1162 = vpop.f32.mrf.mxu0
      %1163 = vmatprep.mubr.f32.mxu0 0.0
      %v1164 = vand.u32 %v830, 4294901760
      %v1165 = vsub.f32 %v830, %v1164
      %v1166 = vand.u32 %v1165, 4294901760
      %1167 = vmatmul.mubr.f32.gmra.mxu0 %v1166
      %v1168 = vpop.f32.mrf.mxu0
      %v1169 = vadd.f32 %v1086, %v1168
      %v1170 = vpop.f32.mrf.mxu0
      %1171 = vdwg.mxu0
      %1172 = vmatprep.subr.mxu0 0.0
      %1173 = vmatpush1.msra.mxu0 0.0
      %1174 = vmatprep.subr.mxu0 0.0
      %1175 = vmatpush1.msra.mxu0 0.0
      %1176 = vmatprep.subr.mxu0 0.0
      %1177 = vmatpush1.msra.mxu0 0.0
      %1178 = vmatprep.subr.mxu0 0.0
      %1179 = vmatpush1.msra.mxu0 0.0
      %1180 = vmatprep.subr.mxu0 0.0
      %1181 = vmatpush1.msra.mxu0 0.0
      %1182 = vmatprep.subr.mxu0 0.0
      %1183 = vmatpush1.msra.mxu0 0.0
      %1184 = vmatprep.subr.mxu0 0.0
      %1185 = vmatpush1.msra.mxu0 0.0
      %1186 = vmatprep.subr.mxu0 0.0
      %1187 = vmatpush1.msra.mxu0 0.0
      %1188 = vmatprep.subr.mxu0 0.0
      %1189 = vmatpush1.msra.mxu0 0.0
      %1190 = vmatprep.subr.mxu0 0.0
      %1191 = vmatpush1.msra.mxu0 0.0
      %1192 = vmatprep.subr.mxu0 0.0
      %1193 = vmatpush1.msra.mxu0 0.0
      %1194 = vmatprep.subr.mxu0 0.0
      %1195 = vmatpush1.msra.mxu0 0.0
      %1196 = vmatprep.subr.mxu0 0.0
      %1197 = vmatpush1.msra.mxu0 0.0
      %1198 = vmatprep.subr.mxu0 0.0
      %1199 = vmatpush1.msra.mxu0 0.0
      %1200 = vmatprep.subr.mxu0 0.0
      %v1201 = vand.u32 %v256, 4294901760
      %v1202 = vsub.f32 %v256, %v1201
      %v1203 = vand.u32 %v1202, 4294901760
      %1204 = vmatpush1.msra.mxu0 %v1203
      %1205 = vmatprep.subr.mxu0 0.0
      %v1206 = vand.u32 %v255, 4294901760
      %v1207 = vsub.f32 %v255, %v1206
      %v1208 = vand.u32 %v1207, 4294901760
      %1209 = vmatpush1.msra.mxu0 %v1208
      %1210 = vmatprep.subr.mxu0 0.0
      %1211 = vmatpush2.msra.mxu0 0.0
      %1212 = vmatprep.subr.mxu0 0.0
      %1213 = vmatpush2.msra.mxu0 0.0
      %1214 = vmatprep.subr.mxu0 0.0
      %1215 = vmatpush2.msra.mxu0 0.0
      %1216 = vmatprep.subr.mxu0 0.0
      %1217 = vmatpush2.msra.mxu0 0.0
      %1218 = vmatprep.subr.mxu0 0.0
      %1219 = vmatpush2.msra.mxu0 0.0
      %1220 = vmatprep.subr.mxu0 0.0
      %1221 = vmatpush2.msra.mxu0 0.0
      %1222 = vmatprep.subr.mxu0 0.0
      %1223 = vmatpush2.msra.mxu0 0.0
      %1224 = vmatprep.subr.mxu0 0.0
      %1225 = vmatpush2.msra.mxu0 0.0
      %1226 = vmatprep.subr.mxu0 0.0
      %1227 = vmatpush2.msra.mxu0 0.0
      %1228 = vmatprep.subr.mxu0 0.0
      %1229 = vmatpush2.msra.mxu0 0.0
      %1230 = vmatprep.subr.mxu0 0.0
      %1231 = vmatpush2.msra.mxu0 0.0
      %1232 = vmatprep.subr.mxu0 0.0
      %1233 = vmatpush2.msra.mxu0 0.0
      %1234 = vmatprep.subr.mxu0 0.0
      %1235 = vmatpush2.msra.mxu0 0.0
      %1236 = vmatprep.subr.mxu0 0.0
      %1237 = vmatpush2.msra.mxu0 0.0
      %1238 = vmatprep.subr.mxu0 0.0
      %1239 = vmatpush2.msra.mxu0 0.0
      %1240 = vmatprep.subr.mxu0 0.0
      %1241 = vmatpush2.msra.mxu0 0.0
      %1242 = vmatprep.mubr.f32.mxu0 0.0
      %v1243 = vand.u32 %v827, 4294901760
      %1244 = vmatmul.mubr.f32.gmra.mxu0 %v1243
      %v1245 = vpop.f32.mrf.mxu0
      %v1246 = vadd.f32 %v1161, %v1245
      %v1247 = vpop.f32.mrf.mxu0
      %1248 = vmatprep.mubr.f32.mxu0 0.0
      %v1249 = vand.u32 %v830, 4294901760
      %1250 = vmatmul.mubr.f32.gmra.mxu0 %v1249
      %v1251 = vpop.f32.mrf.mxu0
      %v1252 = vadd.f32 %v1169, %v1251
      %v1253 = vpop.f32.mrf.mxu0
      %1254 = vdwg.mxu0
      %1255 = vmatprep.subr.mxu0 0.0
      %1256 = vmatpush1.msra.mxu0 0.0
      %1257 = vmatprep.subr.mxu0 0.0
      %1258 = vmatpush1.msra.mxu0 0.0
      %1259 = vmatprep.subr.mxu0 0.0
      %1260 = vmatpush1.msra.mxu0 0.0
      %1261 = vmatprep.subr.mxu0 0.0
      %1262 = vmatpush1.msra.mxu0 0.0
      %1263 = vmatprep.subr.mxu0 0.0
      %1264 = vmatpush1.msra.mxu0 0.0
      %1265 = vmatprep.subr.mxu0 0.0
      %1266 = vmatpush1.msra.mxu0 0.0
      %1267 = vmatprep.subr.mxu0 0.0
      %1268 = vmatpush1.msra.mxu0 0.0
      %1269 = vmatprep.subr.mxu0 0.0
      %1270 = vmatpush1.msra.mxu0 0.0
      %1271 = vmatprep.subr.mxu0 0.0
      %1272 = vmatpush1.msra.mxu0 0.0
      %1273 = vmatprep.subr.mxu0 0.0
      %1274 = vmatpush1.msra.mxu0 0.0
      %1275 = vmatprep.subr.mxu0 0.0
      %1276 = vmatpush1.msra.mxu0 0.0
      %1277 = vmatprep.subr.mxu0 0.0
      %1278 = vmatpush1.msra.mxu0 0.0
      %1279 = vmatprep.subr.mxu0 0.0
      %1280 = vmatpush1.msra.mxu0 0.0
      %1281 = vmatprep.subr.mxu0 0.0
      %1282 = vmatpush1.msra.mxu0 0.0
      %1283 = vmatprep.subr.mxu0 0.0
      %v1284 = vand.u32 %v256, 4294901760
      %1285 = vmatpush1.msra.mxu0 %v1284
      %1286 = vmatprep.subr.mxu0 0.0
      %v1287 = vand.u32 %v255, 4294901760
      %1288 = vmatpush1.msra.mxu0 %v1287
      %1289 = vmatprep.subr.mxu0 0.0
      %1290 = vmatpush2.msra.mxu0 0.0
      %1291 = vmatprep.subr.mxu0 0.0
      %1292 = vmatpush2.msra.mxu0 0.0
      %1293 = vmatprep.subr.mxu0 0.0
      %1294 = vmatpush2.msra.mxu0 0.0
      %1295 = vmatprep.subr.mxu0 0.0
      %1296 = vmatpush2.msra.mxu0 0.0
      %1297 = vmatprep.subr.mxu0 0.0
      %1298 = vmatpush2.msra.mxu0 0.0
      %1299 = vmatprep.subr.mxu0 0.0
      %1300 = vmatpush2.msra.mxu0 0.0
      %1301 = vmatprep.subr.mxu0 0.0
      %1302 = vmatpush2.msra.mxu0 0.0
      %1303 = vmatprep.subr.mxu0 0.0
      %1304 = vmatpush2.msra.mxu0 0.0
      %1305 = vmatprep.subr.mxu0 0.0
      %1306 = vmatpush2.msra.mxu0 0.0
      %1307 = vmatprep.subr.mxu0 0.0
      %1308 = vmatpush2.msra.mxu0 0.0
      %1309 = vmatprep.subr.mxu0 0.0
      %1310 = vmatpush2.msra.mxu0 0.0
      %1311 = vmatprep.subr.mxu0 0.0
      %1312 = vmatpush2.msra.mxu0 0.0
      %1313 = vmatprep.subr.mxu0 0.0
      %1314 = vmatpush2.msra.mxu0 0.0
      %1315 = vmatprep.subr.mxu0 0.0
      %1316 = vmatpush2.msra.mxu0 0.0
      %1317 = vmatprep.subr.mxu0 0.0
      %1318 = vmatpush2.msra.mxu0 0.0
      %1319 = vmatprep.subr.mxu0 0.0
      %1320 = vmatpush2.msra.mxu0 0.0
      %1321 = vmatprep.mubr.f32.mxu0 0.0
      %v1322 = vand.u32 %v827, 4294901760
      %1323 = vmatmul.mubr.f32.gmra.mxu0 %v1322
      %v1324 = vpop.f32.mrf.mxu0
      %v1325 = vadd.f32 %v1246, %v1324
      %v1326 = vpop.f32.mrf.mxu0
      %1327 = vmatprep.mubr.f32.mxu0 0.0
      %v1328 = vand.u32 %v830, 4294901760
      %1329 = vmatmul.mubr.f32.gmra.mxu0 %v1328
      %v1330 = vpop.f32.mrf.mxu0
      %v1331 = vadd.f32 %v1252, %v1330
      %v1332 = vpop.f32.mrf.mxu0
      %1333 = vdwg.mxu0
      %v1335 = vsel %vm317, %v289, 0
      %v1338 = vsel %vm317, %v290, 0
      %1340 = vmatprep.subr.mxu0 0.0
      %1341 = vmatpush1.msra.mxu0 0.0
      %1342 = vmatprep.subr.mxu0 0.0
      %1343 = vmatpush1.msra.mxu0 0.0
      %1344 = vmatprep.subr.mxu0 0.0
      %1345 = vmatpush1.msra.mxu0 0.0
      %1346 = vmatprep.subr.mxu0 0.0
      %1347 = vmatpush1.msra.mxu0 0.0
      %1348 = vmatprep.subr.mxu0 0.0
      %1349 = vmatpush1.msra.mxu0 0.0
      %1350 = vmatprep.subr.mxu0 0.0
      %1351 = vmatpush1.msra.mxu0 0.0
      %1352 = vmatprep.subr.mxu0 0.0
      %1353 = vmatpush1.msra.mxu0 0.0
      %1354 = vmatprep.subr.mxu0 0.0
      %1355 = vmatpush1.msra.mxu0 0.0
      %1356 = vmatprep.subr.mxu0 0.0
      %1357 = vmatpush1.msra.mxu0 0.0
      %1358 = vmatprep.subr.mxu0 0.0
      %1359 = vmatpush1.msra.mxu0 0.0
      %1360 = vmatprep.subr.mxu0 0.0
      %1361 = vmatpush1.msra.mxu0 0.0
      %1362 = vmatprep.subr.mxu0 0.0
      %1363 = vmatpush1.msra.mxu0 0.0
      %1364 = vmatprep.subr.mxu0 0.0
      %1365 = vmatpush1.msra.mxu0 0.0
      %1366 = vmatprep.subr.mxu0 0.0
      %1367 = vmatpush1.msra.mxu0 0.0
      %1368 = vmatprep.subr.mxu0 0.0
      %v1369 = vand.u32 %v258, 4294901760
      %1370 = vmatpush1.msra.mxu0 %v1369
      %1371 = vmatprep.subr.mxu0 0.0
      %v1372 = vand.u32 %v257, 4294901760
      %1373 = vmatpush1.msra.mxu0 %v1372
      %1374 = vmatprep.subr.mxu0 0.0
      %1375 = vmatpush2.msra.mxu0 0.0
      %1376 = vmatprep.subr.mxu0 0.0
      %1377 = vmatpush2.msra.mxu0 0.0
      %1378 = vmatprep.subr.mxu0 0.0
      %1379 = vmatpush2.msra.mxu0 0.0
      %1380 = vmatprep.subr.mxu0 0.0
      %1381 = vmatpush2.msra.mxu0 0.0
      %1382 = vmatprep.subr.mxu0 0.0
      %1383 = vmatpush2.msra.mxu0 0.0
      %1384 = vmatprep.subr.mxu0 0.0
      %1385 = vmatpush2.msra.mxu0 0.0
      %1386 = vmatprep.subr.mxu0 0.0
      %1387 = vmatpush2.msra.mxu0 0.0
      %1388 = vmatprep.subr.mxu0 0.0
      %1389 = vmatpush2.msra.mxu0 0.0
      %1390 = vmatprep.subr.mxu0 0.0
      %1391 = vmatpush2.msra.mxu0 0.0
      %1392 = vmatprep.subr.mxu0 0.0
      %1393 = vmatpush2.msra.mxu0 0.0
      %1394 = vmatprep.subr.mxu0 0.0
      %1395 = vmatpush2.msra.mxu0 0.0
      %1396 = vmatprep.subr.mxu0 0.0
      %1397 = vmatpush2.msra.mxu0 0.0
      %1398 = vmatprep.subr.mxu0 0.0
      %1399 = vmatpush2.msra.mxu0 0.0
      %1400 = vmatprep.subr.mxu0 0.0
      %1401 = vmatpush2.msra.mxu0 0.0
      %1402 = vmatprep.subr.mxu0 0.0
      %1403 = vmatpush2.msra.mxu0 0.0
      %1404 = vmatprep.subr.mxu0 0.0
      %1405 = vmatpush2.msra.mxu0 0.0
      %1406 = vmatprep.mubr.f32.mxu0 0.0
      %v1407 = vand.u32 %v1335, 4294901760
      %v1408 = vsub.f32 %v1335, %v1407
      %v1409 = vand.u32 %v1408, 4294901760
      %v1410 = vsub.f32 %v1408, %v1409
      %v1411 = vand.u32 %v1410, 4294901760
      %1412 = vmatmul.mubr.f32.gmra.mxu0 %v1411
      %v1413 = vpop.f32.mrf.mxu0
      %v1414 = vadd.f32 0.0, %v1413
      %v1415 = vpop.f32.mrf.mxu0
      %1416 = vmatprep.mubr.f32.mxu0 0.0
      %v1417 = vand.u32 %v1338, 4294901760
      %v1418 = vsub.f32 %v1338, %v1417
      %v1419 = vand.u32 %v1418, 4294901760
      %v1420 = vsub.f32 %v1418, %v1419
      %v1421 = vand.u32 %v1420, 4294901760
      %1422 = vmatmul.mubr.f32.gmra.mxu0 %v1421
      %v1423 = vpop.f32.mrf.mxu0
      %v1424 = vadd.f32 0.0, %v1423
      %v1425 = vpop.f32.mrf.mxu0
      %1426 = vdwg.mxu0
      %1427 = vmatprep.subr.mxu0 0.0
      %1428 = vmatpush1.msra.mxu0 0.0
      %1429 = vmatprep.subr.mxu0 0.0
      %1430 = vmatpush1.msra.mxu0 0.0
      %1431 = vmatprep.subr.mxu0 0.0
      %1432 = vmatpush1.msra.mxu0 0.0
      %1433 = vmatprep.subr.mxu0 0.0
      %1434 = vmatpush1.msra.mxu0 0.0
      %1435 = vmatprep.subr.mxu0 0.0
      %1436 = vmatpush1.msra.mxu0 0.0
      %1437 = vmatprep.subr.mxu0 0.0
      %1438 = vmatpush1.msra.mxu0 0.0
      %1439 = vmatprep.subr.mxu0 0.0
      %1440 = vmatpush1.msra.mxu0 0.0
      %1441 = vmatprep.subr.mxu0 0.0
      %1442 = vmatpush1.msra.mxu0 0.0
      %1443 = vmatprep.subr.mxu0 0.0
      %1444 = vmatpush1.msra.mxu0 0.0
      %1445 = vmatprep.subr.mxu0 0.0
      %1446 = vmatpush1.msra.mxu0 0.0
      %1447 = vmatprep.subr.mxu0 0.0
      %1448 = vmatpush1.msra.mxu0 0.0
      %1449 = vmatprep.subr.mxu0 0.0
      %1450 = vmatpush1.msra.mxu0 0.0
      %1451 = vmatprep.subr.mxu0 0.0
      %1452 = vmatpush1.msra.mxu0 0.0
      %1453 = vmatprep.subr.mxu0 0.0
      %1454 = vmatpush1.msra.mxu0 0.0
      %1455 = vmatprep.subr.mxu0 0.0
      %v1456 = vand.u32 %v258, 4294901760
      %v1457 = vsub.f32 %v258, %v1456
      %v1458 = vand.u32 %v1457, 4294901760
      %v1459 = vsub.f32 %v1457, %v1458
      %v1460 = vand.u32 %v1459, 4294901760
      %1461 = vmatpush1.msra.mxu0 %v1460
      %1462 = vmatprep.subr.mxu0 0.0
      %v1463 = vand.u32 %v257, 4294901760
      %v1464 = vsub.f32 %v257, %v1463
      %v1465 = vand.u32 %v1464, 4294901760
      %v1466 = vsub.f32 %v1464, %v1465
      %v1467 = vand.u32 %v1466, 4294901760
      %1468 = vmatpush1.msra.mxu0 %v1467
      %1469 = vmatprep.subr.mxu0 0.0
      %1470 = vmatpush2.msra.mxu0 0.0
      %1471 = vmatprep.subr.mxu0 0.0
      %1472 = vmatpush2.msra.mxu0 0.0
      %1473 = vmatprep.subr.mxu0 0.0
      %1474 = vmatpush2.msra.mxu0 0.0
      %1475 = vmatprep.subr.mxu0 0.0
      %1476 = vmatpush2.msra.mxu0 0.0
      %1477 = vmatprep.subr.mxu0 0.0
      %1478 = vmatpush2.msra.mxu0 0.0
      %1479 = vmatprep.subr.mxu0 0.0
      %1480 = vmatpush2.msra.mxu0 0.0
      %1481 = vmatprep.subr.mxu0 0.0
      %1482 = vmatpush2.msra.mxu0 0.0
      %1483 = vmatprep.subr.mxu0 0.0
      %1484 = vmatpush2.msra.mxu0 0.0
      %1485 = vmatprep.subr.mxu0 0.0
      %1486 = vmatpush2.msra.mxu0 0.0
      %1487 = vmatprep.subr.mxu0 0.0
      %1488 = vmatpush2.msra.mxu0 0.0
      %1489 = vmatprep.subr.mxu0 0.0
      %1490 = vmatpush2.msra.mxu0 0.0
      %1491 = vmatprep.subr.mxu0 0.0
      %1492 = vmatpush2.msra.mxu0 0.0
      %1493 = vmatprep.subr.mxu0 0.0
      %1494 = vmatpush2.msra.mxu0 0.0
      %1495 = vmatprep.subr.mxu0 0.0
      %1496 = vmatpush2.msra.mxu0 0.0
      %1497 = vmatprep.subr.mxu0 0.0
      %1498 = vmatpush2.msra.mxu0 0.0
      %1499 = vmatprep.subr.mxu0 0.0
      %1500 = vmatpush2.msra.mxu0 0.0
      %1501 = vmatprep.mubr.f32.mxu0 0.0
      %v1502 = vand.u32 %v1335, 4294901760
      %1503 = vmatmul.mubr.f32.gmra.mxu0 %v1502
      %v1504 = vpop.f32.mrf.mxu0
      %v1505 = vadd.f32 %v1414, %v1504
      %v1506 = vpop.f32.mrf.mxu0
      %1507 = vmatprep.mubr.f32.mxu0 0.0
      %v1508 = vand.u32 %v1338, 4294901760
      %1509 = vmatmul.mubr.f32.gmra.mxu0 %v1508
      %v1510 = vpop.f32.mrf.mxu0
      %v1511 = vadd.f32 %v1424, %v1510
      %v1512 = vpop.f32.mrf.mxu0
      %1513 = vdwg.mxu0
      %1514 = vmatprep.subr.mxu0 0.0
      %1515 = vmatpush1.msra.mxu0 0.0
      %1516 = vmatprep.subr.mxu0 0.0
      %1517 = vmatpush1.msra.mxu0 0.0
      %1518 = vmatprep.subr.mxu0 0.0
      %1519 = vmatpush1.msra.mxu0 0.0
      %1520 = vmatprep.subr.mxu0 0.0
      %1521 = vmatpush1.msra.mxu0 0.0
      %1522 = vmatprep.subr.mxu0 0.0
      %1523 = vmatpush1.msra.mxu0 0.0
      %1524 = vmatprep.subr.mxu0 0.0
      %1525 = vmatpush1.msra.mxu0 0.0
      %1526 = vmatprep.subr.mxu0 0.0
      %1527 = vmatpush1.msra.mxu0 0.0
      %1528 = vmatprep.subr.mxu0 0.0
      %1529 = vmatpush1.msra.mxu0 0.0
      %1530 = vmatprep.subr.mxu0 0.0
      %1531 = vmatpush1.msra.mxu0 0.0
      %1532 = vmatprep.subr.mxu0 0.0
      %1533 = vmatpush1.msra.mxu0 0.0
      %1534 = vmatprep.subr.mxu0 0.0
      %1535 = vmatpush1.msra.mxu0 0.0
      %1536 = vmatprep.subr.mxu0 0.0
      %1537 = vmatpush1.msra.mxu0 0.0
      %1538 = vmatprep.subr.mxu0 0.0
      %1539 = vmatpush1.msra.mxu0 0.0
      %1540 = vmatprep.subr.mxu0 0.0
      %1541 = vmatpush1.msra.mxu0 0.0
      %1542 = vmatprep.subr.mxu0 0.0
      %v1543 = vand.u32 %v258, 4294901760
      %v1544 = vsub.f32 %v258, %v1543
      %1545 = vmatpush1.msra.mxu0 %v1544
      %1546 = vmatprep.subr.mxu0 0.0
      %v1547 = vand.u32 %v257, 4294901760
      %v1548 = vsub.f32 %v257, %v1547
      %1549 = vmatpush1.msra.mxu0 %v1548
      %1550 = vmatprep.subr.mxu0 0.0
      %1551 = vmatpush2.msra.mxu0 0.0
      %1552 = vmatprep.subr.mxu0 0.0
      %1553 = vmatpush2.msra.mxu0 0.0
      %1554 = vmatprep.subr.mxu0 0.0
      %1555 = vmatpush2.msra.mxu0 0.0
      %1556 = vmatprep.subr.mxu0 0.0
      %1557 = vmatpush2.msra.mxu0 0.0
      %1558 = vmatprep.subr.mxu0 0.0
      %1559 = vmatpush2.msra.mxu0 0.0
      %1560 = vmatprep.subr.mxu0 0.0
      %1561 = vmatpush2.msra.mxu0 0.0
      %1562 = vmatprep.subr.mxu0 0.0
      %1563 = vmatpush2.msra.mxu0 0.0
      %1564 = vmatprep.subr.mxu0 0.0
      %1565 = vmatpush2.msra.mxu0 0.0
      %1566 = vmatprep.subr.mxu0 0.0
      %1567 = vmatpush2.msra.mxu0 0.0
      %1568 = vmatprep.subr.mxu0 0.0
      %1569 = vmatpush2.msra.mxu0 0.0
      %1570 = vmatprep.subr.mxu0 0.0
      %1571 = vmatpush2.msra.mxu0 0.0
      %1572 = vmatprep.subr.mxu0 0.0
      %1573 = vmatpush2.msra.mxu0 0.0
      %1574 = vmatprep.subr.mxu0 0.0
      %1575 = vmatpush2.msra.mxu0 0.0
      %1576 = vmatprep.subr.mxu0 0.0
      %1577 = vmatpush2.msra.mxu0 0.0
      %1578 = vmatprep.subr.mxu0 0.0
      %1579 = vmatpush2.msra.mxu0 0.0
      %1580 = vmatprep.subr.mxu0 0.0
      %1581 = vmatpush2.msra.mxu0 0.0
      %1582 = vmatprep.mubr.f32.mxu0 0.0
      %v1583 = vand.u32 %v1335, 4294901760
      %v1584 = vsub.f32 %v1335, %v1583
      %1585 = vmatmul.mubr.f32.gmra.mxu0 %v1584
      %v1586 = vpop.f32.mrf.mxu0
      %v1587 = vadd.f32 %v1505, %v1586
      %v1588 = vpop.f32.mrf.mxu0
      %1589 = vmatprep.mubr.f32.mxu0 0.0
      %v1590 = vand.u32 %v1338, 4294901760
      %v1591 = vsub.f32 %v1338, %v1590
      %1592 = vmatmul.mubr.f32.gmra.mxu0 %v1591
      %v1593 = vpop.f32.mrf.mxu0
      %v1594 = vadd.f32 %v1511, %v1593
      %v1595 = vpop.f32.mrf.mxu0
      %1596 = vdwg.mxu0
      %1597 = vmatprep.subr.mxu0 0.0
      %1598 = vmatpush1.msra.mxu0 0.0
      %1599 = vmatprep.subr.mxu0 0.0
      %1600 = vmatpush1.msra.mxu0 0.0
      %1601 = vmatprep.subr.mxu0 0.0
      %1602 = vmatpush1.msra.mxu0 0.0
      %1603 = vmatprep.subr.mxu0 0.0
      %1604 = vmatpush1.msra.mxu0 0.0
      %1605 = vmatprep.subr.mxu0 0.0
      %1606 = vmatpush1.msra.mxu0 0.0
      %1607 = vmatprep.subr.mxu0 0.0
      %1608 = vmatpush1.msra.mxu0 0.0
      %1609 = vmatprep.subr.mxu0 0.0
      %1610 = vmatpush1.msra.mxu0 0.0
      %1611 = vmatprep.subr.mxu0 0.0
      %1612 = vmatpush1.msra.mxu0 0.0
      %1613 = vmatprep.subr.mxu0 0.0
      %1614 = vmatpush1.msra.mxu0 0.0
      %1615 = vmatprep.subr.mxu0 0.0
      %1616 = vmatpush1.msra.mxu0 0.0
      %1617 = vmatprep.subr.mxu0 0.0
      %1618 = vmatpush1.msra.mxu0 0.0
      %1619 = vmatprep.subr.mxu0 0.0
      %1620 = vmatpush1.msra.mxu0 0.0
      %1621 = vmatprep.subr.mxu0 0.0
      %1622 = vmatpush1.msra.mxu0 0.0
      %1623 = vmatprep.subr.mxu0 0.0
      %1624 = vmatpush1.msra.mxu0 0.0
      %1625 = vmatprep.subr.mxu0 0.0
      %v1626 = vand.u32 %v258, 4294901760
      %1627 = vmatpush1.msra.mxu0 %v1626
      %1628 = vmatprep.subr.mxu0 0.0
      %v1629 = vand.u32 %v257, 4294901760
      %1630 = vmatpush1.msra.mxu0 %v1629
      %1631 = vmatprep.subr.mxu0 0.0
      %1632 = vmatpush2.msra.mxu0 0.0
      %1633 = vmatprep.subr.mxu0 0.0
      %1634 = vmatpush2.msra.mxu0 0.0
      %1635 = vmatprep.subr.mxu0 0.0
      %1636 = vmatpush2.msra.mxu0 0.0
      %1637 = vmatprep.subr.mxu0 0.0
      %1638 = vmatpush2.msra.mxu0 0.0
      %1639 = vmatprep.subr.mxu0 0.0
      %1640 = vmatpush2.msra.mxu0 0.0
      %1641 = vmatprep.subr.mxu0 0.0
      %1642 = vmatpush2.msra.mxu0 0.0
      %1643 = vmatprep.subr.mxu0 0.0
      %1644 = vmatpush2.msra.mxu0 0.0
      %1645 = vmatprep.subr.mxu0 0.0
      %1646 = vmatpush2.msra.mxu0 0.0
      %1647 = vmatprep.subr.mxu0 0.0
      %1648 = vmatpush2.msra.mxu0 0.0
      %1649 = vmatprep.subr.mxu0 0.0
      %1650 = vmatpush2.msra.mxu0 0.0
      %1651 = vmatprep.subr.mxu0 0.0
      %1652 = vmatpush2.msra.mxu0 0.0
      %1653 = vmatprep.subr.mxu0 0.0
      %1654 = vmatpush2.msra.mxu0 0.0
      %1655 = vmatprep.subr.mxu0 0.0
      %1656 = vmatpush2.msra.mxu0 0.0
      %1657 = vmatprep.subr.mxu0 0.0
      %1658 = vmatpush2.msra.mxu0 0.0
      %1659 = vmatprep.subr.mxu0 0.0
      %1660 = vmatpush2.msra.mxu0 0.0
      %1661 = vmatprep.subr.mxu0 0.0
      %1662 = vmatpush2.msra.mxu0 0.0
      %1663 = vmatprep.mubr.f32.mxu0 0.0
      %v1664 = vand.u32 %v1335, 4294901760
      %v1665 = vsub.f32 %v1335, %v1664
      %v1666 = vand.u32 %v1665, 4294901760
      %1667 = vmatmul.mubr.f32.gmra.mxu0 %v1666
      %v1668 = vpop.f32.mrf.mxu0
      %v1669 = vadd.f32 %v1587, %v1668
      %v1670 = vpop.f32.mrf.mxu0
      %1671 = vmatprep.mubr.f32.mxu0 0.0
      %v1672 = vand.u32 %v1338, 4294901760
      %v1673 = vsub.f32 %v1338, %v1672
      %v1674 = vand.u32 %v1673, 4294901760
      %1675 = vmatmul.mubr.f32.gmra.mxu0 %v1674
      %v1676 = vpop.f32.mrf.mxu0
      %v1677 = vadd.f32 %v1594, %v1676
      %v1678 = vpop.f32.mrf.mxu0
      %1679 = vdwg.mxu0
      %1680 = vmatprep.subr.mxu0 0.0
      %1681 = vmatpush1.msra.mxu0 0.0
      %1682 = vmatprep.subr.mxu0 0.0
      %1683 = vmatpush1.msra.mxu0 0.0
      %1684 = vmatprep.subr.mxu0 0.0
      %1685 = vmatpush1.msra.mxu0 0.0
      %1686 = vmatprep.subr.mxu0 0.0
      %1687 = vmatpush1.msra.mxu0 0.0
      %1688 = vmatprep.subr.mxu0 0.0
      %1689 = vmatpush1.msra.mxu0 0.0
      %1690 = vmatprep.subr.mxu0 0.0
      %1691 = vmatpush1.msra.mxu0 0.0
      %1692 = vmatprep.subr.mxu0 0.0
      %1693 = vmatpush1.msra.mxu0 0.0
      %1694 = vmatprep.subr.mxu0 0.0
      %1695 = vmatpush1.msra.mxu0 0.0
      %1696 = vmatprep.subr.mxu0 0.0
      %1697 = vmatpush1.msra.mxu0 0.0
      %1698 = vmatprep.subr.mxu0 0.0
      %1699 = vmatpush1.msra.mxu0 0.0
      %1700 = vmatprep.subr.mxu0 0.0
      %1701 = vmatpush1.msra.mxu0 0.0
      %1702 = vmatprep.subr.mxu0 0.0
      %1703 = vmatpush1.msra.mxu0 0.0
      %1704 = vmatprep.subr.mxu0 0.0
      %1705 = vmatpush1.msra.mxu0 0.0
      %1706 = vmatprep.subr.mxu0 0.0
      %1707 = vmatpush1.msra.mxu0 0.0
      %1708 = vmatprep.subr.mxu0 0.0
      %v1709 = vand.u32 %v258, 4294901760
      %v1710 = vsub.f32 %v258, %v1709
      %v1711 = vand.u32 %v1710, 4294901760
      %1712 = vmatpush1.msra.mxu0 %v1711
      %1713 = vmatprep.subr.mxu0 0.0
      %v1714 = vand.u32 %v257, 4294901760
      %v1715 = vsub.f32 %v257, %v1714
      %v1716 = vand.u32 %v1715, 4294901760
      %1717 = vmatpush1.msra.mxu0 %v1716
      %1718 = vmatprep.subr.mxu0 0.0
      %1719 = vmatpush2.msra.mxu0 0.0
      %1720 = vmatprep.subr.mxu0 0.0
      %1721 = vmatpush2.msra.mxu0 0.0
      %1722 = vmatprep.subr.mxu0 0.0
      %1723 = vmatpush2.msra.mxu0 0.0
      %1724 = vmatprep.subr.mxu0 0.0
      %1725 = vmatpush2.msra.mxu0 0.0
      %1726 = vmatprep.subr.mxu0 0.0
      %1727 = vmatpush2.msra.mxu0 0.0
      %1728 = vmatprep.subr.mxu0 0.0
      %1729 = vmatpush2.msra.mxu0 0.0
      %1730 = vmatprep.subr.mxu0 0.0
      %1731 = vmatpush2.msra.mxu0 0.0
      %1732 = vmatprep.subr.mxu0 0.0
      %1733 = vmatpush2.msra.mxu0 0.0
      %1734 = vmatprep.subr.mxu0 0.0
      %1735 = vmatpush2.msra.mxu0 0.0
      %1736 = vmatprep.subr.mxu0 0.0
      %1737 = vmatpush2.msra.mxu0 0.0
      %1738 = vmatprep.subr.mxu0 0.0
      %1739 = vmatpush2.msra.mxu0 0.0
      %1740 = vmatprep.subr.mxu0 0.0
      %1741 = vmatpush2.msra.mxu0 0.0
      %1742 = vmatprep.subr.mxu0 0.0
      %1743 = vmatpush2.msra.mxu0 0.0
      %1744 = vmatprep.subr.mxu0 0.0
      %1745 = vmatpush2.msra.mxu0 0.0
      %1746 = vmatprep.subr.mxu0 0.0
      %1747 = vmatpush2.msra.mxu0 0.0
      %1748 = vmatprep.subr.mxu0 0.0
      %1749 = vmatpush2.msra.mxu0 0.0
      %1750 = vmatprep.mubr.f32.mxu0 0.0
      %v1751 = vand.u32 %v1335, 4294901760
      %1752 = vmatmul.mubr.f32.gmra.mxu0 %v1751
      %v1753 = vpop.f32.mrf.mxu0
      %v1754 = vadd.f32 %v1669, %v1753
      %v1755 = vpop.f32.mrf.mxu0
      %1756 = vmatprep.mubr.f32.mxu0 0.0
      %v1757 = vand.u32 %v1338, 4294901760
      %1758 = vmatmul.mubr.f32.gmra.mxu0 %v1757
      %v1759 = vpop.f32.mrf.mxu0
      %v1760 = vadd.f32 %v1677, %v1759
      %v1761 = vpop.f32.mrf.mxu0
      %1762 = vdwg.mxu0
      %1763 = vmatprep.subr.mxu0 0.0
      %1764 = vmatpush1.msra.mxu0 0.0
      %1765 = vmatprep.subr.mxu0 0.0
      %1766 = vmatpush1.msra.mxu0 0.0
      %1767 = vmatprep.subr.mxu0 0.0
      %1768 = vmatpush1.msra.mxu0 0.0
      %1769 = vmatprep.subr.mxu0 0.0
      %1770 = vmatpush1.msra.mxu0 0.0
      %1771 = vmatprep.subr.mxu0 0.0
      %1772 = vmatpush1.msra.mxu0 0.0
      %1773 = vmatprep.subr.mxu0 0.0
      %1774 = vmatpush1.msra.mxu0 0.0
      %1775 = vmatprep.subr.mxu0 0.0
      %1776 = vmatpush1.msra.mxu0 0.0
      %1777 = vmatprep.subr.mxu0 0.0
      %1778 = vmatpush1.msra.mxu0 0.0
      %1779 = vmatprep.subr.mxu0 0.0
      %1780 = vmatpush1.msra.mxu0 0.0
      %1781 = vmatprep.subr.mxu0 0.0
      %1782 = vmatpush1.msra.mxu0 0.0
      %1783 = vmatprep.subr.mxu0 0.0
      %1784 = vmatpush1.msra.mxu0 0.0
      %1785 = vmatprep.subr.mxu0 0.0
      %1786 = vmatpush1.msra.mxu0 0.0
      %1787 = vmatprep.subr.mxu0 0.0
      %1788 = vmatpush1.msra.mxu0 0.0
      %1789 = vmatprep.subr.mxu0 0.0
      %1790 = vmatpush1.msra.mxu0 0.0
      %1791 = vmatprep.subr.mxu0 0.0
      %v1792 = vand.u32 %v258, 4294901760
      %1793 = vmatpush1.msra.mxu0 %v1792
      %1794 = vmatprep.subr.mxu0 0.0
      %v1795 = vand.u32 %v257, 4294901760
      %1796 = vmatpush1.msra.mxu0 %v1795
      %1797 = vmatprep.subr.mxu0 0.0
      %1798 = vmatpush2.msra.mxu0 0.0
      %1799 = vmatprep.subr.mxu0 0.0
      %1800 = vmatpush2.msra.mxu0 0.0
      %1801 = vmatprep.subr.mxu0 0.0
      %1802 = vmatpush2.msra.mxu0 0.0
      %1803 = vmatprep.subr.mxu0 0.0
      %1804 = vmatpush2.msra.mxu0 0.0
      %1805 = vmatprep.subr.mxu0 0.0
      %1806 = vmatpush2.msra.mxu0 0.0
      %1807 = vmatprep.subr.mxu0 0.0
      %1808 = vmatpush2.msra.mxu0 0.0
      %1809 = vmatprep.subr.mxu0 0.0
      %1810 = vmatpush2.msra.mxu0 0.0
      %1811 = vmatprep.subr.mxu0 0.0
      %1812 = vmatpush2.msra.mxu0 0.0
      %1813 = vmatprep.subr.mxu0 0.0
      %1814 = vmatpush2.msra.mxu0 0.0
      %1815 = vmatprep.subr.mxu0 0.0
      %1816 = vmatpush2.msra.mxu0 0.0
      %1817 = vmatprep.subr.mxu0 0.0
      %1818 = vmatpush2.msra.mxu0 0.0
      %1819 = vmatprep.subr.mxu0 0.0
      %1820 = vmatpush2.msra.mxu0 0.0
      %1821 = vmatprep.subr.mxu0 0.0
      %1822 = vmatpush2.msra.mxu0 0.0
      %1823 = vmatprep.subr.mxu0 0.0
      %1824 = vmatpush2.msra.mxu0 0.0
      %1825 = vmatprep.subr.mxu0 0.0
      %1826 = vmatpush2.msra.mxu0 0.0
      %1827 = vmatprep.subr.mxu0 0.0
      %1828 = vmatpush2.msra.mxu0 0.0
      %1829 = vmatprep.mubr.f32.mxu0 0.0
      %v1830 = vand.u32 %v1335, 4294901760
      %1831 = vmatmul.mubr.f32.gmra.mxu0 %v1830
      %v1832 = vpop.f32.mrf.mxu0
      %v1833 = vadd.f32 %v1754, %v1832
      %v1834 = vpop.f32.mrf.mxu0
      %1835 = vmatprep.mubr.f32.mxu0 0.0
      %v1836 = vand.u32 %v1338, 4294901760
      %1837 = vmatmul.mubr.f32.gmra.mxu0 %v1836
      %v1838 = vpop.f32.mrf.mxu0
      %v1839 = vadd.f32 %v1760, %v1838
      %v1840 = vpop.f32.mrf.mxu0
      %1841 = vdwg.mxu0
      %v1843 = vsel %vm317, %v291, 0
      %v1846 = vsel %vm317, %v292, 0
      %1848 = vmatprep.subr.mxu0 0.0
      %1849 = vmatpush1.msra.mxu0 0.0
      %1850 = vmatprep.subr.mxu0 0.0
      %1851 = vmatpush1.msra.mxu0 0.0
      %1852 = vmatprep.subr.mxu0 0.0
      %1853 = vmatpush1.msra.mxu0 0.0
      %1854 = vmatprep.subr.mxu0 0.0
      %1855 = vmatpush1.msra.mxu0 0.0
      %1856 = vmatprep.subr.mxu0 0.0
      %1857 = vmatpush1.msra.mxu0 0.0
      %1858 = vmatprep.subr.mxu0 0.0
      %1859 = vmatpush1.msra.mxu0 0.0
      %1860 = vmatprep.subr.mxu0 0.0
      %1861 = vmatpush1.msra.mxu0 0.0
      %1862 = vmatprep.subr.mxu0 0.0
      %1863 = vmatpush1.msra.mxu0 0.0
      %1864 = vmatprep.subr.mxu0 0.0
      %1865 = vmatpush1.msra.mxu0 0.0
      %1866 = vmatprep.subr.mxu0 0.0
      %1867 = vmatpush1.msra.mxu0 0.0
      %1868 = vmatprep.subr.mxu0 0.0
      %1869 = vmatpush1.msra.mxu0 0.0
      %1870 = vmatprep.subr.mxu0 0.0
      %1871 = vmatpush1.msra.mxu0 0.0
      %1872 = vmatprep.subr.mxu0 0.0
      %1873 = vmatpush1.msra.mxu0 0.0
      %1874 = vmatprep.subr.mxu0 0.0
      %1875 = vmatpush1.msra.mxu0 0.0
      %1876 = vmatprep.subr.mxu0 0.0
      %v1877 = vand.u32 %v260, 4294901760
      %1878 = vmatpush1.msra.mxu0 %v1877
      %1879 = vmatprep.subr.mxu0 0.0
      %v1880 = vand.u32 %v259, 4294901760
      %1881 = vmatpush1.msra.mxu0 %v1880
      %1882 = vmatprep.subr.mxu0 0.0
      %1883 = vmatpush2.msra.mxu0 0.0
      %1884 = vmatprep.subr.mxu0 0.0
      %1885 = vmatpush2.msra.mxu0 0.0
      %1886 = vmatprep.subr.mxu0 0.0
      %1887 = vmatpush2.msra.mxu0 0.0
      %1888 = vmatprep.subr.mxu0 0.0
      %1889 = vmatpush2.msra.mxu0 0.0
      %1890 = vmatprep.subr.mxu0 0.0
      %1891 = vmatpush2.msra.mxu0 0.0
      %1892 = vmatprep.subr.mxu0 0.0
      %1893 = vmatpush2.msra.mxu0 0.0
      %1894 = vmatprep.subr.mxu0 0.0
      %1895 = vmatpush2.msra.mxu0 0.0
      %1896 = vmatprep.subr.mxu0 0.0
      %1897 = vmatpush2.msra.mxu0 0.0
      %1898 = vmatprep.subr.mxu0 0.0
      %1899 = vmatpush2.msra.mxu0 0.0
      %1900 = vmatprep.subr.mxu0 0.0
      %1901 = vmatpush2.msra.mxu0 0.0
      %1902 = vmatprep.subr.mxu0 0.0
      %1903 = vmatpush2.msra.mxu0 0.0
      %1904 = vmatprep.subr.mxu0 0.0
      %1905 = vmatpush2.msra.mxu0 0.0
      %1906 = vmatprep.subr.mxu0 0.0
      %1907 = vmatpush2.msra.mxu0 0.0
      %1908 = vmatprep.subr.mxu0 0.0
      %1909 = vmatpush2.msra.mxu0 0.0
      %1910 = vmatprep.subr.mxu0 0.0
      %1911 = vmatpush2.msra.mxu0 0.0
      %1912 = vmatprep.subr.mxu0 0.0
      %1913 = vmatpush2.msra.mxu0 0.0
      %1914 = vmatprep.mubr.f32.mxu0 0.0
      %v1915 = vand.u32 %v1843, 4294901760
      %v1916 = vsub.f32 %v1843, %v1915
      %v1917 = vand.u32 %v1916, 4294901760
      %v1918 = vsub.f32 %v1916, %v1917
      %v1919 = vand.u32 %v1918, 4294901760
      %1920 = vmatmul.mubr.f32.gmra.mxu0 %v1919
      %v1921 = vpop.f32.mrf.mxu0
      %v1922 = vadd.f32 0.0, %v1921
      %v1923 = vpop.f32.mrf.mxu0
      %1924 = vmatprep.mubr.f32.mxu0 0.0
      %v1925 = vand.u32 %v1846, 4294901760
      %v1926 = vsub.f32 %v1846, %v1925
      %v1927 = vand.u32 %v1926, 4294901760
      %v1928 = vsub.f32 %v1926, %v1927
      %v1929 = vand.u32 %v1928, 4294901760
      %1930 = vmatmul.mubr.f32.gmra.mxu0 %v1929
      %v1931 = vpop.f32.mrf.mxu0
      %v1932 = vadd.f32 0.0, %v1931
      %v1933 = vpop.f32.mrf.mxu0
      %1934 = vdwg.mxu0
      %1935 = vmatprep.subr.mxu0 0.0
      %1936 = vmatpush1.msra.mxu0 0.0
      %1937 = vmatprep.subr.mxu0 0.0
      %1938 = vmatpush1.msra.mxu0 0.0
      %1939 = vmatprep.subr.mxu0 0.0
      %1940 = vmatpush1.msra.mxu0 0.0
      %1941 = vmatprep.subr.mxu0 0.0
      %1942 = vmatpush1.msra.mxu0 0.0
      %1943 = vmatprep.subr.mxu0 0.0
      %1944 = vmatpush1.msra.mxu0 0.0
      %1945 = vmatprep.subr.mxu0 0.0
      %1946 = vmatpush1.msra.mxu0 0.0
      %1947 = vmatprep.subr.mxu0 0.0
      %1948 = vmatpush1.msra.mxu0 0.0
      %1949 = vmatprep.subr.mxu0 0.0
      %1950 = vmatpush1.msra.mxu0 0.0
      %1951 = vmatprep.subr.mxu0 0.0
      %1952 = vmatpush1.msra.mxu0 0.0
      %1953 = vmatprep.subr.mxu0 0.0
      %1954 = vmatpush1.msra.mxu0 0.0
      %1955 = vmatprep.subr.mxu0 0.0
      %1956 = vmatpush1.msra.mxu0 0.0
      %1957 = vmatprep.subr.mxu0 0.0
      %1958 = vmatpush1.msra.mxu0 0.0
      %1959 = vmatprep.subr.mxu0 0.0
      %1960 = vmatpush1.msra.mxu0 0.0
      %1961 = vmatprep.subr.mxu0 0.0
      %1962 = vmatpush1.msra.mxu0 0.0
      %1963 = vmatprep.subr.mxu0 0.0
      %v1964 = vand.u32 %v260, 4294901760
      %v1965 = vsub.f32 %v260, %v1964
      %v1966 = vand.u32 %v1965, 4294901760
      %v1967 = vsub.f32 %v1965, %v1966
      %v1968 = vand.u32 %v1967, 4294901760
      %1969 = vmatpush1.msra.mxu0 %v1968
      %1970 = vmatprep.subr.mxu0 0.0
      %v1971 = vand.u32 %v259, 4294901760
      %v1972 = vsub.f32 %v259, %v1971
      %v1973 = vand.u32 %v1972, 4294901760
      %v1974 = vsub.f32 %v1972, %v1973
      %v1975 = vand.u32 %v1974, 4294901760
      %1976 = vmatpush1.msra.mxu0 %v1975
      %1977 = vmatprep.subr.mxu0 0.0
      %1978 = vmatpush2.msra.mxu0 0.0
      %1979 = vmatprep.subr.mxu0 0.0
      %1980 = vmatpush2.msra.mxu0 0.0
      %1981 = vmatprep.subr.mxu0 0.0
      %1982 = vmatpush2.msra.mxu0 0.0
      %1983 = vmatprep.subr.mxu0 0.0
      %1984 = vmatpush2.msra.mxu0 0.0
      %1985 = vmatprep.subr.mxu0 0.0
      %1986 = vmatpush2.msra.mxu0 0.0
      %1987 = vmatprep.subr.mxu0 0.0
      %1988 = vmatpush2.msra.mxu0 0.0
      %1989 = vmatprep.subr.mxu0 0.0
      %1990 = vmatpush2.msra.mxu0 0.0
      %1991 = vmatprep.subr.mxu0 0.0
      %1992 = vmatpush2.msra.mxu0 0.0
      %1993 = vmatprep.subr.mxu0 0.0
      %1994 = vmatpush2.msra.mxu0 0.0
      %1995 = vmatprep.subr.mxu0 0.0
      %1996 = vmatpush2.msra.mxu0 0.0
      %1997 = vmatprep.subr.mxu0 0.0
      %1998 = vmatpush2.msra.mxu0 0.0
      %1999 = vmatprep.subr.mxu0 0.0
      %2000 = vmatpush2.msra.mxu0 0.0
      %2001 = vmatprep.subr.mxu0 0.0
      %2002 = vmatpush2.msra.mxu0 0.0
      %2003 = vmatprep.subr.mxu0 0.0
      %2004 = vmatpush2.msra.mxu0 0.0
      %2005 = vmatprep.subr.mxu0 0.0
      %2006 = vmatpush2.msra.mxu0 0.0
      %2007 = vmatprep.subr.mxu0 0.0
      %2008 = vmatpush2.msra.mxu0 0.0
      %2009 = vmatprep.mubr.f32.mxu0 0.0
      %v2010 = vand.u32 %v1843, 4294901760
      %2011 = vmatmul.mubr.f32.gmra.mxu0 %v2010
      %v2012 = vpop.f32.mrf.mxu0
      %v2013 = vadd.f32 %v1922, %v2012
      %v2014 = vpop.f32.mrf.mxu0
      %2015 = vmatprep.mubr.f32.mxu0 0.0
      %v2016 = vand.u32 %v1846, 4294901760
      %2017 = vmatmul.mubr.f32.gmra.mxu0 %v2016
      %v2018 = vpop.f32.mrf.mxu0
      %v2019 = vadd.f32 %v1932, %v2018
      %v2020 = vpop.f32.mrf.mxu0
      %2021 = vdwg.mxu0
      %2022 = vmatprep.subr.mxu0 0.0
      %2023 = vmatpush1.msra.mxu0 0.0
      %2024 = vmatprep.subr.mxu0 0.0
      %2025 = vmatpush1.msra.mxu0 0.0
      %2026 = vmatprep.subr.mxu0 0.0
      %2027 = vmatpush1.msra.mxu0 0.0
      %2028 = vmatprep.subr.mxu0 0.0
      %2029 = vmatpush1.msra.mxu0 0.0
      %2030 = vmatprep.subr.mxu0 0.0
      %2031 = vmatpush1.msra.mxu0 0.0
      %2032 = vmatprep.subr.mxu0 0.0
      %2033 = vmatpush1.msra.mxu0 0.0
      %2034 = vmatprep.subr.mxu0 0.0
      %2035 = vmatpush1.msra.mxu0 0.0
      %2036 = vmatprep.subr.mxu0 0.0
      %2037 = vmatpush1.msra.mxu0 0.0
      %2038 = vmatprep.subr.mxu0 0.0
      %2039 = vmatpush1.msra.mxu0 0.0
      %2040 = vmatprep.subr.mxu0 0.0
      %2041 = vmatpush1.msra.mxu0 0.0
      %2042 = vmatprep.subr.mxu0 0.0
      %2043 = vmatpush1.msra.mxu0 0.0
      %2044 = vmatprep.subr.mxu0 0.0
      %2045 = vmatpush1.msra.mxu0 0.0
      %2046 = vmatprep.subr.mxu0 0.0
      %2047 = vmatpush1.msra.mxu0 0.0
      %2048 = vmatprep.subr.mxu0 0.0
      %2049 = vmatpush1.msra.mxu0 0.0
      %2050 = vmatprep.subr.mxu0 0.0
      %v2051 = vand.u32 %v260, 4294901760
      %v2052 = vsub.f32 %v260, %v2051
      %2053 = vmatpush1.msra.mxu0 %v2052
      %2054 = vmatprep.subr.mxu0 0.0
      %v2055 = vand.u32 %v259, 4294901760
      %v2056 = vsub.f32 %v259, %v2055
      %2057 = vmatpush1.msra.mxu0 %v2056
      %2058 = vmatprep.subr.mxu0 0.0
      %2059 = vmatpush2.msra.mxu0 0.0
      %2060 = vmatprep.subr.mxu0 0.0
      %2061 = vmatpush2.msra.mxu0 0.0
      %2062 = vmatprep.subr.mxu0 0.0
      %2063 = vmatpush2.msra.mxu0 0.0
      %2064 = vmatprep.subr.mxu0 0.0
      %2065 = vmatpush2.msra.mxu0 0.0
      %2066 = vmatprep.subr.mxu0 0.0
      %2067 = vmatpush2.msra.mxu0 0.0
      %2068 = vmatprep.subr.mxu0 0.0
      %2069 = vmatpush2.msra.mxu0 0.0
      %2070 = vmatprep.subr.mxu0 0.0
      %2071 = vmatpush2.msra.mxu0 0.0
      %2072 = vmatprep.subr.mxu0 0.0
      %2073 = vmatpush2.msra.mxu0 0.0
      %2074 = vmatprep.subr.mxu0 0.0
      %2075 = vmatpush2.msra.mxu0 0.0
      %2076 = vmatprep.subr.mxu0 0.0
      %2077 = vmatpush2.msra.mxu0 0.0
      %2078 = vmatprep.subr.mxu0 0.0
      %2079 = vmatpush2.msra.mxu0 0.0
      %2080 = vmatprep.subr.mxu0 0.0
      %2081 = vmatpush2.msra.mxu0 0.0
      %2082 = vmatprep.subr.mxu0 0.0
      %2083 = vmatpush2.msra.mxu0 0.0
      %2084 = vmatprep.subr.mxu0 0.0
      %2085 = vmatpush2.msra.mxu0 0.0
      %2086 = vmatprep.subr.mxu0 0.0
      %2087 = vmatpush2.msra.mxu0 0.0
      %2088 = vmatprep.subr.mxu0 0.0
      %2089 = vmatpush2.msra.mxu0 0.0
      %2090 = vmatprep.mubr.f32.mxu0 0.0
      %v2091 = vand.u32 %v1843, 4294901760
      %v2092 = vsub.f32 %v1843, %v2091
      %2093 = vmatmul.mubr.f32.gmra.mxu0 %v2092
      %v2094 = vpop.f32.mrf.mxu0
      %v2095 = vadd.f32 %v2013, %v2094
      %v2096 = vpop.f32.mrf.mxu0
      %2097 = vmatprep.mubr.f32.mxu0 0.0
      %v2098 = vand.u32 %v1846, 4294901760
      %v2099 = vsub.f32 %v1846, %v2098
      %2100 = vmatmul.mubr.f32.gmra.mxu0 %v2099
      %v2101 = vpop.f32.mrf.mxu0
      %v2102 = vadd.f32 %v2019, %v2101
      %v2103 = vpop.f32.mrf.mxu0
      %2104 = vdwg.mxu0
      %2105 = vmatprep.subr.mxu0 0.0
      %2106 = vmatpush1.msra.mxu0 0.0
      %2107 = vmatprep.subr.mxu0 0.0
      %2108 = vmatpush1.msra.mxu0 0.0
      %2109 = vmatprep.subr.mxu0 0.0
      %2110 = vmatpush1.msra.mxu0 0.0
      %2111 = vmatprep.subr.mxu0 0.0
      %2112 = vmatpush1.msra.mxu0 0.0
      %2113 = vmatprep.subr.mxu0 0.0
      %2114 = vmatpush1.msra.mxu0 0.0
      %2115 = vmatprep.subr.mxu0 0.0
      %2116 = vmatpush1.msra.mxu0 0.0
      %2117 = vmatprep.subr.mxu0 0.0
      %2118 = vmatpush1.msra.mxu0 0.0
      %2119 = vmatprep.subr.mxu0 0.0
      %2120 = vmatpush1.msra.mxu0 0.0
      %2121 = vmatprep.subr.mxu0 0.0
      %2122 = vmatpush1.msra.mxu0 0.0
      %2123 = vmatprep.subr.mxu0 0.0
      %2124 = vmatpush1.msra.mxu0 0.0
      %2125 = vmatprep.subr.mxu0 0.0
      %2126 = vmatpush1.msra.mxu0 0.0
      %2127 = vmatprep.subr.mxu0 0.0
      %2128 = vmatpush1.msra.mxu0 0.0
      %2129 = vmatprep.subr.mxu0 0.0
      %2130 = vmatpush1.msra.mxu0 0.0
      %2131 = vmatprep.subr.mxu0 0.0
      %2132 = vmatpush1.msra.mxu0 0.0
      %2133 = vmatprep.subr.mxu0 0.0
      %v2134 = vand.u32 %v260, 4294901760
      %2135 = vmatpush1.msra.mxu0 %v2134
      %2136 = vmatprep.subr.mxu0 0.0
      %v2137 = vand.u32 %v259, 4294901760
      %2138 = vmatpush1.msra.mxu0 %v2137
      %2139 = vmatprep.subr.mxu0 0.0
      %2140 = vmatpush2.msra.mxu0 0.0
      %2141 = vmatprep.subr.mxu0 0.0
      %2142 = vmatpush2.msra.mxu0 0.0
      %2143 = vmatprep.subr.mxu0 0.0
      %2144 = vmatpush2.msra.mxu0 0.0
      %2145 = vmatprep.subr.mxu0 0.0
      %2146 = vmatpush2.msra.mxu0 0.0
      %2147 = vmatprep.subr.mxu0 0.0
      %2148 = vmatpush2.msra.mxu0 0.0
      %2149 = vmatprep.subr.mxu0 0.0
      %2150 = vmatpush2.msra.mxu0 0.0
      %2151 = vmatprep.subr.mxu0 0.0
      %2152 = vmatpush2.msra.mxu0 0.0
      %2153 = vmatprep.subr.mxu0 0.0
      %2154 = vmatpush2.msra.mxu0 0.0
      %2155 = vmatprep.subr.mxu0 0.0
      %2156 = vmatpush2.msra.mxu0 0.0
      %2157 = vmatprep.subr.mxu0 0.0
      %2158 = vmatpush2.msra.mxu0 0.0
      %2159 = vmatprep.subr.mxu0 0.0
      %2160 = vmatpush2.msra.mxu0 0.0
      %2161 = vmatprep.subr.mxu0 0.0
      %2162 = vmatpush2.msra.mxu0 0.0
      %2163 = vmatprep.subr.mxu0 0.0
      %2164 = vmatpush2.msra.mxu0 0.0
      %2165 = vmatprep.subr.mxu0 0.0
      %2166 = vmatpush2.msra.mxu0 0.0
      %2167 = vmatprep.subr.mxu0 0.0
      %2168 = vmatpush2.msra.mxu0 0.0
      %2169 = vmatprep.subr.mxu0 0.0
      %2170 = vmatpush2.msra.mxu0 0.0
      %2171 = vmatprep.mubr.f32.mxu0 0.0
      %v2172 = vand.u32 %v1843, 4294901760
      %v2173 = vsub.f32 %v1843, %v2172
      %v2174 = vand.u32 %v2173, 4294901760
      %2175 = vmatmul.mubr.f32.gmra.mxu0 %v2174
      %v2176 = vpop.f32.mrf.mxu0
      %v2177 = vadd.f32 %v2095, %v2176
      %v2178 = vpop.f32.mrf.mxu0
      %2179 = vmatprep.mubr.f32.mxu0 0.0
      %v2180 = vand.u32 %v1846, 4294901760
      %v2181 = vsub.f32 %v1846, %v2180
      %v2182 = vand.u32 %v2181, 4294901760
      %2183 = vmatmul.mubr.f32.gmra.mxu0 %v2182
      %v2184 = vpop.f32.mrf.mxu0
      %v2185 = vadd.f32 %v2102, %v2184
      %v2186 = vpop.f32.mrf.mxu0
      %2187 = vdwg.mxu0
      %2188 = vmatprep.subr.mxu0 0.0
      %2189 = vmatpush1.msra.mxu0 0.0
      %2190 = vmatprep.subr.mxu0 0.0
      %2191 = vmatpush1.msra.mxu0 0.0
      %2192 = vmatprep.subr.mxu0 0.0
      %2193 = vmatpush1.msra.mxu0 0.0
      %2194 = vmatprep.subr.mxu0 0.0
      %2195 = vmatpush1.msra.mxu0 0.0
      %2196 = vmatprep.subr.mxu0 0.0
      %2197 = vmatpush1.msra.mxu0 0.0
      %2198 = vmatprep.subr.mxu0 0.0
      %2199 = vmatpush1.msra.mxu0 0.0
      %2200 = vmatprep.subr.mxu0 0.0
      %2201 = vmatpush1.msra.mxu0 0.0
      %2202 = vmatprep.subr.mxu0 0.0
      %2203 = vmatpush1.msra.mxu0 0.0
      %2204 = vmatprep.subr.mxu0 0.0
      %2205 = vmatpush1.msra.mxu0 0.0
      %2206 = vmatprep.subr.mxu0 0.0
      %2207 = vmatpush1.msra.mxu0 0.0
      %2208 = vmatprep.subr.mxu0 0.0
      %2209 = vmatpush1.msra.mxu0 0.0
      %2210 = vmatprep.subr.mxu0 0.0
      %2211 = vmatpush1.msra.mxu0 0.0
      %2212 = vmatprep.subr.mxu0 0.0
      %2213 = vmatpush1.msra.mxu0 0.0
      %2214 = vmatprep.subr.mxu0 0.0
      %2215 = vmatpush1.msra.mxu0 0.0
      %2216 = vmatprep.subr.mxu0 0.0
      %v2217 = vand.u32 %v260, 4294901760
      %v2218 = vsub.f32 %v260, %v2217
      %v2219 = vand.u32 %v2218, 4294901760
      %2220 = vmatpush1.msra.mxu0 %v2219
      %2221 = vmatprep.subr.mxu0 0.0
      %v2222 = vand.u32 %v259, 4294901760
      %v2223 = vsub.f32 %v259, %v2222
      %v2224 = vand.u32 %v2223, 4294901760
      %2225 = vmatpush1.msra.mxu0 %v2224
      %2226 = vmatprep.subr.mxu0 0.0
      %2227 = vmatpush2.msra.mxu0 0.0
      %2228 = vmatprep.subr.mxu0 0.0
      %2229 = vmatpush2.msra.mxu0 0.0
      %2230 = vmatprep.subr.mxu0 0.0
      %2231 = vmatpush2.msra.mxu0 0.0
      %2232 = vmatprep.subr.mxu0 0.0
      %2233 = vmatpush2.msra.mxu0 0.0
      %2234 = vmatprep.subr.mxu0 0.0
      %2235 = vmatpush2.msra.mxu0 0.0
      %2236 = vmatprep.subr.mxu0 0.0
      %2237 = vmatpush2.msra.mxu0 0.0
      %2238 = vmatprep.subr.mxu0 0.0
      %2239 = vmatpush2.msra.mxu0 0.0
      %2240 = vmatprep.subr.mxu0 0.0
      %2241 = vmatpush2.msra.mxu0 0.0
      %2242 = vmatprep.subr.mxu0 0.0
      %2243 = vmatpush2.msra.mxu0 0.0
      %2244 = vmatprep.subr.mxu0 0.0
      %2245 = vmatpush2.msra.mxu0 0.0
      %2246 = vmatprep.subr.mxu0 0.0
      %2247 = vmatpush2.msra.mxu0 0.0
      %2248 = vmatprep.subr.mxu0 0.0
      %2249 = vmatpush2.msra.mxu0 0.0
      %2250 = vmatprep.subr.mxu0 0.0
      %2251 = vmatpush2.msra.mxu0 0.0
      %2252 = vmatprep.subr.mxu0 0.0
      %2253 = vmatpush2.msra.mxu0 0.0
      %2254 = vmatprep.subr.mxu0 0.0
      %2255 = vmatpush2.msra.mxu0 0.0
      %2256 = vmatprep.subr.mxu0 0.0
      %2257 = vmatpush2.msra.mxu0 0.0
      %2258 = vmatprep.mubr.f32.mxu0 0.0
      %v2259 = vand.u32 %v1843, 4294901760
      %2260 = vmatmul.mubr.f32.gmra.mxu0 %v2259
      %v2261 = vpop.f32.mrf.mxu0
      %v2262 = vadd.f32 %v2177, %v2261
      %v2263 = vpop.f32.mrf.mxu0
      %2264 = vmatprep.mubr.f32.mxu0 0.0
      %v2265 = vand.u32 %v1846, 4294901760
      %2266 = vmatmul.mubr.f32.gmra.mxu0 %v2265
      %v2267 = vpop.f32.mrf.mxu0
      %v2268 = vadd.f32 %v2185, %v2267
      %v2269 = vpop.f32.mrf.mxu0
      %2270 = vdwg.mxu0
      %2271 = vmatprep.subr.mxu0 0.0
      %2272 = vmatpush1.msra.mxu0 0.0
      %2273 = vmatprep.subr.mxu0 0.0
      %2274 = vmatpush1.msra.mxu0 0.0
      %2275 = vmatprep.subr.mxu0 0.0
      %2276 = vmatpush1.msra.mxu0 0.0
      %2277 = vmatprep.subr.mxu0 0.0
      %2278 = vmatpush1.msra.mxu0 0.0
      %2279 = vmatprep.subr.mxu0 0.0
      %2280 = vmatpush1.msra.mxu0 0.0
      %2281 = vmatprep.subr.mxu0 0.0
      %2282 = vmatpush1.msra.mxu0 0.0
      %2283 = vmatprep.subr.mxu0 0.0
      %2284 = vmatpush1.msra.mxu0 0.0
      %2285 = vmatprep.subr.mxu0 0.0
      %2286 = vmatpush1.msra.mxu0 0.0
      %2287 = vmatprep.subr.mxu0 0.0
      %2288 = vmatpush1.msra.mxu0 0.0
      %2289 = vmatprep.subr.mxu0 0.0
      %2290 = vmatpush1.msra.mxu0 0.0
      %2291 = vmatprep.subr.mxu0 0.0
      %2292 = vmatpush1.msra.mxu0 0.0
      %2293 = vmatprep.subr.mxu0 0.0
      %2294 = vmatpush1.msra.mxu0 0.0
      %2295 = vmatprep.subr.mxu0 0.0
      %2296 = vmatpush1.msra.mxu0 0.0
      %2297 = vmatprep.subr.mxu0 0.0
      %2298 = vmatpush1.msra.mxu0 0.0
      %2299 = vmatprep.subr.mxu0 0.0
      %v2300 = vand.u32 %v260, 4294901760
      %2301 = vmatpush1.msra.mxu0 %v2300
      %2302 = vmatprep.subr.mxu0 0.0
      %v2303 = vand.u32 %v259, 4294901760
      %2304 = vmatpush1.msra.mxu0 %v2303
      %2305 = vmatprep.subr.mxu0 0.0
      %2306 = vmatpush2.msra.mxu0 0.0
      %2307 = vmatprep.subr.mxu0 0.0
      %2308 = vmatpush2.msra.mxu0 0.0
      %2309 = vmatprep.subr.mxu0 0.0
      %2310 = vmatpush2.msra.mxu0 0.0
      %2311 = vmatprep.subr.mxu0 0.0
      %2312 = vmatpush2.msra.mxu0 0.0
      %2313 = vmatprep.subr.mxu0 0.0
      %2314 = vmatpush2.msra.mxu0 0.0
      %2315 = vmatprep.subr.mxu0 0.0
      %2316 = vmatpush2.msra.mxu0 0.0
      %2317 = vmatprep.subr.mxu0 0.0
      %2318 = vmatpush2.msra.mxu0 0.0
      %2319 = vmatprep.subr.mxu0 0.0
      %2320 = vmatpush2.msra.mxu0 0.0
      %2321 = vmatprep.subr.mxu0 0.0
      %2322 = vmatpush2.msra.mxu0 0.0
      %2323 = vmatprep.subr.mxu0 0.0
      %2324 = vmatpush2.msra.mxu0 0.0
      %2325 = vmatprep.subr.mxu0 0.0
      %2326 = vmatpush2.msra.mxu0 0.0
      %2327 = vmatprep.subr.mxu0 0.0
      %2328 = vmatpush2.msra.mxu0 0.0
      %2329 = vmatprep.subr.mxu0 0.0
      %2330 = vmatpush2.msra.mxu0 0.0
      %2331 = vmatprep.subr.mxu0 0.0
      %2332 = vmatpush2.msra.mxu0 0.0
      %2333 = vmatprep.subr.mxu0 0.0
      %2334 = vmatpush2.msra.mxu0 0.0
      %2335 = vmatprep.subr.mxu0 0.0
      %2336 = vmatpush2.msra.mxu0 0.0
      %2337 = vmatprep.mubr.f32.mxu0 0.0
      %v2338 = vand.u32 %v1843, 4294901760
      %2339 = vmatmul.mubr.f32.gmra.mxu0 %v2338
      %v2340 = vpop.f32.mrf.mxu0
      %v2341 = vadd.f32 %v2262, %v2340
      %v2342 = vpop.f32.mrf.mxu0
      %2343 = vmatprep.mubr.f32.mxu0 0.0
      %v2344 = vand.u32 %v1846, 4294901760
      %2345 = vmatmul.mubr.f32.gmra.mxu0 %v2344
      %v2346 = vpop.f32.mrf.mxu0
      %v2347 = vadd.f32 %v2268, %v2346
      %v2348 = vpop.f32.mrf.mxu0
      %2349 = vdwg.mxu0
      %v2351 = vsel %vm317, %v293, 0
      %v2354 = vsel %vm317, %v294, 0
      %2356 = vmatprep.subr.mxu0 0.0
      %2357 = vmatpush1.msra.mxu0 0.0
      %2358 = vmatprep.subr.mxu0 0.0
      %2359 = vmatpush1.msra.mxu0 0.0
      %2360 = vmatprep.subr.mxu0 0.0
      %2361 = vmatpush1.msra.mxu0 0.0
      %2362 = vmatprep.subr.mxu0 0.0
      %2363 = vmatpush1.msra.mxu0 0.0
      %2364 = vmatprep.subr.mxu0 0.0
      %2365 = vmatpush1.msra.mxu0 0.0
      %2366 = vmatprep.subr.mxu0 0.0
      %2367 = vmatpush1.msra.mxu0 0.0
      %2368 = vmatprep.subr.mxu0 0.0
      %2369 = vmatpush1.msra.mxu0 0.0
      %2370 = vmatprep.subr.mxu0 0.0
      %2371 = vmatpush1.msra.mxu0 0.0
      %2372 = vmatprep.subr.mxu0 0.0
      %2373 = vmatpush1.msra.mxu0 0.0
      %2374 = vmatprep.subr.mxu0 0.0
      %2375 = vmatpush1.msra.mxu0 0.0
      %2376 = vmatprep.subr.mxu0 0.0
      %2377 = vmatpush1.msra.mxu0 0.0
      %2378 = vmatprep.subr.mxu0 0.0
      %2379 = vmatpush1.msra.mxu0 0.0
      %2380 = vmatprep.subr.mxu0 0.0
      %2381 = vmatpush1.msra.mxu0 0.0
      %2382 = vmatprep.subr.mxu0 0.0
      %2383 = vmatpush1.msra.mxu0 0.0
      %2384 = vmatprep.subr.mxu0 0.0
      %v2385 = vand.u32 %v262, 4294901760
      %2386 = vmatpush1.msra.mxu0 %v2385
      %2387 = vmatprep.subr.mxu0 0.0
      %v2388 = vand.u32 %v261, 4294901760
      %2389 = vmatpush1.msra.mxu0 %v2388
      %2390 = vmatprep.subr.mxu0 0.0
      %2391 = vmatpush2.msra.mxu0 0.0
      %2392 = vmatprep.subr.mxu0 0.0
      %2393 = vmatpush2.msra.mxu0 0.0
      %2394 = vmatprep.subr.mxu0 0.0
      %2395 = vmatpush2.msra.mxu0 0.0
      %2396 = vmatprep.subr.mxu0 0.0
      %2397 = vmatpush2.msra.mxu0 0.0
      %2398 = vmatprep.subr.mxu0 0.0
      %2399 = vmatpush2.msra.mxu0 0.0
      %2400 = vmatprep.subr.mxu0 0.0
      %2401 = vmatpush2.msra.mxu0 0.0
      %2402 = vmatprep.subr.mxu0 0.0
      %2403 = vmatpush2.msra.mxu0 0.0
      %2404 = vmatprep.subr.mxu0 0.0
      %2405 = vmatpush2.msra.mxu0 0.0
      %2406 = vmatprep.subr.mxu0 0.0
      %2407 = vmatpush2.msra.mxu0 0.0
      %2408 = vmatprep.subr.mxu0 0.0
      %2409 = vmatpush2.msra.mxu0 0.0
      %2410 = vmatprep.subr.mxu0 0.0
      %2411 = vmatpush2.msra.mxu0 0.0
      %2412 = vmatprep.subr.mxu0 0.0
      %2413 = vmatpush2.msra.mxu0 0.0
      %2414 = vmatprep.subr.mxu0 0.0
      %2415 = vmatpush2.msra.mxu0 0.0
      %2416 = vmatprep.subr.mxu0 0.0
      %2417 = vmatpush2.msra.mxu0 0.0
      %2418 = vmatprep.subr.mxu0 0.0
      %2419 = vmatpush2.msra.mxu0 0.0
      %2420 = vmatprep.subr.mxu0 0.0
      %2421 = vmatpush2.msra.mxu0 0.0
      %2422 = vmatprep.mubr.f32.mxu0 0.0
      %v2423 = vand.u32 %v2351, 4294901760
      %v2424 = vsub.f32 %v2351, %v2423
      %v2425 = vand.u32 %v2424, 4294901760
      %v2426 = vsub.f32 %v2424, %v2425
      %v2427 = vand.u32 %v2426, 4294901760
      %2428 = vmatmul.mubr.f32.gmra.mxu0 %v2427
      %v2429 = vpop.f32.mrf.mxu0
      %v2430 = vadd.f32 0.0, %v2429
      %v2431 = vpop.f32.mrf.mxu0
      %2432 = vmatprep.mubr.f32.mxu0 0.0
      %v2433 = vand.u32 %v2354, 4294901760
      %v2434 = vsub.f32 %v2354, %v2433
      %v2435 = vand.u32 %v2434, 4294901760
      %v2436 = vsub.f32 %v2434, %v2435
      %v2437 = vand.u32 %v2436, 4294901760
      %2438 = vmatmul.mubr.f32.gmra.mxu0 %v2437
      %v2439 = vpop.f32.mrf.mxu0
      %v2440 = vadd.f32 0.0, %v2439
      %v2441 = vpop.f32.mrf.mxu0
      %2442 = vdwg.mxu0
      %2443 = vmatprep.subr.mxu0 0.0
      %2444 = vmatpush1.msra.mxu0 0.0
      %2445 = vmatprep.subr.mxu0 0.0
      %2446 = vmatpush1.msra.mxu0 0.0
      %2447 = vmatprep.subr.mxu0 0.0
      %2448 = vmatpush1.msra.mxu0 0.0
      %2449 = vmatprep.subr.mxu0 0.0
      %2450 = vmatpush1.msra.mxu0 0.0
      %2451 = vmatprep.subr.mxu0 0.0
      %2452 = vmatpush1.msra.mxu0 0.0
      %2453 = vmatprep.subr.mxu0 0.0
      %2454 = vmatpush1.msra.mxu0 0.0
      %2455 = vmatprep.subr.mxu0 0.0
      %2456 = vmatpush1.msra.mxu0 0.0
      %2457 = vmatprep.subr.mxu0 0.0
      %2458 = vmatpush1.msra.mxu0 0.0
      %2459 = vmatprep.subr.mxu0 0.0
      %2460 = vmatpush1.msra.mxu0 0.0
      %2461 = vmatprep.subr.mxu0 0.0
      %2462 = vmatpush1.msra.mxu0 0.0
      %2463 = vmatprep.subr.mxu0 0.0
      %2464 = vmatpush1.msra.mxu0 0.0
      %2465 = vmatprep.subr.mxu0 0.0
      %2466 = vmatpush1.msra.mxu0 0.0
      %2467 = vmatprep.subr.mxu0 0.0
      %2468 = vmatpush1.msra.mxu0 0.0
      %2469 = vmatprep.subr.mxu0 0.0
      %2470 = vmatpush1.msra.mxu0 0.0
      %2471 = vmatprep.subr.mxu0 0.0
      %v2472 = vand.u32 %v262, 4294901760
      %v2473 = vsub.f32 %v262, %v2472
      %v2474 = vand.u32 %v2473, 4294901760
      %v2475 = vsub.f32 %v2473, %v2474
      %v2476 = vand.u32 %v2475, 4294901760
      %2477 = vmatpush1.msra.mxu0 %v2476
      %2478 = vmatprep.subr.mxu0 0.0
      %v2479 = vand.u32 %v261, 4294901760
      %v2480 = vsub.f32 %v261, %v2479
      %v2481 = vand.u32 %v2480, 4294901760
      %v2482 = vsub.f32 %v2480, %v2481
      %v2483 = vand.u32 %v2482, 4294901760
      %2484 = vmatpush1.msra.mxu0 %v2483
      %2485 = vmatprep.subr.mxu0 0.0
      %2486 = vmatpush2.msra.mxu0 0.0
      %2487 = vmatprep.subr.mxu0 0.0
      %2488 = vmatpush2.msra.mxu0 0.0
      %2489 = vmatprep.subr.mxu0 0.0
      %2490 = vmatpush2.msra.mxu0 0.0
      %2491 = vmatprep.subr.mxu0 0.0
      %2492 = vmatpush2.msra.mxu0 0.0
      %2493 = vmatprep.subr.mxu0 0.0
      %2494 = vmatpush2.msra.mxu0 0.0
      %2495 = vmatprep.subr.mxu0 0.0
      %2496 = vmatpush2.msra.mxu0 0.0
      %2497 = vmatprep.subr.mxu0 0.0
      %2498 = vmatpush2.msra.mxu0 0.0
      %2499 = vmatprep.subr.mxu0 0.0
      %2500 = vmatpush2.msra.mxu0 0.0
      %2501 = vmatprep.subr.mxu0 0.0
      %2502 = vmatpush2.msra.mxu0 0.0
      %2503 = vmatprep.subr.mxu0 0.0
      %2504 = vmatpush2.msra.mxu0 0.0
      %2505 = vmatprep.subr.mxu0 0.0
      %2506 = vmatpush2.msra.mxu0 0.0
      %2507 = vmatprep.subr.mxu0 0.0
      %2508 = vmatpush2.msra.mxu0 0.0
      %2509 = vmatprep.subr.mxu0 0.0
      %2510 = vmatpush2.msra.mxu0 0.0
      %2511 = vmatprep.subr.mxu0 0.0
      %2512 = vmatpush2.msra.mxu0 0.0
      %2513 = vmatprep.subr.mxu0 0.0
      %2514 = vmatpush2.msra.mxu0 0.0
      %2515 = vmatprep.subr.mxu0 0.0
      %2516 = vmatpush2.msra.mxu0 0.0
      %2517 = vmatprep.mubr.f32.mxu0 0.0
      %v2518 = vand.u32 %v2351, 4294901760
      %2519 = vmatmul.mubr.f32.gmra.mxu0 %v2518
      %v2520 = vpop.f32.mrf.mxu0
      %v2521 = vadd.f32 %v2430, %v2520
      %v2522 = vpop.f32.mrf.mxu0
      %2523 = vmatprep.mubr.f32.mxu0 0.0
      %v2524 = vand.u32 %v2354, 4294901760
      %2525 = vmatmul.mubr.f32.gmra.mxu0 %v2524
      %v2526 = vpop.f32.mrf.mxu0
      %v2527 = vadd.f32 %v2440, %v2526
      %v2528 = vpop.f32.mrf.mxu0
      %2529 = vdwg.mxu0
      %2530 = vmatprep.subr.mxu0 0.0
      %2531 = vmatpush1.msra.mxu0 0.0
      %2532 = vmatprep.subr.mxu0 0.0
      %2533 = vmatpush1.msra.mxu0 0.0
      %2534 = vmatprep.subr.mxu0 0.0
      %2535 = vmatpush1.msra.mxu0 0.0
      %2536 = vmatprep.subr.mxu0 0.0
      %2537 = vmatpush1.msra.mxu0 0.0
      %2538 = vmatprep.subr.mxu0 0.0
      %2539 = vmatpush1.msra.mxu0 0.0
      %2540 = vmatprep.subr.mxu0 0.0
      %2541 = vmatpush1.msra.mxu0 0.0
      %2542 = vmatprep.subr.mxu0 0.0
      %2543 = vmatpush1.msra.mxu0 0.0
      %2544 = vmatprep.subr.mxu0 0.0
      %2545 = vmatpush1.msra.mxu0 0.0
      %2546 = vmatprep.subr.mxu0 0.0
      %2547 = vmatpush1.msra.mxu0 0.0
      %2548 = vmatprep.subr.mxu0 0.0
      %2549 = vmatpush1.msra.mxu0 0.0
      %2550 = vmatprep.subr.mxu0 0.0
      %2551 = vmatpush1.msra.mxu0 0.0
      %2552 = vmatprep.subr.mxu0 0.0
      %2553 = vmatpush1.msra.mxu0 0.0
      %2554 = vmatprep.subr.mxu0 0.0
      %2555 = vmatpush1.msra.mxu0 0.0
      %2556 = vmatprep.subr.mxu0 0.0
      %2557 = vmatpush1.msra.mxu0 0.0
      %2558 = vmatprep.subr.mxu0 0.0
      %v2559 = vand.u32 %v262, 4294901760
      %v2560 = vsub.f32 %v262, %v2559
      %2561 = vmatpush1.msra.mxu0 %v2560
      %2562 = vmatprep.subr.mxu0 0.0
      %v2563 = vand.u32 %v261, 4294901760
      %v2564 = vsub.f32 %v261, %v2563
      %2565 = vmatpush1.msra.mxu0 %v2564
      %2566 = vmatprep.subr.mxu0 0.0
      %2567 = vmatpush2.msra.mxu0 0.0
      %2568 = vmatprep.subr.mxu0 0.0
      %2569 = vmatpush2.msra.mxu0 0.0
      %2570 = vmatprep.subr.mxu0 0.0
      %2571 = vmatpush2.msra.mxu0 0.0
      %2572 = vmatprep.subr.mxu0 0.0
      %2573 = vmatpush2.msra.mxu0 0.0
      %2574 = vmatprep.subr.mxu0 0.0
      %2575 = vmatpush2.msra.mxu0 0.0
      %2576 = vmatprep.subr.mxu0 0.0
      %2577 = vmatpush2.msra.mxu0 0.0
      %2578 = vmatprep.subr.mxu0 0.0
      %2579 = vmatpush2.msra.mxu0 0.0
      %2580 = vmatprep.subr.mxu0 0.0
      %2581 = vmatpush2.msra.mxu0 0.0
      %2582 = vmatprep.subr.mxu0 0.0
      %2583 = vmatpush2.msra.mxu0 0.0
      %2584 = vmatprep.subr.mxu0 0.0
      %2585 = vmatpush2.msra.mxu0 0.0
      %2586 = vmatprep.subr.mxu0 0.0
      %2587 = vmatpush2.msra.mxu0 0.0
      %2588 = vmatprep.subr.mxu0 0.0
      %2589 = vmatpush2.msra.mxu0 0.0
      %2590 = vmatprep.subr.mxu0 0.0
      %2591 = vmatpush2.msra.mxu0 0.0
      %2592 = vmatprep.subr.mxu0 0.0
      %2593 = vmatpush2.msra.mxu0 0.0
      %2594 = vmatprep.subr.mxu0 0.0
      %2595 = vmatpush2.msra.mxu0 0.0
      %2596 = vmatprep.subr.mxu0 0.0
      %2597 = vmatpush2.msra.mxu0 0.0
      %2598 = vmatprep.mubr.f32.mxu0 0.0
      %v2599 = vand.u32 %v2351, 4294901760
      %v2600 = vsub.f32 %v2351, %v2599
      %2601 = vmatmul.mubr.f32.gmra.mxu0 %v2600
      %v2602 = vpop.f32.mrf.mxu0
      %v2603 = vadd.f32 %v2521, %v2602
      %v2604 = vpop.f32.mrf.mxu0
      %2605 = vmatprep.mubr.f32.mxu0 0.0
      %v2606 = vand.u32 %v2354, 4294901760
      %v2607 = vsub.f32 %v2354, %v2606
      %2608 = vmatmul.mubr.f32.gmra.mxu0 %v2607
      %v2609 = vpop.f32.mrf.mxu0
      %v2610 = vadd.f32 %v2527, %v2609
      %v2611 = vpop.f32.mrf.mxu0
      %2612 = vdwg.mxu0
      %2613 = vmatprep.subr.mxu0 0.0
      %2614 = vmatpush1.msra.mxu0 0.0
      %2615 = vmatprep.subr.mxu0 0.0
      %2616 = vmatpush1.msra.mxu0 0.0
      %2617 = vmatprep.subr.mxu0 0.0
      %2618 = vmatpush1.msra.mxu0 0.0
      %2619 = vmatprep.subr.mxu0 0.0
      %2620 = vmatpush1.msra.mxu0 0.0
      %2621 = vmatprep.subr.mxu0 0.0
      %2622 = vmatpush1.msra.mxu0 0.0
      %2623 = vmatprep.subr.mxu0 0.0
      %2624 = vmatpush1.msra.mxu0 0.0
      %2625 = vmatprep.subr.mxu0 0.0
      %2626 = vmatpush1.msra.mxu0 0.0
      %2627 = vmatprep.subr.mxu0 0.0
      %2628 = vmatpush1.msra.mxu0 0.0
      %2629 = vmatprep.subr.mxu0 0.0
      %2630 = vmatpush1.msra.mxu0 0.0
      %2631 = vmatprep.subr.mxu0 0.0
      %2632 = vmatpush1.msra.mxu0 0.0
      %2633 = vmatprep.subr.mxu0 0.0
      %2634 = vmatpush1.msra.mxu0 0.0
      %2635 = vmatprep.subr.mxu0 0.0
      %2636 = vmatpush1.msra.mxu0 0.0
      %2637 = vmatprep.subr.mxu0 0.0
      %2638 = vmatpush1.msra.mxu0 0.0
      %2639 = vmatprep.subr.mxu0 0.0
      %2640 = vmatpush1.msra.mxu0 0.0
      %2641 = vmatprep.subr.mxu0 0.0
      %v2642 = vand.u32 %v262, 4294901760
      %2643 = vmatpush1.msra.mxu0 %v2642
      %2644 = vmatprep.subr.mxu0 0.0
      %v2645 = vand.u32 %v261, 4294901760
      %2646 = vmatpush1.msra.mxu0 %v2645
      %2647 = vmatprep.subr.mxu0 0.0
      %2648 = vmatpush2.msra.mxu0 0.0
      %2649 = vmatprep.subr.mxu0 0.0
      %2650 = vmatpush2.msra.mxu0 0.0
      %2651 = vmatprep.subr.mxu0 0.0
      %2652 = vmatpush2.msra.mxu0 0.0
      %2653 = vmatprep.subr.mxu0 0.0
      %2654 = vmatpush2.msra.mxu0 0.0
      %2655 = vmatprep.subr.mxu0 0.0
      %2656 = vmatpush2.msra.mxu0 0.0
      %2657 = vmatprep.subr.mxu0 0.0
      %2658 = vmatpush2.msra.mxu0 0.0
      %2659 = vmatprep.subr.mxu0 0.0
      %2660 = vmatpush2.msra.mxu0 0.0
      %2661 = vmatprep.subr.mxu0 0.0
      %2662 = vmatpush2.msra.mxu0 0.0
      %2663 = vmatprep.subr.mxu0 0.0
      %2664 = vmatpush2.msra.mxu0 0.0
      %2665 = vmatprep.subr.mxu0 0.0
      %2666 = vmatpush2.msra.mxu0 0.0
      %2667 = vmatprep.subr.mxu0 0.0
      %2668 = vmatpush2.msra.mxu0 0.0
      %2669 = vmatprep.subr.mxu0 0.0
      %2670 = vmatpush2.msra.mxu0 0.0
      %2671 = vmatprep.subr.mxu0 0.0
      %2672 = vmatpush2.msra.mxu0 0.0
      %2673 = vmatprep.subr.mxu0 0.0
      %2674 = vmatpush2.msra.mxu0 0.0
      %2675 = vmatprep.subr.mxu0 0.0
      %2676 = vmatpush2.msra.mxu0 0.0
      %2677 = vmatprep.subr.mxu0 0.0
      %2678 = vmatpush2.msra.mxu0 0.0
      %2679 = vmatprep.mubr.f32.mxu0 0.0
      %v2680 = vand.u32 %v2351, 4294901760
      %v2681 = vsub.f32 %v2351, %v2680
      %v2682 = vand.u32 %v2681, 4294901760
      %2683 = vmatmul.mubr.f32.gmra.mxu0 %v2682
      %v2684 = vpop.f32.mrf.mxu0
      %v2685 = vadd.f32 %v2603, %v2684
      %v2686 = vpop.f32.mrf.mxu0
      %2687 = vmatprep.mubr.f32.mxu0 0.0
      %v2688 = vand.u32 %v2354, 4294901760
      %v2689 = vsub.f32 %v2354, %v2688
      %v2690 = vand.u32 %v2689, 4294901760
      %2691 = vmatmul.mubr.f32.gmra.mxu0 %v2690
      %v2692 = vpop.f32.mrf.mxu0
      %v2693 = vadd.f32 %v2610, %v2692
      %v2694 = vpop.f32.mrf.mxu0
      %2695 = vdwg.mxu0
      %2696 = vmatprep.subr.mxu0 0.0
      %2697 = vmatpush1.msra.mxu0 0.0
      %2698 = vmatprep.subr.mxu0 0.0
      %2699 = vmatpush1.msra.mxu0 0.0
      %2700 = vmatprep.subr.mxu0 0.0
      %2701 = vmatpush1.msra.mxu0 0.0
      %2702 = vmatprep.subr.mxu0 0.0
      %2703 = vmatpush1.msra.mxu0 0.0
      %2704 = vmatprep.subr.mxu0 0.0
      %2705 = vmatpush1.msra.mxu0 0.0
      %2706 = vmatprep.subr.mxu0 0.0
      %2707 = vmatpush1.msra.mxu0 0.0
      %2708 = vmatprep.subr.mxu0 0.0
      %2709 = vmatpush1.msra.mxu0 0.0
      %2710 = vmatprep.subr.mxu0 0.0
      %2711 = vmatpush1.msra.mxu0 0.0
      %2712 = vmatprep.subr.mxu0 0.0
      %2713 = vmatpush1.msra.mxu0 0.0
      %2714 = vmatprep.subr.mxu0 0.0
      %2715 = vmatpush1.msra.mxu0 0.0
      %2716 = vmatprep.subr.mxu0 0.0
      %2717 = vmatpush1.msra.mxu0 0.0
      %2718 = vmatprep.subr.mxu0 0.0
      %2719 = vmatpush1.msra.mxu0 0.0
      %2720 = vmatprep.subr.mxu0 0.0
      %2721 = vmatpush1.msra.mxu0 0.0
      %2722 = vmatprep.subr.mxu0 0.0
      %2723 = vmatpush1.msra.mxu0 0.0
      %2724 = vmatprep.subr.mxu0 0.0
      %v2725 = vand.u32 %v262, 4294901760
      %v2726 = vsub.f32 %v262, %v2725
      %v2727 = vand.u32 %v2726, 4294901760
      %2728 = vmatpush1.msra.mxu0 %v2727
      %2729 = vmatprep.subr.mxu0 0.0
      %v2730 = vand.u32 %v261, 4294901760
      %v2731 = vsub.f32 %v261, %v2730
      %v2732 = vand.u32 %v2731, 4294901760
      %2733 = vmatpush1.msra.mxu0 %v2732
      %2734 = vmatprep.subr.mxu0 0.0
      %2735 = vmatpush2.msra.mxu0 0.0
      %2736 = vmatprep.subr.mxu0 0.0
      %2737 = vmatpush2.msra.mxu0 0.0
      %2738 = vmatprep.subr.mxu0 0.0
      %2739 = vmatpush2.msra.mxu0 0.0
      %2740 = vmatprep.subr.mxu0 0.0
      %2741 = vmatpush2.msra.mxu0 0.0
      %2742 = vmatprep.subr.mxu0 0.0
      %2743 = vmatpush2.msra.mxu0 0.0
      %2744 = vmatprep.subr.mxu0 0.0
      %2745 = vmatpush2.msra.mxu0 0.0
      %2746 = vmatprep.subr.mxu0 0.0
      %2747 = vmatpush2.msra.mxu0 0.0
      %2748 = vmatprep.subr.mxu0 0.0
      %2749 = vmatpush2.msra.mxu0 0.0
      %2750 = vmatprep.subr.mxu0 0.0
      %2751 = vmatpush2.msra.mxu0 0.0
      %2752 = vmatprep.subr.mxu0 0.0
      %2753 = vmatpush2.msra.mxu0 0.0
      %2754 = vmatprep.subr.mxu0 0.0
      %2755 = vmatpush2.msra.mxu0 0.0
      %2756 = vmatprep.subr.mxu0 0.0
      %2757 = vmatpush2.msra.mxu0 0.0
      %2758 = vmatprep.subr.mxu0 0.0
      %2759 = vmatpush2.msra.mxu0 0.0
      %2760 = vmatprep.subr.mxu0 0.0
      %2761 = vmatpush2.msra.mxu0 0.0
      %2762 = vmatprep.subr.mxu0 0.0
      %2763 = vmatpush2.msra.mxu0 0.0
      %2764 = vmatprep.subr.mxu0 0.0
      %2765 = vmatpush2.msra.mxu0 0.0
      %2766 = vmatprep.mubr.f32.mxu0 0.0
      %v2767 = vand.u32 %v2351, 4294901760
      %2768 = vmatmul.mubr.f32.gmra.mxu0 %v2767
      %v2769 = vpop.f32.mrf.mxu0
      %v2770 = vadd.f32 %v2685, %v2769
      %v2771 = vpop.f32.mrf.mxu0
      %2772 = vmatprep.mubr.f32.mxu0 0.0
      %v2773 = vand.u32 %v2354, 4294901760
      %2774 = vmatmul.mubr.f32.gmra.mxu0 %v2773
      %v2775 = vpop.f32.mrf.mxu0
      %v2776 = vadd.f32 %v2693, %v2775
      %v2777 = vpop.f32.mrf.mxu0
      %2778 = vdwg.mxu0
      %2779 = vmatprep.subr.mxu0 0.0
      %2780 = vmatpush1.msra.mxu0 0.0
      %2781 = vmatprep.subr.mxu0 0.0
      %2782 = vmatpush1.msra.mxu0 0.0
      %2783 = vmatprep.subr.mxu0 0.0
      %2784 = vmatpush1.msra.mxu0 0.0
      %2785 = vmatprep.subr.mxu0 0.0
      %2786 = vmatpush1.msra.mxu0 0.0
      %2787 = vmatprep.subr.mxu0 0.0
      %2788 = vmatpush1.msra.mxu0 0.0
      %2789 = vmatprep.subr.mxu0 0.0
      %2790 = vmatpush1.msra.mxu0 0.0
      %2791 = vmatprep.subr.mxu0 0.0
      %2792 = vmatpush1.msra.mxu0 0.0
      %2793 = vmatprep.subr.mxu0 0.0
      %2794 = vmatpush1.msra.mxu0 0.0
      %2795 = vmatprep.subr.mxu0 0.0
      %2796 = vmatpush1.msra.mxu0 0.0
      %2797 = vmatprep.subr.mxu0 0.0
      %2798 = vmatpush1.msra.mxu0 0.0
      %2799 = vmatprep.subr.mxu0 0.0
      %2800 = vmatpush1.msra.mxu0 0.0
      %2801 = vmatprep.subr.mxu0 0.0
      %2802 = vmatpush1.msra.mxu0 0.0
      %2803 = vmatprep.subr.mxu0 0.0
      %2804 = vmatpush1.msra.mxu0 0.0
      %2805 = vmatprep.subr.mxu0 0.0
      %2806 = vmatpush1.msra.mxu0 0.0
      %2807 = vmatprep.subr.mxu0 0.0
      %v2808 = vand.u32 %v262, 4294901760
      %2809 = vmatpush1.msra.mxu0 %v2808
      %2810 = vmatprep.subr.mxu0 0.0
      %v2811 = vand.u32 %v261, 4294901760
      %2812 = vmatpush1.msra.mxu0 %v2811
      %2813 = vmatprep.subr.mxu0 0.0
      %2814 = vmatpush2.msra.mxu0 0.0
      %2815 = vmatprep.subr.mxu0 0.0
      %2816 = vmatpush2.msra.mxu0 0.0
      %2817 = vmatprep.subr.mxu0 0.0
      %2818 = vmatpush2.msra.mxu0 0.0
      %2819 = vmatprep.subr.mxu0 0.0
      %2820 = vmatpush2.msra.mxu0 0.0
      %2821 = vmatprep.subr.mxu0 0.0
      %2822 = vmatpush2.msra.mxu0 0.0
      %2823 = vmatprep.subr.mxu0 0.0
      %2824 = vmatpush2.msra.mxu0 0.0
      %2825 = vmatprep.subr.mxu0 0.0
      %2826 = vmatpush2.msra.mxu0 0.0
      %2827 = vmatprep.subr.mxu0 0.0
      %2828 = vmatpush2.msra.mxu0 0.0
      %2829 = vmatprep.subr.mxu0 0.0
      %2830 = vmatpush2.msra.mxu0 0.0
      %2831 = vmatprep.subr.mxu0 0.0
      %2832 = vmatpush2.msra.mxu0 0.0
      %2833 = vmatprep.subr.mxu0 0.0
      %2834 = vmatpush2.msra.mxu0 0.0
      %2835 = vmatprep.subr.mxu0 0.0
      %2836 = vmatpush2.msra.mxu0 0.0
      %2837 = vmatprep.subr.mxu0 0.0
      %2838 = vmatpush2.msra.mxu0 0.0
      %2839 = vmatprep.subr.mxu0 0.0
      %2840 = vmatpush2.msra.mxu0 0.0
      %2841 = vmatprep.subr.mxu0 0.0
      %2842 = vmatpush2.msra.mxu0 0.0
      %2843 = vmatprep.subr.mxu0 0.0
      %2844 = vmatpush2.msra.mxu0 0.0
      %2845 = vmatprep.mubr.f32.mxu0 0.0
      %v2846 = vand.u32 %v2351, 4294901760
      %2847 = vmatmul.mubr.f32.gmra.mxu0 %v2846
      %v2848 = vpop.f32.mrf.mxu0
      %v2849 = vadd.f32 %v2770, %v2848
      %v2850 = vpop.f32.mrf.mxu0
      %2851 = vmatprep.mubr.f32.mxu0 0.0
      %v2852 = vand.u32 %v2354, 4294901760
      %2853 = vmatmul.mubr.f32.gmra.mxu0 %v2852
      %v2854 = vpop.f32.mrf.mxu0
      %v2855 = vadd.f32 %v2776, %v2854
      %v2856 = vpop.f32.mrf.mxu0
      %2857 = vdwg.mxu0
      %v2859 = vsel %vm317, %v295, 0
      %v2862 = vsel %vm317, %v296, 0
      %2864 = vmatprep.subr.mxu0 0.0
      %2865 = vmatpush1.msra.mxu0 0.0
      %2866 = vmatprep.subr.mxu0 0.0
      %2867 = vmatpush1.msra.mxu0 0.0
      %2868 = vmatprep.subr.mxu0 0.0
      %2869 = vmatpush1.msra.mxu0 0.0
      %2870 = vmatprep.subr.mxu0 0.0
      %2871 = vmatpush1.msra.mxu0 0.0
      %2872 = vmatprep.subr.mxu0 0.0
      %2873 = vmatpush1.msra.mxu0 0.0
      %2874 = vmatprep.subr.mxu0 0.0
      %2875 = vmatpush1.msra.mxu0 0.0
      %2876 = vmatprep.subr.mxu0 0.0
      %2877 = vmatpush1.msra.mxu0 0.0
      %2878 = vmatprep.subr.mxu0 0.0
      %2879 = vmatpush1.msra.mxu0 0.0
      %2880 = vmatprep.subr.mxu0 0.0
      %2881 = vmatpush1.msra.mxu0 0.0
      %2882 = vmatprep.subr.mxu0 0.0
      %2883 = vmatpush1.msra.mxu0 0.0
      %2884 = vmatprep.subr.mxu0 0.0
      %2885 = vmatpush1.msra.mxu0 0.0
      %2886 = vmatprep.subr.mxu0 0.0
      %2887 = vmatpush1.msra.mxu0 0.0
      %2888 = vmatprep.subr.mxu0 0.0
      %2889 = vmatpush1.msra.mxu0 0.0
      %2890 = vmatprep.subr.mxu0 0.0
      %2891 = vmatpush1.msra.mxu0 0.0
      %2892 = vmatprep.subr.mxu0 0.0
      %v2893 = vand.u32 %v264, 4294901760
      %2894 = vmatpush1.msra.mxu0 %v2893
      %2895 = vmatprep.subr.mxu0 0.0
      %v2896 = vand.u32 %v263, 4294901760
      %2897 = vmatpush1.msra.mxu0 %v2896
      %2898 = vmatprep.subr.mxu0 0.0
      %2899 = vmatpush2.msra.mxu0 0.0
      %2900 = vmatprep.subr.mxu0 0.0
      %2901 = vmatpush2.msra.mxu0 0.0
      %2902 = vmatprep.subr.mxu0 0.0
      %2903 = vmatpush2.msra.mxu0 0.0
      %2904 = vmatprep.subr.mxu0 0.0
      %2905 = vmatpush2.msra.mxu0 0.0
      %2906 = vmatprep.subr.mxu0 0.0
      %2907 = vmatpush2.msra.mxu0 0.0
      %2908 = vmatprep.subr.mxu0 0.0
      %2909 = vmatpush2.msra.mxu0 0.0
      %2910 = vmatprep.subr.mxu0 0.0
      %2911 = vmatpush2.msra.mxu0 0.0
      %2912 = vmatprep.subr.mxu0 0.0
      %2913 = vmatpush2.msra.mxu0 0.0
      %2914 = vmatprep.subr.mxu0 0.0
      %2915 = vmatpush2.msra.mxu0 0.0
      %2916 = vmatprep.subr.mxu0 0.0
      %2917 = vmatpush2.msra.mxu0 0.0
      %2918 = vmatprep.subr.mxu0 0.0
      %2919 = vmatpush2.msra.mxu0 0.0
      %2920 = vmatprep.subr.mxu0 0.0
      %2921 = vmatpush2.msra.mxu0 0.0
      %2922 = vmatprep.subr.mxu0 0.0
      %2923 = vmatpush2.msra.mxu0 0.0
      %2924 = vmatprep.subr.mxu0 0.0
      %2925 = vmatpush2.msra.mxu0 0.0
      %2926 = vmatprep.subr.mxu0 0.0
      %2927 = vmatpush2.msra.mxu0 0.0
      %2928 = vmatprep.subr.mxu0 0.0
      %2929 = vmatpush2.msra.mxu0 0.0
      %2930 = vmatprep.mubr.f32.mxu0 0.0
      %v2931 = vand.u32 %v2859, 4294901760
      %v2932 = vsub.f32 %v2859, %v2931
      %v2933 = vand.u32 %v2932, 4294901760
      %v2934 = vsub.f32 %v2932, %v2933
      %v2935 = vand.u32 %v2934, 4294901760
      %2936 = vmatmul.mubr.f32.gmra.mxu0 %v2935
      %v2937 = vpop.f32.mrf.mxu0
      %v2938 = vadd.f32 0.0, %v2937
      %v2939 = vpop.f32.mrf.mxu0
      %2940 = vmatprep.mubr.f32.mxu0 0.0
      %v2941 = vand.u32 %v2862, 4294901760
      %v2942 = vsub.f32 %v2862, %v2941
      %v2943 = vand.u32 %v2942, 4294901760
      %v2944 = vsub.f32 %v2942, %v2943
      %v2945 = vand.u32 %v2944, 4294901760
      %2946 = vmatmul.mubr.f32.gmra.mxu0 %v2945
      %v2947 = vpop.f32.mrf.mxu0
      %v2948 = vadd.f32 0.0, %v2947
      %v2949 = vpop.f32.mrf.mxu0
      %2950 = vdwg.mxu0
      %2951 = vmatprep.subr.mxu0 0.0
      %2952 = vmatpush1.msra.mxu0 0.0
      %2953 = vmatprep.subr.mxu0 0.0
      %2954 = vmatpush1.msra.mxu0 0.0
      %2955 = vmatprep.subr.mxu0 0.0
      %2956 = vmatpush1.msra.mxu0 0.0
      %2957 = vmatprep.subr.mxu0 0.0
      %2958 = vmatpush1.msra.mxu0 0.0
      %2959 = vmatprep.subr.mxu0 0.0
      %2960 = vmatpush1.msra.mxu0 0.0
      %2961 = vmatprep.subr.mxu0 0.0
      %2962 = vmatpush1.msra.mxu0 0.0
      %2963 = vmatprep.subr.mxu0 0.0
      %2964 = vmatpush1.msra.mxu0 0.0
      %2965 = vmatprep.subr.mxu0 0.0
      %2966 = vmatpush1.msra.mxu0 0.0
      %2967 = vmatprep.subr.mxu0 0.0
      %2968 = vmatpush1.msra.mxu0 0.0
      %2969 = vmatprep.subr.mxu0 0.0
      %2970 = vmatpush1.msra.mxu0 0.0
      %2971 = vmatprep.subr.mxu0 0.0
      %2972 = vmatpush1.msra.mxu0 0.0
      %2973 = vmatprep.subr.mxu0 0.0
      %2974 = vmatpush1.msra.mxu0 0.0
      %2975 = vmatprep.subr.mxu0 0.0
      %2976 = vmatpush1.msra.mxu0 0.0
      %2977 = vmatprep.subr.mxu0 0.0
      %2978 = vmatpush1.msra.mxu0 0.0
      %2979 = vmatprep.subr.mxu0 0.0
      %v2980 = vand.u32 %v264, 4294901760
      %v2981 = vsub.f32 %v264, %v2980
      %v2982 = vand.u32 %v2981, 4294901760
      %v2983 = vsub.f32 %v2981, %v2982
      %v2984 = vand.u32 %v2983, 4294901760
      %2985 = vmatpush1.msra.mxu0 %v2984
      %2986 = vmatprep.subr.mxu0 0.0
      %v2987 = vand.u32 %v263, 4294901760
      %v2988 = vsub.f32 %v263, %v2987
      %v2989 = vand.u32 %v2988, 4294901760
      %v2990 = vsub.f32 %v2988, %v2989
      %v2991 = vand.u32 %v2990, 4294901760
      %2992 = vmatpush1.msra.mxu0 %v2991
      %2993 = vmatprep.subr.mxu0 0.0
      %2994 = vmatpush2.msra.mxu0 0.0
      %2995 = vmatprep.subr.mxu0 0.0
      %2996 = vmatpush2.msra.mxu0 0.0
      %2997 = vmatprep.subr.mxu0 0.0
      %2998 = vmatpush2.msra.mxu0 0.0
      %2999 = vmatprep.subr.mxu0 0.0
      %3000 = vmatpush2.msra.mxu0 0.0
      %3001 = vmatprep.subr.mxu0 0.0
      %3002 = vmatpush2.msra.mxu0 0.0
      %3003 = vmatprep.subr.mxu0 0.0
      %3004 = vmatpush2.msra.mxu0 0.0
      %3005 = vmatprep.subr.mxu0 0.0
      %3006 = vmatpush2.msra.mxu0 0.0
      %3007 = vmatprep.subr.mxu0 0.0
      %3008 = vmatpush2.msra.mxu0 0.0
      %3009 = vmatprep.subr.mxu0 0.0
      %3010 = vmatpush2.msra.mxu0 0.0
      %3011 = vmatprep.subr.mxu0 0.0
      %3012 = vmatpush2.msra.mxu0 0.0
      %3013 = vmatprep.subr.mxu0 0.0
      %3014 = vmatpush2.msra.mxu0 0.0
      %3015 = vmatprep.subr.mxu0 0.0
      %3016 = vmatpush2.msra.mxu0 0.0
      %3017 = vmatprep.subr.mxu0 0.0
      %3018 = vmatpush2.msra.mxu0 0.0
      %3019 = vmatprep.subr.mxu0 0.0
      %3020 = vmatpush2.msra.mxu0 0.0
      %3021 = vmatprep.subr.mxu0 0.0
      %3022 = vmatpush2.msra.mxu0 0.0
      %3023 = vmatprep.subr.mxu0 0.0
      %3024 = vmatpush2.msra.mxu0 0.0
      %3025 = vmatprep.mubr.f32.mxu0 0.0
      %v3026 = vand.u32 %v2859, 4294901760
      %3027 = vmatmul.mubr.f32.gmra.mxu0 %v3026
      %v3028 = vpop.f32.mrf.mxu0
      %v3029 = vadd.f32 %v2938, %v3028
      %v3030 = vpop.f32.mrf.mxu0
      %3031 = vmatprep.mubr.f32.mxu0 0.0
      %v3032 = vand.u32 %v2862, 4294901760
      %3033 = vmatmul.mubr.f32.gmra.mxu0 %v3032
      %v3034 = vpop.f32.mrf.mxu0
      %v3035 = vadd.f32 %v2948, %v3034
      %v3036 = vpop.f32.mrf.mxu0
      %3037 = vdwg.mxu0
      %3038 = vmatprep.subr.mxu0 0.0
      %3039 = vmatpush1.msra.mxu0 0.0
      %3040 = vmatprep.subr.mxu0 0.0
      %3041 = vmatpush1.msra.mxu0 0.0
      %3042 = vmatprep.subr.mxu0 0.0
      %3043 = vmatpush1.msra.mxu0 0.0
      %3044 = vmatprep.subr.mxu0 0.0
      %3045 = vmatpush1.msra.mxu0 0.0
      %3046 = vmatprep.subr.mxu0 0.0
      %3047 = vmatpush1.msra.mxu0 0.0
      %3048 = vmatprep.subr.mxu0 0.0
      %3049 = vmatpush1.msra.mxu0 0.0
      %3050 = vmatprep.subr.mxu0 0.0
      %3051 = vmatpush1.msra.mxu0 0.0
      %3052 = vmatprep.subr.mxu0 0.0
      %3053 = vmatpush1.msra.mxu0 0.0
      %3054 = vmatprep.subr.mxu0 0.0
      %3055 = vmatpush1.msra.mxu0 0.0
      %3056 = vmatprep.subr.mxu0 0.0
      %3057 = vmatpush1.msra.mxu0 0.0
      %3058 = vmatprep.subr.mxu0 0.0
      %3059 = vmatpush1.msra.mxu0 0.0
      %3060 = vmatprep.subr.mxu0 0.0
      %3061 = vmatpush1.msra.mxu0 0.0
      %3062 = vmatprep.subr.mxu0 0.0
      %3063 = vmatpush1.msra.mxu0 0.0
      %3064 = vmatprep.subr.mxu0 0.0
      %3065 = vmatpush1.msra.mxu0 0.0
      %3066 = vmatprep.subr.mxu0 0.0
      %v3067 = vand.u32 %v264, 4294901760
      %v3068 = vsub.f32 %v264, %v3067
      %3069 = vmatpush1.msra.mxu0 %v3068
      %3070 = vmatprep.subr.mxu0 0.0
      %v3071 = vand.u32 %v263, 4294901760
      %v3072 = vsub.f32 %v263, %v3071
      %3073 = vmatpush1.msra.mxu0 %v3072
      %3074 = vmatprep.subr.mxu0 0.0
      %3075 = vmatpush2.msra.mxu0 0.0
      %3076 = vmatprep.subr.mxu0 0.0
      %3077 = vmatpush2.msra.mxu0 0.0
      %3078 = vmatprep.subr.mxu0 0.0
      %3079 = vmatpush2.msra.mxu0 0.0
      %3080 = vmatprep.subr.mxu0 0.0
      %3081 = vmatpush2.msra.mxu0 0.0
      %3082 = vmatprep.subr.mxu0 0.0
      %3083 = vmatpush2.msra.mxu0 0.0
      %3084 = vmatprep.subr.mxu0 0.0
      %3085 = vmatpush2.msra.mxu0 0.0
      %3086 = vmatprep.subr.mxu0 0.0
      %3087 = vmatpush2.msra.mxu0 0.0
      %3088 = vmatprep.subr.mxu0 0.0
      %3089 = vmatpush2.msra.mxu0 0.0
      %3090 = vmatprep.subr.mxu0 0.0
      %3091 = vmatpush2.msra.mxu0 0.0
      %3092 = vmatprep.subr.mxu0 0.0
      %3093 = vmatpush2.msra.mxu0 0.0
      %3094 = vmatprep.subr.mxu0 0.0
      %3095 = vmatpush2.msra.mxu0 0.0
      %3096 = vmatprep.subr.mxu0 0.0
      %3097 = vmatpush2.msra.mxu0 0.0
      %3098 = vmatprep.subr.mxu0 0.0
      %3099 = vmatpush2.msra.mxu0 0.0
      %3100 = vmatprep.subr.mxu0 0.0
      %3101 = vmatpush2.msra.mxu0 0.0
      %3102 = vmatprep.subr.mxu0 0.0
      %3103 = vmatpush2.msra.mxu0 0.0
      %3104 = vmatprep.subr.mxu0 0.0
      %3105 = vmatpush2.msra.mxu0 0.0
      %3106 = vmatprep.mubr.f32.mxu0 0.0
      %v3107 = vand.u32 %v2859, 4294901760
      %v3108 = vsub.f32 %v2859, %v3107
      %3109 = vmatmul.mubr.f32.gmra.mxu0 %v3108
      %v3110 = vpop.f32.mrf.mxu0
      %v3111 = vadd.f32 %v3029, %v3110
      %v3112 = vpop.f32.mrf.mxu0
      %3113 = vmatprep.mubr.f32.mxu0 0.0
      %v3114 = vand.u32 %v2862, 4294901760
      %v3115 = vsub.f32 %v2862, %v3114
      %3116 = vmatmul.mubr.f32.gmra.mxu0 %v3115
      %v3117 = vpop.f32.mrf.mxu0
      %v3118 = vadd.f32 %v3035, %v3117
      %v3119 = vpop.f32.mrf.mxu0
      %3120 = vdwg.mxu0
      %3121 = vmatprep.subr.mxu0 0.0
      %3122 = vmatpush1.msra.mxu0 0.0
      %3123 = vmatprep.subr.mxu0 0.0
      %3124 = vmatpush1.msra.mxu0 0.0
      %3125 = vmatprep.subr.mxu0 0.0
      %3126 = vmatpush1.msra.mxu0 0.0
      %3127 = vmatprep.subr.mxu0 0.0
      %3128 = vmatpush1.msra.mxu0 0.0
      %3129 = vmatprep.subr.mxu0 0.0
      %3130 = vmatpush1.msra.mxu0 0.0
      %3131 = vmatprep.subr.mxu0 0.0
      %3132 = vmatpush1.msra.mxu0 0.0
      %3133 = vmatprep.subr.mxu0 0.0
      %3134 = vmatpush1.msra.mxu0 0.0
      %3135 = vmatprep.subr.mxu0 0.0
      %3136 = vmatpush1.msra.mxu0 0.0
      %3137 = vmatprep.subr.mxu0 0.0
      %3138 = vmatpush1.msra.mxu0 0.0
      %3139 = vmatprep.subr.mxu0 0.0
      %3140 = vmatpush1.msra.mxu0 0.0
      %3141 = vmatprep.subr.mxu0 0.0
      %3142 = vmatpush1.msra.mxu0 0.0
      %3143 = vmatprep.subr.mxu0 0.0
      %3144 = vmatpush1.msra.mxu0 0.0
      %3145 = vmatprep.subr.mxu0 0.0
      %3146 = vmatpush1.msra.mxu0 0.0
      %3147 = vmatprep.subr.mxu0 0.0
      %3148 = vmatpush1.msra.mxu0 0.0
      %3149 = vmatprep.subr.mxu0 0.0
      %v3150 = vand.u32 %v264, 4294901760
      %3151 = vmatpush1.msra.mxu0 %v3150
      %3152 = vmatprep.subr.mxu0 0.0
      %v3153 = vand.u32 %v263, 4294901760
      %3154 = vmatpush1.msra.mxu0 %v3153
      %3155 = vmatprep.subr.mxu0 0.0
      %3156 = vmatpush2.msra.mxu0 0.0
      %3157 = vmatprep.subr.mxu0 0.0
      %3158 = vmatpush2.msra.mxu0 0.0
      %3159 = vmatprep.subr.mxu0 0.0
      %3160 = vmatpush2.msra.mxu0 0.0
      %3161 = vmatprep.subr.mxu0 0.0
      %3162 = vmatpush2.msra.mxu0 0.0
      %3163 = vmatprep.subr.mxu0 0.0
      %3164 = vmatpush2.msra.mxu0 0.0
      %3165 = vmatprep.subr.mxu0 0.0
      %3166 = vmatpush2.msra.mxu0 0.0
      %3167 = vmatprep.subr.mxu0 0.0
      %3168 = vmatpush2.msra.mxu0 0.0
      %3169 = vmatprep.subr.mxu0 0.0
      %3170 = vmatpush2.msra.mxu0 0.0
      %3171 = vmatprep.subr.mxu0 0.0
      %3172 = vmatpush2.msra.mxu0 0.0
      %3173 = vmatprep.subr.mxu0 0.0
      %3174 = vmatpush2.msra.mxu0 0.0
      %3175 = vmatprep.subr.mxu0 0.0
      %3176 = vmatpush2.msra.mxu0 0.0
      %3177 = vmatprep.subr.mxu0 0.0
      %3178 = vmatpush2.msra.mxu0 0.0
      %3179 = vmatprep.subr.mxu0 0.0
      %3180 = vmatpush2.msra.mxu0 0.0
      %3181 = vmatprep.subr.mxu0 0.0
      %3182 = vmatpush2.msra.mxu0 0.0
      %3183 = vmatprep.subr.mxu0 0.0
      %3184 = vmatpush2.msra.mxu0 0.0
      %3185 = vmatprep.subr.mxu0 0.0
      %3186 = vmatpush2.msra.mxu0 0.0
      %3187 = vmatprep.mubr.f32.mxu0 0.0
      %v3188 = vand.u32 %v2859, 4294901760
      %v3189 = vsub.f32 %v2859, %v3188
      %v3190 = vand.u32 %v3189, 4294901760
      %3191 = vmatmul.mubr.f32.gmra.mxu0 %v3190
      %v3192 = vpop.f32.mrf.mxu0
      %v3193 = vadd.f32 %v3111, %v3192
      %v3194 = vpop.f32.mrf.mxu0
      %3195 = vmatprep.mubr.f32.mxu0 0.0
      %v3196 = vand.u32 %v2862, 4294901760
      %v3197 = vsub.f32 %v2862, %v3196
      %v3198 = vand.u32 %v3197, 4294901760
      %3199 = vmatmul.mubr.f32.gmra.mxu0 %v3198
      %v3200 = vpop.f32.mrf.mxu0
      %v3201 = vadd.f32 %v3118, %v3200
      %v3202 = vpop.f32.mrf.mxu0
      %3203 = vdwg.mxu0
      %3204 = vmatprep.subr.mxu0 0.0
      %3205 = vmatpush1.msra.mxu0 0.0
      %3206 = vmatprep.subr.mxu0 0.0
      %3207 = vmatpush1.msra.mxu0 0.0
      %3208 = vmatprep.subr.mxu0 0.0
      %3209 = vmatpush1.msra.mxu0 0.0
      %3210 = vmatprep.subr.mxu0 0.0
      %3211 = vmatpush1.msra.mxu0 0.0
      %3212 = vmatprep.subr.mxu0 0.0
      %3213 = vmatpush1.msra.mxu0 0.0
      %3214 = vmatprep.subr.mxu0 0.0
      %3215 = vmatpush1.msra.mxu0 0.0
      %3216 = vmatprep.subr.mxu0 0.0
      %3217 = vmatpush1.msra.mxu0 0.0
      %3218 = vmatprep.subr.mxu0 0.0
      %3219 = vmatpush1.msra.mxu0 0.0
      %3220 = vmatprep.subr.mxu0 0.0
      %3221 = vmatpush1.msra.mxu0 0.0
      %3222 = vmatprep.subr.mxu0 0.0
      %3223 = vmatpush1.msra.mxu0 0.0
      %3224 = vmatprep.subr.mxu0 0.0
      %3225 = vmatpush1.msra.mxu0 0.0
      %3226 = vmatprep.subr.mxu0 0.0
      %3227 = vmatpush1.msra.mxu0 0.0
      %3228 = vmatprep.subr.mxu0 0.0
      %3229 = vmatpush1.msra.mxu0 0.0
      %3230 = vmatprep.subr.mxu0 0.0
      %3231 = vmatpush1.msra.mxu0 0.0
      %3232 = vmatprep.subr.mxu0 0.0
      %v3233 = vand.u32 %v264, 4294901760
      %v3234 = vsub.f32 %v264, %v3233
      %v3235 = vand.u32 %v3234, 4294901760
      %3236 = vmatpush1.msra.mxu0 %v3235
      %3237 = vmatprep.subr.mxu0 0.0
      %v3238 = vand.u32 %v263, 4294901760
      %v3239 = vsub.f32 %v263, %v3238
      %v3240 = vand.u32 %v3239, 4294901760
      %3241 = vmatpush1.msra.mxu0 %v3240
      %3242 = vmatprep.subr.mxu0 0.0
      %3243 = vmatpush2.msra.mxu0 0.0
      %3244 = vmatprep.subr.mxu0 0.0
      %3245 = vmatpush2.msra.mxu0 0.0
      %3246 = vmatprep.subr.mxu0 0.0
      %3247 = vmatpush2.msra.mxu0 0.0
      %3248 = vmatprep.subr.mxu0 0.0
      %3249 = vmatpush2.msra.mxu0 0.0
      %3250 = vmatprep.subr.mxu0 0.0
      %3251 = vmatpush2.msra.mxu0 0.0
      %3252 = vmatprep.subr.mxu0 0.0
      %3253 = vmatpush2.msra.mxu0 0.0
      %3254 = vmatprep.subr.mxu0 0.0
      %3255 = vmatpush2.msra.mxu0 0.0
      %3256 = vmatprep.subr.mxu0 0.0
      %3257 = vmatpush2.msra.mxu0 0.0
      %3258 = vmatprep.subr.mxu0 0.0
      %3259 = vmatpush2.msra.mxu0 0.0
      %3260 = vmatprep.subr.mxu0 0.0
      %3261 = vmatpush2.msra.mxu0 0.0
      %3262 = vmatprep.subr.mxu0 0.0
      %3263 = vmatpush2.msra.mxu0 0.0
      %3264 = vmatprep.subr.mxu0 0.0
      %3265 = vmatpush2.msra.mxu0 0.0
      %3266 = vmatprep.subr.mxu0 0.0
      %3267 = vmatpush2.msra.mxu0 0.0
      %3268 = vmatprep.subr.mxu0 0.0
      %3269 = vmatpush2.msra.mxu0 0.0
      %3270 = vmatprep.subr.mxu0 0.0
      %3271 = vmatpush2.msra.mxu0 0.0
      %3272 = vmatprep.subr.mxu0 0.0
      %3273 = vmatpush2.msra.mxu0 0.0
      %3274 = vmatprep.mubr.f32.mxu0 0.0
      %v3275 = vand.u32 %v2859, 4294901760
      %3276 = vmatmul.mubr.f32.gmra.mxu0 %v3275
      %v3277 = vpop.f32.mrf.mxu0
      %v3278 = vadd.f32 %v3193, %v3277
      %v3279 = vpop.f32.mrf.mxu0
      %3280 = vmatprep.mubr.f32.mxu0 0.0
      %v3281 = vand.u32 %v2862, 4294901760
      %3282 = vmatmul.mubr.f32.gmra.mxu0 %v3281
      %v3283 = vpop.f32.mrf.mxu0
      %v3284 = vadd.f32 %v3201, %v3283
      %v3285 = vpop.f32.mrf.mxu0
      %3286 = vdwg.mxu0
      %3287 = vmatprep.subr.mxu0 0.0
      %3288 = vmatpush1.msra.mxu0 0.0
      %3289 = vmatprep.subr.mxu0 0.0
      %3290 = vmatpush1.msra.mxu0 0.0
      %3291 = vmatprep.subr.mxu0 0.0
      %3292 = vmatpush1.msra.mxu0 0.0
      %3293 = vmatprep.subr.mxu0 0.0
      %3294 = vmatpush1.msra.mxu0 0.0
      %3295 = vmatprep.subr.mxu0 0.0
      %3296 = vmatpush1.msra.mxu0 0.0
      %3297 = vmatprep.subr.mxu0 0.0
      %3298 = vmatpush1.msra.mxu0 0.0
      %3299 = vmatprep.subr.mxu0 0.0
      %3300 = vmatpush1.msra.mxu0 0.0
      %3301 = vmatprep.subr.mxu0 0.0
      %3302 = vmatpush1.msra.mxu0 0.0
      %3303 = vmatprep.subr.mxu0 0.0
      %3304 = vmatpush1.msra.mxu0 0.0
      %3305 = vmatprep.subr.mxu0 0.0
      %3306 = vmatpush1.msra.mxu0 0.0
      %3307 = vmatprep.subr.mxu0 0.0
      %3308 = vmatpush1.msra.mxu0 0.0
      %3309 = vmatprep.subr.mxu0 0.0
      %3310 = vmatpush1.msra.mxu0 0.0
      %3311 = vmatprep.subr.mxu0 0.0
      %3312 = vmatpush1.msra.mxu0 0.0
      %3313 = vmatprep.subr.mxu0 0.0
      %3314 = vmatpush1.msra.mxu0 0.0
      %3315 = vmatprep.subr.mxu0 0.0
      %v3316 = vand.u32 %v264, 4294901760
      %3317 = vmatpush1.msra.mxu0 %v3316
      %3318 = vmatprep.subr.mxu0 0.0
      %v3319 = vand.u32 %v263, 4294901760
      %3320 = vmatpush1.msra.mxu0 %v3319
      %3321 = vmatprep.subr.mxu0 0.0
      %3322 = vmatpush2.msra.mxu0 0.0
      %3323 = vmatprep.subr.mxu0 0.0
      %3324 = vmatpush2.msra.mxu0 0.0
      %3325 = vmatprep.subr.mxu0 0.0
      %3326 = vmatpush2.msra.mxu0 0.0
      %3327 = vmatprep.subr.mxu0 0.0
      %3328 = vmatpush2.msra.mxu0 0.0
      %3329 = vmatprep.subr.mxu0 0.0
      %3330 = vmatpush2.msra.mxu0 0.0
      %3331 = vmatprep.subr.mxu0 0.0
      %3332 = vmatpush2.msra.mxu0 0.0
      %3333 = vmatprep.subr.mxu0 0.0
      %3334 = vmatpush2.msra.mxu0 0.0
      %3335 = vmatprep.subr.mxu0 0.0
      %3336 = vmatpush2.msra.mxu0 0.0
      %3337 = vmatprep.subr.mxu0 0.0
      %3338 = vmatpush2.msra.mxu0 0.0
      %3339 = vmatprep.subr.mxu0 0.0
      %3340 = vmatpush2.msra.mxu0 0.0
      %3341 = vmatprep.subr.mxu0 0.0
      %3342 = vmatpush2.msra.mxu0 0.0
      %3343 = vmatprep.subr.mxu0 0.0
      %3344 = vmatpush2.msra.mxu0 0.0
      %3345 = vmatprep.subr.mxu0 0.0
      %3346 = vmatpush2.msra.mxu0 0.0
      %3347 = vmatprep.subr.mxu0 0.0
      %3348 = vmatpush2.msra.mxu0 0.0
      %3349 = vmatprep.subr.mxu0 0.0
      %3350 = vmatpush2.msra.mxu0 0.0
      %3351 = vmatprep.subr.mxu0 0.0
      %3352 = vmatpush2.msra.mxu0 0.0
      %3353 = vmatprep.mubr.f32.mxu0 0.0
      %v3354 = vand.u32 %v2859, 4294901760
      %3355 = vmatmul.mubr.f32.gmra.mxu0 %v3354
      %v3356 = vpop.f32.mrf.mxu0
      %v3357 = vadd.f32 %v3278, %v3356
      %v3358 = vpop.f32.mrf.mxu0
      %3359 = vmatprep.mubr.f32.mxu0 0.0
      %v3360 = vand.u32 %v2862, 4294901760
      %3361 = vmatmul.mubr.f32.gmra.mxu0 %v3360
      %v3362 = vpop.f32.mrf.mxu0
      %v3363 = vadd.f32 %v3284, %v3362
      %v3364 = vpop.f32.mrf.mxu0
      %3365 = vdwg.mxu0
      %v3367 = vsel %vm317, %v297, 0
      %v3370 = vsel %vm317, %v298, 0
      %3372 = vmatprep.subr.mxu0 0.0
      %3373 = vmatpush1.msra.mxu0 0.0
      %3374 = vmatprep.subr.mxu0 0.0
      %3375 = vmatpush1.msra.mxu0 0.0
      %3376 = vmatprep.subr.mxu0 0.0
      %3377 = vmatpush1.msra.mxu0 0.0
      %3378 = vmatprep.subr.mxu0 0.0
      %3379 = vmatpush1.msra.mxu0 0.0
      %3380 = vmatprep.subr.mxu0 0.0
      %3381 = vmatpush1.msra.mxu0 0.0
      %3382 = vmatprep.subr.mxu0 0.0
      %3383 = vmatpush1.msra.mxu0 0.0
      %3384 = vmatprep.subr.mxu0 0.0
      %3385 = vmatpush1.msra.mxu0 0.0
      %3386 = vmatprep.subr.mxu0 0.0
      %3387 = vmatpush1.msra.mxu0 0.0
      %3388 = vmatprep.subr.mxu0 0.0
      %3389 = vmatpush1.msra.mxu0 0.0
      %3390 = vmatprep.subr.mxu0 0.0
      %3391 = vmatpush1.msra.mxu0 0.0
      %3392 = vmatprep.subr.mxu0 0.0
      %3393 = vmatpush1.msra.mxu0 0.0
      %3394 = vmatprep.subr.mxu0 0.0
      %3395 = vmatpush1.msra.mxu0 0.0
      %3396 = vmatprep.subr.mxu0 0.0
      %3397 = vmatpush1.msra.mxu0 0.0
      %3398 = vmatprep.subr.mxu0 0.0
      %3399 = vmatpush1.msra.mxu0 0.0
      %3400 = vmatprep.subr.mxu0 0.0
      %v3401 = vand.u32 %v266, 4294901760
      %3402 = vmatpush1.msra.mxu0 %v3401
      %3403 = vmatprep.subr.mxu0 0.0
      %v3404 = vand.u32 %v265, 4294901760
      %3405 = vmatpush1.msra.mxu0 %v3404
      %3406 = vmatprep.subr.mxu0 0.0
      %3407 = vmatpush2.msra.mxu0 0.0
      %3408 = vmatprep.subr.mxu0 0.0
      %3409 = vmatpush2.msra.mxu0 0.0
      %3410 = vmatprep.subr.mxu0 0.0
      %3411 = vmatpush2.msra.mxu0 0.0
      %3412 = vmatprep.subr.mxu0 0.0
      %3413 = vmatpush2.msra.mxu0 0.0
      %3414 = vmatprep.subr.mxu0 0.0
      %3415 = vmatpush2.msra.mxu0 0.0
      %3416 = vmatprep.subr.mxu0 0.0
      %3417 = vmatpush2.msra.mxu0 0.0
      %3418 = vmatprep.subr.mxu0 0.0
      %3419 = vmatpush2.msra.mxu0 0.0
      %3420 = vmatprep.subr.mxu0 0.0
      %3421 = vmatpush2.msra.mxu0 0.0
      %3422 = vmatprep.subr.mxu0 0.0
      %3423 = vmatpush2.msra.mxu0 0.0
      %3424 = vmatprep.subr.mxu0 0.0
      %3425 = vmatpush2.msra.mxu0 0.0
      %3426 = vmatprep.subr.mxu0 0.0
      %3427 = vmatpush2.msra.mxu0 0.0
      %3428 = vmatprep.subr.mxu0 0.0
      %3429 = vmatpush2.msra.mxu0 0.0
      %3430 = vmatprep.subr.mxu0 0.0
      %3431 = vmatpush2.msra.mxu0 0.0
      %3432 = vmatprep.subr.mxu0 0.0
      %3433 = vmatpush2.msra.mxu0 0.0
      %3434 = vmatprep.subr.mxu0 0.0
      %3435 = vmatpush2.msra.mxu0 0.0
      %3436 = vmatprep.subr.mxu0 0.0
      %3437 = vmatpush2.msra.mxu0 0.0
      %3438 = vmatprep.mubr.f32.mxu0 0.0
      %v3439 = vand.u32 %v3367, 4294901760
      %v3440 = vsub.f32 %v3367, %v3439
      %v3441 = vand.u32 %v3440, 4294901760
      %v3442 = vsub.f32 %v3440, %v3441
      %v3443 = vand.u32 %v3442, 4294901760
      %3444 = vmatmul.mubr.f32.gmra.mxu0 %v3443
      %v3445 = vpop.f32.mrf.mxu0
      %v3446 = vadd.f32 0.0, %v3445
      %v3447 = vpop.f32.mrf.mxu0
      %3448 = vmatprep.mubr.f32.mxu0 0.0
      %v3449 = vand.u32 %v3370, 4294901760
      %v3450 = vsub.f32 %v3370, %v3449
      %v3451 = vand.u32 %v3450, 4294901760
      %v3452 = vsub.f32 %v3450, %v3451
      %v3453 = vand.u32 %v3452, 4294901760
      %3454 = vmatmul.mubr.f32.gmra.mxu0 %v3453
      %v3455 = vpop.f32.mrf.mxu0
      %v3456 = vadd.f32 0.0, %v3455
      %v3457 = vpop.f32.mrf.mxu0
      %3458 = vdwg.mxu0
      %3459 = vmatprep.subr.mxu0 0.0
      %3460 = vmatpush1.msra.mxu0 0.0
      %3461 = vmatprep.subr.mxu0 0.0
      %3462 = vmatpush1.msra.mxu0 0.0
      %3463 = vmatprep.subr.mxu0 0.0
      %3464 = vmatpush1.msra.mxu0 0.0
      %3465 = vmatprep.subr.mxu0 0.0
      %3466 = vmatpush1.msra.mxu0 0.0
      %3467 = vmatprep.subr.mxu0 0.0
      %3468 = vmatpush1.msra.mxu0 0.0
      %3469 = vmatprep.subr.mxu0 0.0
      %3470 = vmatpush1.msra.mxu0 0.0
      %3471 = vmatprep.subr.mxu0 0.0
      %3472 = vmatpush1.msra.mxu0 0.0
      %3473 = vmatprep.subr.mxu0 0.0
      %3474 = vmatpush1.msra.mxu0 0.0
      %3475 = vmatprep.subr.mxu0 0.0
      %3476 = vmatpush1.msra.mxu0 0.0
      %3477 = vmatprep.subr.mxu0 0.0
      %3478 = vmatpush1.msra.mxu0 0.0
      %3479 = vmatprep.subr.mxu0 0.0
      %3480 = vmatpush1.msra.mxu0 0.0
      %3481 = vmatprep.subr.mxu0 0.0
      %3482 = vmatpush1.msra.mxu0 0.0
      %3483 = vmatprep.subr.mxu0 0.0
      %3484 = vmatpush1.msra.mxu0 0.0
      %3485 = vmatprep.subr.mxu0 0.0
      %3486 = vmatpush1.msra.mxu0 0.0
      %3487 = vmatprep.subr.mxu0 0.0
      %v3488 = vand.u32 %v266, 4294901760
      %v3489 = vsub.f32 %v266, %v3488
      %v3490 = vand.u32 %v3489, 4294901760
      %v3491 = vsub.f32 %v3489, %v3490
      %v3492 = vand.u32 %v3491, 4294901760
      %3493 = vmatpush1.msra.mxu0 %v3492
      %3494 = vmatprep.subr.mxu0 0.0
      %v3495 = vand.u32 %v265, 4294901760
      %v3496 = vsub.f32 %v265, %v3495
      %v3497 = vand.u32 %v3496, 4294901760
      %v3498 = vsub.f32 %v3496, %v3497
      %v3499 = vand.u32 %v3498, 4294901760
      %3500 = vmatpush1.msra.mxu0 %v3499
      %3501 = vmatprep.subr.mxu0 0.0
      %3502 = vmatpush2.msra.mxu0 0.0
      %3503 = vmatprep.subr.mxu0 0.0
      %3504 = vmatpush2.msra.mxu0 0.0
      %3505 = vmatprep.subr.mxu0 0.0
      %3506 = vmatpush2.msra.mxu0 0.0
      %3507 = vmatprep.subr.mxu0 0.0
      %3508 = vmatpush2.msra.mxu0 0.0
      %3509 = vmatprep.subr.mxu0 0.0
      %3510 = vmatpush2.msra.mxu0 0.0
      %3511 = vmatprep.subr.mxu0 0.0
      %3512 = vmatpush2.msra.mxu0 0.0
      %3513 = vmatprep.subr.mxu0 0.0
      %3514 = vmatpush2.msra.mxu0 0.0
      %3515 = vmatprep.subr.mxu0 0.0
      %3516 = vmatpush2.msra.mxu0 0.0
      %3517 = vmatprep.subr.mxu0 0.0
      %3518 = vmatpush2.msra.mxu0 0.0
      %3519 = vmatprep.subr.mxu0 0.0
      %3520 = vmatpush2.msra.mxu0 0.0
      %3521 = vmatprep.subr.mxu0 0.0
      %3522 = vmatpush2.msra.mxu0 0.0
      %3523 = vmatprep.subr.mxu0 0.0
      %3524 = vmatpush2.msra.mxu0 0.0
      %3525 = vmatprep.subr.mxu0 0.0
      %3526 = vmatpush2.msra.mxu0 0.0
      %3527 = vmatprep.subr.mxu0 0.0
      %3528 = vmatpush2.msra.mxu0 0.0
      %3529 = vmatprep.subr.mxu0 0.0
      %3530 = vmatpush2.msra.mxu0 0.0
      %3531 = vmatprep.subr.mxu0 0.0
      %3532 = vmatpush2.msra.mxu0 0.0
      %3533 = vmatprep.mubr.f32.mxu0 0.0
      %v3534 = vand.u32 %v3367, 4294901760
      %3535 = vmatmul.mubr.f32.gmra.mxu0 %v3534
      %v3536 = vpop.f32.mrf.mxu0
      %v3537 = vadd.f32 %v3446, %v3536
      %v3538 = vpop.f32.mrf.mxu0
      %3539 = vmatprep.mubr.f32.mxu0 0.0
      %v3540 = vand.u32 %v3370, 4294901760
      %3541 = vmatmul.mubr.f32.gmra.mxu0 %v3540
      %v3542 = vpop.f32.mrf.mxu0
      %v3543 = vadd.f32 %v3456, %v3542
      %v3544 = vpop.f32.mrf.mxu0
      %3545 = vdwg.mxu0
      %3546 = vmatprep.subr.mxu0 0.0
      %3547 = vmatpush1.msra.mxu0 0.0
      %3548 = vmatprep.subr.mxu0 0.0
      %3549 = vmatpush1.msra.mxu0 0.0
      %3550 = vmatprep.subr.mxu0 0.0
      %3551 = vmatpush1.msra.mxu0 0.0
      %3552 = vmatprep.subr.mxu0 0.0
      %3553 = vmatpush1.msra.mxu0 0.0
      %3554 = vmatprep.subr.mxu0 0.0
      %3555 = vmatpush1.msra.mxu0 0.0
      %3556 = vmatprep.subr.mxu0 0.0
      %3557 = vmatpush1.msra.mxu0 0.0
      %3558 = vmatprep.subr.mxu0 0.0
      %3559 = vmatpush1.msra.mxu0 0.0
      %3560 = vmatprep.subr.mxu0 0.0
      %3561 = vmatpush1.msra.mxu0 0.0
      %3562 = vmatprep.subr.mxu0 0.0
      %3563 = vmatpush1.msra.mxu0 0.0
      %3564 = vmatprep.subr.mxu0 0.0
      %3565 = vmatpush1.msra.mxu0 0.0
      %3566 = vmatprep.subr.mxu0 0.0
      %3567 = vmatpush1.msra.mxu0 0.0
      %3568 = vmatprep.subr.mxu0 0.0
      %3569 = vmatpush1.msra.mxu0 0.0
      %3570 = vmatprep.subr.mxu0 0.0
      %3571 = vmatpush1.msra.mxu0 0.0
      %3572 = vmatprep.subr.mxu0 0.0
      %3573 = vmatpush1.msra.mxu0 0.0
      %3574 = vmatprep.subr.mxu0 0.0
      %v3575 = vand.u32 %v266, 4294901760
      %v3576 = vsub.f32 %v266, %v3575
      %3577 = vmatpush1.msra.mxu0 %v3576
      %3578 = vmatprep.subr.mxu0 0.0
      %v3579 = vand.u32 %v265, 4294901760
      %v3580 = vsub.f32 %v265, %v3579
      %3581 = vmatpush1.msra.mxu0 %v3580
      %3582 = vmatprep.subr.mxu0 0.0
      %3583 = vmatpush2.msra.mxu0 0.0
      %3584 = vmatprep.subr.mxu0 0.0
      %3585 = vmatpush2.msra.mxu0 0.0
      %3586 = vmatprep.subr.mxu0 0.0
      %3587 = vmatpush2.msra.mxu0 0.0
      %3588 = vmatprep.subr.mxu0 0.0
      %3589 = vmatpush2.msra.mxu0 0.0
      %3590 = vmatprep.subr.mxu0 0.0
      %3591 = vmatpush2.msra.mxu0 0.0
      %3592 = vmatprep.subr.mxu0 0.0
      %3593 = vmatpush2.msra.mxu0 0.0
      %3594 = vmatprep.subr.mxu0 0.0
      %3595 = vmatpush2.msra.mxu0 0.0
      %3596 = vmatprep.subr.mxu0 0.0
      %3597 = vmatpush2.msra.mxu0 0.0
      %3598 = vmatprep.subr.mxu0 0.0
      %3599 = vmatpush2.msra.mxu0 0.0
      %3600 = vmatprep.subr.mxu0 0.0
      %3601 = vmatpush2.msra.mxu0 0.0
      %3602 = vmatprep.subr.mxu0 0.0
      %3603 = vmatpush2.msra.mxu0 0.0
      %3604 = vmatprep.subr.mxu0 0.0
      %3605 = vmatpush2.msra.mxu0 0.0
      %3606 = vmatprep.subr.mxu0 0.0
      %3607 = vmatpush2.msra.mxu0 0.0
      %3608 = vmatprep.subr.mxu0 0.0
      %3609 = vmatpush2.msra.mxu0 0.0
      %3610 = vmatprep.subr.mxu0 0.0
      %3611 = vmatpush2.msra.mxu0 0.0
      %3612 = vmatprep.subr.mxu0 0.0
      %3613 = vmatpush2.msra.mxu0 0.0
      %3614 = vmatprep.mubr.f32.mxu0 0.0
      %v3615 = vand.u32 %v3367, 4294901760
      %v3616 = vsub.f32 %v3367, %v3615
      %3617 = vmatmul.mubr.f32.gmra.mxu0 %v3616
      %v3618 = vpop.f32.mrf.mxu0
      %v3619 = vadd.f32 %v3537, %v3618
      %v3620 = vpop.f32.mrf.mxu0
      %3621 = vmatprep.mubr.f32.mxu0 0.0
      %v3622 = vand.u32 %v3370, 4294901760
      %v3623 = vsub.f32 %v3370, %v3622
      %3624 = vmatmul.mubr.f32.gmra.mxu0 %v3623
      %v3625 = vpop.f32.mrf.mxu0
      %v3626 = vadd.f32 %v3543, %v3625
      %v3627 = vpop.f32.mrf.mxu0
      %3628 = vdwg.mxu0
      %3629 = vmatprep.subr.mxu0 0.0
      %3630 = vmatpush1.msra.mxu0 0.0
      %3631 = vmatprep.subr.mxu0 0.0
      %3632 = vmatpush1.msra.mxu0 0.0
      %3633 = vmatprep.subr.mxu0 0.0
      %3634 = vmatpush1.msra.mxu0 0.0
      %3635 = vmatprep.subr.mxu0 0.0
      %3636 = vmatpush1.msra.mxu0 0.0
      %3637 = vmatprep.subr.mxu0 0.0
      %3638 = vmatpush1.msra.mxu0 0.0
      %3639 = vmatprep.subr.mxu0 0.0
      %3640 = vmatpush1.msra.mxu0 0.0
      %3641 = vmatprep.subr.mxu0 0.0
      %3642 = vmatpush1.msra.mxu0 0.0
      %3643 = vmatprep.subr.mxu0 0.0
      %3644 = vmatpush1.msra.mxu0 0.0
      %3645 = vmatprep.subr.mxu0 0.0
      %3646 = vmatpush1.msra.mxu0 0.0
      %3647 = vmatprep.subr.mxu0 0.0
      %3648 = vmatpush1.msra.mxu0 0.0
      %3649 = vmatprep.subr.mxu0 0.0
      %3650 = vmatpush1.msra.mxu0 0.0
      %3651 = vmatprep.subr.mxu0 0.0
      %3652 = vmatpush1.msra.mxu0 0.0
      %3653 = vmatprep.subr.mxu0 0.0
      %3654 = vmatpush1.msra.mxu0 0.0
      %3655 = vmatprep.subr.mxu0 0.0
      %3656 = vmatpush1.msra.mxu0 0.0
      %3657 = vmatprep.subr.mxu0 0.0
      %v3658 = vand.u32 %v266, 4294901760
      %3659 = vmatpush1.msra.mxu0 %v3658
      %3660 = vmatprep.subr.mxu0 0.0
      %v3661 = vand.u32 %v265, 4294901760
      %3662 = vmatpush1.msra.mxu0 %v3661
      %3663 = vmatprep.subr.mxu0 0.0
      %3664 = vmatpush2.msra.mxu0 0.0
      %3665 = vmatprep.subr.mxu0 0.0
      %3666 = vmatpush2.msra.mxu0 0.0
      %3667 = vmatprep.subr.mxu0 0.0
      %3668 = vmatpush2.msra.mxu0 0.0
      %3669 = vmatprep.subr.mxu0 0.0
      %3670 = vmatpush2.msra.mxu0 0.0
      %3671 = vmatprep.subr.mxu0 0.0
      %3672 = vmatpush2.msra.mxu0 0.0
      %3673 = vmatprep.subr.mxu0 0.0
      %3674 = vmatpush2.msra.mxu0 0.0
      %3675 = vmatprep.subr.mxu0 0.0
      %3676 = vmatpush2.msra.mxu0 0.0
      %3677 = vmatprep.subr.mxu0 0.0
      %3678 = vmatpush2.msra.mxu0 0.0
      %3679 = vmatprep.subr.mxu0 0.0
      %3680 = vmatpush2.msra.mxu0 0.0
      %3681 = vmatprep.subr.mxu0 0.0
      %3682 = vmatpush2.msra.mxu0 0.0
      %3683 = vmatprep.subr.mxu0 0.0
      %3684 = vmatpush2.msra.mxu0 0.0
      %3685 = vmatprep.subr.mxu0 0.0
      %3686 = vmatpush2.msra.mxu0 0.0
      %3687 = vmatprep.subr.mxu0 0.0
      %3688 = vmatpush2.msra.mxu0 0.0
      %3689 = vmatprep.subr.mxu0 0.0
      %3690 = vmatpush2.msra.mxu0 0.0
      %3691 = vmatprep.subr.mxu0 0.0
      %3692 = vmatpush2.msra.mxu0 0.0
      %3693 = vmatprep.subr.mxu0 0.0
      %3694 = vmatpush2.msra.mxu0 0.0
      %3695 = vmatprep.mubr.f32.mxu0 0.0
      %v3696 = vand.u32 %v3367, 4294901760
      %v3697 = vsub.f32 %v3367, %v3696
      %v3698 = vand.u32 %v3697, 4294901760
      %3699 = vmatmul.mubr.f32.gmra.mxu0 %v3698
      %v3700 = vpop.f32.mrf.mxu0
      %v3701 = vadd.f32 %v3619, %v3700
      %v3702 = vpop.f32.mrf.mxu0
      %3703 = vmatprep.mubr.f32.mxu0 0.0
      %v3704 = vand.u32 %v3370, 4294901760
      %v3705 = vsub.f32 %v3370, %v3704
      %v3706 = vand.u32 %v3705, 4294901760
      %3707 = vmatmul.mubr.f32.gmra.mxu0 %v3706
      %v3708 = vpop.f32.mrf.mxu0
      %v3709 = vadd.f32 %v3626, %v3708
      %v3710 = vpop.f32.mrf.mxu0
      %3711 = vdwg.mxu0
      %3712 = vmatprep.subr.mxu0 0.0
      %3713 = vmatpush1.msra.mxu0 0.0
      %3714 = vmatprep.subr.mxu0 0.0
      %3715 = vmatpush1.msra.mxu0 0.0
      %3716 = vmatprep.subr.mxu0 0.0
      %3717 = vmatpush1.msra.mxu0 0.0
      %3718 = vmatprep.subr.mxu0 0.0
      %3719 = vmatpush1.msra.mxu0 0.0
      %3720 = vmatprep.subr.mxu0 0.0
      %3721 = vmatpush1.msra.mxu0 0.0
      %3722 = vmatprep.subr.mxu0 0.0
      %3723 = vmatpush1.msra.mxu0 0.0
      %3724 = vmatprep.subr.mxu0 0.0
      %3725 = vmatpush1.msra.mxu0 0.0
      %3726 = vmatprep.subr.mxu0 0.0
      %3727 = vmatpush1.msra.mxu0 0.0
      %3728 = vmatprep.subr.mxu0 0.0
      %3729 = vmatpush1.msra.mxu0 0.0
      %3730 = vmatprep.subr.mxu0 0.0
      %3731 = vmatpush1.msra.mxu0 0.0
      %3732 = vmatprep.subr.mxu0 0.0
      %3733 = vmatpush1.msra.mxu0 0.0
      %3734 = vmatprep.subr.mxu0 0.0
      %3735 = vmatpush1.msra.mxu0 0.0
      %3736 = vmatprep.subr.mxu0 0.0
      %3737 = vmatpush1.msra.mxu0 0.0
      %3738 = vmatprep.subr.mxu0 0.0
      %3739 = vmatpush1.msra.mxu0 0.0
      %3740 = vmatprep.subr.mxu0 0.0
      %v3741 = vand.u32 %v266, 4294901760
      %v3742 = vsub.f32 %v266, %v3741
      %v3743 = vand.u32 %v3742, 4294901760
      %3744 = vmatpush1.msra.mxu0 %v3743
      %3745 = vmatprep.subr.mxu0 0.0
      %v3746 = vand.u32 %v265, 4294901760
      %v3747 = vsub.f32 %v265, %v3746
      %v3748 = vand.u32 %v3747, 4294901760
      %3749 = vmatpush1.msra.mxu0 %v3748
      %3750 = vmatprep.subr.mxu0 0.0
      %3751 = vmatpush2.msra.mxu0 0.0
      %3752 = vmatprep.subr.mxu0 0.0
      %3753 = vmatpush2.msra.mxu0 0.0
      %3754 = vmatprep.subr.mxu0 0.0
      %3755 = vmatpush2.msra.mxu0 0.0
      %3756 = vmatprep.subr.mxu0 0.0
      %3757 = vmatpush2.msra.mxu0 0.0
      %3758 = vmatprep.subr.mxu0 0.0
      %3759 = vmatpush2.msra.mxu0 0.0
      %3760 = vmatprep.subr.mxu0 0.0
      %3761 = vmatpush2.msra.mxu0 0.0
      %3762 = vmatprep.subr.mxu0 0.0
      %3763 = vmatpush2.msra.mxu0 0.0
      %3764 = vmatprep.subr.mxu0 0.0
      %3765 = vmatpush2.msra.mxu0 0.0
      %3766 = vmatprep.subr.mxu0 0.0
      %3767 = vmatpush2.msra.mxu0 0.0
      %3768 = vmatprep.subr.mxu0 0.0
      %3769 = vmatpush2.msra.mxu0 0.0
      %3770 = vmatprep.subr.mxu0 0.0
      %3771 = vmatpush2.msra.mxu0 0.0
      %3772 = vmatprep.subr.mxu0 0.0
      %3773 = vmatpush2.msra.mxu0 0.0
      %3774 = vmatprep.subr.mxu0 0.0
      %3775 = vmatpush2.msra.mxu0 0.0
      %3776 = vmatprep.subr.mxu0 0.0
      %3777 = vmatpush2.msra.mxu0 0.0
      %3778 = vmatprep.subr.mxu0 0.0
      %3779 = vmatpush2.msra.mxu0 0.0
      %3780 = vmatprep.subr.mxu0 0.0
      %3781 = vmatpush2.msra.mxu0 0.0
      %3782 = vmatprep.mubr.f32.mxu0 0.0
      %v3783 = vand.u32 %v3367, 4294901760
      %3784 = vmatmul.mubr.f32.gmra.mxu0 %v3783
      %v3785 = vpop.f32.mrf.mxu0
      %v3786 = vadd.f32 %v3701, %v3785
      %v3787 = vpop.f32.mrf.mxu0
      %3788 = vmatprep.mubr.f32.mxu0 0.0
      %v3789 = vand.u32 %v3370, 4294901760
      %3790 = vmatmul.mubr.f32.gmra.mxu0 %v3789
      %v3791 = vpop.f32.mrf.mxu0
      %v3792 = vadd.f32 %v3709, %v3791
      %v3793 = vpop.f32.mrf.mxu0
      %3794 = vdwg.mxu0
      %3795 = vmatprep.subr.mxu0 0.0
      %3796 = vmatpush1.msra.mxu0 0.0
      %3797 = vmatprep.subr.mxu0 0.0
      %3798 = vmatpush1.msra.mxu0 0.0
      %3799 = vmatprep.subr.mxu0 0.0
      %3800 = vmatpush1.msra.mxu0 0.0
      %3801 = vmatprep.subr.mxu0 0.0
      %3802 = vmatpush1.msra.mxu0 0.0
      %3803 = vmatprep.subr.mxu0 0.0
      %3804 = vmatpush1.msra.mxu0 0.0
      %3805 = vmatprep.subr.mxu0 0.0
      %3806 = vmatpush1.msra.mxu0 0.0
      %3807 = vmatprep.subr.mxu0 0.0
      %3808 = vmatpush1.msra.mxu0 0.0
      %3809 = vmatprep.subr.mxu0 0.0
      %3810 = vmatpush1.msra.mxu0 0.0
      %3811 = vmatprep.subr.mxu0 0.0
      %3812 = vmatpush1.msra.mxu0 0.0
      %3813 = vmatprep.subr.mxu0 0.0
      %3814 = vmatpush1.msra.mxu0 0.0
      %3815 = vmatprep.subr.mxu0 0.0
      %3816 = vmatpush1.msra.mxu0 0.0
      %3817 = vmatprep.subr.mxu0 0.0
      %3818 = vmatpush1.msra.mxu0 0.0
      %3819 = vmatprep.subr.mxu0 0.0
      %3820 = vmatpush1.msra.mxu0 0.0
      %3821 = vmatprep.subr.mxu0 0.0
      %3822 = vmatpush1.msra.mxu0 0.0
      %3823 = vmatprep.subr.mxu0 0.0
      %v3824 = vand.u32 %v266, 4294901760
      %3825 = vmatpush1.msra.mxu0 %v3824
      %3826 = vmatprep.subr.mxu0 0.0
      %v3827 = vand.u32 %v265, 4294901760
      %3828 = vmatpush1.msra.mxu0 %v3827
      %3829 = vmatprep.subr.mxu0 0.0
      %3830 = vmatpush2.msra.mxu0 0.0
      %3831 = vmatprep.subr.mxu0 0.0
      %3832 = vmatpush2.msra.mxu0 0.0
      %3833 = vmatprep.subr.mxu0 0.0
      %3834 = vmatpush2.msra.mxu0 0.0
      %3835 = vmatprep.subr.mxu0 0.0
      %3836 = vmatpush2.msra.mxu0 0.0
      %3837 = vmatprep.subr.mxu0 0.0
      %3838 = vmatpush2.msra.mxu0 0.0
      %3839 = vmatprep.subr.mxu0 0.0
      %3840 = vmatpush2.msra.mxu0 0.0
      %3841 = vmatprep.subr.mxu0 0.0
      %3842 = vmatpush2.msra.mxu0 0.0
      %3843 = vmatprep.subr.mxu0 0.0
      %3844 = vmatpush2.msra.mxu0 0.0
      %3845 = vmatprep.subr.mxu0 0.0
      %3846 = vmatpush2.msra.mxu0 0.0
      %3847 = vmatprep.subr.mxu0 0.0
      %3848 = vmatpush2.msra.mxu0 0.0
      %3849 = vmatprep.subr.mxu0 0.0
      %3850 = vmatpush2.msra.mxu0 0.0
      %3851 = vmatprep.subr.mxu0 0.0
      %3852 = vmatpush2.msra.mxu0 0.0
      %3853 = vmatprep.subr.mxu0 0.0
      %3854 = vmatpush2.msra.mxu0 0.0
      %3855 = vmatprep.subr.mxu0 0.0
      %3856 = vmatpush2.msra.mxu0 0.0
      %3857 = vmatprep.subr.mxu0 0.0
      %3858 = vmatpush2.msra.mxu0 0.0
      %3859 = vmatprep.subr.mxu0 0.0
      %3860 = vmatpush2.msra.mxu0 0.0
      %3861 = vmatprep.mubr.f32.mxu0 0.0
      %v3862 = vand.u32 %v3367, 4294901760
      %3863 = vmatmul.mubr.f32.gmra.mxu0 %v3862
      %v3864 = vpop.f32.mrf.mxu0
      %v3865 = vadd.f32 %v3786, %v3864
      %v3866 = vpop.f32.mrf.mxu0
      %3867 = vmatprep.mubr.f32.mxu0 0.0
      %v3868 = vand.u32 %v3370, 4294901760
      %3869 = vmatmul.mubr.f32.gmra.mxu0 %v3868
      %v3870 = vpop.f32.mrf.mxu0
      %v3871 = vadd.f32 %v3792, %v3870
      %v3872 = vpop.f32.mrf.mxu0
      %3873 = vdwg.mxu0
      %v3875 = vsel %vm317, %v299, 0
      %v3878 = vsel %vm317, %v300, 0
      %3880 = vmatprep.subr.mxu0 0.0
      %3881 = vmatpush1.msra.mxu0 0.0
      %3882 = vmatprep.subr.mxu0 0.0
      %3883 = vmatpush1.msra.mxu0 0.0
      %3884 = vmatprep.subr.mxu0 0.0
      %3885 = vmatpush1.msra.mxu0 0.0
      %3886 = vmatprep.subr.mxu0 0.0
      %3887 = vmatpush1.msra.mxu0 0.0
      %3888 = vmatprep.subr.mxu0 0.0
      %3889 = vmatpush1.msra.mxu0 0.0
      %3890 = vmatprep.subr.mxu0 0.0
      %3891 = vmatpush1.msra.mxu0 0.0
      %3892 = vmatprep.subr.mxu0 0.0
      %3893 = vmatpush1.msra.mxu0 0.0
      %3894 = vmatprep.subr.mxu0 0.0
      %3895 = vmatpush1.msra.mxu0 0.0
      %3896 = vmatprep.subr.mxu0 0.0
      %3897 = vmatpush1.msra.mxu0 0.0
      %3898 = vmatprep.subr.mxu0 0.0
      %3899 = vmatpush1.msra.mxu0 0.0
      %3900 = vmatprep.subr.mxu0 0.0
      %3901 = vmatpush1.msra.mxu0 0.0
      %3902 = vmatprep.subr.mxu0 0.0
      %3903 = vmatpush1.msra.mxu0 0.0
      %3904 = vmatprep.subr.mxu0 0.0
      %3905 = vmatpush1.msra.mxu0 0.0
      %3906 = vmatprep.subr.mxu0 0.0
      %3907 = vmatpush1.msra.mxu0 0.0
      %3908 = vmatprep.subr.mxu0 0.0
      %v3909 = vand.u32 %v268, 4294901760
      %3910 = vmatpush1.msra.mxu0 %v3909
      %3911 = vmatprep.subr.mxu0 0.0
      %v3912 = vand.u32 %v267, 4294901760
      %3913 = vmatpush1.msra.mxu0 %v3912
      %3914 = vmatprep.subr.mxu0 0.0
      %3915 = vmatpush2.msra.mxu0 0.0
      %3916 = vmatprep.subr.mxu0 0.0
      %3917 = vmatpush2.msra.mxu0 0.0
      %3918 = vmatprep.subr.mxu0 0.0
      %3919 = vmatpush2.msra.mxu0 0.0
      %3920 = vmatprep.subr.mxu0 0.0
      %3921 = vmatpush2.msra.mxu0 0.0
      %3922 = vmatprep.subr.mxu0 0.0
      %3923 = vmatpush2.msra.mxu0 0.0
      %3924 = vmatprep.subr.mxu0 0.0
      %3925 = vmatpush2.msra.mxu0 0.0
      %3926 = vmatprep.subr.mxu0 0.0
      %3927 = vmatpush2.msra.mxu0 0.0
      %3928 = vmatprep.subr.mxu0 0.0
      %3929 = vmatpush2.msra.mxu0 0.0
      %3930 = vmatprep.subr.mxu0 0.0
      %3931 = vmatpush2.msra.mxu0 0.0
      %3932 = vmatprep.subr.mxu0 0.0
      %3933 = vmatpush2.msra.mxu0 0.0
      %3934 = vmatprep.subr.mxu0 0.0
      %3935 = vmatpush2.msra.mxu0 0.0
      %3936 = vmatprep.subr.mxu0 0.0
      %3937 = vmatpush2.msra.mxu0 0.0
      %3938 = vmatprep.subr.mxu0 0.0
      %3939 = vmatpush2.msra.mxu0 0.0
      %3940 = vmatprep.subr.mxu0 0.0
      %3941 = vmatpush2.msra.mxu0 0.0
      %3942 = vmatprep.subr.mxu0 0.0
      %3943 = vmatpush2.msra.mxu0 0.0
      %3944 = vmatprep.subr.mxu0 0.0
      %3945 = vmatpush2.msra.mxu0 0.0
      %3946 = vmatprep.mubr.f32.mxu0 0.0
      %v3947 = vand.u32 %v3875, 4294901760
      %v3948 = vsub.f32 %v3875, %v3947
      %v3949 = vand.u32 %v3948, 4294901760
      %v3950 = vsub.f32 %v3948, %v3949
      %v3951 = vand.u32 %v3950, 4294901760
      %3952 = vmatmul.mubr.f32.gmra.mxu0 %v3951
      %v3953 = vpop.f32.mrf.mxu0
      %v3954 = vadd.f32 0.0, %v3953
      %v3955 = vpop.f32.mrf.mxu0
      %3956 = vmatprep.mubr.f32.mxu0 0.0
      %v3957 = vand.u32 %v3878, 4294901760
      %v3958 = vsub.f32 %v3878, %v3957
      %v3959 = vand.u32 %v3958, 4294901760
      %v3960 = vsub.f32 %v3958, %v3959
      %v3961 = vand.u32 %v3960, 4294901760
      %3962 = vmatmul.mubr.f32.gmra.mxu0 %v3961
      %v3963 = vpop.f32.mrf.mxu0
      %v3964 = vadd.f32 0.0, %v3963
      %v3965 = vpop.f32.mrf.mxu0
      %3966 = vdwg.mxu0
      %3967 = vmatprep.subr.mxu0 0.0
      %3968 = vmatpush1.msra.mxu0 0.0
      %3969 = vmatprep.subr.mxu0 0.0
      %3970 = vmatpush1.msra.mxu0 0.0
      %3971 = vmatprep.subr.mxu0 0.0
      %3972 = vmatpush1.msra.mxu0 0.0
      %3973 = vmatprep.subr.mxu0 0.0
      %3974 = vmatpush1.msra.mxu0 0.0
      %3975 = vmatprep.subr.mxu0 0.0
      %3976 = vmatpush1.msra.mxu0 0.0
      %3977 = vmatprep.subr.mxu0 0.0
      %3978 = vmatpush1.msra.mxu0 0.0
      %3979 = vmatprep.subr.mxu0 0.0
      %3980 = vmatpush1.msra.mxu0 0.0
      %3981 = vmatprep.subr.mxu0 0.0
      %3982 = vmatpush1.msra.mxu0 0.0
      %3983 = vmatprep.subr.mxu0 0.0
      %3984 = vmatpush1.msra.mxu0 0.0
      %3985 = vmatprep.subr.mxu0 0.0
      %3986 = vmatpush1.msra.mxu0 0.0
      %3987 = vmatprep.subr.mxu0 0.0
      %3988 = vmatpush1.msra.mxu0 0.0
      %3989 = vmatprep.subr.mxu0 0.0
      %3990 = vmatpush1.msra.mxu0 0.0
      %3991 = vmatprep.subr.mxu0 0.0
      %3992 = vmatpush1.msra.mxu0 0.0
      %3993 = vmatprep.subr.mxu0 0.0
      %3994 = vmatpush1.msra.mxu0 0.0
      %3995 = vmatprep.subr.mxu0 0.0
      %v3996 = vand.u32 %v268, 4294901760
      %v3997 = vsub.f32 %v268, %v3996
      %v3998 = vand.u32 %v3997, 4294901760
      %v3999 = vsub.f32 %v3997, %v3998
      %v4000 = vand.u32 %v3999, 4294901760
      %4001 = vmatpush1.msra.mxu0 %v4000
      %4002 = vmatprep.subr.mxu0 0.0
      %v4003 = vand.u32 %v267, 4294901760
      %v4004 = vsub.f32 %v267, %v4003
      %v4005 = vand.u32 %v4004, 4294901760
      %v4006 = vsub.f32 %v4004, %v4005
      %v4007 = vand.u32 %v4006, 4294901760
      %4008 = vmatpush1.msra.mxu0 %v4007
      %4009 = vmatprep.subr.mxu0 0.0
      %4010 = vmatpush2.msra.mxu0 0.0
      %4011 = vmatprep.subr.mxu0 0.0
      %4012 = vmatpush2.msra.mxu0 0.0
      %4013 = vmatprep.subr.mxu0 0.0
      %4014 = vmatpush2.msra.mxu0 0.0
      %4015 = vmatprep.subr.mxu0 0.0
      %4016 = vmatpush2.msra.mxu0 0.0
      %4017 = vmatprep.subr.mxu0 0.0
      %4018 = vmatpush2.msra.mxu0 0.0
      %4019 = vmatprep.subr.mxu0 0.0
      %4020 = vmatpush2.msra.mxu0 0.0
      %4021 = vmatprep.subr.mxu0 0.0
      %4022 = vmatpush2.msra.mxu0 0.0
      %4023 = vmatprep.subr.mxu0 0.0
      %4024 = vmatpush2.msra.mxu0 0.0
      %4025 = vmatprep.subr.mxu0 0.0
      %4026 = vmatpush2.msra.mxu0 0.0
      %4027 = vmatprep.subr.mxu0 0.0
      %4028 = vmatpush2.msra.mxu0 0.0
      %4029 = vmatprep.subr.mxu0 0.0
      %4030 = vmatpush2.msra.mxu0 0.0
      %4031 = vmatprep.subr.mxu0 0.0
      %4032 = vmatpush2.msra.mxu0 0.0
      %4033 = vmatprep.subr.mxu0 0.0
      %4034 = vmatpush2.msra.mxu0 0.0
      %4035 = vmatprep.subr.mxu0 0.0
      %4036 = vmatpush2.msra.mxu0 0.0
      %4037 = vmatprep.subr.mxu0 0.0
      %4038 = vmatpush2.msra.mxu0 0.0
      %4039 = vmatprep.subr.mxu0 0.0
      %4040 = vmatpush2.msra.mxu0 0.0
      %4041 = vmatprep.mubr.f32.mxu0 0.0
      %v4042 = vand.u32 %v3875, 4294901760
      %4043 = vmatmul.mubr.f32.gmra.mxu0 %v4042
      %v4044 = vpop.f32.mrf.mxu0
      %v4045 = vadd.f32 %v3954, %v4044
      %v4046 = vpop.f32.mrf.mxu0
      %4047 = vmatprep.mubr.f32.mxu0 0.0
      %v4048 = vand.u32 %v3878, 4294901760
      %4049 = vmatmul.mubr.f32.gmra.mxu0 %v4048
      %v4050 = vpop.f32.mrf.mxu0
      %v4051 = vadd.f32 %v3964, %v4050
      %v4052 = vpop.f32.mrf.mxu0
      %4053 = vdwg.mxu0
      %4054 = vmatprep.subr.mxu0 0.0
      %4055 = vmatpush1.msra.mxu0 0.0
      %4056 = vmatprep.subr.mxu0 0.0
      %4057 = vmatpush1.msra.mxu0 0.0
      %4058 = vmatprep.subr.mxu0 0.0
      %4059 = vmatpush1.msra.mxu0 0.0
      %4060 = vmatprep.subr.mxu0 0.0
      %4061 = vmatpush1.msra.mxu0 0.0
      %4062 = vmatprep.subr.mxu0 0.0
      %4063 = vmatpush1.msra.mxu0 0.0
      %4064 = vmatprep.subr.mxu0 0.0
      %4065 = vmatpush1.msra.mxu0 0.0
      %4066 = vmatprep.subr.mxu0 0.0
      %4067 = vmatpush1.msra.mxu0 0.0
      %4068 = vmatprep.subr.mxu0 0.0
      %4069 = vmatpush1.msra.mxu0 0.0
      %4070 = vmatprep.subr.mxu0 0.0
      %4071 = vmatpush1.msra.mxu0 0.0
      %4072 = vmatprep.subr.mxu0 0.0
      %4073 = vmatpush1.msra.mxu0 0.0
      %4074 = vmatprep.subr.mxu0 0.0
      %4075 = vmatpush1.msra.mxu0 0.0
      %4076 = vmatprep.subr.mxu0 0.0
      %4077 = vmatpush1.msra.mxu0 0.0
      %4078 = vmatprep.subr.mxu0 0.0
      %4079 = vmatpush1.msra.mxu0 0.0
      %4080 = vmatprep.subr.mxu0 0.0
      %4081 = vmatpush1.msra.mxu0 0.0
      %4082 = vmatprep.subr.mxu0 0.0
      %v4083 = vand.u32 %v268, 4294901760
      %v4084 = vsub.f32 %v268, %v4083
      %4085 = vmatpush1.msra.mxu0 %v4084
      %4086 = vmatprep.subr.mxu0 0.0
      %v4087 = vand.u32 %v267, 4294901760
      %v4088 = vsub.f32 %v267, %v4087
      %4089 = vmatpush1.msra.mxu0 %v4088
      %4090 = vmatprep.subr.mxu0 0.0
      %4091 = vmatpush2.msra.mxu0 0.0
      %4092 = vmatprep.subr.mxu0 0.0
      %4093 = vmatpush2.msra.mxu0 0.0
      %4094 = vmatprep.subr.mxu0 0.0
      %4095 = vmatpush2.msra.mxu0 0.0
      %4096 = vmatprep.subr.mxu0 0.0
      %4097 = vmatpush2.msra.mxu0 0.0
      %4098 = vmatprep.subr.mxu0 0.0
      %4099 = vmatpush2.msra.mxu0 0.0
      %4100 = vmatprep.subr.mxu0 0.0
      %4101 = vmatpush2.msra.mxu0 0.0
      %4102 = vmatprep.subr.mxu0 0.0
      %4103 = vmatpush2.msra.mxu0 0.0
      %4104 = vmatprep.subr.mxu0 0.0
      %4105 = vmatpush2.msra.mxu0 0.0
      %4106 = vmatprep.subr.mxu0 0.0
      %4107 = vmatpush2.msra.mxu0 0.0
      %4108 = vmatprep.subr.mxu0 0.0
      %4109 = vmatpush2.msra.mxu0 0.0
      %4110 = vmatprep.subr.mxu0 0.0
      %4111 = vmatpush2.msra.mxu0 0.0
      %4112 = vmatprep.subr.mxu0 0.0
      %4113 = vmatpush2.msra.mxu0 0.0
      %4114 = vmatprep.subr.mxu0 0.0
      %4115 = vmatpush2.msra.mxu0 0.0
      %4116 = vmatprep.subr.mxu0 0.0
      %4117 = vmatpush2.msra.mxu0 0.0
      %4118 = vmatprep.subr.mxu0 0.0
      %4119 = vmatpush2.msra.mxu0 0.0
      %4120 = vmatprep.subr.mxu0 0.0
      %4121 = vmatpush2.msra.mxu0 0.0
      %4122 = vmatprep.mubr.f32.mxu0 0.0
      %v4123 = vand.u32 %v3875, 4294901760
      %v4124 = vsub.f32 %v3875, %v4123
      %4125 = vmatmul.mubr.f32.gmra.mxu0 %v4124
      %v4126 = vpop.f32.mrf.mxu0
      %v4127 = vadd.f32 %v4045, %v4126
      %v4128 = vpop.f32.mrf.mxu0
      %4129 = vmatprep.mubr.f32.mxu0 0.0
      %v4130 = vand.u32 %v3878, 4294901760
      %v4131 = vsub.f32 %v3878, %v4130
      %4132 = vmatmul.mubr.f32.gmra.mxu0 %v4131
      %v4133 = vpop.f32.mrf.mxu0
      %v4134 = vadd.f32 %v4051, %v4133
      %v4135 = vpop.f32.mrf.mxu0
      %4136 = vdwg.mxu0
      %4137 = vmatprep.subr.mxu0 0.0
      %4138 = vmatpush1.msra.mxu0 0.0
      %4139 = vmatprep.subr.mxu0 0.0
      %4140 = vmatpush1.msra.mxu0 0.0
      %4141 = vmatprep.subr.mxu0 0.0
      %4142 = vmatpush1.msra.mxu0 0.0
      %4143 = vmatprep.subr.mxu0 0.0
      %4144 = vmatpush1.msra.mxu0 0.0
      %4145 = vmatprep.subr.mxu0 0.0
      %4146 = vmatpush1.msra.mxu0 0.0
      %4147 = vmatprep.subr.mxu0 0.0
      %4148 = vmatpush1.msra.mxu0 0.0
      %4149 = vmatprep.subr.mxu0 0.0
      %4150 = vmatpush1.msra.mxu0 0.0
      %4151 = vmatprep.subr.mxu0 0.0
      %4152 = vmatpush1.msra.mxu0 0.0
      %4153 = vmatprep.subr.mxu0 0.0
      %4154 = vmatpush1.msra.mxu0 0.0
      %4155 = vmatprep.subr.mxu0 0.0
      %4156 = vmatpush1.msra.mxu0 0.0
      %4157 = vmatprep.subr.mxu0 0.0
      %4158 = vmatpush1.msra.mxu0 0.0
      %4159 = vmatprep.subr.mxu0 0.0
      %4160 = vmatpush1.msra.mxu0 0.0
      %4161 = vmatprep.subr.mxu0 0.0
      %4162 = vmatpush1.msra.mxu0 0.0
      %4163 = vmatprep.subr.mxu0 0.0
      %4164 = vmatpush1.msra.mxu0 0.0
      %4165 = vmatprep.subr.mxu0 0.0
      %v4166 = vand.u32 %v268, 4294901760
      %4167 = vmatpush1.msra.mxu0 %v4166
      %4168 = vmatprep.subr.mxu0 0.0
      %v4169 = vand.u32 %v267, 4294901760
      %4170 = vmatpush1.msra.mxu0 %v4169
      %4171 = vmatprep.subr.mxu0 0.0
      %4172 = vmatpush2.msra.mxu0 0.0
      %4173 = vmatprep.subr.mxu0 0.0
      %4174 = vmatpush2.msra.mxu0 0.0
      %4175 = vmatprep.subr.mxu0 0.0
      %4176 = vmatpush2.msra.mxu0 0.0
      %4177 = vmatprep.subr.mxu0 0.0
      %4178 = vmatpush2.msra.mxu0 0.0
      %4179 = vmatprep.subr.mxu0 0.0
      %4180 = vmatpush2.msra.mxu0 0.0
      %4181 = vmatprep.subr.mxu0 0.0
      %4182 = vmatpush2.msra.mxu0 0.0
      %4183 = vmatprep.subr.mxu0 0.0
      %4184 = vmatpush2.msra.mxu0 0.0
      %4185 = vmatprep.subr.mxu0 0.0
      %4186 = vmatpush2.msra.mxu0 0.0
      %4187 = vmatprep.subr.mxu0 0.0
      %4188 = vmatpush2.msra.mxu0 0.0
      %4189 = vmatprep.subr.mxu0 0.0
      %4190 = vmatpush2.msra.mxu0 0.0
      %4191 = vmatprep.subr.mxu0 0.0
      %4192 = vmatpush2.msra.mxu0 0.0
      %4193 = vmatprep.subr.mxu0 0.0
      %4194 = vmatpush2.msra.mxu0 0.0
      %4195 = vmatprep.subr.mxu0 0.0
      %4196 = vmatpush2.msra.mxu0 0.0
      %4197 = vmatprep.subr.mxu0 0.0
      %4198 = vmatpush2.msra.mxu0 0.0
      %4199 = vmatprep.subr.mxu0 0.0
      %4200 = vmatpush2.msra.mxu0 0.0
      %4201 = vmatprep.subr.mxu0 0.0
      %4202 = vmatpush2.msra.mxu0 0.0
      %4203 = vmatprep.mubr.f32.mxu0 0.0
      %v4204 = vand.u32 %v3875, 4294901760
      %v4205 = vsub.f32 %v3875, %v4204
      %v4206 = vand.u32 %v4205, 4294901760
      %4207 = vmatmul.mubr.f32.gmra.mxu0 %v4206
      %v4208 = vpop.f32.mrf.mxu0
      %v4209 = vadd.f32 %v4127, %v4208
      %v4210 = vpop.f32.mrf.mxu0
      %4211 = vmatprep.mubr.f32.mxu0 0.0
      %v4212 = vand.u32 %v3878, 4294901760
      %v4213 = vsub.f32 %v3878, %v4212
      %v4214 = vand.u32 %v4213, 4294901760
      %4215 = vmatmul.mubr.f32.gmra.mxu0 %v4214
      %v4216 = vpop.f32.mrf.mxu0
      %v4217 = vadd.f32 %v4134, %v4216
      %v4218 = vpop.f32.mrf.mxu0
      %4219 = vdwg.mxu0
      %4220 = vmatprep.subr.mxu0 0.0
      %4221 = vmatpush1.msra.mxu0 0.0
      %4222 = vmatprep.subr.mxu0 0.0
      %4223 = vmatpush1.msra.mxu0 0.0
      %4224 = vmatprep.subr.mxu0 0.0
      %4225 = vmatpush1.msra.mxu0 0.0
      %4226 = vmatprep.subr.mxu0 0.0
      %4227 = vmatpush1.msra.mxu0 0.0
      %4228 = vmatprep.subr.mxu0 0.0
      %4229 = vmatpush1.msra.mxu0 0.0
      %4230 = vmatprep.subr.mxu0 0.0
      %4231 = vmatpush1.msra.mxu0 0.0
      %4232 = vmatprep.subr.mxu0 0.0
      %4233 = vmatpush1.msra.mxu0 0.0
      %4234 = vmatprep.subr.mxu0 0.0
      %4235 = vmatpush1.msra.mxu0 0.0
      %4236 = vmatprep.subr.mxu0 0.0
      %4237 = vmatpush1.msra.mxu0 0.0
      %4238 = vmatprep.subr.mxu0 0.0
      %4239 = vmatpush1.msra.mxu0 0.0
      %4240 = vmatprep.subr.mxu0 0.0
      %4241 = vmatpush1.msra.mxu0 0.0
      %4242 = vmatprep.subr.mxu0 0.0
      %4243 = vmatpush1.msra.mxu0 0.0
      %4244 = vmatprep.subr.mxu0 0.0
      %4245 = vmatpush1.msra.mxu0 0.0
      %4246 = vmatprep.subr.mxu0 0.0
      %4247 = vmatpush1.msra.mxu0 0.0
      %4248 = vmatprep.subr.mxu0 0.0
      %v4249 = vand.u32 %v268, 4294901760
      %v4250 = vsub.f32 %v268, %v4249
      %v4251 = vand.u32 %v4250, 4294901760
      %4252 = vmatpush1.msra.mxu0 %v4251
      %4253 = vmatprep.subr.mxu0 0.0
      %v4254 = vand.u32 %v267, 4294901760
      %v4255 = vsub.f32 %v267, %v4254
      %v4256 = vand.u32 %v4255, 4294901760
      %4257 = vmatpush1.msra.mxu0 %v4256
      %4258 = vmatprep.subr.mxu0 0.0
      %4259 = vmatpush2.msra.mxu0 0.0
      %4260 = vmatprep.subr.mxu0 0.0
      %4261 = vmatpush2.msra.mxu0 0.0
      %4262 = vmatprep.subr.mxu0 0.0
      %4263 = vmatpush2.msra.mxu0 0.0
      %4264 = vmatprep.subr.mxu0 0.0
      %4265 = vmatpush2.msra.mxu0 0.0
      %4266 = vmatprep.subr.mxu0 0.0
      %4267 = vmatpush2.msra.mxu0 0.0
      %4268 = vmatprep.subr.mxu0 0.0
      %4269 = vmatpush2.msra.mxu0 0.0
      %4270 = vmatprep.subr.mxu0 0.0
      %4271 = vmatpush2.msra.mxu0 0.0
      %4272 = vmatprep.subr.mxu0 0.0
      %4273 = vmatpush2.msra.mxu0 0.0
      %4274 = vmatprep.subr.mxu0 0.0
      %4275 = vmatpush2.msra.mxu0 0.0
      %4276 = vmatprep.subr.mxu0 0.0
      %4277 = vmatpush2.msra.mxu0 0.0
      %4278 = vmatprep.subr.mxu0 0.0
      %4279 = vmatpush2.msra.mxu0 0.0
      %4280 = vmatprep.subr.mxu0 0.0
      %4281 = vmatpush2.msra.mxu0 0.0
      %4282 = vmatprep.subr.mxu0 0.0
      %4283 = vmatpush2.msra.mxu0 0.0
      %4284 = vmatprep.subr.mxu0 0.0
      %4285 = vmatpush2.msra.mxu0 0.0
      %4286 = vmatprep.subr.mxu0 0.0
      %4287 = vmatpush2.msra.mxu0 0.0
      %4288 = vmatprep.subr.mxu0 0.0
      %4289 = vmatpush2.msra.mxu0 0.0
      %4290 = vmatprep.mubr.f32.mxu0 0.0
      %v4291 = vand.u32 %v3875, 4294901760
      %4292 = vmatmul.mubr.f32.gmra.mxu0 %v4291
      %v4293 = vpop.f32.mrf.mxu0
      %v4294 = vadd.f32 %v4209, %v4293
      %v4295 = vpop.f32.mrf.mxu0
      %4296 = vmatprep.mubr.f32.mxu0 0.0
      %v4297 = vand.u32 %v3878, 4294901760
      %4298 = vmatmul.mubr.f32.gmra.mxu0 %v4297
      %v4299 = vpop.f32.mrf.mxu0
      %v4300 = vadd.f32 %v4217, %v4299
      %v4301 = vpop.f32.mrf.mxu0
      %4302 = vdwg.mxu0
      %4303 = vmatprep.subr.mxu0 0.0
      %4304 = vmatpush1.msra.mxu0 0.0
      %4305 = vmatprep.subr.mxu0 0.0
      %4306 = vmatpush1.msra.mxu0 0.0
      %4307 = vmatprep.subr.mxu0 0.0
      %4308 = vmatpush1.msra.mxu0 0.0
      %4309 = vmatprep.subr.mxu0 0.0
      %4310 = vmatpush1.msra.mxu0 0.0
      %4311 = vmatprep.subr.mxu0 0.0
      %4312 = vmatpush1.msra.mxu0 0.0
      %4313 = vmatprep.subr.mxu0 0.0
      %4314 = vmatpush1.msra.mxu0 0.0
      %4315 = vmatprep.subr.mxu0 0.0
      %4316 = vmatpush1.msra.mxu0 0.0
      %4317 = vmatprep.subr.mxu0 0.0
      %4318 = vmatpush1.msra.mxu0 0.0
      %4319 = vmatprep.subr.mxu0 0.0
      %4320 = vmatpush1.msra.mxu0 0.0
      %4321 = vmatprep.subr.mxu0 0.0
      %4322 = vmatpush1.msra.mxu0 0.0
      %4323 = vmatprep.subr.mxu0 0.0
      %4324 = vmatpush1.msra.mxu0 0.0
      %4325 = vmatprep.subr.mxu0 0.0
      %4326 = vmatpush1.msra.mxu0 0.0
      %4327 = vmatprep.subr.mxu0 0.0
      %4328 = vmatpush1.msra.mxu0 0.0
      %4329 = vmatprep.subr.mxu0 0.0
      %4330 = vmatpush1.msra.mxu0 0.0
      %4331 = vmatprep.subr.mxu0 0.0
      %v4332 = vand.u32 %v268, 4294901760
      %4333 = vmatpush1.msra.mxu0 %v4332
      %4334 = vmatprep.subr.mxu0 0.0
      %v4335 = vand.u32 %v267, 4294901760
      %4336 = vmatpush1.msra.mxu0 %v4335
      %4337 = vmatprep.subr.mxu0 0.0
      %4338 = vmatpush2.msra.mxu0 0.0
      %4339 = vmatprep.subr.mxu0 0.0
      %4340 = vmatpush2.msra.mxu0 0.0
      %4341 = vmatprep.subr.mxu0 0.0
      %4342 = vmatpush2.msra.mxu0 0.0
      %4343 = vmatprep.subr.mxu0 0.0
      %4344 = vmatpush2.msra.mxu0 0.0
      %4345 = vmatprep.subr.mxu0 0.0
      %4346 = vmatpush2.msra.mxu0 0.0
      %4347 = vmatprep.subr.mxu0 0.0
      %4348 = vmatpush2.msra.mxu0 0.0
      %4349 = vmatprep.subr.mxu0 0.0
      %4350 = vmatpush2.msra.mxu0 0.0
      %4351 = vmatprep.subr.mxu0 0.0
      %4352 = vmatpush2.msra.mxu0 0.0
      %4353 = vmatprep.subr.mxu0 0.0
      %4354 = vmatpush2.msra.mxu0 0.0
      %4355 = vmatprep.subr.mxu0 0.0
      %4356 = vmatpush2.msra.mxu0 0.0
      %4357 = vmatprep.subr.mxu0 0.0
      %4358 = vmatpush2.msra.mxu0 0.0
      %4359 = vmatprep.subr.mxu0 0.0
      %4360 = vmatpush2.msra.mxu0 0.0
      %4361 = vmatprep.subr.mxu0 0.0
      %4362 = vmatpush2.msra.mxu0 0.0
      %4363 = vmatprep.subr.mxu0 0.0
      %4364 = vmatpush2.msra.mxu0 0.0
      %4365 = vmatprep.subr.mxu0 0.0
      %4366 = vmatpush2.msra.mxu0 0.0
      %4367 = vmatprep.subr.mxu0 0.0
      %4368 = vmatpush2.msra.mxu0 0.0
      %4369 = vmatprep.mubr.f32.mxu0 0.0
      %v4370 = vand.u32 %v3875, 4294901760
      %4371 = vmatmul.mubr.f32.gmra.mxu0 %v4370
      %v4372 = vpop.f32.mrf.mxu0
      %v4373 = vadd.f32 %v4294, %v4372
      %v4374 = vpop.f32.mrf.mxu0
      %4375 = vmatprep.mubr.f32.mxu0 0.0
      %v4376 = vand.u32 %v3878, 4294901760
      %4377 = vmatmul.mubr.f32.gmra.mxu0 %v4376
      %v4378 = vpop.f32.mrf.mxu0
      %v4379 = vadd.f32 %v4300, %v4378
      %v4380 = vpop.f32.mrf.mxu0
      %4381 = vdwg.mxu0
      %v4383 = vsel %vm317, %v301, 0
      %v4386 = vsel %vm317, %v302, 0
      %4388 = vmatprep.subr.mxu0 0.0
      %4389 = vmatpush1.msra.mxu0 0.0
      %4390 = vmatprep.subr.mxu0 0.0
      %4391 = vmatpush1.msra.mxu0 0.0
      %4392 = vmatprep.subr.mxu0 0.0
      %4393 = vmatpush1.msra.mxu0 0.0
      %4394 = vmatprep.subr.mxu0 0.0
      %4395 = vmatpush1.msra.mxu0 0.0
      %4396 = vmatprep.subr.mxu0 0.0
      %4397 = vmatpush1.msra.mxu0 0.0
      %4398 = vmatprep.subr.mxu0 0.0
      %4399 = vmatpush1.msra.mxu0 0.0
      %4400 = vmatprep.subr.mxu0 0.0
      %4401 = vmatpush1.msra.mxu0 0.0
      %4402 = vmatprep.subr.mxu0 0.0
      %4403 = vmatpush1.msra.mxu0 0.0
      %4404 = vmatprep.subr.mxu0 0.0
      %4405 = vmatpush1.msra.mxu0 0.0
      %4406 = vmatprep.subr.mxu0 0.0
      %4407 = vmatpush1.msra.mxu0 0.0
      %4408 = vmatprep.subr.mxu0 0.0
      %4409 = vmatpush1.msra.mxu0 0.0
      %4410 = vmatprep.subr.mxu0 0.0
      %4411 = vmatpush1.msra.mxu0 0.0
      %4412 = vmatprep.subr.mxu0 0.0
      %4413 = vmatpush1.msra.mxu0 0.0
      %4414 = vmatprep.subr.mxu0 0.0
      %4415 = vmatpush1.msra.mxu0 0.0
      %4416 = vmatprep.subr.mxu0 0.0
      %v4417 = vand.u32 %v270, 4294901760
      %4418 = vmatpush1.msra.mxu0 %v4417
      %4419 = vmatprep.subr.mxu0 0.0
      %v4420 = vand.u32 %v269, 4294901760
      %4421 = vmatpush1.msra.mxu0 %v4420
      %4422 = vmatprep.subr.mxu0 0.0
      %4423 = vmatpush2.msra.mxu0 0.0
      %4424 = vmatprep.subr.mxu0 0.0
      %4425 = vmatpush2.msra.mxu0 0.0
      %4426 = vmatprep.subr.mxu0 0.0
      %4427 = vmatpush2.msra.mxu0 0.0
      %4428 = vmatprep.subr.mxu0 0.0
      %4429 = vmatpush2.msra.mxu0 0.0
      %4430 = vmatprep.subr.mxu0 0.0
      %4431 = vmatpush2.msra.mxu0 0.0
      %4432 = vmatprep.subr.mxu0 0.0
      %4433 = vmatpush2.msra.mxu0 0.0
      %4434 = vmatprep.subr.mxu0 0.0
      %4435 = vmatpush2.msra.mxu0 0.0
      %4436 = vmatprep.subr.mxu0 0.0
      %4437 = vmatpush2.msra.mxu0 0.0
      %4438 = vmatprep.subr.mxu0 0.0
      %4439 = vmatpush2.msra.mxu0 0.0
      %4440 = vmatprep.subr.mxu0 0.0
      %4441 = vmatpush2.msra.mxu0 0.0
      %4442 = vmatprep.subr.mxu0 0.0
      %4443 = vmatpush2.msra.mxu0 0.0
      %4444 = vmatprep.subr.mxu0 0.0
      %4445 = vmatpush2.msra.mxu0 0.0
      %4446 = vmatprep.subr.mxu0 0.0
      %4447 = vmatpush2.msra.mxu0 0.0
      %4448 = vmatprep.subr.mxu0 0.0
      %4449 = vmatpush2.msra.mxu0 0.0
      %4450 = vmatprep.subr.mxu0 0.0
      %4451 = vmatpush2.msra.mxu0 0.0
      %4452 = vmatprep.subr.mxu0 0.0
      %4453 = vmatpush2.msra.mxu0 0.0
      %4454 = vmatprep.mubr.f32.mxu0 0.0
      %v4455 = vand.u32 %v4383, 4294901760
      %v4456 = vsub.f32 %v4383, %v4455
      %v4457 = vand.u32 %v4456, 4294901760
      %v4458 = vsub.f32 %v4456, %v4457
      %v4459 = vand.u32 %v4458, 4294901760
      %4460 = vmatmul.mubr.f32.gmra.mxu0 %v4459
      %v4461 = vpop.f32.mrf.mxu0
      %v4462 = vadd.f32 0.0, %v4461
      %v4463 = vpop.f32.mrf.mxu0
      %4464 = vmatprep.mubr.f32.mxu0 0.0
      %v4465 = vand.u32 %v4386, 4294901760
      %v4466 = vsub.f32 %v4386, %v4465
      %v4467 = vand.u32 %v4466, 4294901760
      %v4468 = vsub.f32 %v4466, %v4467
      %v4469 = vand.u32 %v4468, 4294901760
      %4470 = vmatmul.mubr.f32.gmra.mxu0 %v4469
      %v4471 = vpop.f32.mrf.mxu0
      %v4472 = vadd.f32 0.0, %v4471
      %v4473 = vpop.f32.mrf.mxu0
      %4474 = vdwg.mxu0
      %4475 = vmatprep.subr.mxu0 0.0
      %4476 = vmatpush1.msra.mxu0 0.0
      %4477 = vmatprep.subr.mxu0 0.0
      %4478 = vmatpush1.msra.mxu0 0.0
      %4479 = vmatprep.subr.mxu0 0.0
      %4480 = vmatpush1.msra.mxu0 0.0
      %4481 = vmatprep.subr.mxu0 0.0
      %4482 = vmatpush1.msra.mxu0 0.0
      %4483 = vmatprep.subr.mxu0 0.0
      %4484 = vmatpush1.msra.mxu0 0.0
      %4485 = vmatprep.subr.mxu0 0.0
      %4486 = vmatpush1.msra.mxu0 0.0
      %4487 = vmatprep.subr.mxu0 0.0
      %4488 = vmatpush1.msra.mxu0 0.0
      %4489 = vmatprep.subr.mxu0 0.0
      %4490 = vmatpush1.msra.mxu0 0.0
      %4491 = vmatprep.subr.mxu0 0.0
      %4492 = vmatpush1.msra.mxu0 0.0
      %4493 = vmatprep.subr.mxu0 0.0
      %4494 = vmatpush1.msra.mxu0 0.0
      %4495 = vmatprep.subr.mxu0 0.0
      %4496 = vmatpush1.msra.mxu0 0.0
      %4497 = vmatprep.subr.mxu0 0.0
      %4498 = vmatpush1.msra.mxu0 0.0
      %4499 = vmatprep.subr.mxu0 0.0
      %4500 = vmatpush1.msra.mxu0 0.0
      %4501 = vmatprep.subr.mxu0 0.0
      %4502 = vmatpush1.msra.mxu0 0.0
      %4503 = vmatprep.subr.mxu0 0.0
      %v4504 = vand.u32 %v270, 4294901760
      %v4505 = vsub.f32 %v270, %v4504
      %v4506 = vand.u32 %v4505, 4294901760
      %v4507 = vsub.f32 %v4505, %v4506
      %v4508 = vand.u32 %v4507, 4294901760
      %4509 = vmatpush1.msra.mxu0 %v4508
      %4510 = vmatprep.subr.mxu0 0.0
      %v4511 = vand.u32 %v269, 4294901760
      %v4512 = vsub.f32 %v269, %v4511
      %v4513 = vand.u32 %v4512, 4294901760
      %v4514 = vsub.f32 %v4512, %v4513
      %v4515 = vand.u32 %v4514, 4294901760
      %4516 = vmatpush1.msra.mxu0 %v4515
      %4517 = vmatprep.subr.mxu0 0.0
      %4518 = vmatpush2.msra.mxu0 0.0
      %4519 = vmatprep.subr.mxu0 0.0
      %4520 = vmatpush2.msra.mxu0 0.0
      %4521 = vmatprep.subr.mxu0 0.0
      %4522 = vmatpush2.msra.mxu0 0.0
      %4523 = vmatprep.subr.mxu0 0.0
      %4524 = vmatpush2.msra.mxu0 0.0
      %4525 = vmatprep.subr.mxu0 0.0
      %4526 = vmatpush2.msra.mxu0 0.0
      %4527 = vmatprep.subr.mxu0 0.0
      %4528 = vmatpush2.msra.mxu0 0.0
      %4529 = vmatprep.subr.mxu0 0.0
      %4530 = vmatpush2.msra.mxu0 0.0
      %4531 = vmatprep.subr.mxu0 0.0
      %4532 = vmatpush2.msra.mxu0 0.0
      %4533 = vmatprep.subr.mxu0 0.0
      %4534 = vmatpush2.msra.mxu0 0.0
      %4535 = vmatprep.subr.mxu0 0.0
      %4536 = vmatpush2.msra.mxu0 0.0
      %4537 = vmatprep.subr.mxu0 0.0
      %4538 = vmatpush2.msra.mxu0 0.0
      %4539 = vmatprep.subr.mxu0 0.0
      %4540 = vmatpush2.msra.mxu0 0.0
      %4541 = vmatprep.subr.mxu0 0.0
      %4542 = vmatpush2.msra.mxu0 0.0
      %4543 = vmatprep.subr.mxu0 0.0
      %4544 = vmatpush2.msra.mxu0 0.0
      %4545 = vmatprep.subr.mxu0 0.0
      %4546 = vmatpush2.msra.mxu0 0.0
      %4547 = vmatprep.subr.mxu0 0.0
      %4548 = vmatpush2.msra.mxu0 0.0
      %4549 = vmatprep.mubr.f32.mxu0 0.0
      %v4550 = vand.u32 %v4383, 4294901760
      %4551 = vmatmul.mubr.f32.gmra.mxu0 %v4550
      %v4552 = vpop.f32.mrf.mxu0
      %v4553 = vadd.f32 %v4462, %v4552
      %v4554 = vpop.f32.mrf.mxu0
      %4555 = vmatprep.mubr.f32.mxu0 0.0
      %v4556 = vand.u32 %v4386, 4294901760
      %4557 = vmatmul.mubr.f32.gmra.mxu0 %v4556
      %v4558 = vpop.f32.mrf.mxu0
      %v4559 = vadd.f32 %v4472, %v4558
      %v4560 = vpop.f32.mrf.mxu0
      %4561 = vdwg.mxu0
      %4562 = vmatprep.subr.mxu0 0.0
      %4563 = vmatpush1.msra.mxu0 0.0
      %4564 = vmatprep.subr.mxu0 0.0
      %4565 = vmatpush1.msra.mxu0 0.0
      %4566 = vmatprep.subr.mxu0 0.0
      %4567 = vmatpush1.msra.mxu0 0.0
      %4568 = vmatprep.subr.mxu0 0.0
      %4569 = vmatpush1.msra.mxu0 0.0
      %4570 = vmatprep.subr.mxu0 0.0
      %4571 = vmatpush1.msra.mxu0 0.0
      %4572 = vmatprep.subr.mxu0 0.0
      %4573 = vmatpush1.msra.mxu0 0.0
      %4574 = vmatprep.subr.mxu0 0.0
      %4575 = vmatpush1.msra.mxu0 0.0
      %4576 = vmatprep.subr.mxu0 0.0
      %4577 = vmatpush1.msra.mxu0 0.0
      %4578 = vmatprep.subr.mxu0 0.0
      %4579 = vmatpush1.msra.mxu0 0.0
      %4580 = vmatprep.subr.mxu0 0.0
      %4581 = vmatpush1.msra.mxu0 0.0
      %4582 = vmatprep.subr.mxu0 0.0
      %4583 = vmatpush1.msra.mxu0 0.0
      %4584 = vmatprep.subr.mxu0 0.0
      %4585 = vmatpush1.msra.mxu0 0.0
      %4586 = vmatprep.subr.mxu0 0.0
      %4587 = vmatpush1.msra.mxu0 0.0
      %4588 = vmatprep.subr.mxu0 0.0
      %4589 = vmatpush1.msra.mxu0 0.0
      %4590 = vmatprep.subr.mxu0 0.0
      %v4591 = vand.u32 %v270, 4294901760
      %v4592 = vsub.f32 %v270, %v4591
      %4593 = vmatpush1.msra.mxu0 %v4592
      %4594 = vmatprep.subr.mxu0 0.0
      %v4595 = vand.u32 %v269, 4294901760
      %v4596 = vsub.f32 %v269, %v4595
      %4597 = vmatpush1.msra.mxu0 %v4596
      %4598 = vmatprep.subr.mxu0 0.0
      %4599 = vmatpush2.msra.mxu0 0.0
      %4600 = vmatprep.subr.mxu0 0.0
      %4601 = vmatpush2.msra.mxu0 0.0
      %4602 = vmatprep.subr.mxu0 0.0
      %4603 = vmatpush2.msra.mxu0 0.0
      %4604 = vmatprep.subr.mxu0 0.0
      %4605 = vmatpush2.msra.mxu0 0.0
      %4606 = vmatprep.subr.mxu0 0.0
      %4607 = vmatpush2.msra.mxu0 0.0
      %4608 = vmatprep.subr.mxu0 0.0
      %4609 = vmatpush2.msra.mxu0 0.0
      %4610 = vmatprep.subr.mxu0 0.0
      %4611 = vmatpush2.msra.mxu0 0.0
      %4612 = vmatprep.subr.mxu0 0.0
      %4613 = vmatpush2.msra.mxu0 0.0
      %4614 = vmatprep.subr.mxu0 0.0
      %4615 = vmatpush2.msra.mxu0 0.0
      %4616 = vmatprep.subr.mxu0 0.0
      %4617 = vmatpush2.msra.mxu0 0.0
      %4618 = vmatprep.subr.mxu0 0.0
      %4619 = vmatpush2.msra.mxu0 0.0
      %4620 = vmatprep.subr.mxu0 0.0
      %4621 = vmatpush2.msra.mxu0 0.0
      %4622 = vmatprep.subr.mxu0 0.0
      %4623 = vmatpush2.msra.mxu0 0.0
      %4624 = vmatprep.subr.mxu0 0.0
      %4625 = vmatpush2.msra.mxu0 0.0
      %4626 = vmatprep.subr.mxu0 0.0
      %4627 = vmatpush2.msra.mxu0 0.0
      %4628 = vmatprep.subr.mxu0 0.0
      %4629 = vmatpush2.msra.mxu0 0.0
      %4630 = vmatprep.mubr.f32.mxu0 0.0
      %v4631 = vand.u32 %v4383, 4294901760
      %v4632 = vsub.f32 %v4383, %v4631
      %4633 = vmatmul.mubr.f32.gmra.mxu0 %v4632
      %v4634 = vpop.f32.mrf.mxu0
      %v4635 = vadd.f32 %v4553, %v4634
      %v4636 = vpop.f32.mrf.mxu0
      %4637 = vmatprep.mubr.f32.mxu0 0.0
      %v4638 = vand.u32 %v4386, 4294901760
      %v4639 = vsub.f32 %v4386, %v4638
      %4640 = vmatmul.mubr.f32.gmra.mxu0 %v4639
      %v4641 = vpop.f32.mrf.mxu0
      %v4642 = vadd.f32 %v4559, %v4641
      %v4643 = vpop.f32.mrf.mxu0
      %4644 = vdwg.mxu0
      %4645 = vmatprep.subr.mxu0 0.0
      %4646 = vmatpush1.msra.mxu0 0.0
      %4647 = vmatprep.subr.mxu0 0.0
      %4648 = vmatpush1.msra.mxu0 0.0
      %4649 = vmatprep.subr.mxu0 0.0
      %4650 = vmatpush1.msra.mxu0 0.0
      %4651 = vmatprep.subr.mxu0 0.0
      %4652 = vmatpush1.msra.mxu0 0.0
      %4653 = vmatprep.subr.mxu0 0.0
      %4654 = vmatpush1.msra.mxu0 0.0
      %4655 = vmatprep.subr.mxu0 0.0
      %4656 = vmatpush1.msra.mxu0 0.0
      %4657 = vmatprep.subr.mxu0 0.0
      %4658 = vmatpush1.msra.mxu0 0.0
      %4659 = vmatprep.subr.mxu0 0.0
      %4660 = vmatpush1.msra.mxu0 0.0
      %4661 = vmatprep.subr.mxu0 0.0
      %4662 = vmatpush1.msra.mxu0 0.0
      %4663 = vmatprep.subr.mxu0 0.0
      %4664 = vmatpush1.msra.mxu0 0.0
      %4665 = vmatprep.subr.mxu0 0.0
      %4666 = vmatpush1.msra.mxu0 0.0
      %4667 = vmatprep.subr.mxu0 0.0
      %4668 = vmatpush1.msra.mxu0 0.0
      %4669 = vmatprep.subr.mxu0 0.0
      %4670 = vmatpush1.msra.mxu0 0.0
      %4671 = vmatprep.subr.mxu0 0.0
      %4672 = vmatpush1.msra.mxu0 0.0
      %4673 = vmatprep.subr.mxu0 0.0
      %v4674 = vand.u32 %v270, 4294901760
      %4675 = vmatpush1.msra.mxu0 %v4674
      %4676 = vmatprep.subr.mxu0 0.0
      %v4677 = vand.u32 %v269, 4294901760
      %4678 = vmatpush1.msra.mxu0 %v4677
      %4679 = vmatprep.subr.mxu0 0.0
      %4680 = vmatpush2.msra.mxu0 0.0
      %4681 = vmatprep.subr.mxu0 0.0
      %4682 = vmatpush2.msra.mxu0 0.0
      %4683 = vmatprep.subr.mxu0 0.0
      %4684 = vmatpush2.msra.mxu0 0.0
      %4685 = vmatprep.subr.mxu0 0.0
      %4686 = vmatpush2.msra.mxu0 0.0
      %4687 = vmatprep.subr.mxu0 0.0
      %4688 = vmatpush2.msra.mxu0 0.0
      %4689 = vmatprep.subr.mxu0 0.0
      %4690 = vmatpush2.msra.mxu0 0.0
      %4691 = vmatprep.subr.mxu0 0.0
      %4692 = vmatpush2.msra.mxu0 0.0
      %4693 = vmatprep.subr.mxu0 0.0
      %4694 = vmatpush2.msra.mxu0 0.0
      %4695 = vmatprep.subr.mxu0 0.0
      %4696 = vmatpush2.msra.mxu0 0.0
      %4697 = vmatprep.subr.mxu0 0.0
      %4698 = vmatpush2.msra.mxu0 0.0
      %4699 = vmatprep.subr.mxu0 0.0
      %4700 = vmatpush2.msra.mxu0 0.0
      %4701 = vmatprep.subr.mxu0 0.0
      %4702 = vmatpush2.msra.mxu0 0.0
      %4703 = vmatprep.subr.mxu0 0.0
      %4704 = vmatpush2.msra.mxu0 0.0
      %4705 = vmatprep.subr.mxu0 0.0
      %4706 = vmatpush2.msra.mxu0 0.0
      %4707 = vmatprep.subr.mxu0 0.0
      %4708 = vmatpush2.msra.mxu0 0.0
      %4709 = vmatprep.subr.mxu0 0.0
      %4710 = vmatpush2.msra.mxu0 0.0
      %4711 = vmatprep.mubr.f32.mxu0 0.0
      %v4712 = vand.u32 %v4383, 4294901760
      %v4713 = vsub.f32 %v4383, %v4712
      %v4714 = vand.u32 %v4713, 4294901760
      %4715 = vmatmul.mubr.f32.gmra.mxu0 %v4714
      %v4716 = vpop.f32.mrf.mxu0
      %v4717 = vadd.f32 %v4635, %v4716
      %v4718 = vpop.f32.mrf.mxu0
      %4719 = vmatprep.mubr.f32.mxu0 0.0
      %v4720 = vand.u32 %v4386, 4294901760
      %v4721 = vsub.f32 %v4386, %v4720
      %v4722 = vand.u32 %v4721, 4294901760
      %4723 = vmatmul.mubr.f32.gmra.mxu0 %v4722
      %v4724 = vpop.f32.mrf.mxu0
      %v4725 = vadd.f32 %v4642, %v4724
      %v4726 = vpop.f32.mrf.mxu0
      %4727 = vdwg.mxu0
      %4728 = vmatprep.subr.mxu0 0.0
      %4729 = vmatpush1.msra.mxu0 0.0
      %4730 = vmatprep.subr.mxu0 0.0
      %4731 = vmatpush1.msra.mxu0 0.0
      %4732 = vmatprep.subr.mxu0 0.0
      %4733 = vmatpush1.msra.mxu0 0.0
      %4734 = vmatprep.subr.mxu0 0.0
      %4735 = vmatpush1.msra.mxu0 0.0
      %4736 = vmatprep.subr.mxu0 0.0
      %4737 = vmatpush1.msra.mxu0 0.0
      %4738 = vmatprep.subr.mxu0 0.0
      %4739 = vmatpush1.msra.mxu0 0.0
      %4740 = vmatprep.subr.mxu0 0.0
      %4741 = vmatpush1.msra.mxu0 0.0
      %4742 = vmatprep.subr.mxu0 0.0
      %4743 = vmatpush1.msra.mxu0 0.0
      %4744 = vmatprep.subr.mxu0 0.0
      %4745 = vmatpush1.msra.mxu0 0.0
      %4746 = vmatprep.subr.mxu0 0.0
      %4747 = vmatpush1.msra.mxu0 0.0
      %4748 = vmatprep.subr.mxu0 0.0
      %4749 = vmatpush1.msra.mxu0 0.0
      %4750 = vmatprep.subr.mxu0 0.0
      %4751 = vmatpush1.msra.mxu0 0.0
      %4752 = vmatprep.subr.mxu0 0.0
      %4753 = vmatpush1.msra.mxu0 0.0
      %4754 = vmatprep.subr.mxu0 0.0
      %4755 = vmatpush1.msra.mxu0 0.0
      %4756 = vmatprep.subr.mxu0 0.0
      %v4757 = vand.u32 %v270, 4294901760
      %v4758 = vsub.f32 %v270, %v4757
      %v4759 = vand.u32 %v4758, 4294901760
      %4760 = vmatpush1.msra.mxu0 %v4759
      %4761 = vmatprep.subr.mxu0 0.0
      %v4762 = vand.u32 %v269, 4294901760
      %v4763 = vsub.f32 %v269, %v4762
      %v4764 = vand.u32 %v4763, 4294901760
      %4765 = vmatpush1.msra.mxu0 %v4764
      %4766 = vmatprep.subr.mxu0 0.0
      %4767 = vmatpush2.msra.mxu0 0.0
      %4768 = vmatprep.subr.mxu0 0.0
      %4769 = vmatpush2.msra.mxu0 0.0
      %4770 = vmatprep.subr.mxu0 0.0
      %4771 = vmatpush2.msra.mxu0 0.0
      %4772 = vmatprep.subr.mxu0 0.0
      %4773 = vmatpush2.msra.mxu0 0.0
      %4774 = vmatprep.subr.mxu0 0.0
      %4775 = vmatpush2.msra.mxu0 0.0
      %4776 = vmatprep.subr.mxu0 0.0
      %4777 = vmatpush2.msra.mxu0 0.0
      %4778 = vmatprep.subr.mxu0 0.0
      %4779 = vmatpush2.msra.mxu0 0.0
      %4780 = vmatprep.subr.mxu0 0.0
      %4781 = vmatpush2.msra.mxu0 0.0
      %4782 = vmatprep.subr.mxu0 0.0
      %4783 = vmatpush2.msra.mxu0 0.0
      %4784 = vmatprep.subr.mxu0 0.0
      %4785 = vmatpush2.msra.mxu0 0.0
      %4786 = vmatprep.subr.mxu0 0.0
      %4787 = vmatpush2.msra.mxu0 0.0
      %4788 = vmatprep.subr.mxu0 0.0
      %4789 = vmatpush2.msra.mxu0 0.0
      %4790 = vmatprep.subr.mxu0 0.0
      %4791 = vmatpush2.msra.mxu0 0.0
      %4792 = vmatprep.subr.mxu0 0.0
      %4793 = vmatpush2.msra.mxu0 0.0
      %4794 = vmatprep.subr.mxu0 0.0
      %4795 = vmatpush2.msra.mxu0 0.0
      %4796 = vmatprep.subr.mxu0 0.0
      %4797 = vmatpush2.msra.mxu0 0.0
      %4798 = vmatprep.mubr.f32.mxu0 0.0
      %v4799 = vand.u32 %v4383, 4294901760
      %4800 = vmatmul.mubr.f32.gmra.mxu0 %v4799
      %v4801 = vpop.f32.mrf.mxu0
      %v4802 = vadd.f32 %v4717, %v4801
      %v4803 = vpop.f32.mrf.mxu0
      %4804 = vmatprep.mubr.f32.mxu0 0.0
      %v4805 = vand.u32 %v4386, 4294901760
      %4806 = vmatmul.mubr.f32.gmra.mxu0 %v4805
      %v4807 = vpop.f32.mrf.mxu0
      %v4808 = vadd.f32 %v4725, %v4807
      %v4809 = vpop.f32.mrf.mxu0
      %4810 = vdwg.mxu0
      %4811 = vmatprep.subr.mxu0 0.0
      %4812 = vmatpush1.msra.mxu0 0.0
      %4813 = vmatprep.subr.mxu0 0.0
      %4814 = vmatpush1.msra.mxu0 0.0
      %4815 = vmatprep.subr.mxu0 0.0
      %4816 = vmatpush1.msra.mxu0 0.0
      %4817 = vmatprep.subr.mxu0 0.0
      %4818 = vmatpush1.msra.mxu0 0.0
      %4819 = vmatprep.subr.mxu0 0.0
      %4820 = vmatpush1.msra.mxu0 0.0
      %4821 = vmatprep.subr.mxu0 0.0
      %4822 = vmatpush1.msra.mxu0 0.0
      %4823 = vmatprep.subr.mxu0 0.0
      %4824 = vmatpush1.msra.mxu0 0.0
      %4825 = vmatprep.subr.mxu0 0.0
      %4826 = vmatpush1.msra.mxu0 0.0
      %4827 = vmatprep.subr.mxu0 0.0
      %4828 = vmatpush1.msra.mxu0 0.0
      %4829 = vmatprep.subr.mxu0 0.0
      %4830 = vmatpush1.msra.mxu0 0.0
      %4831 = vmatprep.subr.mxu0 0.0
      %4832 = vmatpush1.msra.mxu0 0.0
      %4833 = vmatprep.subr.mxu0 0.0
      %4834 = vmatpush1.msra.mxu0 0.0
      %4835 = vmatprep.subr.mxu0 0.0
      %4836 = vmatpush1.msra.mxu0 0.0
      %4837 = vmatprep.subr.mxu0 0.0
      %4838 = vmatpush1.msra.mxu0 0.0
      %4839 = vmatprep.subr.mxu0 0.0
      %v4840 = vand.u32 %v270, 4294901760
      %4841 = vmatpush1.msra.mxu0 %v4840
      %4842 = vmatprep.subr.mxu0 0.0
      %v4843 = vand.u32 %v269, 4294901760
      %4844 = vmatpush1.msra.mxu0 %v4843
      %4845 = vmatprep.subr.mxu0 0.0
      %4846 = vmatpush2.msra.mxu0 0.0
      %4847 = vmatprep.subr.mxu0 0.0
      %4848 = vmatpush2.msra.mxu0 0.0
      %4849 = vmatprep.subr.mxu0 0.0
      %4850 = vmatpush2.msra.mxu0 0.0
      %4851 = vmatprep.subr.mxu0 0.0
      %4852 = vmatpush2.msra.mxu0 0.0
      %4853 = vmatprep.subr.mxu0 0.0
      %4854 = vmatpush2.msra.mxu0 0.0
      %4855 = vmatprep.subr.mxu0 0.0
      %4856 = vmatpush2.msra.mxu0 0.0
      %4857 = vmatprep.subr.mxu0 0.0
      %4858 = vmatpush2.msra.mxu0 0.0
      %4859 = vmatprep.subr.mxu0 0.0
      %4860 = vmatpush2.msra.mxu0 0.0
      %4861 = vmatprep.subr.mxu0 0.0
      %4862 = vmatpush2.msra.mxu0 0.0
      %4863 = vmatprep.subr.mxu0 0.0
      %4864 = vmatpush2.msra.mxu0 0.0
      %4865 = vmatprep.subr.mxu0 0.0
      %4866 = vmatpush2.msra.mxu0 0.0
      %4867 = vmatprep.subr.mxu0 0.0
      %4868 = vmatpush2.msra.mxu0 0.0
      %4869 = vmatprep.subr.mxu0 0.0
      %4870 = vmatpush2.msra.mxu0 0.0
      %4871 = vmatprep.subr.mxu0 0.0
      %4872 = vmatpush2.msra.mxu0 0.0
      %4873 = vmatprep.subr.mxu0 0.0
      %4874 = vmatpush2.msra.mxu0 0.0
      %4875 = vmatprep.subr.mxu0 0.0
      %4876 = vmatpush2.msra.mxu0 0.0
      %4877 = vmatprep.mubr.f32.mxu0 0.0
      %v4878 = vand.u32 %v4383, 4294901760
      %4879 = vmatmul.mubr.f32.gmra.mxu0 %v4878
      %v4880 = vpop.f32.mrf.mxu0
      %v4881 = vadd.f32 %v4802, %v4880
      %v4882 = vpop.f32.mrf.mxu0
      %4883 = vmatprep.mubr.f32.mxu0 0.0
      %v4884 = vand.u32 %v4386, 4294901760
      %4885 = vmatmul.mubr.f32.gmra.mxu0 %v4884
      %v4886 = vpop.f32.mrf.mxu0
      %v4887 = vadd.f32 %v4808, %v4886
      %v4888 = vpop.f32.mrf.mxu0
      %4889 = vdwg.mxu0
      %v4891 = vsel %vm317, %v303, 0
      %v4894 = vsel %vm317, %v304, 0
      %4896 = vmatprep.subr.mxu0 0.0
      %4897 = vmatpush1.msra.mxu0 0.0
      %4898 = vmatprep.subr.mxu0 0.0
      %4899 = vmatpush1.msra.mxu0 0.0
      %4900 = vmatprep.subr.mxu0 0.0
      %4901 = vmatpush1.msra.mxu0 0.0
      %4902 = vmatprep.subr.mxu0 0.0
      %4903 = vmatpush1.msra.mxu0 0.0
      %4904 = vmatprep.subr.mxu0 0.0
      %4905 = vmatpush1.msra.mxu0 0.0
      %4906 = vmatprep.subr.mxu0 0.0
      %4907 = vmatpush1.msra.mxu0 0.0
      %4908 = vmatprep.subr.mxu0 0.0
      %4909 = vmatpush1.msra.mxu0 0.0
      %4910 = vmatprep.subr.mxu0 0.0
      %4911 = vmatpush1.msra.mxu0 0.0
      %4912 = vmatprep.subr.mxu0 0.0
      %4913 = vmatpush1.msra.mxu0 0.0
      %4914 = vmatprep.subr.mxu0 0.0
      %4915 = vmatpush1.msra.mxu0 0.0
      %4916 = vmatprep.subr.mxu0 0.0
      %4917 = vmatpush1.msra.mxu0 0.0
      %4918 = vmatprep.subr.mxu0 0.0
      %4919 = vmatpush1.msra.mxu0 0.0
      %4920 = vmatprep.subr.mxu0 0.0
      %4921 = vmatpush1.msra.mxu0 0.0
      %4922 = vmatprep.subr.mxu0 0.0
      %4923 = vmatpush1.msra.mxu0 0.0
      %4924 = vmatprep.subr.mxu0 0.0
      %v4925 = vand.u32 %v272, 4294901760
      %4926 = vmatpush1.msra.mxu0 %v4925
      %4927 = vmatprep.subr.mxu0 0.0
      %v4928 = vand.u32 %v271, 4294901760
      %4929 = vmatpush1.msra.mxu0 %v4928
      %4930 = vmatprep.subr.mxu0 0.0
      %4931 = vmatpush2.msra.mxu0 0.0
      %4932 = vmatprep.subr.mxu0 0.0
      %4933 = vmatpush2.msra.mxu0 0.0
      %4934 = vmatprep.subr.mxu0 0.0
      %4935 = vmatpush2.msra.mxu0 0.0
      %4936 = vmatprep.subr.mxu0 0.0
      %4937 = vmatpush2.msra.mxu0 0.0
      %4938 = vmatprep.subr.mxu0 0.0
      %4939 = vmatpush2.msra.mxu0 0.0
      %4940 = vmatprep.subr.mxu0 0.0
      %4941 = vmatpush2.msra.mxu0 0.0
      %4942 = vmatprep.subr.mxu0 0.0
      %4943 = vmatpush2.msra.mxu0 0.0
      %4944 = vmatprep.subr.mxu0 0.0
      %4945 = vmatpush2.msra.mxu0 0.0
      %4946 = vmatprep.subr.mxu0 0.0
      %4947 = vmatpush2.msra.mxu0 0.0
      %4948 = vmatprep.subr.mxu0 0.0
      %4949 = vmatpush2.msra.mxu0 0.0
      %4950 = vmatprep.subr.mxu0 0.0
      %4951 = vmatpush2.msra.mxu0 0.0
      %4952 = vmatprep.subr.mxu0 0.0
      %4953 = vmatpush2.msra.mxu0 0.0
      %4954 = vmatprep.subr.mxu0 0.0
      %4955 = vmatpush2.msra.mxu0 0.0
      %4956 = vmatprep.subr.mxu0 0.0
      %4957 = vmatpush2.msra.mxu0 0.0
      %4958 = vmatprep.subr.mxu0 0.0
      %4959 = vmatpush2.msra.mxu0 0.0
      %4960 = vmatprep.subr.mxu0 0.0
      %4961 = vmatpush2.msra.mxu0 0.0
      %4962 = vmatprep.mubr.f32.mxu0 0.0
      %v4963 = vand.u32 %v4891, 4294901760
      %v4964 = vsub.f32 %v4891, %v4963
      %v4965 = vand.u32 %v4964, 4294901760
      %v4966 = vsub.f32 %v4964, %v4965
      %v4967 = vand.u32 %v4966, 4294901760
      %4968 = vmatmul.mubr.f32.gmra.mxu0 %v4967
      %v4969 = vpop.f32.mrf.mxu0
      %v4970 = vadd.f32 0.0, %v4969
      %v4971 = vpop.f32.mrf.mxu0
      %4972 = vmatprep.mubr.f32.mxu0 0.0
      %v4973 = vand.u32 %v4894, 4294901760
      %v4974 = vsub.f32 %v4894, %v4973
      %v4975 = vand.u32 %v4974, 4294901760
      %v4976 = vsub.f32 %v4974, %v4975
      %v4977 = vand.u32 %v4976, 4294901760
      %4978 = vmatmul.mubr.f32.gmra.mxu0 %v4977
      %v4979 = vpop.f32.mrf.mxu0
      %v4980 = vadd.f32 0.0, %v4979
      %v4981 = vpop.f32.mrf.mxu0
      %4982 = vdwg.mxu0
      %4983 = vmatprep.subr.mxu0 0.0
      %4984 = vmatpush1.msra.mxu0 0.0
      %4985 = vmatprep.subr.mxu0 0.0
      %4986 = vmatpush1.msra.mxu0 0.0
      %4987 = vmatprep.subr.mxu0 0.0
      %4988 = vmatpush1.msra.mxu0 0.0
      %4989 = vmatprep.subr.mxu0 0.0
      %4990 = vmatpush1.msra.mxu0 0.0
      %4991 = vmatprep.subr.mxu0 0.0
      %4992 = vmatpush1.msra.mxu0 0.0
      %4993 = vmatprep.subr.mxu0 0.0
      %4994 = vmatpush1.msra.mxu0 0.0
      %4995 = vmatprep.subr.mxu0 0.0
      %4996 = vmatpush1.msra.mxu0 0.0
      %4997 = vmatprep.subr.mxu0 0.0
      %4998 = vmatpush1.msra.mxu0 0.0
      %4999 = vmatprep.subr.mxu0 0.0
      %5000 = vmatpush1.msra.mxu0 0.0
      %5001 = vmatprep.subr.mxu0 0.0
      %5002 = vmatpush1.msra.mxu0 0.0
      %5003 = vmatprep.subr.mxu0 0.0
      %5004 = vmatpush1.msra.mxu0 0.0
      %5005 = vmatprep.subr.mxu0 0.0
      %5006 = vmatpush1.msra.mxu0 0.0
      %5007 = vmatprep.subr.mxu0 0.0
      %5008 = vmatpush1.msra.mxu0 0.0
      %5009 = vmatprep.subr.mxu0 0.0
      %5010 = vmatpush1.msra.mxu0 0.0
      %5011 = vmatprep.subr.mxu0 0.0
      %v5012 = vand.u32 %v272, 4294901760
      %v5013 = vsub.f32 %v272, %v5012
      %v5014 = vand.u32 %v5013, 4294901760
      %v5015 = vsub.f32 %v5013, %v5014
      %v5016 = vand.u32 %v5015, 4294901760
      %5017 = vmatpush1.msra.mxu0 %v5016
      %5018 = vmatprep.subr.mxu0 0.0
      %v5019 = vand.u32 %v271, 4294901760
      %v5020 = vsub.f32 %v271, %v5019
      %v5021 = vand.u32 %v5020, 4294901760
      %v5022 = vsub.f32 %v5020, %v5021
      %v5023 = vand.u32 %v5022, 4294901760
      %5024 = vmatpush1.msra.mxu0 %v5023
      %5025 = vmatprep.subr.mxu0 0.0
      %5026 = vmatpush2.msra.mxu0 0.0
      %5027 = vmatprep.subr.mxu0 0.0
      %5028 = vmatpush2.msra.mxu0 0.0
      %5029 = vmatprep.subr.mxu0 0.0
      %5030 = vmatpush2.msra.mxu0 0.0
      %5031 = vmatprep.subr.mxu0 0.0
      %5032 = vmatpush2.msra.mxu0 0.0
      %5033 = vmatprep.subr.mxu0 0.0
      %5034 = vmatpush2.msra.mxu0 0.0
      %5035 = vmatprep.subr.mxu0 0.0
      %5036 = vmatpush2.msra.mxu0 0.0
      %5037 = vmatprep.subr.mxu0 0.0
      %5038 = vmatpush2.msra.mxu0 0.0
      %5039 = vmatprep.subr.mxu0 0.0
      %5040 = vmatpush2.msra.mxu0 0.0
      %5041 = vmatprep.subr.mxu0 0.0
      %5042 = vmatpush2.msra.mxu0 0.0
      %5043 = vmatprep.subr.mxu0 0.0
      %5044 = vmatpush2.msra.mxu0 0.0
      %5045 = vmatprep.subr.mxu0 0.0
      %5046 = vmatpush2.msra.mxu0 0.0
      %5047 = vmatprep.subr.mxu0 0.0
      %5048 = vmatpush2.msra.mxu0 0.0
      %5049 = vmatprep.subr.mxu0 0.0
      %5050 = vmatpush2.msra.mxu0 0.0
      %5051 = vmatprep.subr.mxu0 0.0
      %5052 = vmatpush2.msra.mxu0 0.0
      %5053 = vmatprep.subr.mxu0 0.0
      %5054 = vmatpush2.msra.mxu0 0.0
      %5055 = vmatprep.subr.mxu0 0.0
      %5056 = vmatpush2.msra.mxu0 0.0
      %5057 = vmatprep.mubr.f32.mxu0 0.0
      %v5058 = vand.u32 %v4891, 4294901760
      %5059 = vmatmul.mubr.f32.gmra.mxu0 %v5058
      %v5060 = vpop.f32.mrf.mxu0
      %v5061 = vadd.f32 %v4970, %v5060
      %v5062 = vpop.f32.mrf.mxu0
      %5063 = vmatprep.mubr.f32.mxu0 0.0
      %v5064 = vand.u32 %v4894, 4294901760
      %5065 = vmatmul.mubr.f32.gmra.mxu0 %v5064
      %v5066 = vpop.f32.mrf.mxu0
      %v5067 = vadd.f32 %v4980, %v5066
      %v5068 = vpop.f32.mrf.mxu0
      %5069 = vdwg.mxu0
      %5070 = vmatprep.subr.mxu0 0.0
      %5071 = vmatpush1.msra.mxu0 0.0
      %5072 = vmatprep.subr.mxu0 0.0
      %5073 = vmatpush1.msra.mxu0 0.0
      %5074 = vmatprep.subr.mxu0 0.0
      %5075 = vmatpush1.msra.mxu0 0.0
      %5076 = vmatprep.subr.mxu0 0.0
      %5077 = vmatpush1.msra.mxu0 0.0
      %5078 = vmatprep.subr.mxu0 0.0
      %5079 = vmatpush1.msra.mxu0 0.0
      %5080 = vmatprep.subr.mxu0 0.0
      %5081 = vmatpush1.msra.mxu0 0.0
      %5082 = vmatprep.subr.mxu0 0.0
      %5083 = vmatpush1.msra.mxu0 0.0
      %5084 = vmatprep.subr.mxu0 0.0
      %5085 = vmatpush1.msra.mxu0 0.0
      %5086 = vmatprep.subr.mxu0 0.0
      %5087 = vmatpush1.msra.mxu0 0.0
      %5088 = vmatprep.subr.mxu0 0.0
      %5089 = vmatpush1.msra.mxu0 0.0
      %5090 = vmatprep.subr.mxu0 0.0
      %5091 = vmatpush1.msra.mxu0 0.0
      %5092 = vmatprep.subr.mxu0 0.0
      %5093 = vmatpush1.msra.mxu0 0.0
      %5094 = vmatprep.subr.mxu0 0.0
      %5095 = vmatpush1.msra.mxu0 0.0
      %5096 = vmatprep.subr.mxu0 0.0
      %5097 = vmatpush1.msra.mxu0 0.0
      %5098 = vmatprep.subr.mxu0 0.0
      %v5099 = vand.u32 %v272, 4294901760
      %v5100 = vsub.f32 %v272, %v5099
      %5101 = vmatpush1.msra.mxu0 %v5100
      %5102 = vmatprep.subr.mxu0 0.0
      %v5103 = vand.u32 %v271, 4294901760
      %v5104 = vsub.f32 %v271, %v5103
      %5105 = vmatpush1.msra.mxu0 %v5104
      %5106 = vmatprep.subr.mxu0 0.0
      %5107 = vmatpush2.msra.mxu0 0.0
      %5108 = vmatprep.subr.mxu0 0.0
      %5109 = vmatpush2.msra.mxu0 0.0
      %5110 = vmatprep.subr.mxu0 0.0
      %5111 = vmatpush2.msra.mxu0 0.0
      %5112 = vmatprep.subr.mxu0 0.0
      %5113 = vmatpush2.msra.mxu0 0.0
      %5114 = vmatprep.subr.mxu0 0.0
      %5115 = vmatpush2.msra.mxu0 0.0
      %5116 = vmatprep.subr.mxu0 0.0
      %5117 = vmatpush2.msra.mxu0 0.0
      %5118 = vmatprep.subr.mxu0 0.0
      %5119 = vmatpush2.msra.mxu0 0.0
      %5120 = vmatprep.subr.mxu0 0.0
      %5121 = vmatpush2.msra.mxu0 0.0
      %5122 = vmatprep.subr.mxu0 0.0
      %5123 = vmatpush2.msra.mxu0 0.0
      %5124 = vmatprep.subr.mxu0 0.0
      %5125 = vmatpush2.msra.mxu0 0.0
      %5126 = vmatprep.subr.mxu0 0.0
      %5127 = vmatpush2.msra.mxu0 0.0
      %5128 = vmatprep.subr.mxu0 0.0
      %5129 = vmatpush2.msra.mxu0 0.0
      %5130 = vmatprep.subr.mxu0 0.0
      %5131 = vmatpush2.msra.mxu0 0.0
      %5132 = vmatprep.subr.mxu0 0.0
      %5133 = vmatpush2.msra.mxu0 0.0
      %5134 = vmatprep.subr.mxu0 0.0
      %5135 = vmatpush2.msra.mxu0 0.0
      %5136 = vmatprep.subr.mxu0 0.0
      %5137 = vmatpush2.msra.mxu0 0.0
      %5138 = vmatprep.mubr.f32.mxu0 0.0
      %v5139 = vand.u32 %v4891, 4294901760
      %v5140 = vsub.f32 %v4891, %v5139
      %5141 = vmatmul.mubr.f32.gmra.mxu0 %v5140
      %v5142 = vpop.f32.mrf.mxu0
      %v5143 = vadd.f32 %v5061, %v5142
      %v5144 = vpop.f32.mrf.mxu0
      %5145 = vmatprep.mubr.f32.mxu0 0.0
      %v5146 = vand.u32 %v4894, 4294901760
      %v5147 = vsub.f32 %v4894, %v5146
      %5148 = vmatmul.mubr.f32.gmra.mxu0 %v5147
      %v5149 = vpop.f32.mrf.mxu0
      %v5150 = vadd.f32 %v5067, %v5149
      %v5151 = vpop.f32.mrf.mxu0
      %5152 = vdwg.mxu0
      %5153 = vmatprep.subr.mxu0 0.0
      %5154 = vmatpush1.msra.mxu0 0.0
      %5155 = vmatprep.subr.mxu0 0.0
      %5156 = vmatpush1.msra.mxu0 0.0
      %5157 = vmatprep.subr.mxu0 0.0
      %5158 = vmatpush1.msra.mxu0 0.0
      %5159 = vmatprep.subr.mxu0 0.0
      %5160 = vmatpush1.msra.mxu0 0.0
      %5161 = vmatprep.subr.mxu0 0.0
      %5162 = vmatpush1.msra.mxu0 0.0
      %5163 = vmatprep.subr.mxu0 0.0
      %5164 = vmatpush1.msra.mxu0 0.0
      %5165 = vmatprep.subr.mxu0 0.0
      %5166 = vmatpush1.msra.mxu0 0.0
      %5167 = vmatprep.subr.mxu0 0.0
      %5168 = vmatpush1.msra.mxu0 0.0
      %5169 = vmatprep.subr.mxu0 0.0
      %5170 = vmatpush1.msra.mxu0 0.0
      %5171 = vmatprep.subr.mxu0 0.0
      %5172 = vmatpush1.msra.mxu0 0.0
      %5173 = vmatprep.subr.mxu0 0.0
      %5174 = vmatpush1.msra.mxu0 0.0
      %5175 = vmatprep.subr.mxu0 0.0
      %5176 = vmatpush1.msra.mxu0 0.0
      %5177 = vmatprep.subr.mxu0 0.0
      %5178 = vmatpush1.msra.mxu0 0.0
      %5179 = vmatprep.subr.mxu0 0.0
      %5180 = vmatpush1.msra.mxu0 0.0
      %5181 = vmatprep.subr.mxu0 0.0
      %v5182 = vand.u32 %v272, 4294901760
      %5183 = vmatpush1.msra.mxu0 %v5182
      %5184 = vmatprep.subr.mxu0 0.0
      %v5185 = vand.u32 %v271, 4294901760
      %5186 = vmatpush1.msra.mxu0 %v5185
      %5187 = vmatprep.subr.mxu0 0.0
      %5188 = vmatpush2.msra.mxu0 0.0
      %5189 = vmatprep.subr.mxu0 0.0
      %5190 = vmatpush2.msra.mxu0 0.0
      %5191 = vmatprep.subr.mxu0 0.0
      %5192 = vmatpush2.msra.mxu0 0.0
      %5193 = vmatprep.subr.mxu0 0.0
      %5194 = vmatpush2.msra.mxu0 0.0
      %5195 = vmatprep.subr.mxu0 0.0
      %5196 = vmatpush2.msra.mxu0 0.0
      %5197 = vmatprep.subr.mxu0 0.0
      %5198 = vmatpush2.msra.mxu0 0.0
      %5199 = vmatprep.subr.mxu0 0.0
      %5200 = vmatpush2.msra.mxu0 0.0
      %5201 = vmatprep.subr.mxu0 0.0
      %5202 = vmatpush2.msra.mxu0 0.0
      %5203 = vmatprep.subr.mxu0 0.0
      %5204 = vmatpush2.msra.mxu0 0.0
      %5205 = vmatprep.subr.mxu0 0.0
      %5206 = vmatpush2.msra.mxu0 0.0
      %5207 = vmatprep.subr.mxu0 0.0
      %5208 = vmatpush2.msra.mxu0 0.0
      %5209 = vmatprep.subr.mxu0 0.0
      %5210 = vmatpush2.msra.mxu0 0.0
      %5211 = vmatprep.subr.mxu0 0.0
      %5212 = vmatpush2.msra.mxu0 0.0
      %5213 = vmatprep.subr.mxu0 0.0
      %5214 = vmatpush2.msra.mxu0 0.0
      %5215 = vmatprep.subr.mxu0 0.0
      %5216 = vmatpush2.msra.mxu0 0.0
      %5217 = vmatprep.subr.mxu0 0.0
      %5218 = vmatpush2.msra.mxu0 0.0
      %5219 = vmatprep.mubr.f32.mxu0 0.0
      %v5220 = vand.u32 %v4891, 4294901760
      %v5221 = vsub.f32 %v4891, %v5220
      %v5222 = vand.u32 %v5221, 4294901760
      %5223 = vmatmul.mubr.f32.gmra.mxu0 %v5222
      %v5224 = vpop.f32.mrf.mxu0
      %v5225 = vadd.f32 %v5143, %v5224
      %v5226 = vpop.f32.mrf.mxu0
      %5227 = vmatprep.mubr.f32.mxu0 0.0
      %v5228 = vand.u32 %v4894, 4294901760
      %v5229 = vsub.f32 %v4894, %v5228
      %v5230 = vand.u32 %v5229, 4294901760
      %5231 = vmatmul.mubr.f32.gmra.mxu0 %v5230
      %v5232 = vpop.f32.mrf.mxu0
      %v5233 = vadd.f32 %v5150, %v5232
      %v5234 = vpop.f32.mrf.mxu0
      %5235 = vdwg.mxu0
      %5236 = vmatprep.subr.mxu0 0.0
      %5237 = vmatpush1.msra.mxu0 0.0
      %5238 = vmatprep.subr.mxu0 0.0
      %5239 = vmatpush1.msra.mxu0 0.0
      %5240 = vmatprep.subr.mxu0 0.0
      %5241 = vmatpush1.msra.mxu0 0.0
      %5242 = vmatprep.subr.mxu0 0.0
      %5243 = vmatpush1.msra.mxu0 0.0
      %5244 = vmatprep.subr.mxu0 0.0
      %5245 = vmatpush1.msra.mxu0 0.0
      %5246 = vmatprep.subr.mxu0 0.0
      %5247 = vmatpush1.msra.mxu0 0.0
      %5248 = vmatprep.subr.mxu0 0.0
      %5249 = vmatpush1.msra.mxu0 0.0
      %5250 = vmatprep.subr.mxu0 0.0
      %5251 = vmatpush1.msra.mxu0 0.0
      %5252 = vmatprep.subr.mxu0 0.0
      %5253 = vmatpush1.msra.mxu0 0.0
      %5254 = vmatprep.subr.mxu0 0.0
      %5255 = vmatpush1.msra.mxu0 0.0
      %5256 = vmatprep.subr.mxu0 0.0
      %5257 = vmatpush1.msra.mxu0 0.0
      %5258 = vmatprep.subr.mxu0 0.0
      %5259 = vmatpush1.msra.mxu0 0.0
      %5260 = vmatprep.subr.mxu0 0.0
      %5261 = vmatpush1.msra.mxu0 0.0
      %5262 = vmatprep.subr.mxu0 0.0
      %5263 = vmatpush1.msra.mxu0 0.0
      %5264 = vmatprep.subr.mxu0 0.0
      %v5265 = vand.u32 %v272, 4294901760
      %v5266 = vsub.f32 %v272, %v5265
      %v5267 = vand.u32 %v5266, 4294901760
      %5268 = vmatpush1.msra.mxu0 %v5267
      %5269 = vmatprep.subr.mxu0 0.0
      %v5270 = vand.u32 %v271, 4294901760
      %v5271 = vsub.f32 %v271, %v5270
      %v5272 = vand.u32 %v5271, 4294901760
      %5273 = vmatpush1.msra.mxu0 %v5272
      %5274 = vmatprep.subr.mxu0 0.0
      %5275 = vmatpush2.msra.mxu0 0.0
      %5276 = vmatprep.subr.mxu0 0.0
      %5277 = vmatpush2.msra.mxu0 0.0
      %5278 = vmatprep.subr.mxu0 0.0
      %5279 = vmatpush2.msra.mxu0 0.0
      %5280 = vmatprep.subr.mxu0 0.0
      %5281 = vmatpush2.msra.mxu0 0.0
      %5282 = vmatprep.subr.mxu0 0.0
      %5283 = vmatpush2.msra.mxu0 0.0
      %5284 = vmatprep.subr.mxu0 0.0
      %5285 = vmatpush2.msra.mxu0 0.0
      %5286 = vmatprep.subr.mxu0 0.0
      %5287 = vmatpush2.msra.mxu0 0.0
      %5288 = vmatprep.subr.mxu0 0.0
      %5289 = vmatpush2.msra.mxu0 0.0
      %5290 = vmatprep.subr.mxu0 0.0
      %5291 = vmatpush2.msra.mxu0 0.0
      %5292 = vmatprep.subr.mxu0 0.0
      %5293 = vmatpush2.msra.mxu0 0.0
      %5294 = vmatprep.subr.mxu0 0.0
      %5295 = vmatpush2.msra.mxu0 0.0
      %5296 = vmatprep.subr.mxu0 0.0
      %5297 = vmatpush2.msra.mxu0 0.0
      %5298 = vmatprep.subr.mxu0 0.0
      %5299 = vmatpush2.msra.mxu0 0.0
      %5300 = vmatprep.subr.mxu0 0.0
      %5301 = vmatpush2.msra.mxu0 0.0
      %5302 = vmatprep.subr.mxu0 0.0
      %5303 = vmatpush2.msra.mxu0 0.0
      %5304 = vmatprep.subr.mxu0 0.0
      %5305 = vmatpush2.msra.mxu0 0.0
      %5306 = vmatprep.mubr.f32.mxu0 0.0
      %v5307 = vand.u32 %v4891, 4294901760
      %5308 = vmatmul.mubr.f32.gmra.mxu0 %v5307
      %v5309 = vpop.f32.mrf.mxu0
      %v5310 = vadd.f32 %v5225, %v5309
      %v5311 = vpop.f32.mrf.mxu0
      %5312 = vmatprep.mubr.f32.mxu0 0.0
      %v5313 = vand.u32 %v4894, 4294901760
      %5314 = vmatmul.mubr.f32.gmra.mxu0 %v5313
      %v5315 = vpop.f32.mrf.mxu0
      %v5316 = vadd.f32 %v5233, %v5315
      %v5317 = vpop.f32.mrf.mxu0
      %5318 = vdwg.mxu0
      %5319 = vmatprep.subr.mxu0 0.0
      %5320 = vmatpush1.msra.mxu0 0.0
      %5321 = vmatprep.subr.mxu0 0.0
      %5322 = vmatpush1.msra.mxu0 0.0
      %5323 = vmatprep.subr.mxu0 0.0
      %5324 = vmatpush1.msra.mxu0 0.0
      %5325 = vmatprep.subr.mxu0 0.0
      %5326 = vmatpush1.msra.mxu0 0.0
      %5327 = vmatprep.subr.mxu0 0.0
      %5328 = vmatpush1.msra.mxu0 0.0
      %5329 = vmatprep.subr.mxu0 0.0
      %5330 = vmatpush1.msra.mxu0 0.0
      %5331 = vmatprep.subr.mxu0 0.0
      %5332 = vmatpush1.msra.mxu0 0.0
      %5333 = vmatprep.subr.mxu0 0.0
      %5334 = vmatpush1.msra.mxu0 0.0
      %5335 = vmatprep.subr.mxu0 0.0
      %5336 = vmatpush1.msra.mxu0 0.0
      %5337 = vmatprep.subr.mxu0 0.0
      %5338 = vmatpush1.msra.mxu0 0.0
      %5339 = vmatprep.subr.mxu0 0.0
      %5340 = vmatpush1.msra.mxu0 0.0
      %5341 = vmatprep.subr.mxu0 0.0
      %5342 = vmatpush1.msra.mxu0 0.0
      %5343 = vmatprep.subr.mxu0 0.0
      %5344 = vmatpush1.msra.mxu0 0.0
      %5345 = vmatprep.subr.mxu0 0.0
      %5346 = vmatpush1.msra.mxu0 0.0
      %5347 = vmatprep.subr.mxu0 0.0
      %v5348 = vand.u32 %v272, 4294901760
      %5349 = vmatpush1.msra.mxu0 %v5348
      %5350 = vmatprep.subr.mxu0 0.0
      %v5351 = vand.u32 %v271, 4294901760
      %5352 = vmatpush1.msra.mxu0 %v5351
      %5353 = vmatprep.subr.mxu0 0.0
      %5354 = vmatpush2.msra.mxu0 0.0
      %5355 = vmatprep.subr.mxu0 0.0
      %5356 = vmatpush2.msra.mxu0 0.0
      %5357 = vmatprep.subr.mxu0 0.0
      %5358 = vmatpush2.msra.mxu0 0.0
      %5359 = vmatprep.subr.mxu0 0.0
      %5360 = vmatpush2.msra.mxu0 0.0
      %5361 = vmatprep.subr.mxu0 0.0
      %5362 = vmatpush2.msra.mxu0 0.0
      %5363 = vmatprep.subr.mxu0 0.0
      %5364 = vmatpush2.msra.mxu0 0.0
      %5365 = vmatprep.subr.mxu0 0.0
      %5366 = vmatpush2.msra.mxu0 0.0
      %5367 = vmatprep.subr.mxu0 0.0
      %5368 = vmatpush2.msra.mxu0 0.0
      %5369 = vmatprep.subr.mxu0 0.0
      %5370 = vmatpush2.msra.mxu0 0.0
      %5371 = vmatprep.subr.mxu0 0.0
      %5372 = vmatpush2.msra.mxu0 0.0
      %5373 = vmatprep.subr.mxu0 0.0
      %5374 = vmatpush2.msra.mxu0 0.0
      %5375 = vmatprep.subr.mxu0 0.0
      %5376 = vmatpush2.msra.mxu0 0.0
      %5377 = vmatprep.subr.mxu0 0.0
      %5378 = vmatpush2.msra.mxu0 0.0
      %5379 = vmatprep.subr.mxu0 0.0
      %5380 = vmatpush2.msra.mxu0 0.0
      %5381 = vmatprep.subr.mxu0 0.0
      %5382 = vmatpush2.msra.mxu0 0.0
      %5383 = vmatprep.subr.mxu0 0.0
      %5384 = vmatpush2.msra.mxu0 0.0
      %5385 = vmatprep.mubr.f32.mxu0 0.0
      %v5386 = vand.u32 %v4891, 4294901760
      %5387 = vmatmul.mubr.f32.gmra.mxu0 %v5386
      %v5388 = vpop.f32.mrf.mxu0
      %v5389 = vadd.f32 %v5310, %v5388
      %v5390 = vpop.f32.mrf.mxu0
      %5391 = vmatprep.mubr.f32.mxu0 0.0
      %v5392 = vand.u32 %v4894, 4294901760
      %5393 = vmatmul.mubr.f32.gmra.mxu0 %v5392
      %v5394 = vpop.f32.mrf.mxu0
      %v5395 = vadd.f32 %v5316, %v5394
      %v5396 = vpop.f32.mrf.mxu0
      %5397 = vdwg.mxu0
      %v5399 = vsel %vm317, %v305, 0
      %v5402 = vsel %vm317, %v306, 0
      %5404 = vmatprep.subr.mxu0 0.0
      %5405 = vmatpush1.msra.mxu0 0.0
      %5406 = vmatprep.subr.mxu0 0.0
      %5407 = vmatpush1.msra.mxu0 0.0
      %5408 = vmatprep.subr.mxu0 0.0
      %5409 = vmatpush1.msra.mxu0 0.0
      %5410 = vmatprep.subr.mxu0 0.0
      %5411 = vmatpush1.msra.mxu0 0.0
      %5412 = vmatprep.subr.mxu0 0.0
      %5413 = vmatpush1.msra.mxu0 0.0
      %5414 = vmatprep.subr.mxu0 0.0
      %5415 = vmatpush1.msra.mxu0 0.0
      %5416 = vmatprep.subr.mxu0 0.0
      %5417 = vmatpush1.msra.mxu0 0.0
      %5418 = vmatprep.subr.mxu0 0.0
      %5419 = vmatpush1.msra.mxu0 0.0
      %5420 = vmatprep.subr.mxu0 0.0
      %5421 = vmatpush1.msra.mxu0 0.0
      %5422 = vmatprep.subr.mxu0 0.0
      %5423 = vmatpush1.msra.mxu0 0.0
      %5424 = vmatprep.subr.mxu0 0.0
      %5425 = vmatpush1.msra.mxu0 0.0
      %5426 = vmatprep.subr.mxu0 0.0
      %5427 = vmatpush1.msra.mxu0 0.0
      %5428 = vmatprep.subr.mxu0 0.0
      %5429 = vmatpush1.msra.mxu0 0.0
      %5430 = vmatprep.subr.mxu0 0.0
      %5431 = vmatpush1.msra.mxu0 0.0
      %5432 = vmatprep.subr.mxu0 0.0
      %v5433 = vand.u32 %v274, 4294901760
      %5434 = vmatpush1.msra.mxu0 %v5433
      %5435 = vmatprep.subr.mxu0 0.0
      %v5436 = vand.u32 %v273, 4294901760
      %5437 = vmatpush1.msra.mxu0 %v5436
      %5438 = vmatprep.subr.mxu0 0.0
      %5439 = vmatpush2.msra.mxu0 0.0
      %5440 = vmatprep.subr.mxu0 0.0
      %5441 = vmatpush2.msra.mxu0 0.0
      %5442 = vmatprep.subr.mxu0 0.0
      %5443 = vmatpush2.msra.mxu0 0.0
      %5444 = vmatprep.subr.mxu0 0.0
      %5445 = vmatpush2.msra.mxu0 0.0
      %5446 = vmatprep.subr.mxu0 0.0
      %5447 = vmatpush2.msra.mxu0 0.0
      %5448 = vmatprep.subr.mxu0 0.0
      %5449 = vmatpush2.msra.mxu0 0.0
      %5450 = vmatprep.subr.mxu0 0.0
      %5451 = vmatpush2.msra.mxu0 0.0
      %5452 = vmatprep.subr.mxu0 0.0
      %5453 = vmatpush2.msra.mxu0 0.0
      %5454 = vmatprep.subr.mxu0 0.0
      %5455 = vmatpush2.msra.mxu0 0.0
      %5456 = vmatprep.subr.mxu0 0.0
      %5457 = vmatpush2.msra.mxu0 0.0
      %5458 = vmatprep.subr.mxu0 0.0
      %5459 = vmatpush2.msra.mxu0 0.0
      %5460 = vmatprep.subr.mxu0 0.0
      %5461 = vmatpush2.msra.mxu0 0.0
      %5462 = vmatprep.subr.mxu0 0.0
      %5463 = vmatpush2.msra.mxu0 0.0
      %5464 = vmatprep.subr.mxu0 0.0
      %5465 = vmatpush2.msra.mxu0 0.0
      %5466 = vmatprep.subr.mxu0 0.0
      %5467 = vmatpush2.msra.mxu0 0.0
      %5468 = vmatprep.subr.mxu0 0.0
      %5469 = vmatpush2.msra.mxu0 0.0
      %5470 = vmatprep.mubr.f32.mxu0 0.0
      %v5471 = vand.u32 %v5399, 4294901760
      %v5472 = vsub.f32 %v5399, %v5471
      %v5473 = vand.u32 %v5472, 4294901760
      %v5474 = vsub.f32 %v5472, %v5473
      %v5475 = vand.u32 %v5474, 4294901760
      %5476 = vmatmul.mubr.f32.gmra.mxu0 %v5475
      %v5477 = vpop.f32.mrf.mxu0
      %v5478 = vadd.f32 0.0, %v5477
      %v5479 = vpop.f32.mrf.mxu0
      %5480 = vmatprep.mubr.f32.mxu0 0.0
      %v5481 = vand.u32 %v5402, 4294901760
      %v5482 = vsub.f32 %v5402, %v5481
      %v5483 = vand.u32 %v5482, 4294901760
      %v5484 = vsub.f32 %v5482, %v5483
      %v5485 = vand.u32 %v5484, 4294901760
      %5486 = vmatmul.mubr.f32.gmra.mxu0 %v5485
      %v5487 = vpop.f32.mrf.mxu0
      %v5488 = vadd.f32 0.0, %v5487
      %v5489 = vpop.f32.mrf.mxu0
      %5490 = vdwg.mxu0
      %5491 = vmatprep.subr.mxu0 0.0
      %5492 = vmatpush1.msra.mxu0 0.0
      %5493 = vmatprep.subr.mxu0 0.0
      %5494 = vmatpush1.msra.mxu0 0.0
      %5495 = vmatprep.subr.mxu0 0.0
      %5496 = vmatpush1.msra.mxu0 0.0
      %5497 = vmatprep.subr.mxu0 0.0
      %5498 = vmatpush1.msra.mxu0 0.0
      %5499 = vmatprep.subr.mxu0 0.0
      %5500 = vmatpush1.msra.mxu0 0.0
      %5501 = vmatprep.subr.mxu0 0.0
      %5502 = vmatpush1.msra.mxu0 0.0
      %5503 = vmatprep.subr.mxu0 0.0
      %5504 = vmatpush1.msra.mxu0 0.0
      %5505 = vmatprep.subr.mxu0 0.0
      %5506 = vmatpush1.msra.mxu0 0.0
      %5507 = vmatprep.subr.mxu0 0.0
      %5508 = vmatpush1.msra.mxu0 0.0
      %5509 = vmatprep.subr.mxu0 0.0
      %5510 = vmatpush1.msra.mxu0 0.0
      %5511 = vmatprep.subr.mxu0 0.0
      %5512 = vmatpush1.msra.mxu0 0.0
      %5513 = vmatprep.subr.mxu0 0.0
      %5514 = vmatpush1.msra.mxu0 0.0
      %5515 = vmatprep.subr.mxu0 0.0
      %5516 = vmatpush1.msra.mxu0 0.0
      %5517 = vmatprep.subr.mxu0 0.0
      %5518 = vmatpush1.msra.mxu0 0.0
      %5519 = vmatprep.subr.mxu0 0.0
      %v5520 = vand.u32 %v274, 4294901760
      %v5521 = vsub.f32 %v274, %v5520
      %v5522 = vand.u32 %v5521, 4294901760
      %v5523 = vsub.f32 %v5521, %v5522
      %v5524 = vand.u32 %v5523, 4294901760
      %5525 = vmatpush1.msra.mxu0 %v5524
      %5526 = vmatprep.subr.mxu0 0.0
      %v5527 = vand.u32 %v273, 4294901760
      %v5528 = vsub.f32 %v273, %v5527
      %v5529 = vand.u32 %v5528, 4294901760
      %v5530 = vsub.f32 %v5528, %v5529
      %v5531 = vand.u32 %v5530, 4294901760
      %5532 = vmatpush1.msra.mxu0 %v5531
      %5533 = vmatprep.subr.mxu0 0.0
      %5534 = vmatpush2.msra.mxu0 0.0
      %5535 = vmatprep.subr.mxu0 0.0
      %5536 = vmatpush2.msra.mxu0 0.0
      %5537 = vmatprep.subr.mxu0 0.0
      %5538 = vmatpush2.msra.mxu0 0.0
      %5539 = vmatprep.subr.mxu0 0.0
      %5540 = vmatpush2.msra.mxu0 0.0
      %5541 = vmatprep.subr.mxu0 0.0
      %5542 = vmatpush2.msra.mxu0 0.0
      %5543 = vmatprep.subr.mxu0 0.0
      %5544 = vmatpush2.msra.mxu0 0.0
      %5545 = vmatprep.subr.mxu0 0.0
      %5546 = vmatpush2.msra.mxu0 0.0
      %5547 = vmatprep.subr.mxu0 0.0
      %5548 = vmatpush2.msra.mxu0 0.0
      %5549 = vmatprep.subr.mxu0 0.0
      %5550 = vmatpush2.msra.mxu0 0.0
      %5551 = vmatprep.subr.mxu0 0.0
      %5552 = vmatpush2.msra.mxu0 0.0
      %5553 = vmatprep.subr.mxu0 0.0
      %5554 = vmatpush2.msra.mxu0 0.0
      %5555 = vmatprep.subr.mxu0 0.0
      %5556 = vmatpush2.msra.mxu0 0.0
      %5557 = vmatprep.subr.mxu0 0.0
      %5558 = vmatpush2.msra.mxu0 0.0
      %5559 = vmatprep.subr.mxu0 0.0
      %5560 = vmatpush2.msra.mxu0 0.0
      %5561 = vmatprep.subr.mxu0 0.0
      %5562 = vmatpush2.msra.mxu0 0.0
      %5563 = vmatprep.subr.mxu0 0.0
      %5564 = vmatpush2.msra.mxu0 0.0
      %5565 = vmatprep.mubr.f32.mxu0 0.0
      %v5566 = vand.u32 %v5399, 4294901760
      %5567 = vmatmul.mubr.f32.gmra.mxu0 %v5566
      %v5568 = vpop.f32.mrf.mxu0
      %v5569 = vadd.f32 %v5478, %v5568
      %v5570 = vpop.f32.mrf.mxu0
      %5571 = vmatprep.mubr.f32.mxu0 0.0
      %v5572 = vand.u32 %v5402, 4294901760
      %5573 = vmatmul.mubr.f32.gmra.mxu0 %v5572
      %v5574 = vpop.f32.mrf.mxu0
      %v5575 = vadd.f32 %v5488, %v5574
      %v5576 = vpop.f32.mrf.mxu0
      %5577 = vdwg.mxu0
      %5578 = vmatprep.subr.mxu0 0.0
      %5579 = vmatpush1.msra.mxu0 0.0
      %5580 = vmatprep.subr.mxu0 0.0
      %5581 = vmatpush1.msra.mxu0 0.0
      %5582 = vmatprep.subr.mxu0 0.0
      %5583 = vmatpush1.msra.mxu0 0.0
      %5584 = vmatprep.subr.mxu0 0.0
      %5585 = vmatpush1.msra.mxu0 0.0
      %5586 = vmatprep.subr.mxu0 0.0
      %5587 = vmatpush1.msra.mxu0 0.0
      %5588 = vmatprep.subr.mxu0 0.0
      %5589 = vmatpush1.msra.mxu0 0.0
      %5590 = vmatprep.subr.mxu0 0.0
      %5591 = vmatpush1.msra.mxu0 0.0
      %5592 = vmatprep.subr.mxu0 0.0
      %5593 = vmatpush1.msra.mxu0 0.0
      %5594 = vmatprep.subr.mxu0 0.0
      %5595 = vmatpush1.msra.mxu0 0.0
      %5596 = vmatprep.subr.mxu0 0.0
      %5597 = vmatpush1.msra.mxu0 0.0
      %5598 = vmatprep.subr.mxu0 0.0
      %5599 = vmatpush1.msra.mxu0 0.0
      %5600 = vmatprep.subr.mxu0 0.0
      %5601 = vmatpush1.msra.mxu0 0.0
      %5602 = vmatprep.subr.mxu0 0.0
      %5603 = vmatpush1.msra.mxu0 0.0
      %5604 = vmatprep.subr.mxu0 0.0
      %5605 = vmatpush1.msra.mxu0 0.0
      %5606 = vmatprep.subr.mxu0 0.0
      %v5607 = vand.u32 %v274, 4294901760
      %v5608 = vsub.f32 %v274, %v5607
      %5609 = vmatpush1.msra.mxu0 %v5608
      %5610 = vmatprep.subr.mxu0 0.0
      %v5611 = vand.u32 %v273, 4294901760
      %v5612 = vsub.f32 %v273, %v5611
      %5613 = vmatpush1.msra.mxu0 %v5612
      %5614 = vmatprep.subr.mxu0 0.0
      %5615 = vmatpush2.msra.mxu0 0.0
      %5616 = vmatprep.subr.mxu0 0.0
      %5617 = vmatpush2.msra.mxu0 0.0
      %5618 = vmatprep.subr.mxu0 0.0
      %5619 = vmatpush2.msra.mxu0 0.0
      %5620 = vmatprep.subr.mxu0 0.0
      %5621 = vmatpush2.msra.mxu0 0.0
      %5622 = vmatprep.subr.mxu0 0.0
      %5623 = vmatpush2.msra.mxu0 0.0
      %5624 = vmatprep.subr.mxu0 0.0
      %5625 = vmatpush2.msra.mxu0 0.0
      %5626 = vmatprep.subr.mxu0 0.0
      %5627 = vmatpush2.msra.mxu0 0.0
      %5628 = vmatprep.subr.mxu0 0.0
      %5629 = vmatpush2.msra.mxu0 0.0
      %5630 = vmatprep.subr.mxu0 0.0
      %5631 = vmatpush2.msra.mxu0 0.0
      %5632 = vmatprep.subr.mxu0 0.0
      %5633 = vmatpush2.msra.mxu0 0.0
      %5634 = vmatprep.subr.mxu0 0.0
      %5635 = vmatpush2.msra.mxu0 0.0
      %5636 = vmatprep.subr.mxu0 0.0
      %5637 = vmatpush2.msra.mxu0 0.0
      %5638 = vmatprep.subr.mxu0 0.0
      %5639 = vmatpush2.msra.mxu0 0.0
      %5640 = vmatprep.subr.mxu0 0.0
      %5641 = vmatpush2.msra.mxu0 0.0
      %5642 = vmatprep.subr.mxu0 0.0
      %5643 = vmatpush2.msra.mxu0 0.0
      %5644 = vmatprep.subr.mxu0 0.0
      %5645 = vmatpush2.msra.mxu0 0.0
      %5646 = vmatprep.mubr.f32.mxu0 0.0
      %v5647 = vand.u32 %v5399, 4294901760
      %v5648 = vsub.f32 %v5399, %v5647
      %5649 = vmatmul.mubr.f32.gmra.mxu0 %v5648
      %v5650 = vpop.f32.mrf.mxu0
      %v5651 = vadd.f32 %v5569, %v5650
      %v5652 = vpop.f32.mrf.mxu0
      %5653 = vmatprep.mubr.f32.mxu0 0.0
      %v5654 = vand.u32 %v5402, 4294901760
      %v5655 = vsub.f32 %v5402, %v5654
      %5656 = vmatmul.mubr.f32.gmra.mxu0 %v5655
      %v5657 = vpop.f32.mrf.mxu0
      %v5658 = vadd.f32 %v5575, %v5657
      %v5659 = vpop.f32.mrf.mxu0
      %5660 = vdwg.mxu0
      %5661 = vmatprep.subr.mxu0 0.0
      %5662 = vmatpush1.msra.mxu0 0.0
      %5663 = vmatprep.subr.mxu0 0.0
      %5664 = vmatpush1.msra.mxu0 0.0
      %5665 = vmatprep.subr.mxu0 0.0
      %5666 = vmatpush1.msra.mxu0 0.0
      %5667 = vmatprep.subr.mxu0 0.0
      %5668 = vmatpush1.msra.mxu0 0.0
      %5669 = vmatprep.subr.mxu0 0.0
      %5670 = vmatpush1.msra.mxu0 0.0
      %5671 = vmatprep.subr.mxu0 0.0
      %5672 = vmatpush1.msra.mxu0 0.0
      %5673 = vmatprep.subr.mxu0 0.0
      %5674 = vmatpush1.msra.mxu0 0.0
      %5675 = vmatprep.subr.mxu0 0.0
      %5676 = vmatpush1.msra.mxu0 0.0
      %5677 = vmatprep.subr.mxu0 0.0
      %5678 = vmatpush1.msra.mxu0 0.0
      %5679 = vmatprep.subr.mxu0 0.0
      %5680 = vmatpush1.msra.mxu0 0.0
      %5681 = vmatprep.subr.mxu0 0.0
      %5682 = vmatpush1.msra.mxu0 0.0
      %5683 = vmatprep.subr.mxu0 0.0
      %5684 = vmatpush1.msra.mxu0 0.0
      %5685 = vmatprep.subr.mxu0 0.0
      %5686 = vmatpush1.msra.mxu0 0.0
      %5687 = vmatprep.subr.mxu0 0.0
      %5688 = vmatpush1.msra.mxu0 0.0
      %5689 = vmatprep.subr.mxu0 0.0
      %v5690 = vand.u32 %v274, 4294901760
      %5691 = vmatpush1.msra.mxu0 %v5690
      %5692 = vmatprep.subr.mxu0 0.0
      %v5693 = vand.u32 %v273, 4294901760
      %5694 = vmatpush1.msra.mxu0 %v5693
      %5695 = vmatprep.subr.mxu0 0.0
      %5696 = vmatpush2.msra.mxu0 0.0
      %5697 = vmatprep.subr.mxu0 0.0
      %5698 = vmatpush2.msra.mxu0 0.0
      %5699 = vmatprep.subr.mxu0 0.0
      %5700 = vmatpush2.msra.mxu0 0.0
      %5701 = vmatprep.subr.mxu0 0.0
      %5702 = vmatpush2.msra.mxu0 0.0
      %5703 = vmatprep.subr.mxu0 0.0
      %5704 = vmatpush2.msra.mxu0 0.0
      %5705 = vmatprep.subr.mxu0 0.0
      %5706 = vmatpush2.msra.mxu0 0.0
      %5707 = vmatprep.subr.mxu0 0.0
      %5708 = vmatpush2.msra.mxu0 0.0
      %5709 = vmatprep.subr.mxu0 0.0
      %5710 = vmatpush2.msra.mxu0 0.0
      %5711 = vmatprep.subr.mxu0 0.0
      %5712 = vmatpush2.msra.mxu0 0.0
      %5713 = vmatprep.subr.mxu0 0.0
      %5714 = vmatpush2.msra.mxu0 0.0
      %5715 = vmatprep.subr.mxu0 0.0
      %5716 = vmatpush2.msra.mxu0 0.0
      %5717 = vmatprep.subr.mxu0 0.0
      %5718 = vmatpush2.msra.mxu0 0.0
      %5719 = vmatprep.subr.mxu0 0.0
      %5720 = vmatpush2.msra.mxu0 0.0
      %5721 = vmatprep.subr.mxu0 0.0
      %5722 = vmatpush2.msra.mxu0 0.0
      %5723 = vmatprep.subr.mxu0 0.0
      %5724 = vmatpush2.msra.mxu0 0.0
      %5725 = vmatprep.subr.mxu0 0.0
      %5726 = vmatpush2.msra.mxu0 0.0
      %5727 = vmatprep.mubr.f32.mxu0 0.0
      %v5728 = vand.u32 %v5399, 4294901760
      %v5729 = vsub.f32 %v5399, %v5728
      %v5730 = vand.u32 %v5729, 4294901760
      %5731 = vmatmul.mubr.f32.gmra.mxu0 %v5730
      %v5732 = vpop.f32.mrf.mxu0
      %v5733 = vadd.f32 %v5651, %v5732
      %v5734 = vpop.f32.mrf.mxu0
      %5735 = vmatprep.mubr.f32.mxu0 0.0
      %v5736 = vand.u32 %v5402, 4294901760
      %v5737 = vsub.f32 %v5402, %v5736
      %v5738 = vand.u32 %v5737, 4294901760
      %5739 = vmatmul.mubr.f32.gmra.mxu0 %v5738
      %v5740 = vpop.f32.mrf.mxu0
      %v5741 = vadd.f32 %v5658, %v5740
      %v5742 = vpop.f32.mrf.mxu0
      %5743 = vdwg.mxu0
      %5744 = vmatprep.subr.mxu0 0.0
      %5745 = vmatpush1.msra.mxu0 0.0
      %5746 = vmatprep.subr.mxu0 0.0
      %5747 = vmatpush1.msra.mxu0 0.0
      %5748 = vmatprep.subr.mxu0 0.0
      %5749 = vmatpush1.msra.mxu0 0.0
      %5750 = vmatprep.subr.mxu0 0.0
      %5751 = vmatpush1.msra.mxu0 0.0
      %5752 = vmatprep.subr.mxu0 0.0
      %5753 = vmatpush1.msra.mxu0 0.0
      %5754 = vmatprep.subr.mxu0 0.0
      %5755 = vmatpush1.msra.mxu0 0.0
      %5756 = vmatprep.subr.mxu0 0.0
      %5757 = vmatpush1.msra.mxu0 0.0
      %5758 = vmatprep.subr.mxu0 0.0
      %5759 = vmatpush1.msra.mxu0 0.0
      %5760 = vmatprep.subr.mxu0 0.0
      %5761 = vmatpush1.msra.mxu0 0.0
      %5762 = vmatprep.subr.mxu0 0.0
      %5763 = vmatpush1.msra.mxu0 0.0
      %5764 = vmatprep.subr.mxu0 0.0
      %5765 = vmatpush1.msra.mxu0 0.0
      %5766 = vmatprep.subr.mxu0 0.0
      %5767 = vmatpush1.msra.mxu0 0.0
      %5768 = vmatprep.subr.mxu0 0.0
      %5769 = vmatpush1.msra.mxu0 0.0
      %5770 = vmatprep.subr.mxu0 0.0
      %5771 = vmatpush1.msra.mxu0 0.0
      %5772 = vmatprep.subr.mxu0 0.0
      %v5773 = vand.u32 %v274, 4294901760
      %v5774 = vsub.f32 %v274, %v5773
      %v5775 = vand.u32 %v5774, 4294901760
      %5776 = vmatpush1.msra.mxu0 %v5775
      %5777 = vmatprep.subr.mxu0 0.0
      %v5778 = vand.u32 %v273, 4294901760
      %v5779 = vsub.f32 %v273, %v5778
      %v5780 = vand.u32 %v5779, 4294901760
      %5781 = vmatpush1.msra.mxu0 %v5780
      %5782 = vmatprep.subr.mxu0 0.0
      %5783 = vmatpush2.msra.mxu0 0.0
      %5784 = vmatprep.subr.mxu0 0.0
      %5785 = vmatpush2.msra.mxu0 0.0
      %5786 = vmatprep.subr.mxu0 0.0
      %5787 = vmatpush2.msra.mxu0 0.0
      %5788 = vmatprep.subr.mxu0 0.0
      %5789 = vmatpush2.msra.mxu0 0.0
      %5790 = vmatprep.subr.mxu0 0.0
      %5791 = vmatpush2.msra.mxu0 0.0
      %5792 = vmatprep.subr.mxu0 0.0
      %5793 = vmatpush2.msra.mxu0 0.0
      %5794 = vmatprep.subr.mxu0 0.0
      %5795 = vmatpush2.msra.mxu0 0.0
      %5796 = vmatprep.subr.mxu0 0.0
      %5797 = vmatpush2.msra.mxu0 0.0
      %5798 = vmatprep.subr.mxu0 0.0
      %5799 = vmatpush2.msra.mxu0 0.0
      %5800 = vmatprep.subr.mxu0 0.0
      %5801 = vmatpush2.msra.mxu0 0.0
      %5802 = vmatprep.subr.mxu0 0.0
      %5803 = vmatpush2.msra.mxu0 0.0
      %5804 = vmatprep.subr.mxu0 0.0
      %5805 = vmatpush2.msra.mxu0 0.0
      %5806 = vmatprep.subr.mxu0 0.0
      %5807 = vmatpush2.msra.mxu0 0.0
      %5808 = vmatprep.subr.mxu0 0.0
      %5809 = vmatpush2.msra.mxu0 0.0
      %5810 = vmatprep.subr.mxu0 0.0
      %5811 = vmatpush2.msra.mxu0 0.0
      %5812 = vmatprep.subr.mxu0 0.0
      %5813 = vmatpush2.msra.mxu0 0.0
      %5814 = vmatprep.mubr.f32.mxu0 0.0
      %v5815 = vand.u32 %v5399, 4294901760
      %5816 = vmatmul.mubr.f32.gmra.mxu0 %v5815
      %v5817 = vpop.f32.mrf.mxu0
      %v5818 = vadd.f32 %v5733, %v5817
      %v5819 = vpop.f32.mrf.mxu0
      %5820 = vmatprep.mubr.f32.mxu0 0.0
      %v5821 = vand.u32 %v5402, 4294901760
      %5822 = vmatmul.mubr.f32.gmra.mxu0 %v5821
      %v5823 = vpop.f32.mrf.mxu0
      %v5824 = vadd.f32 %v5741, %v5823
      %v5825 = vpop.f32.mrf.mxu0
      %5826 = vdwg.mxu0
      %5827 = vmatprep.subr.mxu0 0.0
      %5828 = vmatpush1.msra.mxu0 0.0
      %5829 = vmatprep.subr.mxu0 0.0
      %5830 = vmatpush1.msra.mxu0 0.0
      %5831 = vmatprep.subr.mxu0 0.0
      %5832 = vmatpush1.msra.mxu0 0.0
      %5833 = vmatprep.subr.mxu0 0.0
      %5834 = vmatpush1.msra.mxu0 0.0
      %5835 = vmatprep.subr.mxu0 0.0
      %5836 = vmatpush1.msra.mxu0 0.0
      %5837 = vmatprep.subr.mxu0 0.0
      %5838 = vmatpush1.msra.mxu0 0.0
      %5839 = vmatprep.subr.mxu0 0.0
      %5840 = vmatpush1.msra.mxu0 0.0
      %5841 = vmatprep.subr.mxu0 0.0
      %5842 = vmatpush1.msra.mxu0 0.0
      %5843 = vmatprep.subr.mxu0 0.0
      %5844 = vmatpush1.msra.mxu0 0.0
      %5845 = vmatprep.subr.mxu0 0.0
      %5846 = vmatpush1.msra.mxu0 0.0
      %5847 = vmatprep.subr.mxu0 0.0
      %5848 = vmatpush1.msra.mxu0 0.0
      %5849 = vmatprep.subr.mxu0 0.0
      %5850 = vmatpush1.msra.mxu0 0.0
      %5851 = vmatprep.subr.mxu0 0.0
      %5852 = vmatpush1.msra.mxu0 0.0
      %5853 = vmatprep.subr.mxu0 0.0
      %5854 = vmatpush1.msra.mxu0 0.0
      %5855 = vmatprep.subr.mxu0 0.0
      %v5856 = vand.u32 %v274, 4294901760
      %5857 = vmatpush1.msra.mxu0 %v5856
      %5858 = vmatprep.subr.mxu0 0.0
      %v5859 = vand.u32 %v273, 4294901760
      %5860 = vmatpush1.msra.mxu0 %v5859
      %5861 = vmatprep.subr.mxu0 0.0
      %5862 = vmatpush2.msra.mxu0 0.0
      %5863 = vmatprep.subr.mxu0 0.0
      %5864 = vmatpush2.msra.mxu0 0.0
      %5865 = vmatprep.subr.mxu0 0.0
      %5866 = vmatpush2.msra.mxu0 0.0
      %5867 = vmatprep.subr.mxu0 0.0
      %5868 = vmatpush2.msra.mxu0 0.0
      %5869 = vmatprep.subr.mxu0 0.0
      %5870 = vmatpush2.msra.mxu0 0.0
      %5871 = vmatprep.subr.mxu0 0.0
      %5872 = vmatpush2.msra.mxu0 0.0
      %5873 = vmatprep.subr.mxu0 0.0
      %5874 = vmatpush2.msra.mxu0 0.0
      %5875 = vmatprep.subr.mxu0 0.0
      %5876 = vmatpush2.msra.mxu0 0.0
      %5877 = vmatprep.subr.mxu0 0.0
      %5878 = vmatpush2.msra.mxu0 0.0
      %5879 = vmatprep.subr.mxu0 0.0
      %5880 = vmatpush2.msra.mxu0 0.0
      %5881 = vmatprep.subr.mxu0 0.0
      %5882 = vmatpush2.msra.mxu0 0.0
      %5883 = vmatprep.subr.mxu0 0.0
      %5884 = vmatpush2.msra.mxu0 0.0
      %5885 = vmatprep.subr.mxu0 0.0
      %5886 = vmatpush2.msra.mxu0 0.0
      %5887 = vmatprep.subr.mxu0 0.0
      %5888 = vmatpush2.msra.mxu0 0.0
      %5889 = vmatprep.subr.mxu0 0.0
      %5890 = vmatpush2.msra.mxu0 0.0
      %5891 = vmatprep.subr.mxu0 0.0
      %5892 = vmatpush2.msra.mxu0 0.0
      %5893 = vmatprep.mubr.f32.mxu0 0.0
      %v5894 = vand.u32 %v5399, 4294901760
      %5895 = vmatmul.mubr.f32.gmra.mxu0 %v5894
      %v5896 = vpop.f32.mrf.mxu0
      %v5897 = vadd.f32 %v5818, %v5896
      %v5898 = vpop.f32.mrf.mxu0
      %5899 = vmatprep.mubr.f32.mxu0 0.0
      %v5900 = vand.u32 %v5402, 4294901760
      %5901 = vmatmul.mubr.f32.gmra.mxu0 %v5900
      %v5902 = vpop.f32.mrf.mxu0
      %v5903 = vadd.f32 %v5824, %v5902
      %v5904 = vpop.f32.mrf.mxu0
      %5905 = vdwg.mxu0
      %v5907 = vsel %vm317, %v307, 0
      %v5910 = vsel %vm317, %v308, 0
      %5912 = vmatprep.subr.mxu0 0.0
      %5913 = vmatpush1.msra.mxu0 0.0
      %5914 = vmatprep.subr.mxu0 0.0
      %5915 = vmatpush1.msra.mxu0 0.0
      %5916 = vmatprep.subr.mxu0 0.0
      %5917 = vmatpush1.msra.mxu0 0.0
      %5918 = vmatprep.subr.mxu0 0.0
      %5919 = vmatpush1.msra.mxu0 0.0
      %5920 = vmatprep.subr.mxu0 0.0
      %5921 = vmatpush1.msra.mxu0 0.0
      %5922 = vmatprep.subr.mxu0 0.0
      %5923 = vmatpush1.msra.mxu0 0.0
      %5924 = vmatprep.subr.mxu0 0.0
      %5925 = vmatpush1.msra.mxu0 0.0
      %5926 = vmatprep.subr.mxu0 0.0
      %5927 = vmatpush1.msra.mxu0 0.0
      %5928 = vmatprep.subr.mxu0 0.0
      %5929 = vmatpush1.msra.mxu0 0.0
      %5930 = vmatprep.subr.mxu0 0.0
      %5931 = vmatpush1.msra.mxu0 0.0
      %5932 = vmatprep.subr.mxu0 0.0
      %5933 = vmatpush1.msra.mxu0 0.0
      %5934 = vmatprep.subr.mxu0 0.0
      %5935 = vmatpush1.msra.mxu0 0.0
      %5936 = vmatprep.subr.mxu0 0.0
      %5937 = vmatpush1.msra.mxu0 0.0
      %5938 = vmatprep.subr.mxu0 0.0
      %5939 = vmatpush1.msra.mxu0 0.0
      %5940 = vmatprep.subr.mxu0 0.0
      %v5941 = vand.u32 %v276, 4294901760
      %5942 = vmatpush1.msra.mxu0 %v5941
      %5943 = vmatprep.subr.mxu0 0.0
      %v5944 = vand.u32 %v275, 4294901760
      %5945 = vmatpush1.msra.mxu0 %v5944
      %5946 = vmatprep.subr.mxu0 0.0
      %5947 = vmatpush2.msra.mxu0 0.0
      %5948 = vmatprep.subr.mxu0 0.0
      %5949 = vmatpush2.msra.mxu0 0.0
      %5950 = vmatprep.subr.mxu0 0.0
      %5951 = vmatpush2.msra.mxu0 0.0
      %5952 = vmatprep.subr.mxu0 0.0
      %5953 = vmatpush2.msra.mxu0 0.0
      %5954 = vmatprep.subr.mxu0 0.0
      %5955 = vmatpush2.msra.mxu0 0.0
      %5956 = vmatprep.subr.mxu0 0.0
      %5957 = vmatpush2.msra.mxu0 0.0
      %5958 = vmatprep.subr.mxu0 0.0
      %5959 = vmatpush2.msra.mxu0 0.0
      %5960 = vmatprep.subr.mxu0 0.0
      %5961 = vmatpush2.msra.mxu0 0.0
      %5962 = vmatprep.subr.mxu0 0.0
      %5963 = vmatpush2.msra.mxu0 0.0
      %5964 = vmatprep.subr.mxu0 0.0
      %5965 = vmatpush2.msra.mxu0 0.0
      %5966 = vmatprep.subr.mxu0 0.0
      %5967 = vmatpush2.msra.mxu0 0.0
      %5968 = vmatprep.subr.mxu0 0.0
      %5969 = vmatpush2.msra.mxu0 0.0
      %5970 = vmatprep.subr.mxu0 0.0
      %5971 = vmatpush2.msra.mxu0 0.0
      %5972 = vmatprep.subr.mxu0 0.0
      %5973 = vmatpush2.msra.mxu0 0.0
      %5974 = vmatprep.subr.mxu0 0.0
      %5975 = vmatpush2.msra.mxu0 0.0
      %5976 = vmatprep.subr.mxu0 0.0
      %5977 = vmatpush2.msra.mxu0 0.0
      %5978 = vmatprep.mubr.f32.mxu0 0.0
      %v5979 = vand.u32 %v5907, 4294901760
      %v5980 = vsub.f32 %v5907, %v5979
      %v5981 = vand.u32 %v5980, 4294901760
      %v5982 = vsub.f32 %v5980, %v5981
      %v5983 = vand.u32 %v5982, 4294901760
      %5984 = vmatmul.mubr.f32.gmra.mxu0 %v5983
      %v5985 = vpop.f32.mrf.mxu0
      %v5986 = vadd.f32 0.0, %v5985
      %v5987 = vpop.f32.mrf.mxu0
      %5988 = vmatprep.mubr.f32.mxu0 0.0
      %v5989 = vand.u32 %v5910, 4294901760
      %v5990 = vsub.f32 %v5910, %v5989
      %v5991 = vand.u32 %v5990, 4294901760
      %v5992 = vsub.f32 %v5990, %v5991
      %v5993 = vand.u32 %v5992, 4294901760
      %5994 = vmatmul.mubr.f32.gmra.mxu0 %v5993
      %v5995 = vpop.f32.mrf.mxu0
      %v5996 = vadd.f32 0.0, %v5995
      %v5997 = vpop.f32.mrf.mxu0
      %5998 = vdwg.mxu0
      %5999 = vmatprep.subr.mxu0 0.0
      %6000 = vmatpush1.msra.mxu0 0.0
      %6001 = vmatprep.subr.mxu0 0.0
      %6002 = vmatpush1.msra.mxu0 0.0
      %6003 = vmatprep.subr.mxu0 0.0
      %6004 = vmatpush1.msra.mxu0 0.0
      %6005 = vmatprep.subr.mxu0 0.0
      %6006 = vmatpush1.msra.mxu0 0.0
      %6007 = vmatprep.subr.mxu0 0.0
      %6008 = vmatpush1.msra.mxu0 0.0
      %6009 = vmatprep.subr.mxu0 0.0
      %6010 = vmatpush1.msra.mxu0 0.0
      %6011 = vmatprep.subr.mxu0 0.0
      %6012 = vmatpush1.msra.mxu0 0.0
      %6013 = vmatprep.subr.mxu0 0.0
      %6014 = vmatpush1.msra.mxu0 0.0
      %6015 = vmatprep.subr.mxu0 0.0
      %6016 = vmatpush1.msra.mxu0 0.0
      %6017 = vmatprep.subr.mxu0 0.0
      %6018 = vmatpush1.msra.mxu0 0.0
      %6019 = vmatprep.subr.mxu0 0.0
      %6020 = vmatpush1.msra.mxu0 0.0
      %6021 = vmatprep.subr.mxu0 0.0
      %6022 = vmatpush1.msra.mxu0 0.0
      %6023 = vmatprep.subr.mxu0 0.0
      %6024 = vmatpush1.msra.mxu0 0.0
      %6025 = vmatprep.subr.mxu0 0.0
      %6026 = vmatpush1.msra.mxu0 0.0
      %6027 = vmatprep.subr.mxu0 0.0
      %v6028 = vand.u32 %v276, 4294901760
      %v6029 = vsub.f32 %v276, %v6028
      %v6030 = vand.u32 %v6029, 4294901760
      %v6031 = vsub.f32 %v6029, %v6030
      %v6032 = vand.u32 %v6031, 4294901760
      %6033 = vmatpush1.msra.mxu0 %v6032
      %6034 = vmatprep.subr.mxu0 0.0
      %v6035 = vand.u32 %v275, 4294901760
      %v6036 = vsub.f32 %v275, %v6035
      %v6037 = vand.u32 %v6036, 4294901760
      %v6038 = vsub.f32 %v6036, %v6037
      %v6039 = vand.u32 %v6038, 4294901760
      %6040 = vmatpush1.msra.mxu0 %v6039
      %6041 = vmatprep.subr.mxu0 0.0
      %6042 = vmatpush2.msra.mxu0 0.0
      %6043 = vmatprep.subr.mxu0 0.0
      %6044 = vmatpush2.msra.mxu0 0.0
      %6045 = vmatprep.subr.mxu0 0.0
      %6046 = vmatpush2.msra.mxu0 0.0
      %6047 = vmatprep.subr.mxu0 0.0
      %6048 = vmatpush2.msra.mxu0 0.0
      %6049 = vmatprep.subr.mxu0 0.0
      %6050 = vmatpush2.msra.mxu0 0.0
      %6051 = vmatprep.subr.mxu0 0.0
      %6052 = vmatpush2.msra.mxu0 0.0
      %6053 = vmatprep.subr.mxu0 0.0
      %6054 = vmatpush2.msra.mxu0 0.0
      %6055 = vmatprep.subr.mxu0 0.0
      %6056 = vmatpush2.msra.mxu0 0.0
      %6057 = vmatprep.subr.mxu0 0.0
      %6058 = vmatpush2.msra.mxu0 0.0
      %6059 = vmatprep.subr.mxu0 0.0
      %6060 = vmatpush2.msra.mxu0 0.0
      %6061 = vmatprep.subr.mxu0 0.0
      %6062 = vmatpush2.msra.mxu0 0.0
      %6063 = vmatprep.subr.mxu0 0.0
      %6064 = vmatpush2.msra.mxu0 0.0
      %6065 = vmatprep.subr.mxu0 0.0
      %6066 = vmatpush2.msra.mxu0 0.0
      %6067 = vmatprep.subr.mxu0 0.0
      %6068 = vmatpush2.msra.mxu0 0.0
      %6069 = vmatprep.subr.mxu0 0.0
      %6070 = vmatpush2.msra.mxu0 0.0
      %6071 = vmatprep.subr.mxu0 0.0
      %6072 = vmatpush2.msra.mxu0 0.0
      %6073 = vmatprep.mubr.f32.mxu0 0.0
      %v6074 = vand.u32 %v5907, 4294901760
      %6075 = vmatmul.mubr.f32.gmra.mxu0 %v6074
      %v6076 = vpop.f32.mrf.mxu0
      %v6077 = vadd.f32 %v5986, %v6076
      %v6078 = vpop.f32.mrf.mxu0
      %6079 = vmatprep.mubr.f32.mxu0 0.0
      %v6080 = vand.u32 %v5910, 4294901760
      %6081 = vmatmul.mubr.f32.gmra.mxu0 %v6080
      %v6082 = vpop.f32.mrf.mxu0
      %v6083 = vadd.f32 %v5996, %v6082
      %v6084 = vpop.f32.mrf.mxu0
      %6085 = vdwg.mxu0
      %6086 = vmatprep.subr.mxu0 0.0
      %6087 = vmatpush1.msra.mxu0 0.0
      %6088 = vmatprep.subr.mxu0 0.0
      %6089 = vmatpush1.msra.mxu0 0.0
      %6090 = vmatprep.subr.mxu0 0.0
      %6091 = vmatpush1.msra.mxu0 0.0
      %6092 = vmatprep.subr.mxu0 0.0
      %6093 = vmatpush1.msra.mxu0 0.0
      %6094 = vmatprep.subr.mxu0 0.0
      %6095 = vmatpush1.msra.mxu0 0.0
      %6096 = vmatprep.subr.mxu0 0.0
      %6097 = vmatpush1.msra.mxu0 0.0
      %6098 = vmatprep.subr.mxu0 0.0
      %6099 = vmatpush1.msra.mxu0 0.0
      %6100 = vmatprep.subr.mxu0 0.0
      %6101 = vmatpush1.msra.mxu0 0.0
      %6102 = vmatprep.subr.mxu0 0.0
      %6103 = vmatpush1.msra.mxu0 0.0
      %6104 = vmatprep.subr.mxu0 0.0
      %6105 = vmatpush1.msra.mxu0 0.0
      %6106 = vmatprep.subr.mxu0 0.0
      %6107 = vmatpush1.msra.mxu0 0.0
      %6108 = vmatprep.subr.mxu0 0.0
      %6109 = vmatpush1.msra.mxu0 0.0
      %6110 = vmatprep.subr.mxu0 0.0
      %6111 = vmatpush1.msra.mxu0 0.0
      %6112 = vmatprep.subr.mxu0 0.0
      %6113 = vmatpush1.msra.mxu0 0.0
      %6114 = vmatprep.subr.mxu0 0.0
      %v6115 = vand.u32 %v276, 4294901760
      %v6116 = vsub.f32 %v276, %v6115
      %6117 = vmatpush1.msra.mxu0 %v6116
      %6118 = vmatprep.subr.mxu0 0.0
      %v6119 = vand.u32 %v275, 4294901760
      %v6120 = vsub.f32 %v275, %v6119
      %6121 = vmatpush1.msra.mxu0 %v6120
      %6122 = vmatprep.subr.mxu0 0.0
      %6123 = vmatpush2.msra.mxu0 0.0
      %6124 = vmatprep.subr.mxu0 0.0
      %6125 = vmatpush2.msra.mxu0 0.0
      %6126 = vmatprep.subr.mxu0 0.0
      %6127 = vmatpush2.msra.mxu0 0.0
      %6128 = vmatprep.subr.mxu0 0.0
      %6129 = vmatpush2.msra.mxu0 0.0
      %6130 = vmatprep.subr.mxu0 0.0
      %6131 = vmatpush2.msra.mxu0 0.0
      %6132 = vmatprep.subr.mxu0 0.0
      %6133 = vmatpush2.msra.mxu0 0.0
      %6134 = vmatprep.subr.mxu0 0.0
      %6135 = vmatpush2.msra.mxu0 0.0
      %6136 = vmatprep.subr.mxu0 0.0
      %6137 = vmatpush2.msra.mxu0 0.0
      %6138 = vmatprep.subr.mxu0 0.0
      %6139 = vmatpush2.msra.mxu0 0.0
      %6140 = vmatprep.subr.mxu0 0.0
      %6141 = vmatpush2.msra.mxu0 0.0
      %6142 = vmatprep.subr.mxu0 0.0
      %6143 = vmatpush2.msra.mxu0 0.0
      %6144 = vmatprep.subr.mxu0 0.0
      %6145 = vmatpush2.msra.mxu0 0.0
      %6146 = vmatprep.subr.mxu0 0.0
      %6147 = vmatpush2.msra.mxu0 0.0
      %6148 = vmatprep.subr.mxu0 0.0
      %6149 = vmatpush2.msra.mxu0 0.0
      %6150 = vmatprep.subr.mxu0 0.0
      %6151 = vmatpush2.msra.mxu0 0.0
      %6152 = vmatprep.subr.mxu0 0.0
      %6153 = vmatpush2.msra.mxu0 0.0
      %6154 = vmatprep.mubr.f32.mxu0 0.0
      %v6155 = vand.u32 %v5907, 4294901760
      %v6156 = vsub.f32 %v5907, %v6155
      %6157 = vmatmul.mubr.f32.gmra.mxu0 %v6156
      %v6158 = vpop.f32.mrf.mxu0
      %v6159 = vadd.f32 %v6077, %v6158
      %v6160 = vpop.f32.mrf.mxu0
      %6161 = vmatprep.mubr.f32.mxu0 0.0
      %v6162 = vand.u32 %v5910, 4294901760
      %v6163 = vsub.f32 %v5910, %v6162
      %6164 = vmatmul.mubr.f32.gmra.mxu0 %v6163
      %v6165 = vpop.f32.mrf.mxu0
      %v6166 = vadd.f32 %v6083, %v6165
      %v6167 = vpop.f32.mrf.mxu0
      %6168 = vdwg.mxu0
      %6169 = vmatprep.subr.mxu0 0.0
      %6170 = vmatpush1.msra.mxu0 0.0
      %6171 = vmatprep.subr.mxu0 0.0
      %6172 = vmatpush1.msra.mxu0 0.0
      %6173 = vmatprep.subr.mxu0 0.0
      %6174 = vmatpush1.msra.mxu0 0.0
      %6175 = vmatprep.subr.mxu0 0.0
      %6176 = vmatpush1.msra.mxu0 0.0
      %6177 = vmatprep.subr.mxu0 0.0
      %6178 = vmatpush1.msra.mxu0 0.0
      %6179 = vmatprep.subr.mxu0 0.0
      %6180 = vmatpush1.msra.mxu0 0.0
      %6181 = vmatprep.subr.mxu0 0.0
      %6182 = vmatpush1.msra.mxu0 0.0
      %6183 = vmatprep.subr.mxu0 0.0
      %6184 = vmatpush1.msra.mxu0 0.0
      %6185 = vmatprep.subr.mxu0 0.0
      %6186 = vmatpush1.msra.mxu0 0.0
      %6187 = vmatprep.subr.mxu0 0.0
      %6188 = vmatpush1.msra.mxu0 0.0
      %6189 = vmatprep.subr.mxu0 0.0
      %6190 = vmatpush1.msra.mxu0 0.0
      %6191 = vmatprep.subr.mxu0 0.0
      %6192 = vmatpush1.msra.mxu0 0.0
      %6193 = vmatprep.subr.mxu0 0.0
      %6194 = vmatpush1.msra.mxu0 0.0
      %6195 = vmatprep.subr.mxu0 0.0
      %6196 = vmatpush1.msra.mxu0 0.0
      %6197 = vmatprep.subr.mxu0 0.0
      %v6198 = vand.u32 %v276, 4294901760
      %6199 = vmatpush1.msra.mxu0 %v6198
      %6200 = vmatprep.subr.mxu0 0.0
      %v6201 = vand.u32 %v275, 4294901760
      %6202 = vmatpush1.msra.mxu0 %v6201
      %6203 = vmatprep.subr.mxu0 0.0
      %6204 = vmatpush2.msra.mxu0 0.0
      %6205 = vmatprep.subr.mxu0 0.0
      %6206 = vmatpush2.msra.mxu0 0.0
      %6207 = vmatprep.subr.mxu0 0.0
      %6208 = vmatpush2.msra.mxu0 0.0
      %6209 = vmatprep.subr.mxu0 0.0
      %6210 = vmatpush2.msra.mxu0 0.0
      %6211 = vmatprep.subr.mxu0 0.0
      %6212 = vmatpush2.msra.mxu0 0.0
      %6213 = vmatprep.subr.mxu0 0.0
      %6214 = vmatpush2.msra.mxu0 0.0
      %6215 = vmatprep.subr.mxu0 0.0
      %6216 = vmatpush2.msra.mxu0 0.0
      %6217 = vmatprep.subr.mxu0 0.0
      %6218 = vmatpush2.msra.mxu0 0.0
      %6219 = vmatprep.subr.mxu0 0.0
      %6220 = vmatpush2.msra.mxu0 0.0
      %6221 = vmatprep.subr.mxu0 0.0
      %6222 = vmatpush2.msra.mxu0 0.0
      %6223 = vmatprep.subr.mxu0 0.0
      %6224 = vmatpush2.msra.mxu0 0.0
      %6225 = vmatprep.subr.mxu0 0.0
      %6226 = vmatpush2.msra.mxu0 0.0
      %6227 = vmatprep.subr.mxu0 0.0
      %6228 = vmatpush2.msra.mxu0 0.0
      %6229 = vmatprep.subr.mxu0 0.0
      %6230 = vmatpush2.msra.mxu0 0.0
      %6231 = vmatprep.subr.mxu0 0.0
      %6232 = vmatpush2.msra.mxu0 0.0
      %6233 = vmatprep.subr.mxu0 0.0
      %6234 = vmatpush2.msra.mxu0 0.0
      %6235 = vmatprep.mubr.f32.mxu0 0.0
      %v6236 = vand.u32 %v5907, 4294901760
      %v6237 = vsub.f32 %v5907, %v6236
      %v6238 = vand.u32 %v6237, 4294901760
      %6239 = vmatmul.mubr.f32.gmra.mxu0 %v6238
      %v6240 = vpop.f32.mrf.mxu0
      %v6241 = vadd.f32 %v6159, %v6240
      %v6242 = vpop.f32.mrf.mxu0
      %6243 = vmatprep.mubr.f32.mxu0 0.0
      %v6244 = vand.u32 %v5910, 4294901760
      %v6245 = vsub.f32 %v5910, %v6244
      %v6246 = vand.u32 %v6245, 4294901760
      %6247 = vmatmul.mubr.f32.gmra.mxu0 %v6246
      %v6248 = vpop.f32.mrf.mxu0
      %v6249 = vadd.f32 %v6166, %v6248
      %v6250 = vpop.f32.mrf.mxu0
      %6251 = vdwg.mxu0
      %6252 = vmatprep.subr.mxu0 0.0
      %6253 = vmatpush1.msra.mxu0 0.0
      %6254 = vmatprep.subr.mxu0 0.0
      %6255 = vmatpush1.msra.mxu0 0.0
      %6256 = vmatprep.subr.mxu0 0.0
      %6257 = vmatpush1.msra.mxu0 0.0
      %6258 = vmatprep.subr.mxu0 0.0
      %6259 = vmatpush1.msra.mxu0 0.0
      %6260 = vmatprep.subr.mxu0 0.0
      %6261 = vmatpush1.msra.mxu0 0.0
      %6262 = vmatprep.subr.mxu0 0.0
      %6263 = vmatpush1.msra.mxu0 0.0
      %6264 = vmatprep.subr.mxu0 0.0
      %6265 = vmatpush1.msra.mxu0 0.0
      %6266 = vmatprep.subr.mxu0 0.0
      %6267 = vmatpush1.msra.mxu0 0.0
      %6268 = vmatprep.subr.mxu0 0.0
      %6269 = vmatpush1.msra.mxu0 0.0
      %6270 = vmatprep.subr.mxu0 0.0
      %6271 = vmatpush1.msra.mxu0 0.0
      %6272 = vmatprep.subr.mxu0 0.0
      %6273 = vmatpush1.msra.mxu0 0.0
      %6274 = vmatprep.subr.mxu0 0.0
      %6275 = vmatpush1.msra.mxu0 0.0
      %6276 = vmatprep.subr.mxu0 0.0
      %6277 = vmatpush1.msra.mxu0 0.0
      %6278 = vmatprep.subr.mxu0 0.0
      %6279 = vmatpush1.msra.mxu0 0.0
      %6280 = vmatprep.subr.mxu0 0.0
      %v6281 = vand.u32 %v276, 4294901760
      %v6282 = vsub.f32 %v276, %v6281
      %v6283 = vand.u32 %v6282, 4294901760
      %6284 = vmatpush1.msra.mxu0 %v6283
      %6285 = vmatprep.subr.mxu0 0.0
      %v6286 = vand.u32 %v275, 4294901760
      %v6287 = vsub.f32 %v275, %v6286
      %v6288 = vand.u32 %v6287, 4294901760
      %6289 = vmatpush1.msra.mxu0 %v6288
      %6290 = vmatprep.subr.mxu0 0.0
      %6291 = vmatpush2.msra.mxu0 0.0
      %6292 = vmatprep.subr.mxu0 0.0
      %6293 = vmatpush2.msra.mxu0 0.0
      %6294 = vmatprep.subr.mxu0 0.0
      %6295 = vmatpush2.msra.mxu0 0.0
      %6296 = vmatprep.subr.mxu0 0.0
      %6297 = vmatpush2.msra.mxu0 0.0
      %6298 = vmatprep.subr.mxu0 0.0
      %6299 = vmatpush2.msra.mxu0 0.0
      %6300 = vmatprep.subr.mxu0 0.0
      %6301 = vmatpush2.msra.mxu0 0.0
      %6302 = vmatprep.subr.mxu0 0.0
      %6303 = vmatpush2.msra.mxu0 0.0
      %6304 = vmatprep.subr.mxu0 0.0
      %6305 = vmatpush2.msra.mxu0 0.0
      %6306 = vmatprep.subr.mxu0 0.0
      %6307 = vmatpush2.msra.mxu0 0.0
      %6308 = vmatprep.subr.mxu0 0.0
      %6309 = vmatpush2.msra.mxu0 0.0
      %6310 = vmatprep.subr.mxu0 0.0
      %6311 = vmatpush2.msra.mxu0 0.0
      %6312 = vmatprep.subr.mxu0 0.0
      %6313 = vmatpush2.msra.mxu0 0.0
      %6314 = vmatprep.subr.mxu0 0.0
      %6315 = vmatpush2.msra.mxu0 0.0
      %6316 = vmatprep.subr.mxu0 0.0
      %6317 = vmatpush2.msra.mxu0 0.0
      %6318 = vmatprep.subr.mxu0 0.0
      %6319 = vmatpush2.msra.mxu0 0.0
      %6320 = vmatprep.subr.mxu0 0.0
      %6321 = vmatpush2.msra.mxu0 0.0
      %6322 = vmatprep.mubr.f32.mxu0 0.0
      %v6323 = vand.u32 %v5907, 4294901760
      %6324 = vmatmul.mubr.f32.gmra.mxu0 %v6323
      %v6325 = vpop.f32.mrf.mxu0
      %v6326 = vadd.f32 %v6241, %v6325
      %v6327 = vpop.f32.mrf.mxu0
      %6328 = vmatprep.mubr.f32.mxu0 0.0
      %v6329 = vand.u32 %v5910, 4294901760
      %6330 = vmatmul.mubr.f32.gmra.mxu0 %v6329
      %v6331 = vpop.f32.mrf.mxu0
      %v6332 = vadd.f32 %v6249, %v6331
      %v6333 = vpop.f32.mrf.mxu0
      %6334 = vdwg.mxu0
      %6335 = vmatprep.subr.mxu0 0.0
      %6336 = vmatpush1.msra.mxu0 0.0
      %6337 = vmatprep.subr.mxu0 0.0
      %6338 = vmatpush1.msra.mxu0 0.0
      %6339 = vmatprep.subr.mxu0 0.0
      %6340 = vmatpush1.msra.mxu0 0.0
      %6341 = vmatprep.subr.mxu0 0.0
      %6342 = vmatpush1.msra.mxu0 0.0
      %6343 = vmatprep.subr.mxu0 0.0
      %6344 = vmatpush1.msra.mxu0 0.0
      %6345 = vmatprep.subr.mxu0 0.0
      %6346 = vmatpush1.msra.mxu0 0.0
      %6347 = vmatprep.subr.mxu0 0.0
      %6348 = vmatpush1.msra.mxu0 0.0
      %6349 = vmatprep.subr.mxu0 0.0
      %6350 = vmatpush1.msra.mxu0 0.0
      %6351 = vmatprep.subr.mxu0 0.0
      %6352 = vmatpush1.msra.mxu0 0.0
      %6353 = vmatprep.subr.mxu0 0.0
      %6354 = vmatpush1.msra.mxu0 0.0
      %6355 = vmatprep.subr.mxu0 0.0
      %6356 = vmatpush1.msra.mxu0 0.0
      %6357 = vmatprep.subr.mxu0 0.0
      %6358 = vmatpush1.msra.mxu0 0.0
      %6359 = vmatprep.subr.mxu0 0.0
      %6360 = vmatpush1.msra.mxu0 0.0
      %6361 = vmatprep.subr.mxu0 0.0
      %6362 = vmatpush1.msra.mxu0 0.0
      %6363 = vmatprep.subr.mxu0 0.0
      %v6364 = vand.u32 %v276, 4294901760
      %6365 = vmatpush1.msra.mxu0 %v6364
      %6366 = vmatprep.subr.mxu0 0.0
      %v6367 = vand.u32 %v275, 4294901760
      %6368 = vmatpush1.msra.mxu0 %v6367
      %6369 = vmatprep.subr.mxu0 0.0
      %6370 = vmatpush2.msra.mxu0 0.0
      %6371 = vmatprep.subr.mxu0 0.0
      %6372 = vmatpush2.msra.mxu0 0.0
      %6373 = vmatprep.subr.mxu0 0.0
      %6374 = vmatpush2.msra.mxu0 0.0
      %6375 = vmatprep.subr.mxu0 0.0
      %6376 = vmatpush2.msra.mxu0 0.0
      %6377 = vmatprep.subr.mxu0 0.0
      %6378 = vmatpush2.msra.mxu0 0.0
      %6379 = vmatprep.subr.mxu0 0.0
      %6380 = vmatpush2.msra.mxu0 0.0
      %6381 = vmatprep.subr.mxu0 0.0
      %6382 = vmatpush2.msra.mxu0 0.0
      %6383 = vmatprep.subr.mxu0 0.0
      %6384 = vmatpush2.msra.mxu0 0.0
      %6385 = vmatprep.subr.mxu0 0.0
      %6386 = vmatpush2.msra.mxu0 0.0
      %6387 = vmatprep.subr.mxu0 0.0
      %6388 = vmatpush2.msra.mxu0 0.0
      %6389 = vmatprep.subr.mxu0 0.0
      %6390 = vmatpush2.msra.mxu0 0.0
      %6391 = vmatprep.subr.mxu0 0.0
      %6392 = vmatpush2.msra.mxu0 0.0
      %6393 = vmatprep.subr.mxu0 0.0
      %6394 = vmatpush2.msra.mxu0 0.0
      %6395 = vmatprep.subr.mxu0 0.0
      %6396 = vmatpush2.msra.mxu0 0.0
      %6397 = vmatprep.subr.mxu0 0.0
      %6398 = vmatpush2.msra.mxu0 0.0
      %6399 = vmatprep.subr.mxu0 0.0
      %6400 = vmatpush2.msra.mxu0 0.0
      %6401 = vmatprep.mubr.f32.mxu0 0.0
      %v6402 = vand.u32 %v5907, 4294901760
      %6403 = vmatmul.mubr.f32.gmra.mxu0 %v6402
      %v6404 = vpop.f32.mrf.mxu0
      %v6405 = vadd.f32 %v6326, %v6404
      %v6406 = vpop.f32.mrf.mxu0
      %6407 = vmatprep.mubr.f32.mxu0 0.0
      %v6408 = vand.u32 %v5910, 4294901760
      %6409 = vmatmul.mubr.f32.gmra.mxu0 %v6408
      %v6410 = vpop.f32.mrf.mxu0
      %v6411 = vadd.f32 %v6332, %v6410
      %v6412 = vpop.f32.mrf.mxu0
      %6413 = vdwg.mxu0
      %v6415 = vsel %vm317, %v309, 0
      %v6418 = vsel %vm317, %v310, 0
      %6420 = vmatprep.subr.mxu0 0.0
      %6421 = vmatpush1.msra.mxu0 0.0
      %6422 = vmatprep.subr.mxu0 0.0
      %6423 = vmatpush1.msra.mxu0 0.0
      %6424 = vmatprep.subr.mxu0 0.0
      %6425 = vmatpush1.msra.mxu0 0.0
      %6426 = vmatprep.subr.mxu0 0.0
      %6427 = vmatpush1.msra.mxu0 0.0
      %6428 = vmatprep.subr.mxu0 0.0
      %6429 = vmatpush1.msra.mxu0 0.0
      %6430 = vmatprep.subr.mxu0 0.0
      %6431 = vmatpush1.msra.mxu0 0.0
      %6432 = vmatprep.subr.mxu0 0.0
      %6433 = vmatpush1.msra.mxu0 0.0
      %6434 = vmatprep.subr.mxu0 0.0
      %6435 = vmatpush1.msra.mxu0 0.0
      %6436 = vmatprep.subr.mxu0 0.0
      %6437 = vmatpush1.msra.mxu0 0.0
      %6438 = vmatprep.subr.mxu0 0.0
      %6439 = vmatpush1.msra.mxu0 0.0
      %6440 = vmatprep.subr.mxu0 0.0
      %6441 = vmatpush1.msra.mxu0 0.0
      %6442 = vmatprep.subr.mxu0 0.0
      %6443 = vmatpush1.msra.mxu0 0.0
      %6444 = vmatprep.subr.mxu0 0.0
      %6445 = vmatpush1.msra.mxu0 0.0
      %6446 = vmatprep.subr.mxu0 0.0
      %6447 = vmatpush1.msra.mxu0 0.0
      %6448 = vmatprep.subr.mxu0 0.0
      %v6449 = vand.u32 %v278, 4294901760
      %6450 = vmatpush1.msra.mxu0 %v6449
      %6451 = vmatprep.subr.mxu0 0.0
      %v6452 = vand.u32 %v277, 4294901760
      %6453 = vmatpush1.msra.mxu0 %v6452
      %6454 = vmatprep.subr.mxu0 0.0
      %6455 = vmatpush2.msra.mxu0 0.0
      %6456 = vmatprep.subr.mxu0 0.0
      %6457 = vmatpush2.msra.mxu0 0.0
      %6458 = vmatprep.subr.mxu0 0.0
      %6459 = vmatpush2.msra.mxu0 0.0
      %6460 = vmatprep.subr.mxu0 0.0
      %6461 = vmatpush2.msra.mxu0 0.0
      %6462 = vmatprep.subr.mxu0 0.0
      %6463 = vmatpush2.msra.mxu0 0.0
      %6464 = vmatprep.subr.mxu0 0.0
      %6465 = vmatpush2.msra.mxu0 0.0
      %6466 = vmatprep.subr.mxu0 0.0
      %6467 = vmatpush2.msra.mxu0 0.0
      %6468 = vmatprep.subr.mxu0 0.0
      %6469 = vmatpush2.msra.mxu0 0.0
      %6470 = vmatprep.subr.mxu0 0.0
      %6471 = vmatpush2.msra.mxu0 0.0
      %6472 = vmatprep.subr.mxu0 0.0
      %6473 = vmatpush2.msra.mxu0 0.0
      %6474 = vmatprep.subr.mxu0 0.0
      %6475 = vmatpush2.msra.mxu0 0.0
      %6476 = vmatprep.subr.mxu0 0.0
      %6477 = vmatpush2.msra.mxu0 0.0
      %6478 = vmatprep.subr.mxu0 0.0
      %6479 = vmatpush2.msra.mxu0 0.0
      %6480 = vmatprep.subr.mxu0 0.0
      %6481 = vmatpush2.msra.mxu0 0.0
      %6482 = vmatprep.subr.mxu0 0.0
      %6483 = vmatpush2.msra.mxu0 0.0
      %6484 = vmatprep.subr.mxu0 0.0
      %6485 = vmatpush2.msra.mxu0 0.0
      %6486 = vmatprep.mubr.f32.mxu0 0.0
      %v6487 = vand.u32 %v6415, 4294901760
      %v6488 = vsub.f32 %v6415, %v6487
      %v6489 = vand.u32 %v6488, 4294901760
      %v6490 = vsub.f32 %v6488, %v6489
      %v6491 = vand.u32 %v6490, 4294901760
      %6492 = vmatmul.mubr.f32.gmra.mxu0 %v6491
      %v6493 = vpop.f32.mrf.mxu0
      %v6494 = vadd.f32 0.0, %v6493
      %v6495 = vpop.f32.mrf.mxu0
      %6496 = vmatprep.mubr.f32.mxu0 0.0
      %v6497 = vand.u32 %v6418, 4294901760
      %v6498 = vsub.f32 %v6418, %v6497
      %v6499 = vand.u32 %v6498, 4294901760
      %v6500 = vsub.f32 %v6498, %v6499
      %v6501 = vand.u32 %v6500, 4294901760
      %6502 = vmatmul.mubr.f32.gmra.mxu0 %v6501
      %v6503 = vpop.f32.mrf.mxu0
      %v6504 = vadd.f32 0.0, %v6503
      %v6505 = vpop.f32.mrf.mxu0
      %6506 = vdwg.mxu0
      %6507 = vmatprep.subr.mxu0 0.0
      %6508 = vmatpush1.msra.mxu0 0.0
      %6509 = vmatprep.subr.mxu0 0.0
      %6510 = vmatpush1.msra.mxu0 0.0
      %6511 = vmatprep.subr.mxu0 0.0
      %6512 = vmatpush1.msra.mxu0 0.0
      %6513 = vmatprep.subr.mxu0 0.0
      %6514 = vmatpush1.msra.mxu0 0.0
      %6515 = vmatprep.subr.mxu0 0.0
      %6516 = vmatpush1.msra.mxu0 0.0
      %6517 = vmatprep.subr.mxu0 0.0
      %6518 = vmatpush1.msra.mxu0 0.0
      %6519 = vmatprep.subr.mxu0 0.0
      %6520 = vmatpush1.msra.mxu0 0.0
      %6521 = vmatprep.subr.mxu0 0.0
      %6522 = vmatpush1.msra.mxu0 0.0
      %6523 = vmatprep.subr.mxu0 0.0
      %6524 = vmatpush1.msra.mxu0 0.0
      %6525 = vmatprep.subr.mxu0 0.0
      %6526 = vmatpush1.msra.mxu0 0.0
      %6527 = vmatprep.subr.mxu0 0.0
      %6528 = vmatpush1.msra.mxu0 0.0
      %6529 = vmatprep.subr.mxu0 0.0
      %6530 = vmatpush1.msra.mxu0 0.0
      %6531 = vmatprep.subr.mxu0 0.0
      %6532 = vmatpush1.msra.mxu0 0.0
      %6533 = vmatprep.subr.mxu0 0.0
      %6534 = vmatpush1.msra.mxu0 0.0
      %6535 = vmatprep.subr.mxu0 0.0
      %v6536 = vand.u32 %v278, 4294901760
      %v6537 = vsub.f32 %v278, %v6536
      %v6538 = vand.u32 %v6537, 4294901760
      %v6539 = vsub.f32 %v6537, %v6538
      %v6540 = vand.u32 %v6539, 4294901760
      %6541 = vmatpush1.msra.mxu0 %v6540
      %6542 = vmatprep.subr.mxu0 0.0
      %v6543 = vand.u32 %v277, 4294901760
      %v6544 = vsub.f32 %v277, %v6543
      %v6545 = vand.u32 %v6544, 4294901760
      %v6546 = vsub.f32 %v6544, %v6545
      %v6547 = vand.u32 %v6546, 4294901760
      %6548 = vmatpush1.msra.mxu0 %v6547
      %6549 = vmatprep.subr.mxu0 0.0
      %6550 = vmatpush2.msra.mxu0 0.0
      %6551 = vmatprep.subr.mxu0 0.0
      %6552 = vmatpush2.msra.mxu0 0.0
      %6553 = vmatprep.subr.mxu0 0.0
      %6554 = vmatpush2.msra.mxu0 0.0
      %6555 = vmatprep.subr.mxu0 0.0
      %6556 = vmatpush2.msra.mxu0 0.0
      %6557 = vmatprep.subr.mxu0 0.0
      %6558 = vmatpush2.msra.mxu0 0.0
      %6559 = vmatprep.subr.mxu0 0.0
      %6560 = vmatpush2.msra.mxu0 0.0
      %6561 = vmatprep.subr.mxu0 0.0
      %6562 = vmatpush2.msra.mxu0 0.0
      %6563 = vmatprep.subr.mxu0 0.0
      %6564 = vmatpush2.msra.mxu0 0.0
      %6565 = vmatprep.subr.mxu0 0.0
      %6566 = vmatpush2.msra.mxu0 0.0
      %6567 = vmatprep.subr.mxu0 0.0
      %6568 = vmatpush2.msra.mxu0 0.0
      %6569 = vmatprep.subr.mxu0 0.0
      %6570 = vmatpush2.msra.mxu0 0.0
      %6571 = vmatprep.subr.mxu0 0.0
      %6572 = vmatpush2.msra.mxu0 0.0
      %6573 = vmatprep.subr.mxu0 0.0
      %6574 = vmatpush2.msra.mxu0 0.0
      %6575 = vmatprep.subr.mxu0 0.0
      %6576 = vmatpush2.msra.mxu0 0.0
      %6577 = vmatprep.subr.mxu0 0.0
      %6578 = vmatpush2.msra.mxu0 0.0
      %6579 = vmatprep.subr.mxu0 0.0
      %6580 = vmatpush2.msra.mxu0 0.0
      %6581 = vmatprep.mubr.f32.mxu0 0.0
      %v6582 = vand.u32 %v6415, 4294901760
      %6583 = vmatmul.mubr.f32.gmra.mxu0 %v6582
      %v6584 = vpop.f32.mrf.mxu0
      %v6585 = vadd.f32 %v6494, %v6584
      %v6586 = vpop.f32.mrf.mxu0
      %6587 = vmatprep.mubr.f32.mxu0 0.0
      %v6588 = vand.u32 %v6418, 4294901760
      %6589 = vmatmul.mubr.f32.gmra.mxu0 %v6588
      %v6590 = vpop.f32.mrf.mxu0
      %v6591 = vadd.f32 %v6504, %v6590
      %v6592 = vpop.f32.mrf.mxu0
      %6593 = vdwg.mxu0
      %6594 = vmatprep.subr.mxu0 0.0
      %6595 = vmatpush1.msra.mxu0 0.0
      %6596 = vmatprep.subr.mxu0 0.0
      %6597 = vmatpush1.msra.mxu0 0.0
      %6598 = vmatprep.subr.mxu0 0.0
      %6599 = vmatpush1.msra.mxu0 0.0
      %6600 = vmatprep.subr.mxu0 0.0
      %6601 = vmatpush1.msra.mxu0 0.0
      %6602 = vmatprep.subr.mxu0 0.0
      %6603 = vmatpush1.msra.mxu0 0.0
      %6604 = vmatprep.subr.mxu0 0.0
      %6605 = vmatpush1.msra.mxu0 0.0
      %6606 = vmatprep.subr.mxu0 0.0
      %6607 = vmatpush1.msra.mxu0 0.0
      %6608 = vmatprep.subr.mxu0 0.0
      %6609 = vmatpush1.msra.mxu0 0.0
      %6610 = vmatprep.subr.mxu0 0.0
      %6611 = vmatpush1.msra.mxu0 0.0
      %6612 = vmatprep.subr.mxu0 0.0
      %6613 = vmatpush1.msra.mxu0 0.0
      %6614 = vmatprep.subr.mxu0 0.0
      %6615 = vmatpush1.msra.mxu0 0.0
      %6616 = vmatprep.subr.mxu0 0.0
      %6617 = vmatpush1.msra.mxu0 0.0
      %6618 = vmatprep.subr.mxu0 0.0
      %6619 = vmatpush1.msra.mxu0 0.0
      %6620 = vmatprep.subr.mxu0 0.0
      %6621 = vmatpush1.msra.mxu0 0.0
      %6622 = vmatprep.subr.mxu0 0.0
      %v6623 = vand.u32 %v278, 4294901760
      %v6624 = vsub.f32 %v278, %v6623
      %6625 = vmatpush1.msra.mxu0 %v6624
      %6626 = vmatprep.subr.mxu0 0.0
      %v6627 = vand.u32 %v277, 4294901760
      %v6628 = vsub.f32 %v277, %v6627
      %6629 = vmatpush1.msra.mxu0 %v6628
      %6630 = vmatprep.subr.mxu0 0.0
      %6631 = vmatpush2.msra.mxu0 0.0
      %6632 = vmatprep.subr.mxu0 0.0
      %6633 = vmatpush2.msra.mxu0 0.0
      %6634 = vmatprep.subr.mxu0 0.0
      %6635 = vmatpush2.msra.mxu0 0.0
      %6636 = vmatprep.subr.mxu0 0.0
      %6637 = vmatpush2.msra.mxu0 0.0
      %6638 = vmatprep.subr.mxu0 0.0
      %6639 = vmatpush2.msra.mxu0 0.0
      %6640 = vmatprep.subr.mxu0 0.0
      %6641 = vmatpush2.msra.mxu0 0.0
      %6642 = vmatprep.subr.mxu0 0.0
      %6643 = vmatpush2.msra.mxu0 0.0
      %6644 = vmatprep.subr.mxu0 0.0
      %6645 = vmatpush2.msra.mxu0 0.0
      %6646 = vmatprep.subr.mxu0 0.0
      %6647 = vmatpush2.msra.mxu0 0.0
      %6648 = vmatprep.subr.mxu0 0.0
      %6649 = vmatpush2.msra.mxu0 0.0
      %6650 = vmatprep.subr.mxu0 0.0
      %6651 = vmatpush2.msra.mxu0 0.0
      %6652 = vmatprep.subr.mxu0 0.0
      %6653 = vmatpush2.msra.mxu0 0.0
      %6654 = vmatprep.subr.mxu0 0.0
      %6655 = vmatpush2.msra.mxu0 0.0
      %6656 = vmatprep.subr.mxu0 0.0
      %6657 = vmatpush2.msra.mxu0 0.0
      %6658 = vmatprep.subr.mxu0 0.0
      %6659 = vmatpush2.msra.mxu0 0.0
      %6660 = vmatprep.subr.mxu0 0.0
      %6661 = vmatpush2.msra.mxu0 0.0
      %6662 = vmatprep.mubr.f32.mxu0 0.0
      %v6663 = vand.u32 %v6415, 4294901760
      %v6664 = vsub.f32 %v6415, %v6663
      %6665 = vmatmul.mubr.f32.gmra.mxu0 %v6664
      %v6666 = vpop.f32.mrf.mxu0
      %v6667 = vadd.f32 %v6585, %v6666
      %v6668 = vpop.f32.mrf.mxu0
      %6669 = vmatprep.mubr.f32.mxu0 0.0
      %v6670 = vand.u32 %v6418, 4294901760
      %v6671 = vsub.f32 %v6418, %v6670
      %6672 = vmatmul.mubr.f32.gmra.mxu0 %v6671
      %v6673 = vpop.f32.mrf.mxu0
      %v6674 = vadd.f32 %v6591, %v6673
      %v6675 = vpop.f32.mrf.mxu0
      %6676 = vdwg.mxu0
      %6677 = vmatprep.subr.mxu0 0.0
      %6678 = vmatpush1.msra.mxu0 0.0
      %6679 = vmatprep.subr.mxu0 0.0
      %6680 = vmatpush1.msra.mxu0 0.0
      %6681 = vmatprep.subr.mxu0 0.0
      %6682 = vmatpush1.msra.mxu0 0.0
      %6683 = vmatprep.subr.mxu0 0.0
      %6684 = vmatpush1.msra.mxu0 0.0
      %6685 = vmatprep.subr.mxu0 0.0
      %6686 = vmatpush1.msra.mxu0 0.0
      %6687 = vmatprep.subr.mxu0 0.0
      %6688 = vmatpush1.msra.mxu0 0.0
      %6689 = vmatprep.subr.mxu0 0.0
      %6690 = vmatpush1.msra.mxu0 0.0
      %6691 = vmatprep.subr.mxu0 0.0
      %6692 = vmatpush1.msra.mxu0 0.0
      %6693 = vmatprep.subr.mxu0 0.0
      %6694 = vmatpush1.msra.mxu0 0.0
      %6695 = vmatprep.subr.mxu0 0.0
      %6696 = vmatpush1.msra.mxu0 0.0
      %6697 = vmatprep.subr.mxu0 0.0
      %6698 = vmatpush1.msra.mxu0 0.0
      %6699 = vmatprep.subr.mxu0 0.0
      %6700 = vmatpush1.msra.mxu0 0.0
      %6701 = vmatprep.subr.mxu0 0.0
      %6702 = vmatpush1.msra.mxu0 0.0
      %6703 = vmatprep.subr.mxu0 0.0
      %6704 = vmatpush1.msra.mxu0 0.0
      %6705 = vmatprep.subr.mxu0 0.0
      %v6706 = vand.u32 %v278, 4294901760
      %6707 = vmatpush1.msra.mxu0 %v6706
      %6708 = vmatprep.subr.mxu0 0.0
      %v6709 = vand.u32 %v277, 4294901760
      %6710 = vmatpush1.msra.mxu0 %v6709
      %6711 = vmatprep.subr.mxu0 0.0
      %6712 = vmatpush2.msra.mxu0 0.0
      %6713 = vmatprep.subr.mxu0 0.0
      %6714 = vmatpush2.msra.mxu0 0.0
      %6715 = vmatprep.subr.mxu0 0.0
      %6716 = vmatpush2.msra.mxu0 0.0
      %6717 = vmatprep.subr.mxu0 0.0
      %6718 = vmatpush2.msra.mxu0 0.0
      %6719 = vmatprep.subr.mxu0 0.0
      %6720 = vmatpush2.msra.mxu0 0.0
      %6721 = vmatprep.subr.mxu0 0.0
      %6722 = vmatpush2.msra.mxu0 0.0
      %6723 = vmatprep.subr.mxu0 0.0
      %6724 = vmatpush2.msra.mxu0 0.0
      %6725 = vmatprep.subr.mxu0 0.0
      %6726 = vmatpush2.msra.mxu0 0.0
      %6727 = vmatprep.subr.mxu0 0.0
      %6728 = vmatpush2.msra.mxu0 0.0
      %6729 = vmatprep.subr.mxu0 0.0
      %6730 = vmatpush2.msra.mxu0 0.0
      %6731 = vmatprep.subr.mxu0 0.0
      %6732 = vmatpush2.msra.mxu0 0.0
      %6733 = vmatprep.subr.mxu0 0.0
      %6734 = vmatpush2.msra.mxu0 0.0
      %6735 = vmatprep.subr.mxu0 0.0
      %6736 = vmatpush2.msra.mxu0 0.0
      %6737 = vmatprep.subr.mxu0 0.0
      %6738 = vmatpush2.msra.mxu0 0.0
      %6739 = vmatprep.subr.mxu0 0.0
      %6740 = vmatpush2.msra.mxu0 0.0
      %6741 = vmatprep.subr.mxu0 0.0
      %6742 = vmatpush2.msra.mxu0 0.0
      %6743 = vmatprep.mubr.f32.mxu0 0.0
      %v6744 = vand.u32 %v6415, 4294901760
      %v6745 = vsub.f32 %v6415, %v6744
      %v6746 = vand.u32 %v6745, 4294901760
      %6747 = vmatmul.mubr.f32.gmra.mxu0 %v6746
      %v6748 = vpop.f32.mrf.mxu0
      %v6749 = vadd.f32 %v6667, %v6748
      %v6750 = vpop.f32.mrf.mxu0
      %6751 = vmatprep.mubr.f32.mxu0 0.0
      %v6752 = vand.u32 %v6418, 4294901760
      %v6753 = vsub.f32 %v6418, %v6752
      %v6754 = vand.u32 %v6753, 4294901760
      %6755 = vmatmul.mubr.f32.gmra.mxu0 %v6754
      %v6756 = vpop.f32.mrf.mxu0
      %v6757 = vadd.f32 %v6674, %v6756
      %v6758 = vpop.f32.mrf.mxu0
      %6759 = vdwg.mxu0
      %6760 = vmatprep.subr.mxu0 0.0
      %6761 = vmatpush1.msra.mxu0 0.0
      %6762 = vmatprep.subr.mxu0 0.0
      %6763 = vmatpush1.msra.mxu0 0.0
      %6764 = vmatprep.subr.mxu0 0.0
      %6765 = vmatpush1.msra.mxu0 0.0
      %6766 = vmatprep.subr.mxu0 0.0
      %6767 = vmatpush1.msra.mxu0 0.0
      %6768 = vmatprep.subr.mxu0 0.0
      %6769 = vmatpush1.msra.mxu0 0.0
      %6770 = vmatprep.subr.mxu0 0.0
      %6771 = vmatpush1.msra.mxu0 0.0
      %6772 = vmatprep.subr.mxu0 0.0
      %6773 = vmatpush1.msra.mxu0 0.0
      %6774 = vmatprep.subr.mxu0 0.0
      %6775 = vmatpush1.msra.mxu0 0.0
      %6776 = vmatprep.subr.mxu0 0.0
      %6777 = vmatpush1.msra.mxu0 0.0
      %6778 = vmatprep.subr.mxu0 0.0
      %6779 = vmatpush1.msra.mxu0 0.0
      %6780 = vmatprep.subr.mxu0 0.0
      %6781 = vmatpush1.msra.mxu0 0.0
      %6782 = vmatprep.subr.mxu0 0.0
      %6783 = vmatpush1.msra.mxu0 0.0
      %6784 = vmatprep.subr.mxu0 0.0
      %6785 = vmatpush1.msra.mxu0 0.0
      %6786 = vmatprep.subr.mxu0 0.0
      %6787 = vmatpush1.msra.mxu0 0.0
      %6788 = vmatprep.subr.mxu0 0.0
      %v6789 = vand.u32 %v278, 4294901760
      %v6790 = vsub.f32 %v278, %v6789
      %v6791 = vand.u32 %v6790, 4294901760
      %6792 = vmatpush1.msra.mxu0 %v6791
      %6793 = vmatprep.subr.mxu0 0.0
      %v6794 = vand.u32 %v277, 4294901760
      %v6795 = vsub.f32 %v277, %v6794
      %v6796 = vand.u32 %v6795, 4294901760
      %6797 = vmatpush1.msra.mxu0 %v6796
      %6798 = vmatprep.subr.mxu0 0.0
      %6799 = vmatpush2.msra.mxu0 0.0
      %6800 = vmatprep.subr.mxu0 0.0
      %6801 = vmatpush2.msra.mxu0 0.0
      %6802 = vmatprep.subr.mxu0 0.0
      %6803 = vmatpush2.msra.mxu0 0.0
      %6804 = vmatprep.subr.mxu0 0.0
      %6805 = vmatpush2.msra.mxu0 0.0
      %6806 = vmatprep.subr.mxu0 0.0
      %6807 = vmatpush2.msra.mxu0 0.0
      %6808 = vmatprep.subr.mxu0 0.0
      %6809 = vmatpush2.msra.mxu0 0.0
      %6810 = vmatprep.subr.mxu0 0.0
      %6811 = vmatpush2.msra.mxu0 0.0
      %6812 = vmatprep.subr.mxu0 0.0
      %6813 = vmatpush2.msra.mxu0 0.0
      %6814 = vmatprep.subr.mxu0 0.0
      %6815 = vmatpush2.msra.mxu0 0.0
      %6816 = vmatprep.subr.mxu0 0.0
      %6817 = vmatpush2.msra.mxu0 0.0
      %6818 = vmatprep.subr.mxu0 0.0
      %6819 = vmatpush2.msra.mxu0 0.0
      %6820 = vmatprep.subr.mxu0 0.0
      %6821 = vmatpush2.msra.mxu0 0.0
      %6822 = vmatprep.subr.mxu0 0.0
      %6823 = vmatpush2.msra.mxu0 0.0
      %6824 = vmatprep.subr.mxu0 0.0
      %6825 = vmatpush2.msra.mxu0 0.0
      %6826 = vmatprep.subr.mxu0 0.0
      %6827 = vmatpush2.msra.mxu0 0.0
      %6828 = vmatprep.subr.mxu0 0.0
      %6829 = vmatpush2.msra.mxu0 0.0
      %6830 = vmatprep.mubr.f32.mxu0 0.0
      %v6831 = vand.u32 %v6415, 4294901760
      %6832 = vmatmul.mubr.f32.gmra.mxu0 %v6831
      %v6833 = vpop.f32.mrf.mxu0
      %v6834 = vadd.f32 %v6749, %v6833
      %v6835 = vpop.f32.mrf.mxu0
      %6836 = vmatprep.mubr.f32.mxu0 0.0
      %v6837 = vand.u32 %v6418, 4294901760
      %6838 = vmatmul.mubr.f32.gmra.mxu0 %v6837
      %v6839 = vpop.f32.mrf.mxu0
      %v6840 = vadd.f32 %v6757, %v6839
      %v6841 = vpop.f32.mrf.mxu0
      %6842 = vdwg.mxu0
      %6843 = vmatprep.subr.mxu0 0.0
      %6844 = vmatpush1.msra.mxu0 0.0
      %6845 = vmatprep.subr.mxu0 0.0
      %6846 = vmatpush1.msra.mxu0 0.0
      %6847 = vmatprep.subr.mxu0 0.0
      %6848 = vmatpush1.msra.mxu0 0.0
      %6849 = vmatprep.subr.mxu0 0.0
      %6850 = vmatpush1.msra.mxu0 0.0
      %6851 = vmatprep.subr.mxu0 0.0
      %6852 = vmatpush1.msra.mxu0 0.0
      %6853 = vmatprep.subr.mxu0 0.0
      %6854 = vmatpush1.msra.mxu0 0.0
      %6855 = vmatprep.subr.mxu0 0.0
      %6856 = vmatpush1.msra.mxu0 0.0
      %6857 = vmatprep.subr.mxu0 0.0
      %6858 = vmatpush1.msra.mxu0 0.0
      %6859 = vmatprep.subr.mxu0 0.0
      %6860 = vmatpush1.msra.mxu0 0.0
      %6861 = vmatprep.subr.mxu0 0.0
      %6862 = vmatpush1.msra.mxu0 0.0
      %6863 = vmatprep.subr.mxu0 0.0
      %6864 = vmatpush1.msra.mxu0 0.0
      %6865 = vmatprep.subr.mxu0 0.0
      %6866 = vmatpush1.msra.mxu0 0.0
      %6867 = vmatprep.subr.mxu0 0.0
      %6868 = vmatpush1.msra.mxu0 0.0
      %6869 = vmatprep.subr.mxu0 0.0
      %6870 = vmatpush1.msra.mxu0 0.0
      %6871 = vmatprep.subr.mxu0 0.0
      %v6872 = vand.u32 %v278, 4294901760
      %6873 = vmatpush1.msra.mxu0 %v6872
      %6874 = vmatprep.subr.mxu0 0.0
      %v6875 = vand.u32 %v277, 4294901760
      %6876 = vmatpush1.msra.mxu0 %v6875
      %6877 = vmatprep.subr.mxu0 0.0
      %6878 = vmatpush2.msra.mxu0 0.0
      %6879 = vmatprep.subr.mxu0 0.0
      %6880 = vmatpush2.msra.mxu0 0.0
      %6881 = vmatprep.subr.mxu0 0.0
      %6882 = vmatpush2.msra.mxu0 0.0
      %6883 = vmatprep.subr.mxu0 0.0
      %6884 = vmatpush2.msra.mxu0 0.0
      %6885 = vmatprep.subr.mxu0 0.0
      %6886 = vmatpush2.msra.mxu0 0.0
      %6887 = vmatprep.subr.mxu0 0.0
      %6888 = vmatpush2.msra.mxu0 0.0
      %6889 = vmatprep.subr.mxu0 0.0
      %6890 = vmatpush2.msra.mxu0 0.0
      %6891 = vmatprep.subr.mxu0 0.0
      %6892 = vmatpush2.msra.mxu0 0.0
      %6893 = vmatprep.subr.mxu0 0.0
      %6894 = vmatpush2.msra.mxu0 0.0
      %6895 = vmatprep.subr.mxu0 0.0
      %6896 = vmatpush2.msra.mxu0 0.0
      %6897 = vmatprep.subr.mxu0 0.0
      %6898 = vmatpush2.msra.mxu0 0.0
      %6899 = vmatprep.subr.mxu0 0.0
      %6900 = vmatpush2.msra.mxu0 0.0
      %6901 = vmatprep.subr.mxu0 0.0
      %6902 = vmatpush2.msra.mxu0 0.0
      %6903 = vmatprep.subr.mxu0 0.0
      %6904 = vmatpush2.msra.mxu0 0.0
      %6905 = vmatprep.subr.mxu0 0.0
      %6906 = vmatpush2.msra.mxu0 0.0
      %6907 = vmatprep.subr.mxu0 0.0
      %6908 = vmatpush2.msra.mxu0 0.0
      %6909 = vmatprep.mubr.f32.mxu0 0.0
      %v6910 = vand.u32 %v6415, 4294901760
      %6911 = vmatmul.mubr.f32.gmra.mxu0 %v6910
      %v6912 = vpop.f32.mrf.mxu0
      %v6913 = vadd.f32 %v6834, %v6912
      %v6914 = vpop.f32.mrf.mxu0
      %6915 = vmatprep.mubr.f32.mxu0 0.0
      %v6916 = vand.u32 %v6418, 4294901760
      %6917 = vmatmul.mubr.f32.gmra.mxu0 %v6916
      %v6918 = vpop.f32.mrf.mxu0
      %v6919 = vadd.f32 %v6840, %v6918
      %v6920 = vpop.f32.mrf.mxu0
      %6921 = vdwg.mxu0
      %v6923 = vsel %vm317, %v311, 0
      %v6926 = vsel %vm317, %v312, 0
      %6928 = vmatprep.subr.mxu0 0.0
      %6929 = vmatpush1.msra.mxu0 0.0
      %6930 = vmatprep.subr.mxu0 0.0
      %6931 = vmatpush1.msra.mxu0 0.0
      %6932 = vmatprep.subr.mxu0 0.0
      %6933 = vmatpush1.msra.mxu0 0.0
      %6934 = vmatprep.subr.mxu0 0.0
      %6935 = vmatpush1.msra.mxu0 0.0
      %6936 = vmatprep.subr.mxu0 0.0
      %6937 = vmatpush1.msra.mxu0 0.0
      %6938 = vmatprep.subr.mxu0 0.0
      %6939 = vmatpush1.msra.mxu0 0.0
      %6940 = vmatprep.subr.mxu0 0.0
      %6941 = vmatpush1.msra.mxu0 0.0
      %6942 = vmatprep.subr.mxu0 0.0
      %6943 = vmatpush1.msra.mxu0 0.0
      %6944 = vmatprep.subr.mxu0 0.0
      %6945 = vmatpush1.msra.mxu0 0.0
      %6946 = vmatprep.subr.mxu0 0.0
      %6947 = vmatpush1.msra.mxu0 0.0
      %6948 = vmatprep.subr.mxu0 0.0
      %6949 = vmatpush1.msra.mxu0 0.0
      %6950 = vmatprep.subr.mxu0 0.0
      %6951 = vmatpush1.msra.mxu0 0.0
      %6952 = vmatprep.subr.mxu0 0.0
      %6953 = vmatpush1.msra.mxu0 0.0
      %6954 = vmatprep.subr.mxu0 0.0
      %6955 = vmatpush1.msra.mxu0 0.0
      %6956 = vmatprep.subr.mxu0 0.0
      %v6957 = vand.u32 %v280, 4294901760
      %6958 = vmatpush1.msra.mxu0 %v6957
      %6959 = vmatprep.subr.mxu0 0.0
      %v6960 = vand.u32 %v279, 4294901760
      %6961 = vmatpush1.msra.mxu0 %v6960
      %6962 = vmatprep.subr.mxu0 0.0
      %6963 = vmatpush2.msra.mxu0 0.0
      %6964 = vmatprep.subr.mxu0 0.0
      %6965 = vmatpush2.msra.mxu0 0.0
      %6966 = vmatprep.subr.mxu0 0.0
      %6967 = vmatpush2.msra.mxu0 0.0
      %6968 = vmatprep.subr.mxu0 0.0
      %6969 = vmatpush2.msra.mxu0 0.0
      %6970 = vmatprep.subr.mxu0 0.0
      %6971 = vmatpush2.msra.mxu0 0.0
      %6972 = vmatprep.subr.mxu0 0.0
      %6973 = vmatpush2.msra.mxu0 0.0
      %6974 = vmatprep.subr.mxu0 0.0
      %6975 = vmatpush2.msra.mxu0 0.0
      %6976 = vmatprep.subr.mxu0 0.0
      %6977 = vmatpush2.msra.mxu0 0.0
      %6978 = vmatprep.subr.mxu0 0.0
      %6979 = vmatpush2.msra.mxu0 0.0
      %6980 = vmatprep.subr.mxu0 0.0
      %6981 = vmatpush2.msra.mxu0 0.0
      %6982 = vmatprep.subr.mxu0 0.0
      %6983 = vmatpush2.msra.mxu0 0.0
      %6984 = vmatprep.subr.mxu0 0.0
      %6985 = vmatpush2.msra.mxu0 0.0
      %6986 = vmatprep.subr.mxu0 0.0
      %6987 = vmatpush2.msra.mxu0 0.0
      %6988 = vmatprep.subr.mxu0 0.0
      %6989 = vmatpush2.msra.mxu0 0.0
      %6990 = vmatprep.subr.mxu0 0.0
      %6991 = vmatpush2.msra.mxu0 0.0
      %6992 = vmatprep.subr.mxu0 0.0
      %6993 = vmatpush2.msra.mxu0 0.0
      %6994 = vmatprep.mubr.f32.mxu0 0.0
      %v6995 = vand.u32 %v6923, 4294901760
      %v6996 = vsub.f32 %v6923, %v6995
      %v6997 = vand.u32 %v6996, 4294901760
      %v6998 = vsub.f32 %v6996, %v6997
      %v6999 = vand.u32 %v6998, 4294901760
      %7000 = vmatmul.mubr.f32.gmra.mxu0 %v6999
      %v7001 = vpop.f32.mrf.mxu0
      %v7002 = vadd.f32 0.0, %v7001
      %v7003 = vpop.f32.mrf.mxu0
      %7004 = vmatprep.mubr.f32.mxu0 0.0
      %v7005 = vand.u32 %v6926, 4294901760
      %v7006 = vsub.f32 %v6926, %v7005
      %v7007 = vand.u32 %v7006, 4294901760
      %v7008 = vsub.f32 %v7006, %v7007
      %v7009 = vand.u32 %v7008, 4294901760
      %7010 = vmatmul.mubr.f32.gmra.mxu0 %v7009
      %v7011 = vpop.f32.mrf.mxu0
      %v7012 = vadd.f32 0.0, %v7011
      %v7013 = vpop.f32.mrf.mxu0
      %7014 = vdwg.mxu0
      %7015 = vmatprep.subr.mxu0 0.0
      %7016 = vmatpush1.msra.mxu0 0.0
      %7017 = vmatprep.subr.mxu0 0.0
      %7018 = vmatpush1.msra.mxu0 0.0
      %7019 = vmatprep.subr.mxu0 0.0
      %7020 = vmatpush1.msra.mxu0 0.0
      %7021 = vmatprep.subr.mxu0 0.0
      %7022 = vmatpush1.msra.mxu0 0.0
      %7023 = vmatprep.subr.mxu0 0.0
      %7024 = vmatpush1.msra.mxu0 0.0
      %7025 = vmatprep.subr.mxu0 0.0
      %7026 = vmatpush1.msra.mxu0 0.0
      %7027 = vmatprep.subr.mxu0 0.0
      %7028 = vmatpush1.msra.mxu0 0.0
      %7029 = vmatprep.subr.mxu0 0.0
      %7030 = vmatpush1.msra.mxu0 0.0
      %7031 = vmatprep.subr.mxu0 0.0
      %7032 = vmatpush1.msra.mxu0 0.0
      %7033 = vmatprep.subr.mxu0 0.0
      %7034 = vmatpush1.msra.mxu0 0.0
      %7035 = vmatprep.subr.mxu0 0.0
      %7036 = vmatpush1.msra.mxu0 0.0
      %7037 = vmatprep.subr.mxu0 0.0
      %7038 = vmatpush1.msra.mxu0 0.0
      %7039 = vmatprep.subr.mxu0 0.0
      %7040 = vmatpush1.msra.mxu0 0.0
      %7041 = vmatprep.subr.mxu0 0.0
      %7042 = vmatpush1.msra.mxu0 0.0
      %7043 = vmatprep.subr.mxu0 0.0
      %v7044 = vand.u32 %v280, 4294901760
      %v7045 = vsub.f32 %v280, %v7044
      %v7046 = vand.u32 %v7045, 4294901760
      %v7047 = vsub.f32 %v7045, %v7046
      %v7048 = vand.u32 %v7047, 4294901760
      %7049 = vmatpush1.msra.mxu0 %v7048
      %7050 = vmatprep.subr.mxu0 0.0
      %v7051 = vand.u32 %v279, 4294901760
      %v7052 = vsub.f32 %v279, %v7051
      %v7053 = vand.u32 %v7052, 4294901760
      %v7054 = vsub.f32 %v7052, %v7053
      %v7055 = vand.u32 %v7054, 4294901760
      %7056 = vmatpush1.msra.mxu0 %v7055
      %7057 = vmatprep.subr.mxu0 0.0
      %7058 = vmatpush2.msra.mxu0 0.0
      %7059 = vmatprep.subr.mxu0 0.0
      %7060 = vmatpush2.msra.mxu0 0.0
      %7061 = vmatprep.subr.mxu0 0.0
      %7062 = vmatpush2.msra.mxu0 0.0
      %7063 = vmatprep.subr.mxu0 0.0
      %7064 = vmatpush2.msra.mxu0 0.0
      %7065 = vmatprep.subr.mxu0 0.0
      %7066 = vmatpush2.msra.mxu0 0.0
      %7067 = vmatprep.subr.mxu0 0.0
      %7068 = vmatpush2.msra.mxu0 0.0
      %7069 = vmatprep.subr.mxu0 0.0
      %7070 = vmatpush2.msra.mxu0 0.0
      %7071 = vmatprep.subr.mxu0 0.0
      %7072 = vmatpush2.msra.mxu0 0.0
      %7073 = vmatprep.subr.mxu0 0.0
      %7074 = vmatpush2.msra.mxu0 0.0
      %7075 = vmatprep.subr.mxu0 0.0
      %7076 = vmatpush2.msra.mxu0 0.0
      %7077 = vmatprep.subr.mxu0 0.0
      %7078 = vmatpush2.msra.mxu0 0.0
      %7079 = vmatprep.subr.mxu0 0.0
      %7080 = vmatpush2.msra.mxu0 0.0
      %7081 = vmatprep.subr.mxu0 0.0
      %7082 = vmatpush2.msra.mxu0 0.0
      %7083 = vmatprep.subr.mxu0 0.0
      %7084 = vmatpush2.msra.mxu0 0.0
      %7085 = vmatprep.subr.mxu0 0.0
      %7086 = vmatpush2.msra.mxu0 0.0
      %7087 = vmatprep.subr.mxu0 0.0
      %7088 = vmatpush2.msra.mxu0 0.0
      %7089 = vmatprep.mubr.f32.mxu0 0.0
      %v7090 = vand.u32 %v6923, 4294901760
      %7091 = vmatmul.mubr.f32.gmra.mxu0 %v7090
      %v7092 = vpop.f32.mrf.mxu0
      %v7093 = vadd.f32 %v7002, %v7092
      %v7094 = vpop.f32.mrf.mxu0
      %7095 = vmatprep.mubr.f32.mxu0 0.0
      %v7096 = vand.u32 %v6926, 4294901760
      %7097 = vmatmul.mubr.f32.gmra.mxu0 %v7096
      %v7098 = vpop.f32.mrf.mxu0
      %v7099 = vadd.f32 %v7012, %v7098
      %v7100 = vpop.f32.mrf.mxu0
      %7101 = vdwg.mxu0
      %7102 = vmatprep.subr.mxu0 0.0
      %7103 = vmatpush1.msra.mxu0 0.0
      %7104 = vmatprep.subr.mxu0 0.0
      %7105 = vmatpush1.msra.mxu0 0.0
      %7106 = vmatprep.subr.mxu0 0.0
      %7107 = vmatpush1.msra.mxu0 0.0
      %7108 = vmatprep.subr.mxu0 0.0
      %7109 = vmatpush1.msra.mxu0 0.0
      %7110 = vmatprep.subr.mxu0 0.0
      %7111 = vmatpush1.msra.mxu0 0.0
      %7112 = vmatprep.subr.mxu0 0.0
      %7113 = vmatpush1.msra.mxu0 0.0
      %7114 = vmatprep.subr.mxu0 0.0
      %7115 = vmatpush1.msra.mxu0 0.0
      %7116 = vmatprep.subr.mxu0 0.0
      %7117 = vmatpush1.msra.mxu0 0.0
      %7118 = vmatprep.subr.mxu0 0.0
      %7119 = vmatpush1.msra.mxu0 0.0
      %7120 = vmatprep.subr.mxu0 0.0
      %7121 = vmatpush1.msra.mxu0 0.0
      %7122 = vmatprep.subr.mxu0 0.0
      %7123 = vmatpush1.msra.mxu0 0.0
      %7124 = vmatprep.subr.mxu0 0.0
      %7125 = vmatpush1.msra.mxu0 0.0
      %7126 = vmatprep.subr.mxu0 0.0
      %7127 = vmatpush1.msra.mxu0 0.0
      %7128 = vmatprep.subr.mxu0 0.0
      %7129 = vmatpush1.msra.mxu0 0.0
      %7130 = vmatprep.subr.mxu0 0.0
      %v7131 = vand.u32 %v280, 4294901760
      %v7132 = vsub.f32 %v280, %v7131
      %7133 = vmatpush1.msra.mxu0 %v7132
      %7134 = vmatprep.subr.mxu0 0.0
      %v7135 = vand.u32 %v279, 4294901760
      %v7136 = vsub.f32 %v279, %v7135
      %7137 = vmatpush1.msra.mxu0 %v7136
      %7138 = vmatprep.subr.mxu0 0.0
      %7139 = vmatpush2.msra.mxu0 0.0
      %7140 = vmatprep.subr.mxu0 0.0
      %7141 = vmatpush2.msra.mxu0 0.0
      %7142 = vmatprep.subr.mxu0 0.0
      %7143 = vmatpush2.msra.mxu0 0.0
      %7144 = vmatprep.subr.mxu0 0.0
      %7145 = vmatpush2.msra.mxu0 0.0
      %7146 = vmatprep.subr.mxu0 0.0
      %7147 = vmatpush2.msra.mxu0 0.0
      %7148 = vmatprep.subr.mxu0 0.0
      %7149 = vmatpush2.msra.mxu0 0.0
      %7150 = vmatprep.subr.mxu0 0.0
      %7151 = vmatpush2.msra.mxu0 0.0
      %7152 = vmatprep.subr.mxu0 0.0
      %7153 = vmatpush2.msra.mxu0 0.0
      %7154 = vmatprep.subr.mxu0 0.0
      %7155 = vmatpush2.msra.mxu0 0.0
      %7156 = vmatprep.subr.mxu0 0.0
      %7157 = vmatpush2.msra.mxu0 0.0
      %7158 = vmatprep.subr.mxu0 0.0
      %7159 = vmatpush2.msra.mxu0 0.0
      %7160 = vmatprep.subr.mxu0 0.0
      %7161 = vmatpush2.msra.mxu0 0.0
      %7162 = vmatprep.subr.mxu0 0.0
      %7163 = vmatpush2.msra.mxu0 0.0
      %7164 = vmatprep.subr.mxu0 0.0
      %7165 = vmatpush2.msra.mxu0 0.0
      %7166 = vmatprep.subr.mxu0 0.0
      %7167 = vmatpush2.msra.mxu0 0.0
      %7168 = vmatprep.subr.mxu0 0.0
      %7169 = vmatpush2.msra.mxu0 0.0
      %7170 = vmatprep.mubr.f32.mxu0 0.0
      %v7171 = vand.u32 %v6923, 4294901760
      %v7172 = vsub.f32 %v6923, %v7171
      %7173 = vmatmul.mubr.f32.gmra.mxu0 %v7172
      %v7174 = vpop.f32.mrf.mxu0
      %v7175 = vadd.f32 %v7093, %v7174
      %v7176 = vpop.f32.mrf.mxu0
      %7177 = vmatprep.mubr.f32.mxu0 0.0
      %v7178 = vand.u32 %v6926, 4294901760
      %v7179 = vsub.f32 %v6926, %v7178
      %7180 = vmatmul.mubr.f32.gmra.mxu0 %v7179
      %v7181 = vpop.f32.mrf.mxu0
      %v7182 = vadd.f32 %v7099, %v7181
      %v7183 = vpop.f32.mrf.mxu0
      %7184 = vdwg.mxu0
      %7185 = vmatprep.subr.mxu0 0.0
      %7186 = vmatpush1.msra.mxu0 0.0
      %7187 = vmatprep.subr.mxu0 0.0
      %7188 = vmatpush1.msra.mxu0 0.0
      %7189 = vmatprep.subr.mxu0 0.0
      %7190 = vmatpush1.msra.mxu0 0.0
      %7191 = vmatprep.subr.mxu0 0.0
      %7192 = vmatpush1.msra.mxu0 0.0
      %7193 = vmatprep.subr.mxu0 0.0
      %7194 = vmatpush1.msra.mxu0 0.0
      %7195 = vmatprep.subr.mxu0 0.0
      %7196 = vmatpush1.msra.mxu0 0.0
      %7197 = vmatprep.subr.mxu0 0.0
      %7198 = vmatpush1.msra.mxu0 0.0
      %7199 = vmatprep.subr.mxu0 0.0
      %7200 = vmatpush1.msra.mxu0 0.0
      %7201 = vmatprep.subr.mxu0 0.0
      %7202 = vmatpush1.msra.mxu0 0.0
      %7203 = vmatprep.subr.mxu0 0.0
      %7204 = vmatpush1.msra.mxu0 0.0
      %7205 = vmatprep.subr.mxu0 0.0
      %7206 = vmatpush1.msra.mxu0 0.0
      %7207 = vmatprep.subr.mxu0 0.0
      %7208 = vmatpush1.msra.mxu0 0.0
      %7209 = vmatprep.subr.mxu0 0.0
      %7210 = vmatpush1.msra.mxu0 0.0
      %7211 = vmatprep.subr.mxu0 0.0
      %7212 = vmatpush1.msra.mxu0 0.0
      %7213 = vmatprep.subr.mxu0 0.0
      %v7214 = vand.u32 %v280, 4294901760
      %7215 = vmatpush1.msra.mxu0 %v7214
      %7216 = vmatprep.subr.mxu0 0.0
      %v7217 = vand.u32 %v279, 4294901760
      %7218 = vmatpush1.msra.mxu0 %v7217
      %7219 = vmatprep.subr.mxu0 0.0
      %7220 = vmatpush2.msra.mxu0 0.0
      %7221 = vmatprep.subr.mxu0 0.0
      %7222 = vmatpush2.msra.mxu0 0.0
      %7223 = vmatprep.subr.mxu0 0.0
      %7224 = vmatpush2.msra.mxu0 0.0
      %7225 = vmatprep.subr.mxu0 0.0
      %7226 = vmatpush2.msra.mxu0 0.0
      %7227 = vmatprep.subr.mxu0 0.0
      %7228 = vmatpush2.msra.mxu0 0.0
      %7229 = vmatprep.subr.mxu0 0.0
      %7230 = vmatpush2.msra.mxu0 0.0
      %7231 = vmatprep.subr.mxu0 0.0
      %7232 = vmatpush2.msra.mxu0 0.0
      %7233 = vmatprep.subr.mxu0 0.0
      %7234 = vmatpush2.msra.mxu0 0.0
      %7235 = vmatprep.subr.mxu0 0.0
      %7236 = vmatpush2.msra.mxu0 0.0
      %7237 = vmatprep.subr.mxu0 0.0
      %7238 = vmatpush2.msra.mxu0 0.0
      %7239 = vmatprep.subr.mxu0 0.0
      %7240 = vmatpush2.msra.mxu0 0.0
      %7241 = vmatprep.subr.mxu0 0.0
      %7242 = vmatpush2.msra.mxu0 0.0
      %7243 = vmatprep.subr.mxu0 0.0
      %7244 = vmatpush2.msra.mxu0 0.0
      %7245 = vmatprep.subr.mxu0 0.0
      %7246 = vmatpush2.msra.mxu0 0.0
      %7247 = vmatprep.subr.mxu0 0.0
      %7248 = vmatpush2.msra.mxu0 0.0
      %7249 = vmatprep.subr.mxu0 0.0
      %7250 = vmatpush2.msra.mxu0 0.0
      %7251 = vmatprep.mubr.f32.mxu0 0.0
      %v7252 = vand.u32 %v6923, 4294901760
      %v7253 = vsub.f32 %v6923, %v7252
      %v7254 = vand.u32 %v7253, 4294901760
      %7255 = vmatmul.mubr.f32.gmra.mxu0 %v7254
      %v7256 = vpop.f32.mrf.mxu0
      %v7257 = vadd.f32 %v7175, %v7256
      %v7258 = vpop.f32.mrf.mxu0
      %7259 = vmatprep.mubr.f32.mxu0 0.0
      %v7260 = vand.u32 %v6926, 4294901760
      %v7261 = vsub.f32 %v6926, %v7260
      %v7262 = vand.u32 %v7261, 4294901760
      %7263 = vmatmul.mubr.f32.gmra.mxu0 %v7262
      %v7264 = vpop.f32.mrf.mxu0
      %v7265 = vadd.f32 %v7182, %v7264
      %v7266 = vpop.f32.mrf.mxu0
      %7267 = vdwg.mxu0
      %7268 = vmatprep.subr.mxu0 0.0
      %7269 = vmatpush1.msra.mxu0 0.0
      %7270 = vmatprep.subr.mxu0 0.0
      %7271 = vmatpush1.msra.mxu0 0.0
      %7272 = vmatprep.subr.mxu0 0.0
      %7273 = vmatpush1.msra.mxu0 0.0
      %7274 = vmatprep.subr.mxu0 0.0
      %7275 = vmatpush1.msra.mxu0 0.0
      %7276 = vmatprep.subr.mxu0 0.0
      %7277 = vmatpush1.msra.mxu0 0.0
      %7278 = vmatprep.subr.mxu0 0.0
      %7279 = vmatpush1.msra.mxu0 0.0
      %7280 = vmatprep.subr.mxu0 0.0
      %7281 = vmatpush1.msra.mxu0 0.0
      %7282 = vmatprep.subr.mxu0 0.0
      %7283 = vmatpush1.msra.mxu0 0.0
      %7284 = vmatprep.subr.mxu0 0.0
      %7285 = vmatpush1.msra.mxu0 0.0
      %7286 = vmatprep.subr.mxu0 0.0
      %7287 = vmatpush1.msra.mxu0 0.0
      %7288 = vmatprep.subr.mxu0 0.0
      %7289 = vmatpush1.msra.mxu0 0.0
      %7290 = vmatprep.subr.mxu0 0.0
      %7291 = vmatpush1.msra.mxu0 0.0
      %7292 = vmatprep.subr.mxu0 0.0
      %7293 = vmatpush1.msra.mxu0 0.0
      %7294 = vmatprep.subr.mxu0 0.0
      %7295 = vmatpush1.msra.mxu0 0.0
      %7296 = vmatprep.subr.mxu0 0.0
      %v7297 = vand.u32 %v280, 4294901760
      %v7298 = vsub.f32 %v280, %v7297
      %v7299 = vand.u32 %v7298, 4294901760
      %7300 = vmatpush1.msra.mxu0 %v7299
      %7301 = vmatprep.subr.mxu0 0.0
      %v7302 = vand.u32 %v279, 4294901760
      %v7303 = vsub.f32 %v279, %v7302
      %v7304 = vand.u32 %v7303, 4294901760
      %7305 = vmatpush1.msra.mxu0 %v7304
      %7306 = vmatprep.subr.mxu0 0.0
      %7307 = vmatpush2.msra.mxu0 0.0
      %7308 = vmatprep.subr.mxu0 0.0
      %7309 = vmatpush2.msra.mxu0 0.0
      %7310 = vmatprep.subr.mxu0 0.0
      %7311 = vmatpush2.msra.mxu0 0.0
      %7312 = vmatprep.subr.mxu0 0.0
      %7313 = vmatpush2.msra.mxu0 0.0
      %7314 = vmatprep.subr.mxu0 0.0
      %7315 = vmatpush2.msra.mxu0 0.0
      %7316 = vmatprep.subr.mxu0 0.0
      %7317 = vmatpush2.msra.mxu0 0.0
      %7318 = vmatprep.subr.mxu0 0.0
      %7319 = vmatpush2.msra.mxu0 0.0
      %7320 = vmatprep.subr.mxu0 0.0
      %7321 = vmatpush2.msra.mxu0 0.0
      %7322 = vmatprep.subr.mxu0 0.0
      %7323 = vmatpush2.msra.mxu0 0.0
      %7324 = vmatprep.subr.mxu0 0.0
      %7325 = vmatpush2.msra.mxu0 0.0
      %7326 = vmatprep.subr.mxu0 0.0
      %7327 = vmatpush2.msra.mxu0 0.0
      %7328 = vmatprep.subr.mxu0 0.0
      %7329 = vmatpush2.msra.mxu0 0.0
      %7330 = vmatprep.subr.mxu0 0.0
      %7331 = vmatpush2.msra.mxu0 0.0
      %7332 = vmatprep.subr.mxu0 0.0
      %7333 = vmatpush2.msra.mxu0 0.0
      %7334 = vmatprep.subr.mxu0 0.0
      %7335 = vmatpush2.msra.mxu0 0.0
      %7336 = vmatprep.subr.mxu0 0.0
      %7337 = vmatpush2.msra.mxu0 0.0
      %7338 = vmatprep.mubr.f32.mxu0 0.0
      %v7339 = vand.u32 %v6923, 4294901760
      %7340 = vmatmul.mubr.f32.gmra.mxu0 %v7339
      %v7341 = vpop.f32.mrf.mxu0
      %v7342 = vadd.f32 %v7257, %v7341
      %v7343 = vpop.f32.mrf.mxu0
      %7344 = vmatprep.mubr.f32.mxu0 0.0
      %v7345 = vand.u32 %v6926, 4294901760
      %7346 = vmatmul.mubr.f32.gmra.mxu0 %v7345
      %v7347 = vpop.f32.mrf.mxu0
      %v7348 = vadd.f32 %v7265, %v7347
      %v7349 = vpop.f32.mrf.mxu0
      %7350 = vdwg.mxu0
      %7351 = vmatprep.subr.mxu0 0.0
      %7352 = vmatpush1.msra.mxu0 0.0
      %7353 = vmatprep.subr.mxu0 0.0
      %7354 = vmatpush1.msra.mxu0 0.0
      %7355 = vmatprep.subr.mxu0 0.0
      %7356 = vmatpush1.msra.mxu0 0.0
      %7357 = vmatprep.subr.mxu0 0.0
      %7358 = vmatpush1.msra.mxu0 0.0
      %7359 = vmatprep.subr.mxu0 0.0
      %7360 = vmatpush1.msra.mxu0 0.0
      %7361 = vmatprep.subr.mxu0 0.0
      %7362 = vmatpush1.msra.mxu0 0.0
      %7363 = vmatprep.subr.mxu0 0.0
      %7364 = vmatpush1.msra.mxu0 0.0
      %7365 = vmatprep.subr.mxu0 0.0
      %7366 = vmatpush1.msra.mxu0 0.0
      %7367 = vmatprep.subr.mxu0 0.0
      %7368 = vmatpush1.msra.mxu0 0.0
      %7369 = vmatprep.subr.mxu0 0.0
      %7370 = vmatpush1.msra.mxu0 0.0
      %7371 = vmatprep.subr.mxu0 0.0
      %7372 = vmatpush1.msra.mxu0 0.0
      %7373 = vmatprep.subr.mxu0 0.0
      %7374 = vmatpush1.msra.mxu0 0.0
      %7375 = vmatprep.subr.mxu0 0.0
      %7376 = vmatpush1.msra.mxu0 0.0
      %7377 = vmatprep.subr.mxu0 0.0
      %7378 = vmatpush1.msra.mxu0 0.0
      %7379 = vmatprep.subr.mxu0 0.0
      %v7380 = vand.u32 %v280, 4294901760
      %7381 = vmatpush1.msra.mxu0 %v7380
      %7382 = vmatprep.subr.mxu0 0.0
      %v7383 = vand.u32 %v279, 4294901760
      %7384 = vmatpush1.msra.mxu0 %v7383
      %7385 = vmatprep.subr.mxu0 0.0
      %7386 = vmatpush2.msra.mxu0 0.0
      %7387 = vmatprep.subr.mxu0 0.0
      %7388 = vmatpush2.msra.mxu0 0.0
      %7389 = vmatprep.subr.mxu0 0.0
      %7390 = vmatpush2.msra.mxu0 0.0
      %7391 = vmatprep.subr.mxu0 0.0
      %7392 = vmatpush2.msra.mxu0 0.0
      %7393 = vmatprep.subr.mxu0 0.0
      %7394 = vmatpush2.msra.mxu0 0.0
      %7395 = vmatprep.subr.mxu0 0.0
      %7396 = vmatpush2.msra.mxu0 0.0
      %7397 = vmatprep.subr.mxu0 0.0
      %7398 = vmatpush2.msra.mxu0 0.0
      %7399 = vmatprep.subr.mxu0 0.0
      %7400 = vmatpush2.msra.mxu0 0.0
      %7401 = vmatprep.subr.mxu0 0.0
      %7402 = vmatpush2.msra.mxu0 0.0
      %7403 = vmatprep.subr.mxu0 0.0
      %7404 = vmatpush2.msra.mxu0 0.0
      %7405 = vmatprep.subr.mxu0 0.0
      %7406 = vmatpush2.msra.mxu0 0.0
      %7407 = vmatprep.subr.mxu0 0.0
      %7408 = vmatpush2.msra.mxu0 0.0
      %7409 = vmatprep.subr.mxu0 0.0
      %7410 = vmatpush2.msra.mxu0 0.0
      %7411 = vmatprep.subr.mxu0 0.0
      %7412 = vmatpush2.msra.mxu0 0.0
      %7413 = vmatprep.subr.mxu0 0.0
      %7414 = vmatpush2.msra.mxu0 0.0
      %7415 = vmatprep.subr.mxu0 0.0
      %7416 = vmatpush2.msra.mxu0 0.0
      %7417 = vmatprep.mubr.f32.mxu0 0.0
      %v7418 = vand.u32 %v6923, 4294901760
      %7419 = vmatmul.mubr.f32.gmra.mxu0 %v7418
      %v7420 = vpop.f32.mrf.mxu0
      %v7421 = vadd.f32 %v7342, %v7420
      %v7422 = vpop.f32.mrf.mxu0
      %7423 = vmatprep.mubr.f32.mxu0 0.0
      %v7424 = vand.u32 %v6926, 4294901760
      %7425 = vmatmul.mubr.f32.gmra.mxu0 %v7424
      %v7426 = vpop.f32.mrf.mxu0
      %v7427 = vadd.f32 %v7348, %v7426
      %v7428 = vpop.f32.mrf.mxu0
      %7429 = vdwg.mxu0
      %v7431 = vsel %vm317, %v313, 0
      %v7434 = vsel %vm317, %v314, 0
      %7436 = vmatprep.subr.mxu0 0.0
      %7437 = vmatpush1.msra.mxu0 0.0
      %7438 = vmatprep.subr.mxu0 0.0
      %7439 = vmatpush1.msra.mxu0 0.0
      %7440 = vmatprep.subr.mxu0 0.0
      %7441 = vmatpush1.msra.mxu0 0.0
      %7442 = vmatprep.subr.mxu0 0.0
      %7443 = vmatpush1.msra.mxu0 0.0
      %7444 = vmatprep.subr.mxu0 0.0
      %7445 = vmatpush1.msra.mxu0 0.0
      %7446 = vmatprep.subr.mxu0 0.0
      %7447 = vmatpush1.msra.mxu0 0.0
      %7448 = vmatprep.subr.mxu0 0.0
      %7449 = vmatpush1.msra.mxu0 0.0
      %7450 = vmatprep.subr.mxu0 0.0
      %7451 = vmatpush1.msra.mxu0 0.0
      %7452 = vmatprep.subr.mxu0 0.0
      %7453 = vmatpush1.msra.mxu0 0.0
      %7454 = vmatprep.subr.mxu0 0.0
      %7455 = vmatpush1.msra.mxu0 0.0
      %7456 = vmatprep.subr.mxu0 0.0
      %7457 = vmatpush1.msra.mxu0 0.0
      %7458 = vmatprep.subr.mxu0 0.0
      %7459 = vmatpush1.msra.mxu0 0.0
      %7460 = vmatprep.subr.mxu0 0.0
      %7461 = vmatpush1.msra.mxu0 0.0
      %7462 = vmatprep.subr.mxu0 0.0
      %7463 = vmatpush1.msra.mxu0 0.0
      %7464 = vmatprep.subr.mxu0 0.0
      %v7465 = vand.u32 %v282, 4294901760
      %7466 = vmatpush1.msra.mxu0 %v7465
      %7467 = vmatprep.subr.mxu0 0.0
      %v7468 = vand.u32 %v281, 4294901760
      %7469 = vmatpush1.msra.mxu0 %v7468
      %7470 = vmatprep.subr.mxu0 0.0
      %7471 = vmatpush2.msra.mxu0 0.0
      %7472 = vmatprep.subr.mxu0 0.0
      %7473 = vmatpush2.msra.mxu0 0.0
      %7474 = vmatprep.subr.mxu0 0.0
      %7475 = vmatpush2.msra.mxu0 0.0
      %7476 = vmatprep.subr.mxu0 0.0
      %7477 = vmatpush2.msra.mxu0 0.0
      %7478 = vmatprep.subr.mxu0 0.0
      %7479 = vmatpush2.msra.mxu0 0.0
      %7480 = vmatprep.subr.mxu0 0.0
      %7481 = vmatpush2.msra.mxu0 0.0
      %7482 = vmatprep.subr.mxu0 0.0
      %7483 = vmatpush2.msra.mxu0 0.0
      %7484 = vmatprep.subr.mxu0 0.0
      %7485 = vmatpush2.msra.mxu0 0.0
      %7486 = vmatprep.subr.mxu0 0.0
      %7487 = vmatpush2.msra.mxu0 0.0
      %7488 = vmatprep.subr.mxu0 0.0
      %7489 = vmatpush2.msra.mxu0 0.0
      %7490 = vmatprep.subr.mxu0 0.0
      %7491 = vmatpush2.msra.mxu0 0.0
      %7492 = vmatprep.subr.mxu0 0.0
      %7493 = vmatpush2.msra.mxu0 0.0
      %7494 = vmatprep.subr.mxu0 0.0
      %7495 = vmatpush2.msra.mxu0 0.0
      %7496 = vmatprep.subr.mxu0 0.0
      %7497 = vmatpush2.msra.mxu0 0.0
      %7498 = vmatprep.subr.mxu0 0.0
      %7499 = vmatpush2.msra.mxu0 0.0
      %7500 = vmatprep.subr.mxu0 0.0
      %7501 = vmatpush2.msra.mxu0 0.0
      %7502 = vmatprep.mubr.f32.mxu0 0.0
      %v7503 = vand.u32 %v7431, 4294901760
      %v7504 = vsub.f32 %v7431, %v7503
      %v7505 = vand.u32 %v7504, 4294901760
      %v7506 = vsub.f32 %v7504, %v7505
      %v7507 = vand.u32 %v7506, 4294901760
      %7508 = vmatmul.mubr.f32.gmra.mxu0 %v7507
      %v7509 = vpop.f32.mrf.mxu0
      %v7510 = vadd.f32 0.0, %v7509
      %v7511 = vpop.f32.mrf.mxu0
      %7512 = vmatprep.mubr.f32.mxu0 0.0
      %v7513 = vand.u32 %v7434, 4294901760
      %v7514 = vsub.f32 %v7434, %v7513
      %v7515 = vand.u32 %v7514, 4294901760
      %v7516 = vsub.f32 %v7514, %v7515
      %v7517 = vand.u32 %v7516, 4294901760
      %7518 = vmatmul.mubr.f32.gmra.mxu0 %v7517
      %v7519 = vpop.f32.mrf.mxu0
      %v7520 = vadd.f32 0.0, %v7519
      %v7521 = vpop.f32.mrf.mxu0
      %7522 = vdwg.mxu0
      %7523 = vmatprep.subr.mxu0 0.0
      %7524 = vmatpush1.msra.mxu0 0.0
      %7525 = vmatprep.subr.mxu0 0.0
      %7526 = vmatpush1.msra.mxu0 0.0
      %7527 = vmatprep.subr.mxu0 0.0
      %7528 = vmatpush1.msra.mxu0 0.0
      %7529 = vmatprep.subr.mxu0 0.0
      %7530 = vmatpush1.msra.mxu0 0.0
      %7531 = vmatprep.subr.mxu0 0.0
      %7532 = vmatpush1.msra.mxu0 0.0
      %7533 = vmatprep.subr.mxu0 0.0
      %7534 = vmatpush1.msra.mxu0 0.0
      %7535 = vmatprep.subr.mxu0 0.0
      %7536 = vmatpush1.msra.mxu0 0.0
      %7537 = vmatprep.subr.mxu0 0.0
      %7538 = vmatpush1.msra.mxu0 0.0
      %7539 = vmatprep.subr.mxu0 0.0
      %7540 = vmatpush1.msra.mxu0 0.0
      %7541 = vmatprep.subr.mxu0 0.0
      %7542 = vmatpush1.msra.mxu0 0.0
      %7543 = vmatprep.subr.mxu0 0.0
      %7544 = vmatpush1.msra.mxu0 0.0
      %7545 = vmatprep.subr.mxu0 0.0
      %7546 = vmatpush1.msra.mxu0 0.0
      %7547 = vmatprep.subr.mxu0 0.0
      %7548 = vmatpush1.msra.mxu0 0.0
      %7549 = vmatprep.subr.mxu0 0.0
      %7550 = vmatpush1.msra.mxu0 0.0
      %7551 = vmatprep.subr.mxu0 0.0
      %v7552 = vand.u32 %v282, 4294901760
      %v7553 = vsub.f32 %v282, %v7552
      %v7554 = vand.u32 %v7553, 4294901760
      %v7555 = vsub.f32 %v7553, %v7554
      %v7556 = vand.u32 %v7555, 4294901760
      %7557 = vmatpush1.msra.mxu0 %v7556
      %7558 = vmatprep.subr.mxu0 0.0
      %v7559 = vand.u32 %v281, 4294901760
      %v7560 = vsub.f32 %v281, %v7559
      %v7561 = vand.u32 %v7560, 4294901760
      %v7562 = vsub.f32 %v7560, %v7561
      %v7563 = vand.u32 %v7562, 4294901760
      %7564 = vmatpush1.msra.mxu0 %v7563
      %7565 = vmatprep.subr.mxu0 0.0
      %7566 = vmatpush2.msra.mxu0 0.0
      %7567 = vmatprep.subr.mxu0 0.0
      %7568 = vmatpush2.msra.mxu0 0.0
      %7569 = vmatprep.subr.mxu0 0.0
      %7570 = vmatpush2.msra.mxu0 0.0
      %7571 = vmatprep.subr.mxu0 0.0
      %7572 = vmatpush2.msra.mxu0 0.0
      %7573 = vmatprep.subr.mxu0 0.0
      %7574 = vmatpush2.msra.mxu0 0.0
      %7575 = vmatprep.subr.mxu0 0.0
      %7576 = vmatpush2.msra.mxu0 0.0
      %7577 = vmatprep.subr.mxu0 0.0
      %7578 = vmatpush2.msra.mxu0 0.0
      %7579 = vmatprep.subr.mxu0 0.0
      %7580 = vmatpush2.msra.mxu0 0.0
      %7581 = vmatprep.subr.mxu0 0.0
      %7582 = vmatpush2.msra.mxu0 0.0
      %7583 = vmatprep.subr.mxu0 0.0
      %7584 = vmatpush2.msra.mxu0 0.0
      %7585 = vmatprep.subr.mxu0 0.0
      %7586 = vmatpush2.msra.mxu0 0.0
      %7587 = vmatprep.subr.mxu0 0.0
      %7588 = vmatpush2.msra.mxu0 0.0
      %7589 = vmatprep.subr.mxu0 0.0
      %7590 = vmatpush2.msra.mxu0 0.0
      %7591 = vmatprep.subr.mxu0 0.0
      %7592 = vmatpush2.msra.mxu0 0.0
      %7593 = vmatprep.subr.mxu0 0.0
      %7594 = vmatpush2.msra.mxu0 0.0
      %7595 = vmatprep.subr.mxu0 0.0
      %7596 = vmatpush2.msra.mxu0 0.0
      %7597 = vmatprep.mubr.f32.mxu0 0.0
      %v7598 = vand.u32 %v7431, 4294901760
      %7599 = vmatmul.mubr.f32.gmra.mxu0 %v7598
      %v7600 = vpop.f32.mrf.mxu0
      %v7601 = vadd.f32 %v7510, %v7600
      %v7602 = vpop.f32.mrf.mxu0
      %7603 = vmatprep.mubr.f32.mxu0 0.0
      %v7604 = vand.u32 %v7434, 4294901760
      %7605 = vmatmul.mubr.f32.gmra.mxu0 %v7604
      %v7606 = vpop.f32.mrf.mxu0
      %v7607 = vadd.f32 %v7520, %v7606
      %v7608 = vpop.f32.mrf.mxu0
      %7609 = vdwg.mxu0
      %7610 = vmatprep.subr.mxu0 0.0
      %7611 = vmatpush1.msra.mxu0 0.0
      %7612 = vmatprep.subr.mxu0 0.0
      %7613 = vmatpush1.msra.mxu0 0.0
      %7614 = vmatprep.subr.mxu0 0.0
      %7615 = vmatpush1.msra.mxu0 0.0
      %7616 = vmatprep.subr.mxu0 0.0
      %7617 = vmatpush1.msra.mxu0 0.0
      %7618 = vmatprep.subr.mxu0 0.0
      %7619 = vmatpush1.msra.mxu0 0.0
      %7620 = vmatprep.subr.mxu0 0.0
      %7621 = vmatpush1.msra.mxu0 0.0
      %7622 = vmatprep.subr.mxu0 0.0
      %7623 = vmatpush1.msra.mxu0 0.0
      %7624 = vmatprep.subr.mxu0 0.0
      %7625 = vmatpush1.msra.mxu0 0.0
      %7626 = vmatprep.subr.mxu0 0.0
      %7627 = vmatpush1.msra.mxu0 0.0
      %7628 = vmatprep.subr.mxu0 0.0
      %7629 = vmatpush1.msra.mxu0 0.0
      %7630 = vmatprep.subr.mxu0 0.0
      %7631 = vmatpush1.msra.mxu0 0.0
      %7632 = vmatprep.subr.mxu0 0.0
      %7633 = vmatpush1.msra.mxu0 0.0
      %7634 = vmatprep.subr.mxu0 0.0
      %7635 = vmatpush1.msra.mxu0 0.0
      %7636 = vmatprep.subr.mxu0 0.0
      %7637 = vmatpush1.msra.mxu0 0.0
      %7638 = vmatprep.subr.mxu0 0.0
      %v7639 = vand.u32 %v282, 4294901760
      %v7640 = vsub.f32 %v282, %v7639
      %7641 = vmatpush1.msra.mxu0 %v7640
      %7642 = vmatprep.subr.mxu0 0.0
      %v7643 = vand.u32 %v281, 4294901760
      %v7644 = vsub.f32 %v281, %v7643
      %7645 = vmatpush1.msra.mxu0 %v7644
      %7646 = vmatprep.subr.mxu0 0.0
      %7647 = vmatpush2.msra.mxu0 0.0
      %7648 = vmatprep.subr.mxu0 0.0
      %7649 = vmatpush2.msra.mxu0 0.0
      %7650 = vmatprep.subr.mxu0 0.0
      %7651 = vmatpush2.msra.mxu0 0.0
      %7652 = vmatprep.subr.mxu0 0.0
      %7653 = vmatpush2.msra.mxu0 0.0
      %7654 = vmatprep.subr.mxu0 0.0
      %7655 = vmatpush2.msra.mxu0 0.0
      %7656 = vmatprep.subr.mxu0 0.0
      %7657 = vmatpush2.msra.mxu0 0.0
      %7658 = vmatprep.subr.mxu0 0.0
      %7659 = vmatpush2.msra.mxu0 0.0
      %7660 = vmatprep.subr.mxu0 0.0
      %7661 = vmatpush2.msra.mxu0 0.0
      %7662 = vmatprep.subr.mxu0 0.0
      %7663 = vmatpush2.msra.mxu0 0.0
      %7664 = vmatprep.subr.mxu0 0.0
      %7665 = vmatpush2.msra.mxu0 0.0
      %7666 = vmatprep.subr.mxu0 0.0
      %7667 = vmatpush2.msra.mxu0 0.0
      %7668 = vmatprep.subr.mxu0 0.0
      %7669 = vmatpush2.msra.mxu0 0.0
      %7670 = vmatprep.subr.mxu0 0.0
      %7671 = vmatpush2.msra.mxu0 0.0
      %7672 = vmatprep.subr.mxu0 0.0
      %7673 = vmatpush2.msra.mxu0 0.0
      %7674 = vmatprep.subr.mxu0 0.0
      %7675 = vmatpush2.msra.mxu0 0.0
      %7676 = vmatprep.subr.mxu0 0.0
      %7677 = vmatpush2.msra.mxu0 0.0
      %7678 = vmatprep.mubr.f32.mxu0 0.0
      %v7679 = vand.u32 %v7431, 4294901760
      %v7680 = vsub.f32 %v7431, %v7679
      %7681 = vmatmul.mubr.f32.gmra.mxu0 %v7680
      %v7682 = vpop.f32.mrf.mxu0
      %v7683 = vadd.f32 %v7601, %v7682
      %v7684 = vpop.f32.mrf.mxu0
      %7685 = vmatprep.mubr.f32.mxu0 0.0
      %v7686 = vand.u32 %v7434, 4294901760
      %v7687 = vsub.f32 %v7434, %v7686
      %7688 = vmatmul.mubr.f32.gmra.mxu0 %v7687
      %v7689 = vpop.f32.mrf.mxu0
      %v7690 = vadd.f32 %v7607, %v7689
      %v7691 = vpop.f32.mrf.mxu0
      %7692 = vdwg.mxu0
      %7693 = vmatprep.subr.mxu0 0.0
      %7694 = vmatpush1.msra.mxu0 0.0
      %7695 = vmatprep.subr.mxu0 0.0
      %7696 = vmatpush1.msra.mxu0 0.0
      %7697 = vmatprep.subr.mxu0 0.0
      %7698 = vmatpush1.msra.mxu0 0.0
      %7699 = vmatprep.subr.mxu0 0.0
      %7700 = vmatpush1.msra.mxu0 0.0
      %7701 = vmatprep.subr.mxu0 0.0
      %7702 = vmatpush1.msra.mxu0 0.0
      %7703 = vmatprep.subr.mxu0 0.0
      %7704 = vmatpush1.msra.mxu0 0.0
      %7705 = vmatprep.subr.mxu0 0.0
      %7706 = vmatpush1.msra.mxu0 0.0
      %7707 = vmatprep.subr.mxu0 0.0
      %7708 = vmatpush1.msra.mxu0 0.0
      %7709 = vmatprep.subr.mxu0 0.0
      %7710 = vmatpush1.msra.mxu0 0.0
      %7711 = vmatprep.subr.mxu0 0.0
      %7712 = vmatpush1.msra.mxu0 0.0
      %7713 = vmatprep.subr.mxu0 0.0
      %7714 = vmatpush1.msra.mxu0 0.0
      %7715 = vmatprep.subr.mxu0 0.0
      %7716 = vmatpush1.msra.mxu0 0.0
      %7717 = vmatprep.subr.mxu0 0.0
      %7718 = vmatpush1.msra.mxu0 0.0
      %7719 = vmatprep.subr.mxu0 0.0
      %7720 = vmatpush1.msra.mxu0 0.0
      %7721 = vmatprep.subr.mxu0 0.0
      %v7722 = vand.u32 %v282, 4294901760
      %7723 = vmatpush1.msra.mxu0 %v7722
      %7724 = vmatprep.subr.mxu0 0.0
      %v7725 = vand.u32 %v281, 4294901760
      %7726 = vmatpush1.msra.mxu0 %v7725
      %7727 = vmatprep.subr.mxu0 0.0
      %7728 = vmatpush2.msra.mxu0 0.0
      %7729 = vmatprep.subr.mxu0 0.0
      %7730 = vmatpush2.msra.mxu0 0.0
      %7731 = vmatprep.subr.mxu0 0.0
      %7732 = vmatpush2.msra.mxu0 0.0
      %7733 = vmatprep.subr.mxu0 0.0
      %7734 = vmatpush2.msra.mxu0 0.0
      %7735 = vmatprep.subr.mxu0 0.0
      %7736 = vmatpush2.msra.mxu0 0.0
      %7737 = vmatprep.subr.mxu0 0.0
      %7738 = vmatpush2.msra.mxu0 0.0
      %7739 = vmatprep.subr.mxu0 0.0
      %7740 = vmatpush2.msra.mxu0 0.0
      %7741 = vmatprep.subr.mxu0 0.0
      %7742 = vmatpush2.msra.mxu0 0.0
      %7743 = vmatprep.subr.mxu0 0.0
      %7744 = vmatpush2.msra.mxu0 0.0
      %7745 = vmatprep.subr.mxu0 0.0
      %7746 = vmatpush2.msra.mxu0 0.0
      %7747 = vmatprep.subr.mxu0 0.0
      %7748 = vmatpush2.msra.mxu0 0.0
      %7749 = vmatprep.subr.mxu0 0.0
      %7750 = vmatpush2.msra.mxu0 0.0
      %7751 = vmatprep.subr.mxu0 0.0
      %7752 = vmatpush2.msra.mxu0 0.0
      %7753 = vmatprep.subr.mxu0 0.0
      %7754 = vmatpush2.msra.mxu0 0.0
      %7755 = vmatprep.subr.mxu0 0.0
      %7756 = vmatpush2.msra.mxu0 0.0
      %7757 = vmatprep.subr.mxu0 0.0
      %7758 = vmatpush2.msra.mxu0 0.0
      %7759 = vmatprep.mubr.f32.mxu0 0.0
      %v7760 = vand.u32 %v7431, 4294901760
      %v7761 = vsub.f32 %v7431, %v7760
      %v7762 = vand.u32 %v7761, 4294901760
      %7763 = vmatmul.mubr.f32.gmra.mxu0 %v7762
      %v7764 = vpop.f32.mrf.mxu0
      %v7765 = vadd.f32 %v7683, %v7764
      %v7766 = vpop.f32.mrf.mxu0
      %7767 = vmatprep.mubr.f32.mxu0 0.0
      %v7768 = vand.u32 %v7434, 4294901760
      %v7769 = vsub.f32 %v7434, %v7768
      %v7770 = vand.u32 %v7769, 4294901760
      %7771 = vmatmul.mubr.f32.gmra.mxu0 %v7770
      %v7772 = vpop.f32.mrf.mxu0
      %v7773 = vadd.f32 %v7690, %v7772
      %v7774 = vpop.f32.mrf.mxu0
      %7775 = vdwg.mxu0
      %7776 = vmatprep.subr.mxu0 0.0
      %7777 = vmatpush1.msra.mxu0 0.0
      %7778 = vmatprep.subr.mxu0 0.0
      %7779 = vmatpush1.msra.mxu0 0.0
      %7780 = vmatprep.subr.mxu0 0.0
      %7781 = vmatpush1.msra.mxu0 0.0
      %7782 = vmatprep.subr.mxu0 0.0
      %7783 = vmatpush1.msra.mxu0 0.0
      %7784 = vmatprep.subr.mxu0 0.0
      %7785 = vmatpush1.msra.mxu0 0.0
      %7786 = vmatprep.subr.mxu0 0.0
      %7787 = vmatpush1.msra.mxu0 0.0
      %7788 = vmatprep.subr.mxu0 0.0
      %7789 = vmatpush1.msra.mxu0 0.0
      %7790 = vmatprep.subr.mxu0 0.0
      %7791 = vmatpush1.msra.mxu0 0.0
      %7792 = vmatprep.subr.mxu0 0.0
      %7793 = vmatpush1.msra.mxu0 0.0
      %7794 = vmatprep.subr.mxu0 0.0
      %7795 = vmatpush1.msra.mxu0 0.0
      %7796 = vmatprep.subr.mxu0 0.0
      %7797 = vmatpush1.msra.mxu0 0.0
      %7798 = vmatprep.subr.mxu0 0.0
      %7799 = vmatpush1.msra.mxu0 0.0
      %7800 = vmatprep.subr.mxu0 0.0
      %7801 = vmatpush1.msra.mxu0 0.0
      %7802 = vmatprep.subr.mxu0 0.0
      %7803 = vmatpush1.msra.mxu0 0.0
      %7804 = vmatprep.subr.mxu0 0.0
      %v7805 = vand.u32 %v282, 4294901760
      %v7806 = vsub.f32 %v282, %v7805
      %v7807 = vand.u32 %v7806, 4294901760
      %7808 = vmatpush1.msra.mxu0 %v7807
      %7809 = vmatprep.subr.mxu0 0.0
      %v7810 = vand.u32 %v281, 4294901760
      %v7811 = vsub.f32 %v281, %v7810
      %v7812 = vand.u32 %v7811, 4294901760
      %7813 = vmatpush1.msra.mxu0 %v7812
      %7814 = vmatprep.subr.mxu0 0.0
      %7815 = vmatpush2.msra.mxu0 0.0
      %7816 = vmatprep.subr.mxu0 0.0
      %7817 = vmatpush2.msra.mxu0 0.0
      %7818 = vmatprep.subr.mxu0 0.0
      %7819 = vmatpush2.msra.mxu0 0.0
      %7820 = vmatprep.subr.mxu0 0.0
      %7821 = vmatpush2.msra.mxu0 0.0
      %7822 = vmatprep.subr.mxu0 0.0
      %7823 = vmatpush2.msra.mxu0 0.0
      %7824 = vmatprep.subr.mxu0 0.0
      %7825 = vmatpush2.msra.mxu0 0.0
      %7826 = vmatprep.subr.mxu0 0.0
      %7827 = vmatpush2.msra.mxu0 0.0
      %7828 = vmatprep.subr.mxu0 0.0
      %7829 = vmatpush2.msra.mxu0 0.0
      %7830 = vmatprep.subr.mxu0 0.0
      %7831 = vmatpush2.msra.mxu0 0.0
      %7832 = vmatprep.subr.mxu0 0.0
      %7833 = vmatpush2.msra.mxu0 0.0
      %7834 = vmatprep.subr.mxu0 0.0
      %7835 = vmatpush2.msra.mxu0 0.0
      %7836 = vmatprep.subr.mxu0 0.0
      %7837 = vmatpush2.msra.mxu0 0.0
      %7838 = vmatprep.subr.mxu0 0.0
      %7839 = vmatpush2.msra.mxu0 0.0
      %7840 = vmatprep.subr.mxu0 0.0
      %7841 = vmatpush2.msra.mxu0 0.0
      %7842 = vmatprep.subr.mxu0 0.0
      %7843 = vmatpush2.msra.mxu0 0.0
      %7844 = vmatprep.subr.mxu0 0.0
      %7845 = vmatpush2.msra.mxu0 0.0
      %7846 = vmatprep.mubr.f32.mxu0 0.0
      %v7847 = vand.u32 %v7431, 4294901760
      %7848 = vmatmul.mubr.f32.gmra.mxu0 %v7847
      %v7849 = vpop.f32.mrf.mxu0
      %v7850 = vadd.f32 %v7765, %v7849
      %v7851 = vpop.f32.mrf.mxu0
      %7852 = vmatprep.mubr.f32.mxu0 0.0
      %v7853 = vand.u32 %v7434, 4294901760
      %7854 = vmatmul.mubr.f32.gmra.mxu0 %v7853
      %v7855 = vpop.f32.mrf.mxu0
      %v7856 = vadd.f32 %v7773, %v7855
      %v7857 = vpop.f32.mrf.mxu0
      %7858 = vdwg.mxu0
      %7859 = vmatprep.subr.mxu0 0.0
      %7860 = vmatpush1.msra.mxu0 0.0
      %7861 = vmatprep.subr.mxu0 0.0
      %7862 = vmatpush1.msra.mxu0 0.0
      %7863 = vmatprep.subr.mxu0 0.0
      %7864 = vmatpush1.msra.mxu0 0.0
      %7865 = vmatprep.subr.mxu0 0.0
      %7866 = vmatpush1.msra.mxu0 0.0
      %7867 = vmatprep.subr.mxu0 0.0
      %7868 = vmatpush1.msra.mxu0 0.0
      %7869 = vmatprep.subr.mxu0 0.0
      %7870 = vmatpush1.msra.mxu0 0.0
      %7871 = vmatprep.subr.mxu0 0.0
      %7872 = vmatpush1.msra.mxu0 0.0
      %7873 = vmatprep.subr.mxu0 0.0
      %7874 = vmatpush1.msra.mxu0 0.0
      %7875 = vmatprep.subr.mxu0 0.0
      %7876 = vmatpush1.msra.mxu0 0.0
      %7877 = vmatprep.subr.mxu0 0.0
      %7878 = vmatpush1.msra.mxu0 0.0
      %7879 = vmatprep.subr.mxu0 0.0
      %7880 = vmatpush1.msra.mxu0 0.0
      %7881 = vmatprep.subr.mxu0 0.0
      %7882 = vmatpush1.msra.mxu0 0.0
      %7883 = vmatprep.subr.mxu0 0.0
      %7884 = vmatpush1.msra.mxu0 0.0
      %7885 = vmatprep.subr.mxu0 0.0
      %7886 = vmatpush1.msra.mxu0 0.0
      %7887 = vmatprep.subr.mxu0 0.0
      %v7888 = vand.u32 %v282, 4294901760
      %7889 = vmatpush1.msra.mxu0 %v7888
      %7890 = vmatprep.subr.mxu0 0.0
      %v7891 = vand.u32 %v281, 4294901760
      %7892 = vmatpush1.msra.mxu0 %v7891
      %7893 = vmatprep.subr.mxu0 0.0
      %7894 = vmatpush2.msra.mxu0 0.0
      %7895 = vmatprep.subr.mxu0 0.0
      %7896 = vmatpush2.msra.mxu0 0.0
      %7897 = vmatprep.subr.mxu0 0.0
      %7898 = vmatpush2.msra.mxu0 0.0
      %7899 = vmatprep.subr.mxu0 0.0
      %7900 = vmatpush2.msra.mxu0 0.0
      %7901 = vmatprep.subr.mxu0 0.0
      %7902 = vmatpush2.msra.mxu0 0.0
      %7903 = vmatprep.subr.mxu0 0.0
      %7904 = vmatpush2.msra.mxu0 0.0
      %7905 = vmatprep.subr.mxu0 0.0
      %7906 = vmatpush2.msra.mxu0 0.0
      %7907 = vmatprep.subr.mxu0 0.0
      %7908 = vmatpush2.msra.mxu0 0.0
      %7909 = vmatprep.subr.mxu0 0.0
      %7910 = vmatpush2.msra.mxu0 0.0
      %7911 = vmatprep.subr.mxu0 0.0
      %7912 = vmatpush2.msra.mxu0 0.0
      %7913 = vmatprep.subr.mxu0 0.0
      %7914 = vmatpush2.msra.mxu0 0.0
      %7915 = vmatprep.subr.mxu0 0.0
      %7916 = vmatpush2.msra.mxu0 0.0
      %7917 = vmatprep.subr.mxu0 0.0
      %7918 = vmatpush2.msra.mxu0 0.0
      %7919 = vmatprep.subr.mxu0 0.0
      %7920 = vmatpush2.msra.mxu0 0.0
      %7921 = vmatprep.subr.mxu0 0.0
      %7922 = vmatpush2.msra.mxu0 0.0
      %7923 = vmatprep.subr.mxu0 0.0
      %7924 = vmatpush2.msra.mxu0 0.0
      %7925 = vmatprep.mubr.f32.mxu0 0.0
      %v7926 = vand.u32 %v7431, 4294901760
      %7927 = vmatmul.mubr.f32.gmra.mxu0 %v7926
      %v7928 = vpop.f32.mrf.mxu0
      %v7929 = vadd.f32 %v7850, %v7928
      %v7930 = vpop.f32.mrf.mxu0
      %7931 = vmatprep.mubr.f32.mxu0 0.0
      %v7932 = vand.u32 %v7434, 4294901760
      %7933 = vmatmul.mubr.f32.gmra.mxu0 %v7932
      %v7934 = vpop.f32.mrf.mxu0
      %v7935 = vadd.f32 %v7856, %v7934
      %v7936 = vpop.f32.mrf.mxu0
      %7937 = vdwg.mxu0
      %v7939 = vsel %vm317, %v315, 0
      %v7942 = vsel %vm317, %v316, 0
      %7944 = vmatprep.subr.mxu0 0.0
      %7945 = vmatpush1.msra.mxu0 0.0
      %7946 = vmatprep.subr.mxu0 0.0
      %7947 = vmatpush1.msra.mxu0 0.0
      %7948 = vmatprep.subr.mxu0 0.0
      %7949 = vmatpush1.msra.mxu0 0.0
      %7950 = vmatprep.subr.mxu0 0.0
      %7951 = vmatpush1.msra.mxu0 0.0
      %7952 = vmatprep.subr.mxu0 0.0
      %7953 = vmatpush1.msra.mxu0 0.0
      %7954 = vmatprep.subr.mxu0 0.0
      %7955 = vmatpush1.msra.mxu0 0.0
      %7956 = vmatprep.subr.mxu0 0.0
      %7957 = vmatpush1.msra.mxu0 0.0
      %7958 = vmatprep.subr.mxu0 0.0
      %7959 = vmatpush1.msra.mxu0 0.0
      %7960 = vmatprep.subr.mxu0 0.0
      %7961 = vmatpush1.msra.mxu0 0.0
      %7962 = vmatprep.subr.mxu0 0.0
      %7963 = vmatpush1.msra.mxu0 0.0
      %7964 = vmatprep.subr.mxu0 0.0
      %7965 = vmatpush1.msra.mxu0 0.0
      %7966 = vmatprep.subr.mxu0 0.0
      %7967 = vmatpush1.msra.mxu0 0.0
      %7968 = vmatprep.subr.mxu0 0.0
      %7969 = vmatpush1.msra.mxu0 0.0
      %7970 = vmatprep.subr.mxu0 0.0
      %7971 = vmatpush1.msra.mxu0 0.0
      %7972 = vmatprep.subr.mxu0 0.0
      %v7973 = vand.u32 %v284, 4294901760
      %7974 = vmatpush1.msra.mxu0 %v7973
      %7975 = vmatprep.subr.mxu0 0.0
      %v7976 = vand.u32 %v283, 4294901760
      %7977 = vmatpush1.msra.mxu0 %v7976
      %7978 = vmatprep.subr.mxu0 0.0
      %7979 = vmatpush2.msra.mxu0 0.0
      %7980 = vmatprep.subr.mxu0 0.0
      %7981 = vmatpush2.msra.mxu0 0.0
      %7982 = vmatprep.subr.mxu0 0.0
      %7983 = vmatpush2.msra.mxu0 0.0
      %7984 = vmatprep.subr.mxu0 0.0
      %7985 = vmatpush2.msra.mxu0 0.0
      %7986 = vmatprep.subr.mxu0 0.0
      %7987 = vmatpush2.msra.mxu0 0.0
      %7988 = vmatprep.subr.mxu0 0.0
      %7989 = vmatpush2.msra.mxu0 0.0
      %7990 = vmatprep.subr.mxu0 0.0
      %7991 = vmatpush2.msra.mxu0 0.0
      %7992 = vmatprep.subr.mxu0 0.0
      %7993 = vmatpush2.msra.mxu0 0.0
      %7994 = vmatprep.subr.mxu0 0.0
      %7995 = vmatpush2.msra.mxu0 0.0
      %7996 = vmatprep.subr.mxu0 0.0
      %7997 = vmatpush2.msra.mxu0 0.0
      %7998 = vmatprep.subr.mxu0 0.0
      %7999 = vmatpush2.msra.mxu0 0.0
      %8000 = vmatprep.subr.mxu0 0.0
      %8001 = vmatpush2.msra.mxu0 0.0
      %8002 = vmatprep.subr.mxu0 0.0
      %8003 = vmatpush2.msra.mxu0 0.0
      %8004 = vmatprep.subr.mxu0 0.0
      %8005 = vmatpush2.msra.mxu0 0.0
      %8006 = vmatprep.subr.mxu0 0.0
      %8007 = vmatpush2.msra.mxu0 0.0
      %8008 = vmatprep.subr.mxu0 0.0
      %8009 = vmatpush2.msra.mxu0 0.0
      %8010 = vmatprep.mubr.f32.mxu0 0.0
      %v8011 = vand.u32 %v7939, 4294901760
      %v8012 = vsub.f32 %v7939, %v8011
      %v8013 = vand.u32 %v8012, 4294901760
      %v8014 = vsub.f32 %v8012, %v8013
      %v8015 = vand.u32 %v8014, 4294901760
      %8016 = vmatmul.mubr.f32.gmra.mxu0 %v8015
      %v8017 = vpop.f32.mrf.mxu0
      %v8018 = vadd.f32 0.0, %v8017
      %v8019 = vpop.f32.mrf.mxu0
      %8020 = vmatprep.mubr.f32.mxu0 0.0
      %v8021 = vand.u32 %v7942, 4294901760
      %v8022 = vsub.f32 %v7942, %v8021
      %v8023 = vand.u32 %v8022, 4294901760
      %v8024 = vsub.f32 %v8022, %v8023
      %v8025 = vand.u32 %v8024, 4294901760
      %8026 = vmatmul.mubr.f32.gmra.mxu0 %v8025
      %v8027 = vpop.f32.mrf.mxu0
      %v8028 = vadd.f32 0.0, %v8027
      %v8029 = vpop.f32.mrf.mxu0
      %8030 = vdwg.mxu0
      %8031 = vmatprep.subr.mxu0 0.0
      %8032 = vmatpush1.msra.mxu0 0.0
      %8033 = vmatprep.subr.mxu0 0.0
      %8034 = vmatpush1.msra.mxu0 0.0
      %8035 = vmatprep.subr.mxu0 0.0
      %8036 = vmatpush1.msra.mxu0 0.0
      %8037 = vmatprep.subr.mxu0 0.0
      %8038 = vmatpush1.msra.mxu0 0.0
      %8039 = vmatprep.subr.mxu0 0.0
      %8040 = vmatpush1.msra.mxu0 0.0
      %8041 = vmatprep.subr.mxu0 0.0
      %8042 = vmatpush1.msra.mxu0 0.0
      %8043 = vmatprep.subr.mxu0 0.0
      %8044 = vmatpush1.msra.mxu0 0.0
      %8045 = vmatprep.subr.mxu0 0.0
      %8046 = vmatpush1.msra.mxu0 0.0
      %8047 = vmatprep.subr.mxu0 0.0
      %8048 = vmatpush1.msra.mxu0 0.0
      %8049 = vmatprep.subr.mxu0 0.0
      %8050 = vmatpush1.msra.mxu0 0.0
      %8051 = vmatprep.subr.mxu0 0.0
      %8052 = vmatpush1.msra.mxu0 0.0
      %8053 = vmatprep.subr.mxu0 0.0
      %8054 = vmatpush1.msra.mxu0 0.0
      %8055 = vmatprep.subr.mxu0 0.0
      %8056 = vmatpush1.msra.mxu0 0.0
      %8057 = vmatprep.subr.mxu0 0.0
      %8058 = vmatpush1.msra.mxu0 0.0
      %8059 = vmatprep.subr.mxu0 0.0
      %v8060 = vand.u32 %v284, 4294901760
      %v8061 = vsub.f32 %v284, %v8060
      %v8062 = vand.u32 %v8061, 4294901760
      %v8063 = vsub.f32 %v8061, %v8062
      %v8064 = vand.u32 %v8063, 4294901760
      %8065 = vmatpush1.msra.mxu0 %v8064
      %8066 = vmatprep.subr.mxu0 0.0
      %v8067 = vand.u32 %v283, 4294901760
      %v8068 = vsub.f32 %v283, %v8067
      %v8069 = vand.u32 %v8068, 4294901760
      %v8070 = vsub.f32 %v8068, %v8069
      %v8071 = vand.u32 %v8070, 4294901760
      %8072 = vmatpush1.msra.mxu0 %v8071
      %8073 = vmatprep.subr.mxu0 0.0
      %8074 = vmatpush2.msra.mxu0 0.0
      %8075 = vmatprep.subr.mxu0 0.0
      %8076 = vmatpush2.msra.mxu0 0.0
      %8077 = vmatprep.subr.mxu0 0.0
      %8078 = vmatpush2.msra.mxu0 0.0
      %8079 = vmatprep.subr.mxu0 0.0
      %8080 = vmatpush2.msra.mxu0 0.0
      %8081 = vmatprep.subr.mxu0 0.0
      %8082 = vmatpush2.msra.mxu0 0.0
      %8083 = vmatprep.subr.mxu0 0.0
      %8084 = vmatpush2.msra.mxu0 0.0
      %8085 = vmatprep.subr.mxu0 0.0
      %8086 = vmatpush2.msra.mxu0 0.0
      %8087 = vmatprep.subr.mxu0 0.0
      %8088 = vmatpush2.msra.mxu0 0.0
      %8089 = vmatprep.subr.mxu0 0.0
      %8090 = vmatpush2.msra.mxu0 0.0
      %8091 = vmatprep.subr.mxu0 0.0
      %8092 = vmatpush2.msra.mxu0 0.0
      %8093 = vmatprep.subr.mxu0 0.0
      %8094 = vmatpush2.msra.mxu0 0.0
      %8095 = vmatprep.subr.mxu0 0.0
      %8096 = vmatpush2.msra.mxu0 0.0
      %8097 = vmatprep.subr.mxu0 0.0
      %8098 = vmatpush2.msra.mxu0 0.0
      %8099 = vmatprep.subr.mxu0 0.0
      %8100 = vmatpush2.msra.mxu0 0.0
      %8101 = vmatprep.subr.mxu0 0.0
      %8102 = vmatpush2.msra.mxu0 0.0
      %8103 = vmatprep.subr.mxu0 0.0
      %8104 = vmatpush2.msra.mxu0 0.0
      %8105 = vmatprep.mubr.f32.mxu0 0.0
      %v8106 = vand.u32 %v7939, 4294901760
      %8107 = vmatmul.mubr.f32.gmra.mxu0 %v8106
      %v8108 = vpop.f32.mrf.mxu0
      %v8109 = vadd.f32 %v8018, %v8108
      %v8110 = vpop.f32.mrf.mxu0
      %8111 = vmatprep.mubr.f32.mxu0 0.0
      %v8112 = vand.u32 %v7942, 4294901760
      %8113 = vmatmul.mubr.f32.gmra.mxu0 %v8112
      %v8114 = vpop.f32.mrf.mxu0
      %v8115 = vadd.f32 %v8028, %v8114
      %v8116 = vpop.f32.mrf.mxu0
      %8117 = vdwg.mxu0
      %8118 = vmatprep.subr.mxu0 0.0
      %8119 = vmatpush1.msra.mxu0 0.0
      %8120 = vmatprep.subr.mxu0 0.0
      %8121 = vmatpush1.msra.mxu0 0.0
      %8122 = vmatprep.subr.mxu0 0.0
      %8123 = vmatpush1.msra.mxu0 0.0
      %8124 = vmatprep.subr.mxu0 0.0
      %8125 = vmatpush1.msra.mxu0 0.0
      %8126 = vmatprep.subr.mxu0 0.0
      %8127 = vmatpush1.msra.mxu0 0.0
      %8128 = vmatprep.subr.mxu0 0.0
      %8129 = vmatpush1.msra.mxu0 0.0
      %8130 = vmatprep.subr.mxu0 0.0
      %8131 = vmatpush1.msra.mxu0 0.0
      %8132 = vmatprep.subr.mxu0 0.0
      %8133 = vmatpush1.msra.mxu0 0.0
      %8134 = vmatprep.subr.mxu0 0.0
      %8135 = vmatpush1.msra.mxu0 0.0
      %8136 = vmatprep.subr.mxu0 0.0
      %8137 = vmatpush1.msra.mxu0 0.0
      %8138 = vmatprep.subr.mxu0 0.0
      %8139 = vmatpush1.msra.mxu0 0.0
      %8140 = vmatprep.subr.mxu0 0.0
      %8141 = vmatpush1.msra.mxu0 0.0
      %8142 = vmatprep.subr.mxu0 0.0
      %8143 = vmatpush1.msra.mxu0 0.0
      %8144 = vmatprep.subr.mxu0 0.0
      %8145 = vmatpush1.msra.mxu0 0.0
      %8146 = vmatprep.subr.mxu0 0.0
      %v8147 = vand.u32 %v284, 4294901760
      %v8148 = vsub.f32 %v284, %v8147
      %8149 = vmatpush1.msra.mxu0 %v8148
      %8150 = vmatprep.subr.mxu0 0.0
      %v8151 = vand.u32 %v283, 4294901760
      %v8152 = vsub.f32 %v283, %v8151
      %8153 = vmatpush1.msra.mxu0 %v8152
      %8154 = vmatprep.subr.mxu0 0.0
      %8155 = vmatpush2.msra.mxu0 0.0
      %8156 = vmatprep.subr.mxu0 0.0
      %8157 = vmatpush2.msra.mxu0 0.0
      %8158 = vmatprep.subr.mxu0 0.0
      %8159 = vmatpush2.msra.mxu0 0.0
      %8160 = vmatprep.subr.mxu0 0.0
      %8161 = vmatpush2.msra.mxu0 0.0
      %8162 = vmatprep.subr.mxu0 0.0
      %8163 = vmatpush2.msra.mxu0 0.0
      %8164 = vmatprep.subr.mxu0 0.0
      %8165 = vmatpush2.msra.mxu0 0.0
      %8166 = vmatprep.subr.mxu0 0.0
      %8167 = vmatpush2.msra.mxu0 0.0
      %8168 = vmatprep.subr.mxu0 0.0
      %8169 = vmatpush2.msra.mxu0 0.0
      %8170 = vmatprep.subr.mxu0 0.0
      %8171 = vmatpush2.msra.mxu0 0.0
      %8172 = vmatprep.subr.mxu0 0.0
      %8173 = vmatpush2.msra.mxu0 0.0
      %8174 = vmatprep.subr.mxu0 0.0
      %8175 = vmatpush2.msra.mxu0 0.0
      %8176 = vmatprep.subr.mxu0 0.0
      %8177 = vmatpush2.msra.mxu0 0.0
      %8178 = vmatprep.subr.mxu0 0.0
      %8179 = vmatpush2.msra.mxu0 0.0
      %8180 = vmatprep.subr.mxu0 0.0
      %8181 = vmatpush2.msra.mxu0 0.0
      %8182 = vmatprep.subr.mxu0 0.0
      %8183 = vmatpush2.msra.mxu0 0.0
      %8184 = vmatprep.subr.mxu0 0.0
      %8185 = vmatpush2.msra.mxu0 0.0
      %8186 = vmatprep.mubr.f32.mxu0 0.0
      %v8187 = vand.u32 %v7939, 4294901760
      %v8188 = vsub.f32 %v7939, %v8187
      %8189 = vmatmul.mubr.f32.gmra.mxu0 %v8188
      %v8190 = vpop.f32.mrf.mxu0
      %v8191 = vadd.f32 %v8109, %v8190
      %v8192 = vpop.f32.mrf.mxu0
      %8193 = vmatprep.mubr.f32.mxu0 0.0
      %v8194 = vand.u32 %v7942, 4294901760
      %v8195 = vsub.f32 %v7942, %v8194
      %8196 = vmatmul.mubr.f32.gmra.mxu0 %v8195
      %v8197 = vpop.f32.mrf.mxu0
      %v8198 = vadd.f32 %v8115, %v8197
      %v8199 = vpop.f32.mrf.mxu0
      %8200 = vdwg.mxu0
      %8201 = vmatprep.subr.mxu0 0.0
      %8202 = vmatpush1.msra.mxu0 0.0
      %8203 = vmatprep.subr.mxu0 0.0
      %8204 = vmatpush1.msra.mxu0 0.0
      %8205 = vmatprep.subr.mxu0 0.0
      %8206 = vmatpush1.msra.mxu0 0.0
      %8207 = vmatprep.subr.mxu0 0.0
      %8208 = vmatpush1.msra.mxu0 0.0
      %8209 = vmatprep.subr.mxu0 0.0
      %8210 = vmatpush1.msra.mxu0 0.0
      %8211 = vmatprep.subr.mxu0 0.0
      %8212 = vmatpush1.msra.mxu0 0.0
      %8213 = vmatprep.subr.mxu0 0.0
      %8214 = vmatpush1.msra.mxu0 0.0
      %8215 = vmatprep.subr.mxu0 0.0
      %8216 = vmatpush1.msra.mxu0 0.0
      %8217 = vmatprep.subr.mxu0 0.0
      %8218 = vmatpush1.msra.mxu0 0.0
      %8219 = vmatprep.subr.mxu0 0.0
      %8220 = vmatpush1.msra.mxu0 0.0
      %8221 = vmatprep.subr.mxu0 0.0
      %8222 = vmatpush1.msra.mxu0 0.0
      %8223 = vmatprep.subr.mxu0 0.0
      %8224 = vmatpush1.msra.mxu0 0.0
      %8225 = vmatprep.subr.mxu0 0.0
      %8226 = vmatpush1.msra.mxu0 0.0
      %8227 = vmatprep.subr.mxu0 0.0
      %8228 = vmatpush1.msra.mxu0 0.0
      %8229 = vmatprep.subr.mxu0 0.0
      %v8230 = vand.u32 %v284, 4294901760
      %8231 = vmatpush1.msra.mxu0 %v8230
      %8232 = vmatprep.subr.mxu0 0.0
      %v8233 = vand.u32 %v283, 4294901760
      %8234 = vmatpush1.msra.mxu0 %v8233
      %8235 = vmatprep.subr.mxu0 0.0
      %8236 = vmatpush2.msra.mxu0 0.0
      %8237 = vmatprep.subr.mxu0 0.0
      %8238 = vmatpush2.msra.mxu0 0.0
      %8239 = vmatprep.subr.mxu0 0.0
      %8240 = vmatpush2.msra.mxu0 0.0
      %8241 = vmatprep.subr.mxu0 0.0
      %8242 = vmatpush2.msra.mxu0 0.0
      %8243 = vmatprep.subr.mxu0 0.0
      %8244 = vmatpush2.msra.mxu0 0.0
      %8245 = vmatprep.subr.mxu0 0.0
      %8246 = vmatpush2.msra.mxu0 0.0
      %8247 = vmatprep.subr.mxu0 0.0
      %8248 = vmatpush2.msra.mxu0 0.0
      %8249 = vmatprep.subr.mxu0 0.0
      %8250 = vmatpush2.msra.mxu0 0.0
      %8251 = vmatprep.subr.mxu0 0.0
      %8252 = vmatpush2.msra.mxu0 0.0
      %8253 = vmatprep.subr.mxu0 0.0
      %8254 = vmatpush2.msra.mxu0 0.0
      %8255 = vmatprep.subr.mxu0 0.0
      %8256 = vmatpush2.msra.mxu0 0.0
      %8257 = vmatprep.subr.mxu0 0.0
      %8258 = vmatpush2.msra.mxu0 0.0
      %8259 = vmatprep.subr.mxu0 0.0
      %8260 = vmatpush2.msra.mxu0 0.0
      %8261 = vmatprep.subr.mxu0 0.0
      %8262 = vmatpush2.msra.mxu0 0.0
      %8263 = vmatprep.subr.mxu0 0.0
      %8264 = vmatpush2.msra.mxu0 0.0
      %8265 = vmatprep.subr.mxu0 0.0
      %8266 = vmatpush2.msra.mxu0 0.0
      %8267 = vmatprep.mubr.f32.mxu0 0.0
      %v8268 = vand.u32 %v7939, 4294901760
      %v8269 = vsub.f32 %v7939, %v8268
      %v8270 = vand.u32 %v8269, 4294901760
      %8271 = vmatmul.mubr.f32.gmra.mxu0 %v8270
      %v8272 = vpop.f32.mrf.mxu0
      %v8273 = vadd.f32 %v8191, %v8272
      %v8274 = vpop.f32.mrf.mxu0
      %8275 = vmatprep.mubr.f32.mxu0 0.0
      %v8276 = vand.u32 %v7942, 4294901760
      %v8277 = vsub.f32 %v7942, %v8276
      %v8278 = vand.u32 %v8277, 4294901760
      %8279 = vmatmul.mubr.f32.gmra.mxu0 %v8278
      %v8280 = vpop.f32.mrf.mxu0
      %v8281 = vadd.f32 %v8198, %v8280
      %v8282 = vpop.f32.mrf.mxu0
      %8283 = vdwg.mxu0
      %8284 = vmatprep.subr.mxu0 0.0
      %8285 = vmatpush1.msra.mxu0 0.0
      %8286 = vmatprep.subr.mxu0 0.0
      %8287 = vmatpush1.msra.mxu0 0.0
      %8288 = vmatprep.subr.mxu0 0.0
      %8289 = vmatpush1.msra.mxu0 0.0
      %8290 = vmatprep.subr.mxu0 0.0
      %8291 = vmatpush1.msra.mxu0 0.0
      %8292 = vmatprep.subr.mxu0 0.0
      %8293 = vmatpush1.msra.mxu0 0.0
      %8294 = vmatprep.subr.mxu0 0.0
      %8295 = vmatpush1.msra.mxu0 0.0
      %8296 = vmatprep.subr.mxu0 0.0
      %8297 = vmatpush1.msra.mxu0 0.0
      %8298 = vmatprep.subr.mxu0 0.0
      %8299 = vmatpush1.msra.mxu0 0.0
      %8300 = vmatprep.subr.mxu0 0.0
      %8301 = vmatpush1.msra.mxu0 0.0
      %8302 = vmatprep.subr.mxu0 0.0
      %8303 = vmatpush1.msra.mxu0 0.0
      %8304 = vmatprep.subr.mxu0 0.0
      %8305 = vmatpush1.msra.mxu0 0.0
      %8306 = vmatprep.subr.mxu0 0.0
      %8307 = vmatpush1.msra.mxu0 0.0
      %8308 = vmatprep.subr.mxu0 0.0
      %8309 = vmatpush1.msra.mxu0 0.0
      %8310 = vmatprep.subr.mxu0 0.0
      %8311 = vmatpush1.msra.mxu0 0.0
      %8312 = vmatprep.subr.mxu0 0.0
      %v8313 = vand.u32 %v284, 4294901760
      %v8314 = vsub.f32 %v284, %v8313
      %v8315 = vand.u32 %v8314, 4294901760
      %8316 = vmatpush1.msra.mxu0 %v8315
      %8317 = vmatprep.subr.mxu0 0.0
      %v8318 = vand.u32 %v283, 4294901760
      %v8319 = vsub.f32 %v283, %v8318
      %v8320 = vand.u32 %v8319, 4294901760
      %8321 = vmatpush1.msra.mxu0 %v8320
      %8322 = vmatprep.subr.mxu0 0.0
      %8323 = vmatpush2.msra.mxu0 0.0
      %8324 = vmatprep.subr.mxu0 0.0
      %8325 = vmatpush2.msra.mxu0 0.0
      %8326 = vmatprep.subr.mxu0 0.0
      %8327 = vmatpush2.msra.mxu0 0.0
      %8328 = vmatprep.subr.mxu0 0.0
      %8329 = vmatpush2.msra.mxu0 0.0
      %8330 = vmatprep.subr.mxu0 0.0
      %8331 = vmatpush2.msra.mxu0 0.0
      %8332 = vmatprep.subr.mxu0 0.0
      %8333 = vmatpush2.msra.mxu0 0.0
      %8334 = vmatprep.subr.mxu0 0.0
      %8335 = vmatpush2.msra.mxu0 0.0
      %8336 = vmatprep.subr.mxu0 0.0
      %8337 = vmatpush2.msra.mxu0 0.0
      %8338 = vmatprep.subr.mxu0 0.0
      %8339 = vmatpush2.msra.mxu0 0.0
      %8340 = vmatprep.subr.mxu0 0.0
      %8341 = vmatpush2.msra.mxu0 0.0
      %8342 = vmatprep.subr.mxu0 0.0
      %8343 = vmatpush2.msra.mxu0 0.0
      %8344 = vmatprep.subr.mxu0 0.0
      %8345 = vmatpush2.msra.mxu0 0.0
      %8346 = vmatprep.subr.mxu0 0.0
      %8347 = vmatpush2.msra.mxu0 0.0
      %8348 = vmatprep.subr.mxu0 0.0
      %8349 = vmatpush2.msra.mxu0 0.0
      %8350 = vmatprep.subr.mxu0 0.0
      %8351 = vmatpush2.msra.mxu0 0.0
      %8352 = vmatprep.subr.mxu0 0.0
      %8353 = vmatpush2.msra.mxu0 0.0
      %8354 = vmatprep.mubr.f32.mxu0 0.0
      %v8355 = vand.u32 %v7939, 4294901760
      %8356 = vmatmul.mubr.f32.gmra.mxu0 %v8355
      %v8357 = vpop.f32.mrf.mxu0
      %v8358 = vadd.f32 %v8273, %v8357
      %v8359 = vpop.f32.mrf.mxu0
      %8360 = vmatprep.mubr.f32.mxu0 0.0
      %v8361 = vand.u32 %v7942, 4294901760
      %8362 = vmatmul.mubr.f32.gmra.mxu0 %v8361
      %v8363 = vpop.f32.mrf.mxu0
      %v8364 = vadd.f32 %v8281, %v8363
      %v8365 = vpop.f32.mrf.mxu0
      %8366 = vdwg.mxu0
      %8367 = vmatprep.subr.mxu0 0.0
      %8368 = vmatpush1.msra.mxu0 0.0
      %8369 = vmatprep.subr.mxu0 0.0
      %8370 = vmatpush1.msra.mxu0 0.0
      %8371 = vmatprep.subr.mxu0 0.0
      %8372 = vmatpush1.msra.mxu0 0.0
      %8373 = vmatprep.subr.mxu0 0.0
      %8374 = vmatpush1.msra.mxu0 0.0
      %8375 = vmatprep.subr.mxu0 0.0
      %8376 = vmatpush1.msra.mxu0 0.0
      %8377 = vmatprep.subr.mxu0 0.0
      %8378 = vmatpush1.msra.mxu0 0.0
      %8379 = vmatprep.subr.mxu0 0.0
      %8380 = vmatpush1.msra.mxu0 0.0
      %8381 = vmatprep.subr.mxu0 0.0
      %8382 = vmatpush1.msra.mxu0 0.0
      %8383 = vmatprep.subr.mxu0 0.0
      %8384 = vmatpush1.msra.mxu0 0.0
      %8385 = vmatprep.subr.mxu0 0.0
      %8386 = vmatpush1.msra.mxu0 0.0
      %8387 = vmatprep.subr.mxu0 0.0
      %8388 = vmatpush1.msra.mxu0 0.0
      %8389 = vmatprep.subr.mxu0 0.0
      %8390 = vmatpush1.msra.mxu0 0.0
      %8391 = vmatprep.subr.mxu0 0.0
      %8392 = vmatpush1.msra.mxu0 0.0
      %8393 = vmatprep.subr.mxu0 0.0
      %8394 = vmatpush1.msra.mxu0 0.0
      %8395 = vmatprep.subr.mxu0 0.0
      %v8396 = vand.u32 %v284, 4294901760
      %8397 = vmatpush1.msra.mxu0 %v8396
      %8398 = vmatprep.subr.mxu0 0.0
      %v8399 = vand.u32 %v283, 4294901760
      %8400 = vmatpush1.msra.mxu0 %v8399
      %8401 = vmatprep.subr.mxu0 0.0
      %8402 = vmatpush2.msra.mxu0 0.0
      %8403 = vmatprep.subr.mxu0 0.0
      %8404 = vmatpush2.msra.mxu0 0.0
      %8405 = vmatprep.subr.mxu0 0.0
      %8406 = vmatpush2.msra.mxu0 0.0
      %8407 = vmatprep.subr.mxu0 0.0
      %8408 = vmatpush2.msra.mxu0 0.0
      %8409 = vmatprep.subr.mxu0 0.0
      %8410 = vmatpush2.msra.mxu0 0.0
      %8411 = vmatprep.subr.mxu0 0.0
      %8412 = vmatpush2.msra.mxu0 0.0
      %8413 = vmatprep.subr.mxu0 0.0
      %8414 = vmatpush2.msra.mxu0 0.0
      %8415 = vmatprep.subr.mxu0 0.0
      %8416 = vmatpush2.msra.mxu0 0.0
      %8417 = vmatprep.subr.mxu0 0.0
      %8418 = vmatpush2.msra.mxu0 0.0
      %8419 = vmatprep.subr.mxu0 0.0
      %8420 = vmatpush2.msra.mxu0 0.0
      %8421 = vmatprep.subr.mxu0 0.0
      %8422 = vmatpush2.msra.mxu0 0.0
      %8423 = vmatprep.subr.mxu0 0.0
      %8424 = vmatpush2.msra.mxu0 0.0
      %8425 = vmatprep.subr.mxu0 0.0
      %8426 = vmatpush2.msra.mxu0 0.0
      %8427 = vmatprep.subr.mxu0 0.0
      %8428 = vmatpush2.msra.mxu0 0.0
      %8429 = vmatprep.subr.mxu0 0.0
      %8430 = vmatpush2.msra.mxu0 0.0
      %8431 = vmatprep.subr.mxu0 0.0
      %8432 = vmatpush2.msra.mxu0 0.0
      %8433 = vmatprep.mubr.f32.mxu0 0.0
      %v8434 = vand.u32 %v7939, 4294901760
      %8435 = vmatmul.mubr.f32.gmra.mxu0 %v8434
      %v8436 = vpop.f32.mrf.mxu0
      %v8437 = vadd.f32 %v8358, %v8436
      %v8438 = vpop.f32.mrf.mxu0
      %8439 = vmatprep.mubr.f32.mxu0 0.0
      %v8440 = vand.u32 %v7942, 4294901760
      %8441 = vmatmul.mubr.f32.gmra.mxu0 %v8440
      %v8442 = vpop.f32.mrf.mxu0
      %v8443 = vadd.f32 %v8364, %v8442
      %v8444 = vpop.f32.mrf.mxu0
      %8445 = vdwg.mxu0
      %v8446 = vld [vmem:[%s2] sm:$0xff]
      %v8447 = vld [vmem:[%s3] sm:$0xff]
      %vm8448 = vcmask 64512
      %v8450 = vsel %vm8448, %v817, 0
      %v8453 = vsel %vm8448, %v823, 0
      %v8456 = vsel %vm8448, %v1325, 0
      %v8459 = vsel %vm8448, %v1331, 0
      %v8462 = vsel %vm8448, %v1833, 0
      %v8465 = vsel %vm8448, %v1839, 0
      %v8468 = vsel %vm8448, %v2341, 0
      %v8471 = vsel %vm8448, %v2347, 0
      %v8474 = vsel %vm8448, %v2849, 0
      %v8477 = vsel %vm8448, %v2855, 0
      %v8480 = vsel %vm8448, %v3357, 0
      %v8483 = vsel %vm8448, %v3363, 0
      %v8486 = vsel %vm8448, %v3865, 0
      %v8489 = vsel %vm8448, %v3871, 0
      %v8492 = vsel %vm8448, %v4373, 0
      %v8495 = vsel %vm8448, %v4379, 0
      %v8498 = vsel %vm8448, %v4881, 0
      %v8501 = vsel %vm8448, %v4887, 0
      %v8504 = vsel %vm8448, %v5389, 0
      %v8507 = vsel %vm8448, %v5395, 0
      %v8510 = vsel %vm8448, %v5897, 0
      %v8513 = vsel %vm8448, %v5903, 0
      %v8516 = vsel %vm8448, %v6405, 0
      %v8519 = vsel %vm8448, %v6411, 0
      %v8522 = vsel %vm8448, %v6913, 0
      %v8525 = vsel %vm8448, %v6919, 0
      %v8528 = vsel %vm8448, %v7421, 0
      %v8531 = vsel %vm8448, %v7427, 0
      %v8534 = vsel %vm8448, %v7929, 0
      %v8537 = vsel %vm8448, %v7935, 0
      %v8540 = vsel %vm8448, %v8437, 0
      %v8543 = vsel %vm8448, %v8443, 0
      %8545 = vmatprep.subr.mxu0 0.0
      %8546 = vmatpush1.msra.mxu0 0.0
      %8547 = vmatprep.subr.mxu0 0.0
      %8548 = vmatpush1.msra.mxu0 0.0
      %8549 = vmatprep.subr.mxu0 0.0
      %8550 = vmatpush1.msra.mxu0 0.0
      %8551 = vmatprep.subr.mxu0 0.0
      %8552 = vmatpush1.msra.mxu0 0.0
      %8553 = vmatprep.subr.mxu0 0.0
      %8554 = vmatpush1.msra.mxu0 0.0
      %8555 = vmatprep.subr.mxu0 0.0
      %8556 = vmatpush1.msra.mxu0 0.0
      %8557 = vmatprep.subr.mxu0 0.0
      %8558 = vmatpush1.msra.mxu0 0.0
      %8559 = vmatprep.subr.mxu0 0.0
      %8560 = vmatpush1.msra.mxu0 0.0
      %8561 = vmatprep.subr.mxu0 0.0
      %8562 = vmatpush1.msra.mxu0 0.0
      %8563 = vmatprep.subr.mxu0 0.0
      %8564 = vmatpush1.msra.mxu0 0.0
      %8565 = vmatprep.subr.mxu0 0.0
      %8566 = vmatpush1.msra.mxu0 0.0
      %8567 = vmatprep.subr.mxu0 0.0
      %8568 = vmatpush1.msra.mxu0 0.0
      %8569 = vmatprep.subr.mxu0 0.0
      %8570 = vmatpush1.msra.mxu0 0.0
      %8571 = vmatprep.subr.mxu0 0.0
      %8572 = vmatpush1.msra.mxu0 0.0
      %8573 = vmatprep.subr.mxu0 0.0
      %8574 = vmatpush1.msra.mxu0 0.0
      %8575 = vmatprep.subr.mxu0 0.0
      %v8576 = vand.u32 %v8447, 4294901760
      %8577 = vmatpush1.msra.mxu0 %v8576
      %8578 = vmatprep.subr.mxu0 0.0
      %8579 = vmatpush2.msra.mxu0 0.0
      %8580 = vmatprep.subr.mxu0 0.0
      %8581 = vmatpush2.msra.mxu0 0.0
      %8582 = vmatprep.subr.mxu0 0.0
      %8583 = vmatpush2.msra.mxu0 0.0
      %8584 = vmatprep.subr.mxu0 0.0
      %8585 = vmatpush2.msra.mxu0 0.0
      %8586 = vmatprep.subr.mxu0 0.0
      %8587 = vmatpush2.msra.mxu0 0.0
      %8588 = vmatprep.subr.mxu0 0.0
      %8589 = vmatpush2.msra.mxu0 0.0
      %8590 = vmatprep.subr.mxu0 0.0
      %8591 = vmatpush2.msra.mxu0 0.0
      %8592 = vmatprep.subr.mxu0 0.0
      %8593 = vmatpush2.msra.mxu0 0.0
      %8594 = vmatprep.subr.mxu0 0.0
      %8595 = vmatpush2.msra.mxu0 0.0
      %8596 = vmatprep.subr.mxu0 0.0
      %8597 = vmatpush2.msra.mxu0 0.0
      %8598 = vmatprep.subr.mxu0 0.0
      %8599 = vmatpush2.msra.mxu0 0.0
      %8600 = vmatprep.subr.mxu0 0.0
      %8601 = vmatpush2.msra.mxu0 0.0
      %8602 = vmatprep.subr.mxu0 0.0
      %8603 = vmatpush2.msra.mxu0 0.0
      %8604 = vmatprep.subr.mxu0 0.0
      %8605 = vmatpush2.msra.mxu0 0.0
      %8606 = vmatprep.subr.mxu0 0.0
      %8607 = vmatpush2.msra.mxu0 0.0
      %8608 = vmatprep.subr.mxu0 0.0
      %8609 = vmatpush2.msra.mxu0 0.0
      %8610 = vmatprep.mubr.f32.mxu0 0.0
      %v8611 = vand.u32 %v8450, 4294901760
      %v8612 = vsub.f32 %v8450, %v8611
      %v8613 = vand.u32 %v8612, 4294901760
      %v8614 = vsub.f32 %v8612, %v8613
      %v8615 = vand.u32 %v8614, 4294901760
      %8616 = vmatmul.mubr.f32.gmra.mxu0 %v8615
      %v8617 = vpop.f32.mrf.mxu0
      %v8618 = vadd.f32 0.0, %v8617
      %v8619 = vpop.f32.mrf.mxu0
      %8620 = vmatprep.mubr.f32.mxu0 0.0
      %v8621 = vand.u32 %v8453, 4294901760
      %v8622 = vsub.f32 %v8453, %v8621
      %v8623 = vand.u32 %v8622, 4294901760
      %v8624 = vsub.f32 %v8622, %v8623
      %v8625 = vand.u32 %v8624, 4294901760
      %8626 = vmatmul.mubr.f32.gmra.mxu0 %v8625
      %v8627 = vpop.f32.mrf.mxu0
      %v8628 = vadd.f32 0.0, %v8627
      %v8629 = vpop.f32.mrf.mxu0
      %8630 = vmatprep.mubr.f32.mxu0 0.0
      %v8631 = vand.u32 %v8456, 4294901760
      %v8632 = vsub.f32 %v8456, %v8631
      %v8633 = vand.u32 %v8632, 4294901760
      %v8634 = vsub.f32 %v8632, %v8633
      %v8635 = vand.u32 %v8634, 4294901760
      %8636 = vmatmul.mubr.f32.gmra.mxu0 %v8635
      %v8637 = vpop.f32.mrf.mxu0
      %v8638 = vadd.f32 0.0, %v8637
      %v8639 = vpop.f32.mrf.mxu0
      %8640 = vmatprep.mubr.f32.mxu0 0.0
      %v8641 = vand.u32 %v8459, 4294901760
      %v8642 = vsub.f32 %v8459, %v8641
      %v8643 = vand.u32 %v8642, 4294901760
      %v8644 = vsub.f32 %v8642, %v8643
      %v8645 = vand.u32 %v8644, 4294901760
      %8646 = vmatmul.mubr.f32.gmra.mxu0 %v8645
      %v8647 = vpop.f32.mrf.mxu0
      %v8648 = vadd.f32 0.0, %v8647
      %v8649 = vpop.f32.mrf.mxu0
      %8650 = vmatprep.mubr.f32.mxu0 0.0
      %v8651 = vand.u32 %v8462, 4294901760
      %v8652 = vsub.f32 %v8462, %v8651
      %v8653 = vand.u32 %v8652, 4294901760
      %v8654 = vsub.f32 %v8652, %v8653
      %v8655 = vand.u32 %v8654, 4294901760
      %8656 = vmatmul.mubr.f32.gmra.mxu0 %v8655
      %v8657 = vpop.f32.mrf.mxu0
      %v8658 = vadd.f32 0.0, %v8657
      %v8659 = vpop.f32.mrf.mxu0
      %8660 = vmatprep.mubr.f32.mxu0 0.0
      %v8661 = vand.u32 %v8465, 4294901760
      %v8662 = vsub.f32 %v8465, %v8661
      %v8663 = vand.u32 %v8662, 4294901760
      %v8664 = vsub.f32 %v8662, %v8663
      %v8665 = vand.u32 %v8664, 4294901760
      %8666 = vmatmul.mubr.f32.gmra.mxu0 %v8665
      %v8667 = vpop.f32.mrf.mxu0
      %v8668 = vadd.f32 0.0, %v8667
      %v8669 = vpop.f32.mrf.mxu0
      %8670 = vmatprep.mubr.f32.mxu0 0.0
      %v8671 = vand.u32 %v8468, 4294901760
      %v8672 = vsub.f32 %v8468, %v8671
      %v8673 = vand.u32 %v8672, 4294901760
      %v8674 = vsub.f32 %v8672, %v8673
      %v8675 = vand.u32 %v8674, 4294901760
      %8676 = vmatmul.mubr.f32.gmra.mxu0 %v8675
      %v8677 = vpop.f32.mrf.mxu0
      %v8678 = vadd.f32 0.0, %v8677
      %v8679 = vpop.f32.mrf.mxu0
      %8680 = vmatprep.mubr.f32.mxu0 0.0
      %v8681 = vand.u32 %v8471, 4294901760
      %v8682 = vsub.f32 %v8471, %v8681
      %v8683 = vand.u32 %v8682, 4294901760
      %v8684 = vsub.f32 %v8682, %v8683
      %v8685 = vand.u32 %v8684, 4294901760
      %8686 = vmatmul.mubr.f32.gmra.mxu0 %v8685
      %v8687 = vpop.f32.mrf.mxu0
      %v8688 = vadd.f32 0.0, %v8687
      %v8689 = vpop.f32.mrf.mxu0
      %8690 = vmatprep.mubr.f32.mxu0 0.0
      %v8691 = vand.u32 %v8474, 4294901760
      %v8692 = vsub.f32 %v8474, %v8691
      %v8693 = vand.u32 %v8692, 4294901760
      %v8694 = vsub.f32 %v8692, %v8693
      %v8695 = vand.u32 %v8694, 4294901760
      %8696 = vmatmul.mubr.f32.gmra.mxu0 %v8695
      %v8697 = vpop.f32.mrf.mxu0
      %v8698 = vadd.f32 0.0, %v8697
      %v8699 = vpop.f32.mrf.mxu0
      %8700 = vmatprep.mubr.f32.mxu0 0.0
      %v8701 = vand.u32 %v8477, 4294901760
      %v8702 = vsub.f32 %v8477, %v8701
      %v8703 = vand.u32 %v8702, 4294901760
      %v8704 = vsub.f32 %v8702, %v8703
      %v8705 = vand.u32 %v8704, 4294901760
      %8706 = vmatmul.mubr.f32.gmra.mxu0 %v8705
      %v8707 = vpop.f32.mrf.mxu0
      %v8708 = vadd.f32 0.0, %v8707
      %v8709 = vpop.f32.mrf.mxu0
      %8710 = vmatprep.mubr.f32.mxu0 0.0
      %v8711 = vand.u32 %v8480, 4294901760
      %v8712 = vsub.f32 %v8480, %v8711
      %v8713 = vand.u32 %v8712, 4294901760
      %v8714 = vsub.f32 %v8712, %v8713
      %v8715 = vand.u32 %v8714, 4294901760
      %8716 = vmatmul.mubr.f32.gmra.mxu0 %v8715
      %v8717 = vpop.f32.mrf.mxu0
      %v8718 = vadd.f32 0.0, %v8717
      %v8719 = vpop.f32.mrf.mxu0
      %8720 = vmatprep.mubr.f32.mxu0 0.0
      %v8721 = vand.u32 %v8483, 4294901760
      %v8722 = vsub.f32 %v8483, %v8721
      %v8723 = vand.u32 %v8722, 4294901760
      %v8724 = vsub.f32 %v8722, %v8723
      %v8725 = vand.u32 %v8724, 4294901760
      %8726 = vmatmul.mubr.f32.gmra.mxu0 %v8725
      %v8727 = vpop.f32.mrf.mxu0
      %v8728 = vadd.f32 0.0, %v8727
      %v8729 = vpop.f32.mrf.mxu0
      %8730 = vmatprep.mubr.f32.mxu0 0.0
      %v8731 = vand.u32 %v8486, 4294901760
      %v8732 = vsub.f32 %v8486, %v8731
      %v8733 = vand.u32 %v8732, 4294901760
      %v8734 = vsub.f32 %v8732, %v8733
      %v8735 = vand.u32 %v8734, 4294901760
      %8736 = vmatmul.mubr.f32.gmra.mxu0 %v8735
      %v8737 = vpop.f32.mrf.mxu0
      %v8738 = vadd.f32 0.0, %v8737
      %v8739 = vpop.f32.mrf.mxu0
      %8740 = vmatprep.mubr.f32.mxu0 0.0
      %v8741 = vand.u32 %v8489, 4294901760
      %v8742 = vsub.f32 %v8489, %v8741
      %v8743 = vand.u32 %v8742, 4294901760
      %v8744 = vsub.f32 %v8742, %v8743
      %v8745 = vand.u32 %v8744, 4294901760
      %8746 = vmatmul.mubr.f32.gmra.mxu0 %v8745
      %v8747 = vpop.f32.mrf.mxu0
      %v8748 = vadd.f32 0.0, %v8747
      %v8749 = vpop.f32.mrf.mxu0
      %8750 = vmatprep.mubr.f32.mxu0 0.0
      %v8751 = vand.u32 %v8492, 4294901760
      %v8752 = vsub.f32 %v8492, %v8751
      %v8753 = vand.u32 %v8752, 4294901760
      %v8754 = vsub.f32 %v8752, %v8753
      %v8755 = vand.u32 %v8754, 4294901760
      %8756 = vmatmul.mubr.f32.gmra.mxu0 %v8755
      %v8757 = vpop.f32.mrf.mxu0
      %v8758 = vadd.f32 0.0, %v8757
      %v8759 = vpop.f32.mrf.mxu0
      %8760 = vmatprep.mubr.f32.mxu0 0.0
      %v8761 = vand.u32 %v8495, 4294901760
      %v8762 = vsub.f32 %v8495, %v8761
      %v8763 = vand.u32 %v8762, 4294901760
      %v8764 = vsub.f32 %v8762, %v8763
      %v8765 = vand.u32 %v8764, 4294901760
      %8766 = vmatmul.mubr.f32.gmra.mxu0 %v8765
      %v8767 = vpop.f32.mrf.mxu0
      %v8768 = vadd.f32 0.0, %v8767
      %v8769 = vpop.f32.mrf.mxu0
      %8770 = vmatprep.mubr.f32.mxu0 0.0
      %v8771 = vand.u32 %v8498, 4294901760
      %v8772 = vsub.f32 %v8498, %v8771
      %v8773 = vand.u32 %v8772, 4294901760
      %v8774 = vsub.f32 %v8772, %v8773
      %v8775 = vand.u32 %v8774, 4294901760
      %8776 = vmatmul.mubr.f32.gmra.mxu0 %v8775
      %v8777 = vpop.f32.mrf.mxu0
      %v8778 = vadd.f32 0.0, %v8777
      %v8779 = vpop.f32.mrf.mxu0
      %8780 = vmatprep.mubr.f32.mxu0 0.0
      %v8781 = vand.u32 %v8501, 4294901760
      %v8782 = vsub.f32 %v8501, %v8781
      %v8783 = vand.u32 %v8782, 4294901760
      %v8784 = vsub.f32 %v8782, %v8783
      %v8785 = vand.u32 %v8784, 4294901760
      %8786 = vmatmul.mubr.f32.gmra.mxu0 %v8785
      %v8787 = vpop.f32.mrf.mxu0
      %v8788 = vadd.f32 0.0, %v8787
      %v8789 = vpop.f32.mrf.mxu0
      %8790 = vmatprep.mubr.f32.mxu0 0.0
      %v8791 = vand.u32 %v8504, 4294901760
      %v8792 = vsub.f32 %v8504, %v8791
      %v8793 = vand.u32 %v8792, 4294901760
      %v8794 = vsub.f32 %v8792, %v8793
      %v8795 = vand.u32 %v8794, 4294901760
      %8796 = vmatmul.mubr.f32.gmra.mxu0 %v8795
      %v8797 = vpop.f32.mrf.mxu0
      %v8798 = vadd.f32 0.0, %v8797
      %v8799 = vpop.f32.mrf.mxu0
      %8800 = vmatprep.mubr.f32.mxu0 0.0
      %v8801 = vand.u32 %v8507, 4294901760
      %v8802 = vsub.f32 %v8507, %v8801
      %v8803 = vand.u32 %v8802, 4294901760
      %v8804 = vsub.f32 %v8802, %v8803
      %v8805 = vand.u32 %v8804, 4294901760
      %8806 = vmatmul.mubr.f32.gmra.mxu0 %v8805
      %v8807 = vpop.f32.mrf.mxu0
      %v8808 = vadd.f32 0.0, %v8807
      %v8809 = vpop.f32.mrf.mxu0
      %8810 = vmatprep.mubr.f32.mxu0 0.0
      %v8811 = vand.u32 %v8510, 4294901760
      %v8812 = vsub.f32 %v8510, %v8811
      %v8813 = vand.u32 %v8812, 4294901760
      %v8814 = vsub.f32 %v8812, %v8813
      %v8815 = vand.u32 %v8814, 4294901760
      %8816 = vmatmul.mubr.f32.gmra.mxu0 %v8815
      %v8817 = vpop.f32.mrf.mxu0
      %v8818 = vadd.f32 0.0, %v8817
      %v8819 = vpop.f32.mrf.mxu0
      %8820 = vmatprep.mubr.f32.mxu0 0.0
      %v8821 = vand.u32 %v8513, 4294901760
      %v8822 = vsub.f32 %v8513, %v8821
      %v8823 = vand.u32 %v8822, 4294901760
      %v8824 = vsub.f32 %v8822, %v8823
      %v8825 = vand.u32 %v8824, 4294901760
      %8826 = vmatmul.mubr.f32.gmra.mxu0 %v8825
      %v8827 = vpop.f32.mrf.mxu0
      %v8828 = vadd.f32 0.0, %v8827
      %v8829 = vpop.f32.mrf.mxu0
      %8830 = vmatprep.mubr.f32.mxu0 0.0
      %v8831 = vand.u32 %v8516, 4294901760
      %v8832 = vsub.f32 %v8516, %v8831
      %v8833 = vand.u32 %v8832, 4294901760
      %v8834 = vsub.f32 %v8832, %v8833
      %v8835 = vand.u32 %v8834, 4294901760
      %8836 = vmatmul.mubr.f32.gmra.mxu0 %v8835
      %v8837 = vpop.f32.mrf.mxu0
      %v8838 = vadd.f32 0.0, %v8837
      %v8839 = vpop.f32.mrf.mxu0
      %8840 = vmatprep.mubr.f32.mxu0 0.0
      %v8841 = vand.u32 %v8519, 4294901760
      %v8842 = vsub.f32 %v8519, %v8841
      %v8843 = vand.u32 %v8842, 4294901760
      %v8844 = vsub.f32 %v8842, %v8843
      %v8845 = vand.u32 %v8844, 4294901760
      %8846 = vmatmul.mubr.f32.gmra.mxu0 %v8845
      %v8847 = vpop.f32.mrf.mxu0
      %v8848 = vadd.f32 0.0, %v8847
      %v8849 = vpop.f32.mrf.mxu0
      %8850 = vmatprep.mubr.f32.mxu0 0.0
      %v8851 = vand.u32 %v8522, 4294901760
      %v8852 = vsub.f32 %v8522, %v8851
      %v8853 = vand.u32 %v8852, 4294901760
      %v8854 = vsub.f32 %v8852, %v8853
      %v8855 = vand.u32 %v8854, 4294901760
      %8856 = vmatmul.mubr.f32.gmra.mxu0 %v8855
      %v8857 = vpop.f32.mrf.mxu0
      %v8858 = vadd.f32 0.0, %v8857
      %v8859 = vpop.f32.mrf.mxu0
      %8860 = vmatprep.mubr.f32.mxu0 0.0
      %v8861 = vand.u32 %v8525, 4294901760
      %v8862 = vsub.f32 %v8525, %v8861
      %v8863 = vand.u32 %v8862, 4294901760
      %v8864 = vsub.f32 %v8862, %v8863
      %v8865 = vand.u32 %v8864, 4294901760
      %8866 = vmatmul.mubr.f32.gmra.mxu0 %v8865
      %v8867 = vpop.f32.mrf.mxu0
      %v8868 = vadd.f32 0.0, %v8867
      %v8869 = vpop.f32.mrf.mxu0
      %8870 = vmatprep.mubr.f32.mxu0 0.0
      %v8871 = vand.u32 %v8528, 4294901760
      %v8872 = vsub.f32 %v8528, %v8871
      %v8873 = vand.u32 %v8872, 4294901760
      %v8874 = vsub.f32 %v8872, %v8873
      %v8875 = vand.u32 %v8874, 4294901760
      %8876 = vmatmul.mubr.f32.gmra.mxu0 %v8875
      %v8877 = vpop.f32.mrf.mxu0
      %v8878 = vadd.f32 0.0, %v8877
      %v8879 = vpop.f32.mrf.mxu0
      %8880 = vmatprep.mubr.f32.mxu0 0.0
      %v8881 = vand.u32 %v8531, 4294901760
      %v8882 = vsub.f32 %v8531, %v8881
      %v8883 = vand.u32 %v8882, 4294901760
      %v8884 = vsub.f32 %v8882, %v8883
      %v8885 = vand.u32 %v8884, 4294901760
      %8886 = vmatmul.mubr.f32.gmra.mxu0 %v8885
      %v8887 = vpop.f32.mrf.mxu0
      %v8888 = vadd.f32 0.0, %v8887
      %v8889 = vpop.f32.mrf.mxu0
      %8890 = vmatprep.mubr.f32.mxu0 0.0
      %v8891 = vand.u32 %v8534, 4294901760
      %v8892 = vsub.f32 %v8534, %v8891
      %v8893 = vand.u32 %v8892, 4294901760
      %v8894 = vsub.f32 %v8892, %v8893
      %v8895 = vand.u32 %v8894, 4294901760
      %8896 = vmatmul.mubr.f32.gmra.mxu0 %v8895
      %v8897 = vpop.f32.mrf.mxu0
      %v8898 = vadd.f32 0.0, %v8897
      %v8899 = vpop.f32.mrf.mxu0
      %8900 = vmatprep.mubr.f32.mxu0 0.0
      %v8901 = vand.u32 %v8537, 4294901760
      %v8902 = vsub.f32 %v8537, %v8901
      %v8903 = vand.u32 %v8902, 4294901760
      %v8904 = vsub.f32 %v8902, %v8903
      %v8905 = vand.u32 %v8904, 4294901760
      %8906 = vmatmul.mubr.f32.gmra.mxu0 %v8905
      %v8907 = vpop.f32.mrf.mxu0
      %v8908 = vadd.f32 0.0, %v8907
      %v8909 = vpop.f32.mrf.mxu0
      %8910 = vmatprep.mubr.f32.mxu0 0.0
      %v8911 = vand.u32 %v8540, 4294901760
      %v8912 = vsub.f32 %v8540, %v8911
      %v8913 = vand.u32 %v8912, 4294901760
      %v8914 = vsub.f32 %v8912, %v8913
      %v8915 = vand.u32 %v8914, 4294901760
      %8916 = vmatmul.mubr.f32.gmra.mxu0 %v8915
      %v8917 = vpop.f32.mrf.mxu0
      %v8918 = vadd.f32 0.0, %v8917
      %v8919 = vpop.f32.mrf.mxu0
      %8920 = vmatprep.mubr.f32.mxu0 0.0
      %v8921 = vand.u32 %v8543, 4294901760
      %v8922 = vsub.f32 %v8543, %v8921
      %v8923 = vand.u32 %v8922, 4294901760
      %v8924 = vsub.f32 %v8922, %v8923
      %v8925 = vand.u32 %v8924, 4294901760
      %8926 = vmatmul.mubr.f32.gmra.mxu0 %v8925
      %v8927 = vpop.f32.mrf.mxu0
      %v8928 = vadd.f32 0.0, %v8927
      %v8929 = vpop.f32.mrf.mxu0
      %8930 = vdwg.mxu0
      %8931 = vmatprep.subr.mxu0 0.0
      %8932 = vmatpush1.msra.mxu0 0.0
      %8933 = vmatprep.subr.mxu0 0.0
      %8934 = vmatpush1.msra.mxu0 0.0
      %8935 = vmatprep.subr.mxu0 0.0
      %8936 = vmatpush1.msra.mxu0 0.0
      %8937 = vmatprep.subr.mxu0 0.0
      %8938 = vmatpush1.msra.mxu0 0.0
      %8939 = vmatprep.subr.mxu0 0.0
      %8940 = vmatpush1.msra.mxu0 0.0
      %8941 = vmatprep.subr.mxu0 0.0
      %8942 = vmatpush1.msra.mxu0 0.0
      %8943 = vmatprep.subr.mxu0 0.0
      %8944 = vmatpush1.msra.mxu0 0.0
      %8945 = vmatprep.subr.mxu0 0.0
      %8946 = vmatpush1.msra.mxu0 0.0
      %8947 = vmatprep.subr.mxu0 0.0
      %8948 = vmatpush1.msra.mxu0 0.0
      %8949 = vmatprep.subr.mxu0 0.0
      %8950 = vmatpush1.msra.mxu0 0.0
      %8951 = vmatprep.subr.mxu0 0.0
      %8952 = vmatpush1.msra.mxu0 0.0
      %8953 = vmatprep.subr.mxu0 0.0
      %8954 = vmatpush1.msra.mxu0 0.0
      %8955 = vmatprep.subr.mxu0 0.0
      %8956 = vmatpush1.msra.mxu0 0.0
      %8957 = vmatprep.subr.mxu0 0.0
      %8958 = vmatpush1.msra.mxu0 0.0
      %8959 = vmatprep.subr.mxu0 0.0
      %8960 = vmatpush1.msra.mxu0 0.0
      %8961 = vmatprep.subr.mxu0 0.0
      %v8962 = vand.u32 %v8447, 4294901760
      %v8963 = vsub.f32 %v8447, %v8962
      %v8964 = vand.u32 %v8963, 4294901760
      %v8965 = vsub.f32 %v8963, %v8964
      %v8966 = vand.u32 %v8965, 4294901760
      %8967 = vmatpush1.msra.mxu0 %v8966
      %8968 = vmatprep.subr.mxu0 0.0
      %8969 = vmatpush2.msra.mxu0 0.0
      %8970 = vmatprep.subr.mxu0 0.0
      %8971 = vmatpush2.msra.mxu0 0.0
      %8972 = vmatprep.subr.mxu0 0.0
      %8973 = vmatpush2.msra.mxu0 0.0
      %8974 = vmatprep.subr.mxu0 0.0
      %8975 = vmatpush2.msra.mxu0 0.0
      %8976 = vmatprep.subr.mxu0 0.0
      %8977 = vmatpush2.msra.mxu0 0.0
      %8978 = vmatprep.subr.mxu0 0.0
      %8979 = vmatpush2.msra.mxu0 0.0
      %8980 = vmatprep.subr.mxu0 0.0
      %8981 = vmatpush2.msra.mxu0 0.0
      %8982 = vmatprep.subr.mxu0 0.0
      %8983 = vmatpush2.msra.mxu0 0.0
      %8984 = vmatprep.subr.mxu0 0.0
      %8985 = vmatpush2.msra.mxu0 0.0
      %8986 = vmatprep.subr.mxu0 0.0
      %8987 = vmatpush2.msra.mxu0 0.0
      %8988 = vmatprep.subr.mxu0 0.0
      %8989 = vmatpush2.msra.mxu0 0.0
      %8990 = vmatprep.subr.mxu0 0.0
      %8991 = vmatpush2.msra.mxu0 0.0
      %8992 = vmatprep.subr.mxu0 0.0
      %8993 = vmatpush2.msra.mxu0 0.0
      %8994 = vmatprep.subr.mxu0 0.0
      %8995 = vmatpush2.msra.mxu0 0.0
      %8996 = vmatprep.subr.mxu0 0.0
      %8997 = vmatpush2.msra.mxu0 0.0
      %8998 = vmatprep.subr.mxu0 0.0
      %8999 = vmatpush2.msra.mxu0 0.0
      %9000 = vmatprep.mubr.f32.mxu0 0.0
      %v9001 = vand.u32 %v8450, 4294901760
      %9002 = vmatmul.mubr.f32.gmra.mxu0 %v9001
      %v9003 = vpop.f32.mrf.mxu0
      %v9004 = vadd.f32 %v8618, %v9003
      %v9005 = vpop.f32.mrf.mxu0
      %9006 = vmatprep.mubr.f32.mxu0 0.0
      %v9007 = vand.u32 %v8453, 4294901760
      %9008 = vmatmul.mubr.f32.gmra.mxu0 %v9007
      %v9009 = vpop.f32.mrf.mxu0
      %v9010 = vadd.f32 %v8628, %v9009
      %v9011 = vpop.f32.mrf.mxu0
      %9012 = vmatprep.mubr.f32.mxu0 0.0
      %v9013 = vand.u32 %v8456, 4294901760
      %9014 = vmatmul.mubr.f32.gmra.mxu0 %v9013
      %v9015 = vpop.f32.mrf.mxu0
      %v9016 = vadd.f32 %v8638, %v9015
      %v9017 = vpop.f32.mrf.mxu0
      %9018 = vmatprep.mubr.f32.mxu0 0.0
      %v9019 = vand.u32 %v8459, 4294901760
      %9020 = vmatmul.mubr.f32.gmra.mxu0 %v9019
      %v9021 = vpop.f32.mrf.mxu0
      %v9022 = vadd.f32 %v8648, %v9021
      %v9023 = vpop.f32.mrf.mxu0
      %9024 = vmatprep.mubr.f32.mxu0 0.0
      %v9025 = vand.u32 %v8462, 4294901760
      %9026 = vmatmul.mubr.f32.gmra.mxu0 %v9025
      %v9027 = vpop.f32.mrf.mxu0
      %v9028 = vadd.f32 %v8658, %v9027
      %v9029 = vpop.f32.mrf.mxu0
      %9030 = vmatprep.mubr.f32.mxu0 0.0
      %v9031 = vand.u32 %v8465, 4294901760
      %9032 = vmatmul.mubr.f32.gmra.mxu0 %v9031
      %v9033 = vpop.f32.mrf.mxu0
      %v9034 = vadd.f32 %v8668, %v9033
      %v9035 = vpop.f32.mrf.mxu0
      %9036 = vmatprep.mubr.f32.mxu0 0.0
      %v9037 = vand.u32 %v8468, 4294901760
      %9038 = vmatmul.mubr.f32.gmra.mxu0 %v9037
      %v9039 = vpop.f32.mrf.mxu0
      %v9040 = vadd.f32 %v8678, %v9039
      %v9041 = vpop.f32.mrf.mxu0
      %9042 = vmatprep.mubr.f32.mxu0 0.0
      %v9043 = vand.u32 %v8471, 4294901760
      %9044 = vmatmul.mubr.f32.gmra.mxu0 %v9043
      %v9045 = vpop.f32.mrf.mxu0
      %v9046 = vadd.f32 %v8688, %v9045
      %v9047 = vpop.f32.mrf.mxu0
      %9048 = vmatprep.mubr.f32.mxu0 0.0
      %v9049 = vand.u32 %v8474, 4294901760
      %9050 = vmatmul.mubr.f32.gmra.mxu0 %v9049
      %v9051 = vpop.f32.mrf.mxu0
      %v9052 = vadd.f32 %v8698, %v9051
      %v9053 = vpop.f32.mrf.mxu0
      %9054 = vmatprep.mubr.f32.mxu0 0.0
      %v9055 = vand.u32 %v8477, 4294901760
      %9056 = vmatmul.mubr.f32.gmra.mxu0 %v9055
      %v9057 = vpop.f32.mrf.mxu0
      %v9058 = vadd.f32 %v8708, %v9057
      %v9059 = vpop.f32.mrf.mxu0
      %9060 = vmatprep.mubr.f32.mxu0 0.0
      %v9061 = vand.u32 %v8480, 4294901760
      %9062 = vmatmul.mubr.f32.gmra.mxu0 %v9061
      %v9063 = vpop.f32.mrf.mxu0
      %v9064 = vadd.f32 %v8718, %v9063
      %v9065 = vpop.f32.mrf.mxu0
      %9066 = vmatprep.mubr.f32.mxu0 0.0
      %v9067 = vand.u32 %v8483, 4294901760
      %9068 = vmatmul.mubr.f32.gmra.mxu0 %v9067
      %v9069 = vpop.f32.mrf.mxu0
      %v9070 = vadd.f32 %v8728, %v9069
      %v9071 = vpop.f32.mrf.mxu0
      %9072 = vmatprep.mubr.f32.mxu0 0.0
      %v9073 = vand.u32 %v8486, 4294901760
      %9074 = vmatmul.mubr.f32.gmra.mxu0 %v9073
      %v9075 = vpop.f32.mrf.mxu0
      %v9076 = vadd.f32 %v8738, %v9075
      %v9077 = vpop.f32.mrf.mxu0
      %9078 = vmatprep.mubr.f32.mxu0 0.0
      %v9079 = vand.u32 %v8489, 4294901760
      %9080 = vmatmul.mubr.f32.gmra.mxu0 %v9079
      %v9081 = vpop.f32.mrf.mxu0
      %v9082 = vadd.f32 %v8748, %v9081
      %v9083 = vpop.f32.mrf.mxu0
      %9084 = vmatprep.mubr.f32.mxu0 0.0
      %v9085 = vand.u32 %v8492, 4294901760
      %9086 = vmatmul.mubr.f32.gmra.mxu0 %v9085
      %v9087 = vpop.f32.mrf.mxu0
      %v9088 = vadd.f32 %v8758, %v9087
      %v9089 = vpop.f32.mrf.mxu0
      %9090 = vmatprep.mubr.f32.mxu0 0.0
      %v9091 = vand.u32 %v8495, 4294901760
      %9092 = vmatmul.mubr.f32.gmra.mxu0 %v9091
      %v9093 = vpop.f32.mrf.mxu0
      %v9094 = vadd.f32 %v8768, %v9093
      %v9095 = vpop.f32.mrf.mxu0
      %9096 = vmatprep.mubr.f32.mxu0 0.0
      %v9097 = vand.u32 %v8498, 4294901760
      %9098 = vmatmul.mubr.f32.gmra.mxu0 %v9097
      %v9099 = vpop.f32.mrf.mxu0
      %v9100 = vadd.f32 %v8778, %v9099
      %v9101 = vpop.f32.mrf.mxu0
      %9102 = vmatprep.mubr.f32.mxu0 0.0
      %v9103 = vand.u32 %v8501, 4294901760
      %9104 = vmatmul.mubr.f32.gmra.mxu0 %v9103
      %v9105 = vpop.f32.mrf.mxu0
      %v9106 = vadd.f32 %v8788, %v9105
      %v9107 = vpop.f32.mrf.mxu0
      %9108 = vmatprep.mubr.f32.mxu0 0.0
      %v9109 = vand.u32 %v8504, 4294901760
      %9110 = vmatmul.mubr.f32.gmra.mxu0 %v9109
      %v9111 = vpop.f32.mrf.mxu0
      %v9112 = vadd.f32 %v8798, %v9111
      %v9113 = vpop.f32.mrf.mxu0
      %9114 = vmatprep.mubr.f32.mxu0 0.0
      %v9115 = vand.u32 %v8507, 4294901760
      %9116 = vmatmul.mubr.f32.gmra.mxu0 %v9115
      %v9117 = vpop.f32.mrf.mxu0
      %v9118 = vadd.f32 %v8808, %v9117
      %v9119 = vpop.f32.mrf.mxu0
      %9120 = vmatprep.mubr.f32.mxu0 0.0
      %v9121 = vand.u32 %v8510, 4294901760
      %9122 = vmatmul.mubr.f32.gmra.mxu0 %v9121
      %v9123 = vpop.f32.mrf.mxu0
      %v9124 = vadd.f32 %v8818, %v9123
      %v9125 = vpop.f32.mrf.mxu0
      %9126 = vmatprep.mubr.f32.mxu0 0.0
      %v9127 = vand.u32 %v8513, 4294901760
      %9128 = vmatmul.mubr.f32.gmra.mxu0 %v9127
      %v9129 = vpop.f32.mrf.mxu0
      %v9130 = vadd.f32 %v8828, %v9129
      %v9131 = vpop.f32.mrf.mxu0
      %9132 = vmatprep.mubr.f32.mxu0 0.0
      %v9133 = vand.u32 %v8516, 4294901760
      %9134 = vmatmul.mubr.f32.gmra.mxu0 %v9133
      %v9135 = vpop.f32.mrf.mxu0
      %v9136 = vadd.f32 %v8838, %v9135
      %v9137 = vpop.f32.mrf.mxu0
      %9138 = vmatprep.mubr.f32.mxu0 0.0
      %v9139 = vand.u32 %v8519, 4294901760
      %9140 = vmatmul.mubr.f32.gmra.mxu0 %v9139
      %v9141 = vpop.f32.mrf.mxu0
      %v9142 = vadd.f32 %v8848, %v9141
      %v9143 = vpop.f32.mrf.mxu0
      %9144 = vmatprep.mubr.f32.mxu0 0.0
      %v9145 = vand.u32 %v8522, 4294901760
      %9146 = vmatmul.mubr.f32.gmra.mxu0 %v9145
      %v9147 = vpop.f32.mrf.mxu0
      %v9148 = vadd.f32 %v8858, %v9147
      %v9149 = vpop.f32.mrf.mxu0
      %9150 = vmatprep.mubr.f32.mxu0 0.0
      %v9151 = vand.u32 %v8525, 4294901760
      %9152 = vmatmul.mubr.f32.gmra.mxu0 %v9151
      %v9153 = vpop.f32.mrf.mxu0
      %v9154 = vadd.f32 %v8868, %v9153
      %v9155 = vpop.f32.mrf.mxu0
      %9156 = vmatprep.mubr.f32.mxu0 0.0
      %v9157 = vand.u32 %v8528, 4294901760
      %9158 = vmatmul.mubr.f32.gmra.mxu0 %v9157
      %v9159 = vpop.f32.mrf.mxu0
      %v9160 = vadd.f32 %v8878, %v9159
      %v9161 = vpop.f32.mrf.mxu0
      %9162 = vmatprep.mubr.f32.mxu0 0.0
      %v9163 = vand.u32 %v8531, 4294901760
      %9164 = vmatmul.mubr.f32.gmra.mxu0 %v9163
      %v9165 = vpop.f32.mrf.mxu0
      %v9166 = vadd.f32 %v8888, %v9165
      %v9167 = vpop.f32.mrf.mxu0
      %9168 = vmatprep.mubr.f32.mxu0 0.0
      %v9169 = vand.u32 %v8534, 4294901760
      %9170 = vmatmul.mubr.f32.gmra.mxu0 %v9169
      %v9171 = vpop.f32.mrf.mxu0
      %v9172 = vadd.f32 %v8898, %v9171
      %v9173 = vpop.f32.mrf.mxu0
      %9174 = vmatprep.mubr.f32.mxu0 0.0
      %v9175 = vand.u32 %v8537, 4294901760
      %9176 = vmatmul.mubr.f32.gmra.mxu0 %v9175
      %v9177 = vpop.f32.mrf.mxu0
      %v9178 = vadd.f32 %v8908, %v9177
      %v9179 = vpop.f32.mrf.mxu0
      %9180 = vmatprep.mubr.f32.mxu0 0.0
      %v9181 = vand.u32 %v8540, 4294901760
      %9182 = vmatmul.mubr.f32.gmra.mxu0 %v9181
      %v9183 = vpop.f32.mrf.mxu0
      %v9184 = vadd.f32 %v8918, %v9183
      %v9185 = vpop.f32.mrf.mxu0
      %9186 = vmatprep.mubr.f32.mxu0 0.0
      %v9187 = vand.u32 %v8543, 4294901760
      %9188 = vmatmul.mubr.f32.gmra.mxu0 %v9187
      %v9189 = vpop.f32.mrf.mxu0
      %v9190 = vadd.f32 %v8928, %v9189
      %v9191 = vpop.f32.mrf.mxu0
      %9192 = vdwg.mxu0
      %9193 = vmatprep.subr.mxu0 0.0
      %9194 = vmatpush1.msra.mxu0 0.0
      %9195 = vmatprep.subr.mxu0 0.0
      %9196 = vmatpush1.msra.mxu0 0.0
      %9197 = vmatprep.subr.mxu0 0.0
      %9198 = vmatpush1.msra.mxu0 0.0
      %9199 = vmatprep.subr.mxu0 0.0
      %9200 = vmatpush1.msra.mxu0 0.0
      %9201 = vmatprep.subr.mxu0 0.0
      %9202 = vmatpush1.msra.mxu0 0.0
      %9203 = vmatprep.subr.mxu0 0.0
      %9204 = vmatpush1.msra.mxu0 0.0
      %9205 = vmatprep.subr.mxu0 0.0
      %9206 = vmatpush1.msra.mxu0 0.0
      %9207 = vmatprep.subr.mxu0 0.0
      %9208 = vmatpush1.msra.mxu0 0.0
      %9209 = vmatprep.subr.mxu0 0.0
      %9210 = vmatpush1.msra.mxu0 0.0
      %9211 = vmatprep.subr.mxu0 0.0
      %9212 = vmatpush1.msra.mxu0 0.0
      %9213 = vmatprep.subr.mxu0 0.0
      %9214 = vmatpush1.msra.mxu0 0.0
      %9215 = vmatprep.subr.mxu0 0.0
      %9216 = vmatpush1.msra.mxu0 0.0
      %9217 = vmatprep.subr.mxu0 0.0
      %9218 = vmatpush1.msra.mxu0 0.0
      %9219 = vmatprep.subr.mxu0 0.0
      %9220 = vmatpush1.msra.mxu0 0.0
      %9221 = vmatprep.subr.mxu0 0.0
      %9222 = vmatpush1.msra.mxu0 0.0
      %9223 = vmatprep.subr.mxu0 0.0
      %v9224 = vand.u32 %v8447, 4294901760
      %v9225 = vsub.f32 %v8447, %v9224
      %9226 = vmatpush1.msra.mxu0 %v9225
      %9227 = vmatprep.subr.mxu0 0.0
      %9228 = vmatpush2.msra.mxu0 0.0
      %9229 = vmatprep.subr.mxu0 0.0
      %9230 = vmatpush2.msra.mxu0 0.0
      %9231 = vmatprep.subr.mxu0 0.0
      %9232 = vmatpush2.msra.mxu0 0.0
      %9233 = vmatprep.subr.mxu0 0.0
      %9234 = vmatpush2.msra.mxu0 0.0
      %9235 = vmatprep.subr.mxu0 0.0
      %9236 = vmatpush2.msra.mxu0 0.0
      %9237 = vmatprep.subr.mxu0 0.0
      %9238 = vmatpush2.msra.mxu0 0.0
      %9239 = vmatprep.subr.mxu0 0.0
      %9240 = vmatpush2.msra.mxu0 0.0
      %9241 = vmatprep.subr.mxu0 0.0
      %9242 = vmatpush2.msra.mxu0 0.0
      %9243 = vmatprep.subr.mxu0 0.0
      %9244 = vmatpush2.msra.mxu0 0.0
      %9245 = vmatprep.subr.mxu0 0.0
      %9246 = vmatpush2.msra.mxu0 0.0
      %9247 = vmatprep.subr.mxu0 0.0
      %9248 = vmatpush2.msra.mxu0 0.0
      %9249 = vmatprep.subr.mxu0 0.0
      %9250 = vmatpush2.msra.mxu0 0.0
      %9251 = vmatprep.subr.mxu0 0.0
      %9252 = vmatpush2.msra.mxu0 0.0
      %9253 = vmatprep.subr.mxu0 0.0
      %9254 = vmatpush2.msra.mxu0 0.0
      %9255 = vmatprep.subr.mxu0 0.0
      %9256 = vmatpush2.msra.mxu0 0.0
      %9257 = vmatprep.subr.mxu0 0.0
      %9258 = vmatpush2.msra.mxu0 0.0
      %9259 = vmatprep.mubr.f32.mxu0 0.0
      %v9260 = vand.u32 %v8450, 4294901760
      %v9261 = vsub.f32 %v8450, %v9260
      %9262 = vmatmul.mubr.f32.gmra.mxu0 %v9261
      %v9263 = vpop.f32.mrf.mxu0
      %v9264 = vadd.f32 %v9004, %v9263
      %v9265 = vpop.f32.mrf.mxu0
      %9266 = vmatprep.mubr.f32.mxu0 0.0
      %v9267 = vand.u32 %v8453, 4294901760
      %v9268 = vsub.f32 %v8453, %v9267
      %9269 = vmatmul.mubr.f32.gmra.mxu0 %v9268
      %v9270 = vpop.f32.mrf.mxu0
      %v9271 = vadd.f32 %v9010, %v9270
      %v9272 = vpop.f32.mrf.mxu0
      %9273 = vmatprep.mubr.f32.mxu0 0.0
      %v9274 = vand.u32 %v8456, 4294901760
      %v9275 = vsub.f32 %v8456, %v9274
      %9276 = vmatmul.mubr.f32.gmra.mxu0 %v9275
      %v9277 = vpop.f32.mrf.mxu0
      %v9278 = vadd.f32 %v9016, %v9277
      %v9279 = vpop.f32.mrf.mxu0
      %9280 = vmatprep.mubr.f32.mxu0 0.0
      %v9281 = vand.u32 %v8459, 4294901760
      %v9282 = vsub.f32 %v8459, %v9281
      %9283 = vmatmul.mubr.f32.gmra.mxu0 %v9282
      %v9284 = vpop.f32.mrf.mxu0
      %v9285 = vadd.f32 %v9022, %v9284
      %v9286 = vpop.f32.mrf.mxu0
      %9287 = vmatprep.mubr.f32.mxu0 0.0
      %v9288 = vand.u32 %v8462, 4294901760
      %v9289 = vsub.f32 %v8462, %v9288
      %9290 = vmatmul.mubr.f32.gmra.mxu0 %v9289
      %v9291 = vpop.f32.mrf.mxu0
      %v9292 = vadd.f32 %v9028, %v9291
      %v9293 = vpop.f32.mrf.mxu0
      %9294 = vmatprep.mubr.f32.mxu0 0.0
      %v9295 = vand.u32 %v8465, 4294901760
      %v9296 = vsub.f32 %v8465, %v9295
      %9297 = vmatmul.mubr.f32.gmra.mxu0 %v9296
      %v9298 = vpop.f32.mrf.mxu0
      %v9299 = vadd.f32 %v9034, %v9298
      %v9300 = vpop.f32.mrf.mxu0
      %9301 = vmatprep.mubr.f32.mxu0 0.0
      %v9302 = vand.u32 %v8468, 4294901760
      %v9303 = vsub.f32 %v8468, %v9302
      %9304 = vmatmul.mubr.f32.gmra.mxu0 %v9303
      %v9305 = vpop.f32.mrf.mxu0
      %v9306 = vadd.f32 %v9040, %v9305
      %v9307 = vpop.f32.mrf.mxu0
      %9308 = vmatprep.mubr.f32.mxu0 0.0
      %v9309 = vand.u32 %v8471, 4294901760
      %v9310 = vsub.f32 %v8471, %v9309
      %9311 = vmatmul.mubr.f32.gmra.mxu0 %v9310
      %v9312 = vpop.f32.mrf.mxu0
      %v9313 = vadd.f32 %v9046, %v9312
      %v9314 = vpop.f32.mrf.mxu0
      %9315 = vmatprep.mubr.f32.mxu0 0.0
      %v9316 = vand.u32 %v8474, 4294901760
      %v9317 = vsub.f32 %v8474, %v9316
      %9318 = vmatmul.mubr.f32.gmra.mxu0 %v9317
      %v9319 = vpop.f32.mrf.mxu0
      %v9320 = vadd.f32 %v9052, %v9319
      %v9321 = vpop.f32.mrf.mxu0
      %9322 = vmatprep.mubr.f32.mxu0 0.0
      %v9323 = vand.u32 %v8477, 4294901760
      %v9324 = vsub.f32 %v8477, %v9323
      %9325 = vmatmul.mubr.f32.gmra.mxu0 %v9324
      %v9326 = vpop.f32.mrf.mxu0
      %v9327 = vadd.f32 %v9058, %v9326
      %v9328 = vpop.f32.mrf.mxu0
      %9329 = vmatprep.mubr.f32.mxu0 0.0
      %v9330 = vand.u32 %v8480, 4294901760
      %v9331 = vsub.f32 %v8480, %v9330
      %9332 = vmatmul.mubr.f32.gmra.mxu0 %v9331
      %v9333 = vpop.f32.mrf.mxu0
      %v9334 = vadd.f32 %v9064, %v9333
      %v9335 = vpop.f32.mrf.mxu0
      %9336 = vmatprep.mubr.f32.mxu0 0.0
      %v9337 = vand.u32 %v8483, 4294901760
      %v9338 = vsub.f32 %v8483, %v9337
      %9339 = vmatmul.mubr.f32.gmra.mxu0 %v9338
      %v9340 = vpop.f32.mrf.mxu0
      %v9341 = vadd.f32 %v9070, %v9340
      %v9342 = vpop.f32.mrf.mxu0
      %9343 = vmatprep.mubr.f32.mxu0 0.0
      %v9344 = vand.u32 %v8486, 4294901760
      %v9345 = vsub.f32 %v8486, %v9344
      %9346 = vmatmul.mubr.f32.gmra.mxu0 %v9345
      %v9347 = vpop.f32.mrf.mxu0
      %v9348 = vadd.f32 %v9076, %v9347
      %v9349 = vpop.f32.mrf.mxu0
      %9350 = vmatprep.mubr.f32.mxu0 0.0
      %v9351 = vand.u32 %v8489, 4294901760
      %v9352 = vsub.f32 %v8489, %v9351
      %9353 = vmatmul.mubr.f32.gmra.mxu0 %v9352
      %v9354 = vpop.f32.mrf.mxu0
      %v9355 = vadd.f32 %v9082, %v9354
      %v9356 = vpop.f32.mrf.mxu0
      %9357 = vmatprep.mubr.f32.mxu0 0.0
      %v9358 = vand.u32 %v8492, 4294901760
      %v9359 = vsub.f32 %v8492, %v9358
      %9360 = vmatmul.mubr.f32.gmra.mxu0 %v9359
      %v9361 = vpop.f32.mrf.mxu0
      %v9362 = vadd.f32 %v9088, %v9361
      %v9363 = vpop.f32.mrf.mxu0
      %9364 = vmatprep.mubr.f32.mxu0 0.0
      %v9365 = vand.u32 %v8495, 4294901760
      %v9366 = vsub.f32 %v8495, %v9365
      %9367 = vmatmul.mubr.f32.gmra.mxu0 %v9366
      %v9368 = vpop.f32.mrf.mxu0
      %v9369 = vadd.f32 %v9094, %v9368
      %v9370 = vpop.f32.mrf.mxu0
      %9371 = vmatprep.mubr.f32.mxu0 0.0
      %v9372 = vand.u32 %v8498, 4294901760
      %v9373 = vsub.f32 %v8498, %v9372
      %9374 = vmatmul.mubr.f32.gmra.mxu0 %v9373
      %v9375 = vpop.f32.mrf.mxu0
      %v9376 = vadd.f32 %v9100, %v9375
      %v9377 = vpop.f32.mrf.mxu0
      %9378 = vmatprep.mubr.f32.mxu0 0.0
      %v9379 = vand.u32 %v8501, 4294901760
      %v9380 = vsub.f32 %v8501, %v9379
      %9381 = vmatmul.mubr.f32.gmra.mxu0 %v9380
      %v9382 = vpop.f32.mrf.mxu0
      %v9383 = vadd.f32 %v9106, %v9382
      %v9384 = vpop.f32.mrf.mxu0
      %9385 = vmatprep.mubr.f32.mxu0 0.0
      %v9386 = vand.u32 %v8504, 4294901760
      %v9387 = vsub.f32 %v8504, %v9386
      %9388 = vmatmul.mubr.f32.gmra.mxu0 %v9387
      %v9389 = vpop.f32.mrf.mxu0
      %v9390 = vadd.f32 %v9112, %v9389
      %v9391 = vpop.f32.mrf.mxu0
      %9392 = vmatprep.mubr.f32.mxu0 0.0
      %v9393 = vand.u32 %v8507, 4294901760
      %v9394 = vsub.f32 %v8507, %v9393
      %9395 = vmatmul.mubr.f32.gmra.mxu0 %v9394
      %v9396 = vpop.f32.mrf.mxu0
      %v9397 = vadd.f32 %v9118, %v9396
      %v9398 = vpop.f32.mrf.mxu0
      %9399 = vmatprep.mubr.f32.mxu0 0.0
      %v9400 = vand.u32 %v8510, 4294901760
      %v9401 = vsub.f32 %v8510, %v9400
      %9402 = vmatmul.mubr.f32.gmra.mxu0 %v9401
      %v9403 = vpop.f32.mrf.mxu0
      %v9404 = vadd.f32 %v9124, %v9403
      %v9405 = vpop.f32.mrf.mxu0
      %9406 = vmatprep.mubr.f32.mxu0 0.0
      %v9407 = vand.u32 %v8513, 4294901760
      %v9408 = vsub.f32 %v8513, %v9407
      %9409 = vmatmul.mubr.f32.gmra.mxu0 %v9408
      %v9410 = vpop.f32.mrf.mxu0
      %v9411 = vadd.f32 %v9130, %v9410
      %v9412 = vpop.f32.mrf.mxu0
      %9413 = vmatprep.mubr.f32.mxu0 0.0
      %v9414 = vand.u32 %v8516, 4294901760
      %v9415 = vsub.f32 %v8516, %v9414
      %9416 = vmatmul.mubr.f32.gmra.mxu0 %v9415
      %v9417 = vpop.f32.mrf.mxu0
      %v9418 = vadd.f32 %v9136, %v9417
      %v9419 = vpop.f32.mrf.mxu0
      %9420 = vmatprep.mubr.f32.mxu0 0.0
      %v9421 = vand.u32 %v8519, 4294901760
      %v9422 = vsub.f32 %v8519, %v9421
      %9423 = vmatmul.mubr.f32.gmra.mxu0 %v9422
      %v9424 = vpop.f32.mrf.mxu0
      %v9425 = vadd.f32 %v9142, %v9424
      %v9426 = vpop.f32.mrf.mxu0
      %9427 = vmatprep.mubr.f32.mxu0 0.0
      %v9428 = vand.u32 %v8522, 4294901760
      %v9429 = vsub.f32 %v8522, %v9428
      %9430 = vmatmul.mubr.f32.gmra.mxu0 %v9429
      %v9431 = vpop.f32.mrf.mxu0
      %v9432 = vadd.f32 %v9148, %v9431
      %v9433 = vpop.f32.mrf.mxu0
      %9434 = vmatprep.mubr.f32.mxu0 0.0
      %v9435 = vand.u32 %v8525, 4294901760
      %v9436 = vsub.f32 %v8525, %v9435
      %9437 = vmatmul.mubr.f32.gmra.mxu0 %v9436
      %v9438 = vpop.f32.mrf.mxu0
      %v9439 = vadd.f32 %v9154, %v9438
      %v9440 = vpop.f32.mrf.mxu0
      %9441 = vmatprep.mubr.f32.mxu0 0.0
      %v9442 = vand.u32 %v8528, 4294901760
      %v9443 = vsub.f32 %v8528, %v9442
      %9444 = vmatmul.mubr.f32.gmra.mxu0 %v9443
      %v9445 = vpop.f32.mrf.mxu0
      %v9446 = vadd.f32 %v9160, %v9445
      %v9447 = vpop.f32.mrf.mxu0
      %9448 = vmatprep.mubr.f32.mxu0 0.0
      %v9449 = vand.u32 %v8531, 4294901760
      %v9450 = vsub.f32 %v8531, %v9449
      %9451 = vmatmul.mubr.f32.gmra.mxu0 %v9450
      %v9452 = vpop.f32.mrf.mxu0
      %v9453 = vadd.f32 %v9166, %v9452
      %v9454 = vpop.f32.mrf.mxu0
      %9455 = vmatprep.mubr.f32.mxu0 0.0
      %v9456 = vand.u32 %v8534, 4294901760
      %v9457 = vsub.f32 %v8534, %v9456
      %9458 = vmatmul.mubr.f32.gmra.mxu0 %v9457
      %v9459 = vpop.f32.mrf.mxu0
      %v9460 = vadd.f32 %v9172, %v9459
      %v9461 = vpop.f32.mrf.mxu0
      %9462 = vmatprep.mubr.f32.mxu0 0.0
      %v9463 = vand.u32 %v8537, 4294901760
      %v9464 = vsub.f32 %v8537, %v9463
      %9465 = vmatmul.mubr.f32.gmra.mxu0 %v9464
      %v9466 = vpop.f32.mrf.mxu0
      %v9467 = vadd.f32 %v9178, %v9466
      %v9468 = vpop.f32.mrf.mxu0
      %9469 = vmatprep.mubr.f32.mxu0 0.0
      %v9470 = vand.u32 %v8540, 4294901760
      %v9471 = vsub.f32 %v8540, %v9470
      %9472 = vmatmul.mubr.f32.gmra.mxu0 %v9471
      %v9473 = vpop.f32.mrf.mxu0
      %v9474 = vadd.f32 %v9184, %v9473
      %v9475 = vpop.f32.mrf.mxu0
      %9476 = vmatprep.mubr.f32.mxu0 0.0
      %v9477 = vand.u32 %v8543, 4294901760
      %v9478 = vsub.f32 %v8543, %v9477
      %9479 = vmatmul.mubr.f32.gmra.mxu0 %v9478
      %v9480 = vpop.f32.mrf.mxu0
      %v9481 = vadd.f32 %v9190, %v9480
      %v9482 = vpop.f32.mrf.mxu0
      %9483 = vdwg.mxu0
      %9484 = vmatprep.subr.mxu0 0.0
      %9485 = vmatpush1.msra.mxu0 0.0
      %9486 = vmatprep.subr.mxu0 0.0
      %9487 = vmatpush1.msra.mxu0 0.0
      %9488 = vmatprep.subr.mxu0 0.0
      %9489 = vmatpush1.msra.mxu0 0.0
      %9490 = vmatprep.subr.mxu0 0.0
      %9491 = vmatpush1.msra.mxu0 0.0
      %9492 = vmatprep.subr.mxu0 0.0
      %9493 = vmatpush1.msra.mxu0 0.0
      %9494 = vmatprep.subr.mxu0 0.0
      %9495 = vmatpush1.msra.mxu0 0.0
      %9496 = vmatprep.subr.mxu0 0.0
      %9497 = vmatpush1.msra.mxu0 0.0
      %9498 = vmatprep.subr.mxu0 0.0
      %9499 = vmatpush1.msra.mxu0 0.0
      %9500 = vmatprep.subr.mxu0 0.0
      %9501 = vmatpush1.msra.mxu0 0.0
      %9502 = vmatprep.subr.mxu0 0.0
      %9503 = vmatpush1.msra.mxu0 0.0
      %9504 = vmatprep.subr.mxu0 0.0
      %9505 = vmatpush1.msra.mxu0 0.0
      %9506 = vmatprep.subr.mxu0 0.0
      %9507 = vmatpush1.msra.mxu0 0.0
      %9508 = vmatprep.subr.mxu0 0.0
      %9509 = vmatpush1.msra.mxu0 0.0
      %9510 = vmatprep.subr.mxu0 0.0
      %9511 = vmatpush1.msra.mxu0 0.0
      %9512 = vmatprep.subr.mxu0 0.0
      %9513 = vmatpush1.msra.mxu0 0.0
      %9514 = vmatprep.subr.mxu0 0.0
      %v9515 = vand.u32 %v8447, 4294901760
      %9516 = vmatpush1.msra.mxu0 %v9515
      %9517 = vmatprep.subr.mxu0 0.0
      %9518 = vmatpush2.msra.mxu0 0.0
      %9519 = vmatprep.subr.mxu0 0.0
      %9520 = vmatpush2.msra.mxu0 0.0
      %9521 = vmatprep.subr.mxu0 0.0
      %9522 = vmatpush2.msra.mxu0 0.0
      %9523 = vmatprep.subr.mxu0 0.0
      %9524 = vmatpush2.msra.mxu0 0.0
      %9525 = vmatprep.subr.mxu0 0.0
      %9526 = vmatpush2.msra.mxu0 0.0
      %9527 = vmatprep.subr.mxu0 0.0
      %9528 = vmatpush2.msra.mxu0 0.0
      %9529 = vmatprep.subr.mxu0 0.0
      %9530 = vmatpush2.msra.mxu0 0.0
      %9531 = vmatprep.subr.mxu0 0.0
      %9532 = vmatpush2.msra.mxu0 0.0
      %9533 = vmatprep.subr.mxu0 0.0
      %9534 = vmatpush2.msra.mxu0 0.0
      %9535 = vmatprep.subr.mxu0 0.0
      %9536 = vmatpush2.msra.mxu0 0.0
      %9537 = vmatprep.subr.mxu0 0.0
      %9538 = vmatpush2.msra.mxu0 0.0
      %9539 = vmatprep.subr.mxu0 0.0
      %9540 = vmatpush2.msra.mxu0 0.0
      %9541 = vmatprep.subr.mxu0 0.0
      %9542 = vmatpush2.msra.mxu0 0.0
      %9543 = vmatprep.subr.mxu0 0.0
      %9544 = vmatpush2.msra.mxu0 0.0
      %9545 = vmatprep.subr.mxu0 0.0
      %9546 = vmatpush2.msra.mxu0 0.0
      %9547 = vmatprep.subr.mxu0 0.0
      %9548 = vmatpush2.msra.mxu0 0.0
      %9549 = vmatprep.mubr.f32.mxu0 0.0
      %v9550 = vand.u32 %v8450, 4294901760
      %v9551 = vsub.f32 %v8450, %v9550
      %v9552 = vand.u32 %v9551, 4294901760
      %9553 = vmatmul.mubr.f32.gmra.mxu0 %v9552
      %v9554 = vpop.f32.mrf.mxu0
      %v9555 = vadd.f32 %v9264, %v9554
      %v9556 = vpop.f32.mrf.mxu0
      %9557 = vmatprep.mubr.f32.mxu0 0.0
      %v9558 = vand.u32 %v8453, 4294901760
      %v9559 = vsub.f32 %v8453, %v9558
      %v9560 = vand.u32 %v9559, 4294901760
      %9561 = vmatmul.mubr.f32.gmra.mxu0 %v9560
      %v9562 = vpop.f32.mrf.mxu0
      %v9563 = vadd.f32 %v9271, %v9562
      %v9564 = vpop.f32.mrf.mxu0
      %9565 = vmatprep.mubr.f32.mxu0 0.0
      %v9566 = vand.u32 %v8456, 4294901760
      %v9567 = vsub.f32 %v8456, %v9566
      %v9568 = vand.u32 %v9567, 4294901760
      %9569 = vmatmul.mubr.f32.gmra.mxu0 %v9568
      %v9570 = vpop.f32.mrf.mxu0
      %v9571 = vadd.f32 %v9278, %v9570
      %v9572 = vpop.f32.mrf.mxu0
      %9573 = vmatprep.mubr.f32.mxu0 0.0
      %v9574 = vand.u32 %v8459, 4294901760
      %v9575 = vsub.f32 %v8459, %v9574
      %v9576 = vand.u32 %v9575, 4294901760
      %9577 = vmatmul.mubr.f32.gmra.mxu0 %v9576
      %v9578 = vpop.f32.mrf.mxu0
      %v9579 = vadd.f32 %v9285, %v9578
      %v9580 = vpop.f32.mrf.mxu0
      %9581 = vmatprep.mubr.f32.mxu0 0.0
      %v9582 = vand.u32 %v8462, 4294901760
      %v9583 = vsub.f32 %v8462, %v9582
      %v9584 = vand.u32 %v9583, 4294901760
      %9585 = vmatmul.mubr.f32.gmra.mxu0 %v9584
      %v9586 = vpop.f32.mrf.mxu0
      %v9587 = vadd.f32 %v9292, %v9586
      %v9588 = vpop.f32.mrf.mxu0
      %9589 = vmatprep.mubr.f32.mxu0 0.0
      %v9590 = vand.u32 %v8465, 4294901760
      %v9591 = vsub.f32 %v8465, %v9590
      %v9592 = vand.u32 %v9591, 4294901760
      %9593 = vmatmul.mubr.f32.gmra.mxu0 %v9592
      %v9594 = vpop.f32.mrf.mxu0
      %v9595 = vadd.f32 %v9299, %v9594
      %v9596 = vpop.f32.mrf.mxu0
      %9597 = vmatprep.mubr.f32.mxu0 0.0
      %v9598 = vand.u32 %v8468, 4294901760
      %v9599 = vsub.f32 %v8468, %v9598
      %v9600 = vand.u32 %v9599, 4294901760
      %9601 = vmatmul.mubr.f32.gmra.mxu0 %v9600
      %v9602 = vpop.f32.mrf.mxu0
      %v9603 = vadd.f32 %v9306, %v9602
      %v9604 = vpop.f32.mrf.mxu0
      %9605 = vmatprep.mubr.f32.mxu0 0.0
      %v9606 = vand.u32 %v8471, 4294901760
      %v9607 = vsub.f32 %v8471, %v9606
      %v9608 = vand.u32 %v9607, 4294901760
      %9609 = vmatmul.mubr.f32.gmra.mxu0 %v9608
      %v9610 = vpop.f32.mrf.mxu0
      %v9611 = vadd.f32 %v9313, %v9610
      %v9612 = vpop.f32.mrf.mxu0
      %9613 = vmatprep.mubr.f32.mxu0 0.0
      %v9614 = vand.u32 %v8474, 4294901760
      %v9615 = vsub.f32 %v8474, %v9614
      %v9616 = vand.u32 %v9615, 4294901760
      %9617 = vmatmul.mubr.f32.gmra.mxu0 %v9616
      %v9618 = vpop.f32.mrf.mxu0
      %v9619 = vadd.f32 %v9320, %v9618
      %v9620 = vpop.f32.mrf.mxu0
      %9621 = vmatprep.mubr.f32.mxu0 0.0
      %v9622 = vand.u32 %v8477, 4294901760
      %v9623 = vsub.f32 %v8477, %v9622
      %v9624 = vand.u32 %v9623, 4294901760
      %9625 = vmatmul.mubr.f32.gmra.mxu0 %v9624
      %v9626 = vpop.f32.mrf.mxu0
      %v9627 = vadd.f32 %v9327, %v9626
      %v9628 = vpop.f32.mrf.mxu0
      %9629 = vmatprep.mubr.f32.mxu0 0.0
      %v9630 = vand.u32 %v8480, 4294901760
      %v9631 = vsub.f32 %v8480, %v9630
      %v9632 = vand.u32 %v9631, 4294901760
      %9633 = vmatmul.mubr.f32.gmra.mxu0 %v9632
      %v9634 = vpop.f32.mrf.mxu0
      %v9635 = vadd.f32 %v9334, %v9634
      %v9636 = vpop.f32.mrf.mxu0
      %9637 = vmatprep.mubr.f32.mxu0 0.0
      %v9638 = vand.u32 %v8483, 4294901760
      %v9639 = vsub.f32 %v8483, %v9638
      %v9640 = vand.u32 %v9639, 4294901760
      %9641 = vmatmul.mubr.f32.gmra.mxu0 %v9640
      %v9642 = vpop.f32.mrf.mxu0
      %v9643 = vadd.f32 %v9341, %v9642
      %v9644 = vpop.f32.mrf.mxu0
      %9645 = vmatprep.mubr.f32.mxu0 0.0
      %v9646 = vand.u32 %v8486, 4294901760
      %v9647 = vsub.f32 %v8486, %v9646
      %v9648 = vand.u32 %v9647, 4294901760
      %9649 = vmatmul.mubr.f32.gmra.mxu0 %v9648
      %v9650 = vpop.f32.mrf.mxu0
      %v9651 = vadd.f32 %v9348, %v9650
      %v9652 = vpop.f32.mrf.mxu0
      %9653 = vmatprep.mubr.f32.mxu0 0.0
      %v9654 = vand.u32 %v8489, 4294901760
      %v9655 = vsub.f32 %v8489, %v9654
      %v9656 = vand.u32 %v9655, 4294901760
      %9657 = vmatmul.mubr.f32.gmra.mxu0 %v9656
      %v9658 = vpop.f32.mrf.mxu0
      %v9659 = vadd.f32 %v9355, %v9658
      %v9660 = vpop.f32.mrf.mxu0
      %9661 = vmatprep.mubr.f32.mxu0 0.0
      %v9662 = vand.u32 %v8492, 4294901760
      %v9663 = vsub.f32 %v8492, %v9662
      %v9664 = vand.u32 %v9663, 4294901760
      %9665 = vmatmul.mubr.f32.gmra.mxu0 %v9664
      %v9666 = vpop.f32.mrf.mxu0
      %v9667 = vadd.f32 %v9362, %v9666
      %v9668 = vpop.f32.mrf.mxu0
      %9669 = vmatprep.mubr.f32.mxu0 0.0
      %v9670 = vand.u32 %v8495, 4294901760
      %v9671 = vsub.f32 %v8495, %v9670
      %v9672 = vand.u32 %v9671, 4294901760
      %9673 = vmatmul.mubr.f32.gmra.mxu0 %v9672
      %v9674 = vpop.f32.mrf.mxu0
      %v9675 = vadd.f32 %v9369, %v9674
      %v9676 = vpop.f32.mrf.mxu0
      %9677 = vmatprep.mubr.f32.mxu0 0.0
      %v9678 = vand.u32 %v8498, 4294901760
      %v9679 = vsub.f32 %v8498, %v9678
      %v9680 = vand.u32 %v9679, 4294901760
      %9681 = vmatmul.mubr.f32.gmra.mxu0 %v9680
      %v9682 = vpop.f32.mrf.mxu0
      %v9683 = vadd.f32 %v9376, %v9682
      %v9684 = vpop.f32.mrf.mxu0
      %9685 = vmatprep.mubr.f32.mxu0 0.0
      %v9686 = vand.u32 %v8501, 4294901760
      %v9687 = vsub.f32 %v8501, %v9686
      %v9688 = vand.u32 %v9687, 4294901760
      %9689 = vmatmul.mubr.f32.gmra.mxu0 %v9688
      %v9690 = vpop.f32.mrf.mxu0
      %v9691 = vadd.f32 %v9383, %v9690
      %v9692 = vpop.f32.mrf.mxu0
      %9693 = vmatprep.mubr.f32.mxu0 0.0
      %v9694 = vand.u32 %v8504, 4294901760
      %v9695 = vsub.f32 %v8504, %v9694
      %v9696 = vand.u32 %v9695, 4294901760
      %9697 = vmatmul.mubr.f32.gmra.mxu0 %v9696
      %v9698 = vpop.f32.mrf.mxu0
      %v9699 = vadd.f32 %v9390, %v9698
      %v9700 = vpop.f32.mrf.mxu0
      %9701 = vmatprep.mubr.f32.mxu0 0.0
      %v9702 = vand.u32 %v8507, 4294901760
      %v9703 = vsub.f32 %v8507, %v9702
      %v9704 = vand.u32 %v9703, 4294901760
      %9705 = vmatmul.mubr.f32.gmra.mxu0 %v9704
      %v9706 = vpop.f32.mrf.mxu0
      %v9707 = vadd.f32 %v9397, %v9706
      %v9708 = vpop.f32.mrf.mxu0
      %9709 = vmatprep.mubr.f32.mxu0 0.0
      %v9710 = vand.u32 %v8510, 4294901760
      %v9711 = vsub.f32 %v8510, %v9710
      %v9712 = vand.u32 %v9711, 4294901760
      %9713 = vmatmul.mubr.f32.gmra.mxu0 %v9712
      %v9714 = vpop.f32.mrf.mxu0
      %v9715 = vadd.f32 %v9404, %v9714
      %v9716 = vpop.f32.mrf.mxu0
      %9717 = vmatprep.mubr.f32.mxu0 0.0
      %v9718 = vand.u32 %v8513, 4294901760
      %v9719 = vsub.f32 %v8513, %v9718
      %v9720 = vand.u32 %v9719, 4294901760
      %9721 = vmatmul.mubr.f32.gmra.mxu0 %v9720
      %v9722 = vpop.f32.mrf.mxu0
      %v9723 = vadd.f32 %v9411, %v9722
      %v9724 = vpop.f32.mrf.mxu0
      %9725 = vmatprep.mubr.f32.mxu0 0.0
      %v9726 = vand.u32 %v8516, 4294901760
      %v9727 = vsub.f32 %v8516, %v9726
      %v9728 = vand.u32 %v9727, 4294901760
      %9729 = vmatmul.mubr.f32.gmra.mxu0 %v9728
      %v9730 = vpop.f32.mrf.mxu0
      %v9731 = vadd.f32 %v9418, %v9730
      %v9732 = vpop.f32.mrf.mxu0
      %9733 = vmatprep.mubr.f32.mxu0 0.0
      %v9734 = vand.u32 %v8519, 4294901760
      %v9735 = vsub.f32 %v8519, %v9734
      %v9736 = vand.u32 %v9735, 4294901760
      %9737 = vmatmul.mubr.f32.gmra.mxu0 %v9736
      %v9738 = vpop.f32.mrf.mxu0
      %v9739 = vadd.f32 %v9425, %v9738
      %v9740 = vpop.f32.mrf.mxu0
      %9741 = vmatprep.mubr.f32.mxu0 0.0
      %v9742 = vand.u32 %v8522, 4294901760
      %v9743 = vsub.f32 %v8522, %v9742
      %v9744 = vand.u32 %v9743, 4294901760
      %9745 = vmatmul.mubr.f32.gmra.mxu0 %v9744
      %v9746 = vpop.f32.mrf.mxu0
      %v9747 = vadd.f32 %v9432, %v9746
      %v9748 = vpop.f32.mrf.mxu0
      %9749 = vmatprep.mubr.f32.mxu0 0.0
      %v9750 = vand.u32 %v8525, 4294901760
      %v9751 = vsub.f32 %v8525, %v9750
      %v9752 = vand.u32 %v9751, 4294901760
      %9753 = vmatmul.mubr.f32.gmra.mxu0 %v9752
      %v9754 = vpop.f32.mrf.mxu0
      %v9755 = vadd.f32 %v9439, %v9754
      %v9756 = vpop.f32.mrf.mxu0
      %9757 = vmatprep.mubr.f32.mxu0 0.0
      %v9758 = vand.u32 %v8528, 4294901760
      %v9759 = vsub.f32 %v8528, %v9758
      %v9760 = vand.u32 %v9759, 4294901760
      %9761 = vmatmul.mubr.f32.gmra.mxu0 %v9760
      %v9762 = vpop.f32.mrf.mxu0
      %v9763 = vadd.f32 %v9446, %v9762
      %v9764 = vpop.f32.mrf.mxu0
      %9765 = vmatprep.mubr.f32.mxu0 0.0
      %v9766 = vand.u32 %v8531, 4294901760
      %v9767 = vsub.f32 %v8531, %v9766
      %v9768 = vand.u32 %v9767, 4294901760
      %9769 = vmatmul.mubr.f32.gmra.mxu0 %v9768
      %v9770 = vpop.f32.mrf.mxu0
      %v9771 = vadd.f32 %v9453, %v9770
      %v9772 = vpop.f32.mrf.mxu0
      %9773 = vmatprep.mubr.f32.mxu0 0.0
      %v9774 = vand.u32 %v8534, 4294901760
      %v9775 = vsub.f32 %v8534, %v9774
      %v9776 = vand.u32 %v9775, 4294901760
      %9777 = vmatmul.mubr.f32.gmra.mxu0 %v9776
      %v9778 = vpop.f32.mrf.mxu0
      %v9779 = vadd.f32 %v9460, %v9778
      %v9780 = vpop.f32.mrf.mxu0
      %9781 = vmatprep.mubr.f32.mxu0 0.0
      %v9782 = vand.u32 %v8537, 4294901760
      %v9783 = vsub.f32 %v8537, %v9782
      %v9784 = vand.u32 %v9783, 4294901760
      %9785 = vmatmul.mubr.f32.gmra.mxu0 %v9784
      %v9786 = vpop.f32.mrf.mxu0
      %v9787 = vadd.f32 %v9467, %v9786
      %v9788 = vpop.f32.mrf.mxu0
      %9789 = vmatprep.mubr.f32.mxu0 0.0
      %v9790 = vand.u32 %v8540, 4294901760
      %v9791 = vsub.f32 %v8540, %v9790
      %v9792 = vand.u32 %v9791, 4294901760
      %9793 = vmatmul.mubr.f32.gmra.mxu0 %v9792
      %v9794 = vpop.f32.mrf.mxu0
      %v9795 = vadd.f32 %v9474, %v9794
      %v9796 = vpop.f32.mrf.mxu0
      %9797 = vmatprep.mubr.f32.mxu0 0.0
      %v9798 = vand.u32 %v8543, 4294901760
      %v9799 = vsub.f32 %v8543, %v9798
      %v9800 = vand.u32 %v9799, 4294901760
      %9801 = vmatmul.mubr.f32.gmra.mxu0 %v9800
      %v9802 = vpop.f32.mrf.mxu0
      %v9803 = vadd.f32 %v9481, %v9802
      %v9804 = vpop.f32.mrf.mxu0
      %9805 = vdwg.mxu0
      %9806 = vmatprep.subr.mxu0 0.0
      %9807 = vmatpush1.msra.mxu0 0.0
      %9808 = vmatprep.subr.mxu0 0.0
      %9809 = vmatpush1.msra.mxu0 0.0
      %9810 = vmatprep.subr.mxu0 0.0
      %9811 = vmatpush1.msra.mxu0 0.0
      %9812 = vmatprep.subr.mxu0 0.0
      %9813 = vmatpush1.msra.mxu0 0.0
      %9814 = vmatprep.subr.mxu0 0.0
      %9815 = vmatpush1.msra.mxu0 0.0
      %9816 = vmatprep.subr.mxu0 0.0
      %9817 = vmatpush1.msra.mxu0 0.0
      %9818 = vmatprep.subr.mxu0 0.0
      %9819 = vmatpush1.msra.mxu0 0.0
      %9820 = vmatprep.subr.mxu0 0.0
      %9821 = vmatpush1.msra.mxu0 0.0
      %9822 = vmatprep.subr.mxu0 0.0
      %9823 = vmatpush1.msra.mxu0 0.0
      %9824 = vmatprep.subr.mxu0 0.0
      %9825 = vmatpush1.msra.mxu0 0.0
      %9826 = vmatprep.subr.mxu0 0.0
      %9827 = vmatpush1.msra.mxu0 0.0
      %9828 = vmatprep.subr.mxu0 0.0
      %9829 = vmatpush1.msra.mxu0 0.0
      %9830 = vmatprep.subr.mxu0 0.0
      %9831 = vmatpush1.msra.mxu0 0.0
      %9832 = vmatprep.subr.mxu0 0.0
      %9833 = vmatpush1.msra.mxu0 0.0
      %9834 = vmatprep.subr.mxu0 0.0
      %9835 = vmatpush1.msra.mxu0 0.0
      %9836 = vmatprep.subr.mxu0 0.0
      %v9837 = vand.u32 %v8447, 4294901760
      %v9838 = vsub.f32 %v8447, %v9837
      %v9839 = vand.u32 %v9838, 4294901760
      %9840 = vmatpush1.msra.mxu0 %v9839
      %9841 = vmatprep.subr.mxu0 0.0
      %9842 = vmatpush2.msra.mxu0 0.0
      %9843 = vmatprep.subr.mxu0 0.0
      %9844 = vmatpush2.msra.mxu0 0.0
      %9845 = vmatprep.subr.mxu0 0.0
      %9846 = vmatpush2.msra.mxu0 0.0
      %9847 = vmatprep.subr.mxu0 0.0
      %9848 = vmatpush2.msra.mxu0 0.0
      %9849 = vmatprep.subr.mxu0 0.0
      %9850 = vmatpush2.msra.mxu0 0.0
      %9851 = vmatprep.subr.mxu0 0.0
      %9852 = vmatpush2.msra.mxu0 0.0
      %9853 = vmatprep.subr.mxu0 0.0
      %9854 = vmatpush2.msra.mxu0 0.0
      %9855 = vmatprep.subr.mxu0 0.0
      %9856 = vmatpush2.msra.mxu0 0.0
      %9857 = vmatprep.subr.mxu0 0.0
      %9858 = vmatpush2.msra.mxu0 0.0
      %9859 = vmatprep.subr.mxu0 0.0
      %9860 = vmatpush2.msra.mxu0 0.0
      %9861 = vmatprep.subr.mxu0 0.0
      %9862 = vmatpush2.msra.mxu0 0.0
      %9863 = vmatprep.subr.mxu0 0.0
      %9864 = vmatpush2.msra.mxu0 0.0
      %9865 = vmatprep.subr.mxu0 0.0
      %9866 = vmatpush2.msra.mxu0 0.0
      %9867 = vmatprep.subr.mxu0 0.0
      %9868 = vmatpush2.msra.mxu0 0.0
      %9869 = vmatprep.subr.mxu0 0.0
      %9870 = vmatpush2.msra.mxu0 0.0
      %9871 = vmatprep.subr.mxu0 0.0
      %9872 = vmatpush2.msra.mxu0 0.0
      %9873 = vmatprep.mubr.f32.mxu0 0.0
      %v9874 = vand.u32 %v8450, 4294901760
      %9875 = vmatmul.mubr.f32.gmra.mxu0 %v9874
      %v9876 = vpop.f32.mrf.mxu0
      %v9877 = vadd.f32 %v9555, %v9876
      %v9878 = vpop.f32.mrf.mxu0
      %9879 = vmatprep.mubr.f32.mxu0 0.0
      %v9880 = vand.u32 %v8453, 4294901760
      %9881 = vmatmul.mubr.f32.gmra.mxu0 %v9880
      %v9882 = vpop.f32.mrf.mxu0
      %v9883 = vadd.f32 %v9563, %v9882
      %v9884 = vpop.f32.mrf.mxu0
      %9885 = vmatprep.mubr.f32.mxu0 0.0
      %v9886 = vand.u32 %v8456, 4294901760
      %9887 = vmatmul.mubr.f32.gmra.mxu0 %v9886
      %v9888 = vpop.f32.mrf.mxu0
      %v9889 = vadd.f32 %v9571, %v9888
      %v9890 = vpop.f32.mrf.mxu0
      %9891 = vmatprep.mubr.f32.mxu0 0.0
      %v9892 = vand.u32 %v8459, 4294901760
      %9893 = vmatmul.mubr.f32.gmra.mxu0 %v9892
      %v9894 = vpop.f32.mrf.mxu0
      %v9895 = vadd.f32 %v9579, %v9894
      %v9896 = vpop.f32.mrf.mxu0
      %9897 = vmatprep.mubr.f32.mxu0 0.0
      %v9898 = vand.u32 %v8462, 4294901760
      %9899 = vmatmul.mubr.f32.gmra.mxu0 %v9898
      %v9900 = vpop.f32.mrf.mxu0
      %v9901 = vadd.f32 %v9587, %v9900
      %v9902 = vpop.f32.mrf.mxu0
      %9903 = vmatprep.mubr.f32.mxu0 0.0
      %v9904 = vand.u32 %v8465, 4294901760
      %9905 = vmatmul.mubr.f32.gmra.mxu0 %v9904
      %v9906 = vpop.f32.mrf.mxu0
      %v9907 = vadd.f32 %v9595, %v9906
      %v9908 = vpop.f32.mrf.mxu0
      %9909 = vmatprep.mubr.f32.mxu0 0.0
      %v9910 = vand.u32 %v8468, 4294901760
      %9911 = vmatmul.mubr.f32.gmra.mxu0 %v9910
      %v9912 = vpop.f32.mrf.mxu0
      %v9913 = vadd.f32 %v9603, %v9912
      %v9914 = vpop.f32.mrf.mxu0
      %9915 = vmatprep.mubr.f32.mxu0 0.0
      %v9916 = vand.u32 %v8471, 4294901760
      %9917 = vmatmul.mubr.f32.gmra.mxu0 %v9916
      %v9918 = vpop.f32.mrf.mxu0
      %v9919 = vadd.f32 %v9611, %v9918
      %v9920 = vpop.f32.mrf.mxu0
      %9921 = vmatprep.mubr.f32.mxu0 0.0
      %v9922 = vand.u32 %v8474, 4294901760
      %9923 = vmatmul.mubr.f32.gmra.mxu0 %v9922
      %v9924 = vpop.f32.mrf.mxu0
      %v9925 = vadd.f32 %v9619, %v9924
      %v9926 = vpop.f32.mrf.mxu0
      %9927 = vmatprep.mubr.f32.mxu0 0.0
      %v9928 = vand.u32 %v8477, 4294901760
      %9929 = vmatmul.mubr.f32.gmra.mxu0 %v9928
      %v9930 = vpop.f32.mrf.mxu0
      %v9931 = vadd.f32 %v9627, %v9930
      %v9932 = vpop.f32.mrf.mxu0
      %9933 = vmatprep.mubr.f32.mxu0 0.0
      %v9934 = vand.u32 %v8480, 4294901760
      %9935 = vmatmul.mubr.f32.gmra.mxu0 %v9934
      %v9936 = vpop.f32.mrf.mxu0
      %v9937 = vadd.f32 %v9635, %v9936
      %v9938 = vpop.f32.mrf.mxu0
      %9939 = vmatprep.mubr.f32.mxu0 0.0
      %v9940 = vand.u32 %v8483, 4294901760
      %9941 = vmatmul.mubr.f32.gmra.mxu0 %v9940
      %v9942 = vpop.f32.mrf.mxu0
      %v9943 = vadd.f32 %v9643, %v9942
      %v9944 = vpop.f32.mrf.mxu0
      %9945 = vmatprep.mubr.f32.mxu0 0.0
      %v9946 = vand.u32 %v8486, 4294901760
      %9947 = vmatmul.mubr.f32.gmra.mxu0 %v9946
      %v9948 = vpop.f32.mrf.mxu0
      %v9949 = vadd.f32 %v9651, %v9948
      %v9950 = vpop.f32.mrf.mxu0
      %9951 = vmatprep.mubr.f32.mxu0 0.0
      %v9952 = vand.u32 %v8489, 4294901760
      %9953 = vmatmul.mubr.f32.gmra.mxu0 %v9952
      %v9954 = vpop.f32.mrf.mxu0
      %v9955 = vadd.f32 %v9659, %v9954
      %v9956 = vpop.f32.mrf.mxu0
      %9957 = vmatprep.mubr.f32.mxu0 0.0
      %v9958 = vand.u32 %v8492, 4294901760
      %9959 = vmatmul.mubr.f32.gmra.mxu0 %v9958
      %v9960 = vpop.f32.mrf.mxu0
      %v9961 = vadd.f32 %v9667, %v9960
      %v9962 = vpop.f32.mrf.mxu0
      %9963 = vmatprep.mubr.f32.mxu0 0.0
      %v9964 = vand.u32 %v8495, 4294901760
      %9965 = vmatmul.mubr.f32.gmra.mxu0 %v9964
      %v9966 = vpop.f32.mrf.mxu0
      %v9967 = vadd.f32 %v9675, %v9966
      %v9968 = vpop.f32.mrf.mxu0
      %9969 = vmatprep.mubr.f32.mxu0 0.0
      %v9970 = vand.u32 %v8498, 4294901760
      %9971 = vmatmul.mubr.f32.gmra.mxu0 %v9970
      %v9972 = vpop.f32.mrf.mxu0
      %v9973 = vadd.f32 %v9683, %v9972
      %v9974 = vpop.f32.mrf.mxu0
      %9975 = vmatprep.mubr.f32.mxu0 0.0
      %v9976 = vand.u32 %v8501, 4294901760
      %9977 = vmatmul.mubr.f32.gmra.mxu0 %v9976
      %v9978 = vpop.f32.mrf.mxu0
      %v9979 = vadd.f32 %v9691, %v9978
      %v9980 = vpop.f32.mrf.mxu0
      %9981 = vmatprep.mubr.f32.mxu0 0.0
      %v9982 = vand.u32 %v8504, 4294901760
      %9983 = vmatmul.mubr.f32.gmra.mxu0 %v9982
      %v9984 = vpop.f32.mrf.mxu0
      %v9985 = vadd.f32 %v9699, %v9984
      %v9986 = vpop.f32.mrf.mxu0
      %9987 = vmatprep.mubr.f32.mxu0 0.0
      %v9988 = vand.u32 %v8507, 4294901760
      %9989 = vmatmul.mubr.f32.gmra.mxu0 %v9988
      %v9990 = vpop.f32.mrf.mxu0
      %v9991 = vadd.f32 %v9707, %v9990
      %v9992 = vpop.f32.mrf.mxu0
      %9993 = vmatprep.mubr.f32.mxu0 0.0
      %v9994 = vand.u32 %v8510, 4294901760
      %9995 = vmatmul.mubr.f32.gmra.mxu0 %v9994
      %v9996 = vpop.f32.mrf.mxu0
      %v9997 = vadd.f32 %v9715, %v9996
      %v9998 = vpop.f32.mrf.mxu0
      %9999 = vmatprep.mubr.f32.mxu0 0.0
      %v10000 = vand.u32 %v8513, 4294901760
      %10001 = vmatmul.mubr.f32.gmra.mxu0 %v10000
      %v10002 = vpop.f32.mrf.mxu0
      %v10003 = vadd.f32 %v9723, %v10002
      %v10004 = vpop.f32.mrf.mxu0
      %10005 = vmatprep.mubr.f32.mxu0 0.0
      %v10006 = vand.u32 %v8516, 4294901760
      %10007 = vmatmul.mubr.f32.gmra.mxu0 %v10006
      %v10008 = vpop.f32.mrf.mxu0
      %v10009 = vadd.f32 %v9731, %v10008
      %v10010 = vpop.f32.mrf.mxu0
      %10011 = vmatprep.mubr.f32.mxu0 0.0
      %v10012 = vand.u32 %v8519, 4294901760
      %10013 = vmatmul.mubr.f32.gmra.mxu0 %v10012
      %v10014 = vpop.f32.mrf.mxu0
      %v10015 = vadd.f32 %v9739, %v10014
      %v10016 = vpop.f32.mrf.mxu0
      %10017 = vmatprep.mubr.f32.mxu0 0.0
      %v10018 = vand.u32 %v8522, 4294901760
      %10019 = vmatmul.mubr.f32.gmra.mxu0 %v10018
      %v10020 = vpop.f32.mrf.mxu0
      %v10021 = vadd.f32 %v9747, %v10020
      %v10022 = vpop.f32.mrf.mxu0
      %10023 = vmatprep.mubr.f32.mxu0 0.0
      %v10024 = vand.u32 %v8525, 4294901760
      %10025 = vmatmul.mubr.f32.gmra.mxu0 %v10024
      %v10026 = vpop.f32.mrf.mxu0
      %v10027 = vadd.f32 %v9755, %v10026
      %v10028 = vpop.f32.mrf.mxu0
      %10029 = vmatprep.mubr.f32.mxu0 0.0
      %v10030 = vand.u32 %v8528, 4294901760
      %10031 = vmatmul.mubr.f32.gmra.mxu0 %v10030
      %v10032 = vpop.f32.mrf.mxu0
      %v10033 = vadd.f32 %v9763, %v10032
      %v10034 = vpop.f32.mrf.mxu0
      %10035 = vmatprep.mubr.f32.mxu0 0.0
      %v10036 = vand.u32 %v8531, 4294901760
      %10037 = vmatmul.mubr.f32.gmra.mxu0 %v10036
      %v10038 = vpop.f32.mrf.mxu0
      %v10039 = vadd.f32 %v9771, %v10038
      %v10040 = vpop.f32.mrf.mxu0
      %10041 = vmatprep.mubr.f32.mxu0 0.0
      %v10042 = vand.u32 %v8534, 4294901760
      %10043 = vmatmul.mubr.f32.gmra.mxu0 %v10042
      %v10044 = vpop.f32.mrf.mxu0
      %v10045 = vadd.f32 %v9779, %v10044
      %v10046 = vpop.f32.mrf.mxu0
      %10047 = vmatprep.mubr.f32.mxu0 0.0
      %v10048 = vand.u32 %v8537, 4294901760
      %10049 = vmatmul.mubr.f32.gmra.mxu0 %v10048
      %v10050 = vpop.f32.mrf.mxu0
      %v10051 = vadd.f32 %v9787, %v10050
      %v10052 = vpop.f32.mrf.mxu0
      %10053 = vmatprep.mubr.f32.mxu0 0.0
      %v10054 = vand.u32 %v8540, 4294901760
      %10055 = vmatmul.mubr.f32.gmra.mxu0 %v10054
      %v10056 = vpop.f32.mrf.mxu0
      %v10057 = vadd.f32 %v9795, %v10056
      %v10058 = vpop.f32.mrf.mxu0
      %10059 = vmatprep.mubr.f32.mxu0 0.0
      %v10060 = vand.u32 %v8543, 4294901760
      %10061 = vmatmul.mubr.f32.gmra.mxu0 %v10060
      %v10062 = vpop.f32.mrf.mxu0
      %v10063 = vadd.f32 %v9803, %v10062
      %v10064 = vpop.f32.mrf.mxu0
      %10065 = vdwg.mxu0
      %10066 = vmatprep.subr.mxu0 0.0
      %10067 = vmatpush1.msra.mxu0 0.0
      %10068 = vmatprep.subr.mxu0 0.0
      %10069 = vmatpush1.msra.mxu0 0.0
      %10070 = vmatprep.subr.mxu0 0.0
      %10071 = vmatpush1.msra.mxu0 0.0
      %10072 = vmatprep.subr.mxu0 0.0
      %10073 = vmatpush1.msra.mxu0 0.0
      %10074 = vmatprep.subr.mxu0 0.0
      %10075 = vmatpush1.msra.mxu0 0.0
      %10076 = vmatprep.subr.mxu0 0.0
      %10077 = vmatpush1.msra.mxu0 0.0
      %10078 = vmatprep.subr.mxu0 0.0
      %10079 = vmatpush1.msra.mxu0 0.0
      %10080 = vmatprep.subr.mxu0 0.0
      %10081 = vmatpush1.msra.mxu0 0.0
      %10082 = vmatprep.subr.mxu0 0.0
      %10083 = vmatpush1.msra.mxu0 0.0
      %10084 = vmatprep.subr.mxu0 0.0
      %10085 = vmatpush1.msra.mxu0 0.0
      %10086 = vmatprep.subr.mxu0 0.0
      %10087 = vmatpush1.msra.mxu0 0.0
      %10088 = vmatprep.subr.mxu0 0.0
      %10089 = vmatpush1.msra.mxu0 0.0
      %10090 = vmatprep.subr.mxu0 0.0
      %10091 = vmatpush1.msra.mxu0 0.0
      %10092 = vmatprep.subr.mxu0 0.0
      %10093 = vmatpush1.msra.mxu0 0.0
      %10094 = vmatprep.subr.mxu0 0.0
      %10095 = vmatpush1.msra.mxu0 0.0
      %10096 = vmatprep.subr.mxu0 0.0
      %v10097 = vand.u32 %v8447, 4294901760
      %10098 = vmatpush1.msra.mxu0 %v10097
      %10099 = vmatprep.subr.mxu0 0.0
      %10100 = vmatpush2.msra.mxu0 0.0
      %10101 = vmatprep.subr.mxu0 0.0
      %10102 = vmatpush2.msra.mxu0 0.0
      %10103 = vmatprep.subr.mxu0 0.0
      %10104 = vmatpush2.msra.mxu0 0.0
      %10105 = vmatprep.subr.mxu0 0.0
      %10106 = vmatpush2.msra.mxu0 0.0
      %10107 = vmatprep.subr.mxu0 0.0
      %10108 = vmatpush2.msra.mxu0 0.0
      %10109 = vmatprep.subr.mxu0 0.0
      %10110 = vmatpush2.msra.mxu0 0.0
      %10111 = vmatprep.subr.mxu0 0.0
      %10112 = vmatpush2.msra.mxu0 0.0
      %10113 = vmatprep.subr.mxu0 0.0
      %10114 = vmatpush2.msra.mxu0 0.0
      %10115 = vmatprep.subr.mxu0 0.0
      %10116 = vmatpush2.msra.mxu0 0.0
      %10117 = vmatprep.subr.mxu0 0.0
      %10118 = vmatpush2.msra.mxu0 0.0
      %10119 = vmatprep.subr.mxu0 0.0
      %10120 = vmatpush2.msra.mxu0 0.0
      %10121 = vmatprep.subr.mxu0 0.0
      %10122 = vmatpush2.msra.mxu0 0.0
      %10123 = vmatprep.subr.mxu0 0.0
      %10124 = vmatpush2.msra.mxu0 0.0
      %10125 = vmatprep.subr.mxu0 0.0
      %10126 = vmatpush2.msra.mxu0 0.0
      %10127 = vmatprep.subr.mxu0 0.0
      %10128 = vmatpush2.msra.mxu0 0.0
      %10129 = vmatprep.subr.mxu0 0.0
      %10130 = vmatpush2.msra.mxu0 0.0
      %10131 = vmatprep.mubr.f32.mxu0 0.0
      %v10132 = vand.u32 %v8450, 4294901760
      %10133 = vmatmul.mubr.f32.gmra.mxu0 %v10132
      %v10134 = vpop.f32.mrf.mxu0
      %v10135 = vadd.f32 %v9877, %v10134
      %v10136 = vpop.f32.mrf.mxu0
      %10137 = vmatprep.mubr.f32.mxu0 0.0
      %v10138 = vand.u32 %v8453, 4294901760
      %10139 = vmatmul.mubr.f32.gmra.mxu0 %v10138
      %v10140 = vpop.f32.mrf.mxu0
      %v10141 = vadd.f32 %v9883, %v10140
      %v10142 = vpop.f32.mrf.mxu0
      %10143 = vmatprep.mubr.f32.mxu0 0.0
      %v10144 = vand.u32 %v8456, 4294901760
      %10145 = vmatmul.mubr.f32.gmra.mxu0 %v10144
      %v10146 = vpop.f32.mrf.mxu0
      %v10147 = vadd.f32 %v9889, %v10146
      %v10148 = vpop.f32.mrf.mxu0
      %10149 = vmatprep.mubr.f32.mxu0 0.0
      %v10150 = vand.u32 %v8459, 4294901760
      %10151 = vmatmul.mubr.f32.gmra.mxu0 %v10150
      %v10152 = vpop.f32.mrf.mxu0
      %v10153 = vadd.f32 %v9895, %v10152
      %v10154 = vpop.f32.mrf.mxu0
      %10155 = vmatprep.mubr.f32.mxu0 0.0
      %v10156 = vand.u32 %v8462, 4294901760
      %10157 = vmatmul.mubr.f32.gmra.mxu0 %v10156
      %v10158 = vpop.f32.mrf.mxu0
      %v10159 = vadd.f32 %v9901, %v10158
      %v10160 = vpop.f32.mrf.mxu0
      %10161 = vmatprep.mubr.f32.mxu0 0.0
      %v10162 = vand.u32 %v8465, 4294901760
      %10163 = vmatmul.mubr.f32.gmra.mxu0 %v10162
      %v10164 = vpop.f32.mrf.mxu0
      %v10165 = vadd.f32 %v9907, %v10164
      %v10166 = vpop.f32.mrf.mxu0
      %10167 = vmatprep.mubr.f32.mxu0 0.0
      %v10168 = vand.u32 %v8468, 4294901760
      %10169 = vmatmul.mubr.f32.gmra.mxu0 %v10168
      %v10170 = vpop.f32.mrf.mxu0
      %v10171 = vadd.f32 %v9913, %v10170
      %v10172 = vpop.f32.mrf.mxu0
      %10173 = vmatprep.mubr.f32.mxu0 0.0
      %v10174 = vand.u32 %v8471, 4294901760
      %10175 = vmatmul.mubr.f32.gmra.mxu0 %v10174
      %v10176 = vpop.f32.mrf.mxu0
      %v10177 = vadd.f32 %v9919, %v10176
      %v10178 = vpop.f32.mrf.mxu0
      %10179 = vmatprep.mubr.f32.mxu0 0.0
      %v10180 = vand.u32 %v8474, 4294901760
      %10181 = vmatmul.mubr.f32.gmra.mxu0 %v10180
      %v10182 = vpop.f32.mrf.mxu0
      %v10183 = vadd.f32 %v9925, %v10182
      %v10184 = vpop.f32.mrf.mxu0
      %10185 = vmatprep.mubr.f32.mxu0 0.0
      %v10186 = vand.u32 %v8477, 4294901760
      %10187 = vmatmul.mubr.f32.gmra.mxu0 %v10186
      %v10188 = vpop.f32.mrf.mxu0
      %v10189 = vadd.f32 %v9931, %v10188
      %v10190 = vpop.f32.mrf.mxu0
      %10191 = vmatprep.mubr.f32.mxu0 0.0
      %v10192 = vand.u32 %v8480, 4294901760
      %10193 = vmatmul.mubr.f32.gmra.mxu0 %v10192
      %v10194 = vpop.f32.mrf.mxu0
      %v10195 = vadd.f32 %v9937, %v10194
      %v10196 = vpop.f32.mrf.mxu0
      %10197 = vmatprep.mubr.f32.mxu0 0.0
      %v10198 = vand.u32 %v8483, 4294901760
      %10199 = vmatmul.mubr.f32.gmra.mxu0 %v10198
      %v10200 = vpop.f32.mrf.mxu0
      %v10201 = vadd.f32 %v9943, %v10200
      %v10202 = vpop.f32.mrf.mxu0
      %10203 = vmatprep.mubr.f32.mxu0 0.0
      %v10204 = vand.u32 %v8486, 4294901760
      %10205 = vmatmul.mubr.f32.gmra.mxu0 %v10204
      %v10206 = vpop.f32.mrf.mxu0
      %v10207 = vadd.f32 %v9949, %v10206
      %v10208 = vpop.f32.mrf.mxu0
      %10209 = vmatprep.mubr.f32.mxu0 0.0
      %v10210 = vand.u32 %v8489, 4294901760
      %10211 = vmatmul.mubr.f32.gmra.mxu0 %v10210
      %v10212 = vpop.f32.mrf.mxu0
      %v10213 = vadd.f32 %v9955, %v10212
      %v10214 = vpop.f32.mrf.mxu0
      %10215 = vmatprep.mubr.f32.mxu0 0.0
      %v10216 = vand.u32 %v8492, 4294901760
      %10217 = vmatmul.mubr.f32.gmra.mxu0 %v10216
      %v10218 = vpop.f32.mrf.mxu0
      %v10219 = vadd.f32 %v9961, %v10218
      %v10220 = vpop.f32.mrf.mxu0
      %10221 = vmatprep.mubr.f32.mxu0 0.0
      %v10222 = vand.u32 %v8495, 4294901760
      %10223 = vmatmul.mubr.f32.gmra.mxu0 %v10222
      %v10224 = vpop.f32.mrf.mxu0
      %v10225 = vadd.f32 %v9967, %v10224
      %v10226 = vpop.f32.mrf.mxu0
      %10227 = vmatprep.mubr.f32.mxu0 0.0
      %v10228 = vand.u32 %v8498, 4294901760
      %10229 = vmatmul.mubr.f32.gmra.mxu0 %v10228
      %v10230 = vpop.f32.mrf.mxu0
      %v10231 = vadd.f32 %v9973, %v10230
      %v10232 = vpop.f32.mrf.mxu0
      %10233 = vmatprep.mubr.f32.mxu0 0.0
      %v10234 = vand.u32 %v8501, 4294901760
      %10235 = vmatmul.mubr.f32.gmra.mxu0 %v10234
      %v10236 = vpop.f32.mrf.mxu0
      %v10237 = vadd.f32 %v9979, %v10236
      %v10238 = vpop.f32.mrf.mxu0
      %10239 = vmatprep.mubr.f32.mxu0 0.0
      %v10240 = vand.u32 %v8504, 4294901760
      %10241 = vmatmul.mubr.f32.gmra.mxu0 %v10240
      %v10242 = vpop.f32.mrf.mxu0
      %v10243 = vadd.f32 %v9985, %v10242
      %v10244 = vpop.f32.mrf.mxu0
      %10245 = vmatprep.mubr.f32.mxu0 0.0
      %v10246 = vand.u32 %v8507, 4294901760
      %10247 = vmatmul.mubr.f32.gmra.mxu0 %v10246
      %v10248 = vpop.f32.mrf.mxu0
      %v10249 = vadd.f32 %v9991, %v10248
      %v10250 = vpop.f32.mrf.mxu0
      %10251 = vmatprep.mubr.f32.mxu0 0.0
      %v10252 = vand.u32 %v8510, 4294901760
      %10253 = vmatmul.mubr.f32.gmra.mxu0 %v10252
      %v10254 = vpop.f32.mrf.mxu0
      %v10255 = vadd.f32 %v9997, %v10254
      %v10256 = vpop.f32.mrf.mxu0
      %10257 = vmatprep.mubr.f32.mxu0 0.0
      %v10258 = vand.u32 %v8513, 4294901760
      %10259 = vmatmul.mubr.f32.gmra.mxu0 %v10258
      %v10260 = vpop.f32.mrf.mxu0
      %v10261 = vadd.f32 %v10003, %v10260
      %v10262 = vpop.f32.mrf.mxu0
      %10263 = vmatprep.mubr.f32.mxu0 0.0
      %v10264 = vand.u32 %v8516, 4294901760
      %10265 = vmatmul.mubr.f32.gmra.mxu0 %v10264
      %v10266 = vpop.f32.mrf.mxu0
      %v10267 = vadd.f32 %v10009, %v10266
      %v10268 = vpop.f32.mrf.mxu0
      %10269 = vmatprep.mubr.f32.mxu0 0.0
      %v10270 = vand.u32 %v8519, 4294901760
      %10271 = vmatmul.mubr.f32.gmra.mxu0 %v10270
      %v10272 = vpop.f32.mrf.mxu0
      %v10273 = vadd.f32 %v10015, %v10272
      %v10274 = vpop.f32.mrf.mxu0
      %10275 = vmatprep.mubr.f32.mxu0 0.0
      %v10276 = vand.u32 %v8522, 4294901760
      %10277 = vmatmul.mubr.f32.gmra.mxu0 %v10276
      %v10278 = vpop.f32.mrf.mxu0
      %v10279 = vadd.f32 %v10021, %v10278
      %v10280 = vpop.f32.mrf.mxu0
      %10281 = vmatprep.mubr.f32.mxu0 0.0
      %v10282 = vand.u32 %v8525, 4294901760
      %10283 = vmatmul.mubr.f32.gmra.mxu0 %v10282
      %v10284 = vpop.f32.mrf.mxu0
      %v10285 = vadd.f32 %v10027, %v10284
      %v10286 = vpop.f32.mrf.mxu0
      %10287 = vmatprep.mubr.f32.mxu0 0.0
      %v10288 = vand.u32 %v8528, 4294901760
      %10289 = vmatmul.mubr.f32.gmra.mxu0 %v10288
      %v10290 = vpop.f32.mrf.mxu0
      %v10291 = vadd.f32 %v10033, %v10290
      %v10292 = vpop.f32.mrf.mxu0
      %10293 = vmatprep.mubr.f32.mxu0 0.0
      %v10294 = vand.u32 %v8531, 4294901760
      %10295 = vmatmul.mubr.f32.gmra.mxu0 %v10294
      %v10296 = vpop.f32.mrf.mxu0
      %v10297 = vadd.f32 %v10039, %v10296
      %v10298 = vpop.f32.mrf.mxu0
      %10299 = vmatprep.mubr.f32.mxu0 0.0
      %v10300 = vand.u32 %v8534, 4294901760
      %10301 = vmatmul.mubr.f32.gmra.mxu0 %v10300
      %v10302 = vpop.f32.mrf.mxu0
      %v10303 = vadd.f32 %v10045, %v10302
      %v10304 = vpop.f32.mrf.mxu0
      %10305 = vmatprep.mubr.f32.mxu0 0.0
      %v10306 = vand.u32 %v8537, 4294901760
      %10307 = vmatmul.mubr.f32.gmra.mxu0 %v10306
      %v10308 = vpop.f32.mrf.mxu0
      %v10309 = vadd.f32 %v10051, %v10308
      %v10310 = vpop.f32.mrf.mxu0
      %10311 = vmatprep.mubr.f32.mxu0 0.0
      %v10312 = vand.u32 %v8540, 4294901760
      %10313 = vmatmul.mubr.f32.gmra.mxu0 %v10312
      %v10314 = vpop.f32.mrf.mxu0
      %v10315 = vadd.f32 %v10057, %v10314
      %v10316 = vpop.f32.mrf.mxu0
      %10317 = vmatprep.mubr.f32.mxu0 0.0
      %v10318 = vand.u32 %v8543, 4294901760
      %10319 = vmatmul.mubr.f32.gmra.mxu0 %v10318
      %v10320 = vpop.f32.mrf.mxu0
      %v10321 = vadd.f32 %v10063, %v10320
      %v10322 = vpop.f32.mrf.mxu0
      %10323 = vdwg.mxu0
      %v10325 = vsel %vm8448, %v253, 0
      %v10328 = vsel %vm8448, %v254, 0
      %v10331 = vsel %vm8448, %v255, 0
      %v10334 = vsel %vm8448, %v256, 0
      %v10337 = vsel %vm8448, %v257, 0
      %v10340 = vsel %vm8448, %v258, 0
      %v10343 = vsel %vm8448, %v259, 0
      %v10346 = vsel %vm8448, %v260, 0
      %v10349 = vsel %vm8448, %v261, 0
      %v10352 = vsel %vm8448, %v262, 0
      %v10355 = vsel %vm8448, %v263, 0
      %v10358 = vsel %vm8448, %v264, 0
      %v10361 = vsel %vm8448, %v265, 0
      %v10364 = vsel %vm8448, %v266, 0
      %v10367 = vsel %vm8448, %v267, 0
      %v10370 = vsel %vm8448, %v268, 0
      %v10373 = vsel %vm8448, %v269, 0
      %v10376 = vsel %vm8448, %v270, 0
      %v10379 = vsel %vm8448, %v271, 0
      %v10382 = vsel %vm8448, %v272, 0
      %v10385 = vsel %vm8448, %v273, 0
      %v10388 = vsel %vm8448, %v274, 0
      %v10391 = vsel %vm8448, %v275, 0
      %v10394 = vsel %vm8448, %v276, 0
      %v10397 = vsel %vm8448, %v277, 0
      %v10400 = vsel %vm8448, %v278, 0
      %v10403 = vsel %vm8448, %v279, 0
      %v10406 = vsel %vm8448, %v280, 0
      %v10409 = vsel %vm8448, %v281, 0
      %v10412 = vsel %vm8448, %v282, 0
      %v10415 = vsel %vm8448, %v283, 0
      %v10418 = vsel %vm8448, %v284, 0
      %10420 = vmatprep.subr.mxu0 0.0
      %10421 = vmatpush1.msra.mxu0 0.0
      %10422 = vmatprep.subr.mxu0 0.0
      %10423 = vmatpush1.msra.mxu0 0.0
      %10424 = vmatprep.subr.mxu0 0.0
      %10425 = vmatpush1.msra.mxu0 0.0
      %10426 = vmatprep.subr.mxu0 0.0
      %10427 = vmatpush1.msra.mxu0 0.0
      %10428 = vmatprep.subr.mxu0 0.0
      %10429 = vmatpush1.msra.mxu0 0.0
      %10430 = vmatprep.subr.mxu0 0.0
      %10431 = vmatpush1.msra.mxu0 0.0
      %10432 = vmatprep.subr.mxu0 0.0
      %10433 = vmatpush1.msra.mxu0 0.0
      %10434 = vmatprep.subr.mxu0 0.0
      %10435 = vmatpush1.msra.mxu0 0.0
      %10436 = vmatprep.subr.mxu0 0.0
      %10437 = vmatpush1.msra.mxu0 0.0
      %10438 = vmatprep.subr.mxu0 0.0
      %10439 = vmatpush1.msra.mxu0 0.0
      %10440 = vmatprep.subr.mxu0 0.0
      %10441 = vmatpush1.msra.mxu0 0.0
      %10442 = vmatprep.subr.mxu0 0.0
      %10443 = vmatpush1.msra.mxu0 0.0
      %10444 = vmatprep.subr.mxu0 0.0
      %10445 = vmatpush1.msra.mxu0 0.0
      %10446 = vmatprep.subr.mxu0 0.0
      %10447 = vmatpush1.msra.mxu0 0.0
      %10448 = vmatprep.subr.mxu0 0.0
      %10449 = vmatpush1.msra.mxu0 0.0
      %10450 = vmatprep.subr.mxu0 0.0
      %v10451 = vand.u32 %v8446, 4294901760
      %10452 = vmatpush1.msra.mxu0 %v10451
      %10453 = vmatprep.subr.mxu0 0.0
      %10454 = vmatpush2.msra.mxu0 0.0
      %10455 = vmatprep.subr.mxu0 0.0
      %10456 = vmatpush2.msra.mxu0 0.0
      %10457 = vmatprep.subr.mxu0 0.0
      %10458 = vmatpush2.msra.mxu0 0.0
      %10459 = vmatprep.subr.mxu0 0.0
      %10460 = vmatpush2.msra.mxu0 0.0
      %10461 = vmatprep.subr.mxu0 0.0
      %10462 = vmatpush2.msra.mxu0 0.0
      %10463 = vmatprep.subr.mxu0 0.0
      %10464 = vmatpush2.msra.mxu0 0.0
      %10465 = vmatprep.subr.mxu0 0.0
      %10466 = vmatpush2.msra.mxu0 0.0
      %10467 = vmatprep.subr.mxu0 0.0
      %10468 = vmatpush2.msra.mxu0 0.0
      %10469 = vmatprep.subr.mxu0 0.0
      %10470 = vmatpush2.msra.mxu0 0.0
      %10471 = vmatprep.subr.mxu0 0.0
      %10472 = vmatpush2.msra.mxu0 0.0
      %10473 = vmatprep.subr.mxu0 0.0
      %10474 = vmatpush2.msra.mxu0 0.0
      %10475 = vmatprep.subr.mxu0 0.0
      %10476 = vmatpush2.msra.mxu0 0.0
      %10477 = vmatprep.subr.mxu0 0.0
      %10478 = vmatpush2.msra.mxu0 0.0
      %10479 = vmatprep.subr.mxu0 0.0
      %10480 = vmatpush2.msra.mxu0 0.0
      %10481 = vmatprep.subr.mxu0 0.0
      %10482 = vmatpush2.msra.mxu0 0.0
      %10483 = vmatprep.subr.mxu0 0.0
      %10484 = vmatpush2.msra.mxu0 0.0
      %10485 = vmatprep.mubr.f32.mxu0 0.0
      %v10486 = vand.u32 %v10325, 4294901760
      %v10487 = vsub.f32 %v10325, %v10486
      %v10488 = vand.u32 %v10487, 4294901760
      %v10489 = vsub.f32 %v10487, %v10488
      %v10490 = vand.u32 %v10489, 4294901760
      %10491 = vmatmul.mubr.f32.gmra.mxu0 %v10490
      %v10492 = vpop.f32.mrf.mxu0
      %v10493 = vadd.f32 %v10135, %v10492
      %v10494 = vpop.f32.mrf.mxu0
      %10495 = vmatprep.mubr.f32.mxu0 0.0
      %v10496 = vand.u32 %v10328, 4294901760
      %v10497 = vsub.f32 %v10328, %v10496
      %v10498 = vand.u32 %v10497, 4294901760
      %v10499 = vsub.f32 %v10497, %v10498
      %v10500 = vand.u32 %v10499, 4294901760
      %10501 = vmatmul.mubr.f32.gmra.mxu0 %v10500
      %v10502 = vpop.f32.mrf.mxu0
      %v10503 = vadd.f32 %v10141, %v10502
      %v10504 = vpop.f32.mrf.mxu0
      %10505 = vmatprep.mubr.f32.mxu0 0.0
      %v10506 = vand.u32 %v10331, 4294901760
      %v10507 = vsub.f32 %v10331, %v10506
      %v10508 = vand.u32 %v10507, 4294901760
      %v10509 = vsub.f32 %v10507, %v10508
      %v10510 = vand.u32 %v10509, 4294901760
      %10511 = vmatmul.mubr.f32.gmra.mxu0 %v10510
      %v10512 = vpop.f32.mrf.mxu0
      %v10513 = vadd.f32 %v10147, %v10512
      %v10514 = vpop.f32.mrf.mxu0
      %10515 = vmatprep.mubr.f32.mxu0 0.0
      %v10516 = vand.u32 %v10334, 4294901760
      %v10517 = vsub.f32 %v10334, %v10516
      %v10518 = vand.u32 %v10517, 4294901760
      %v10519 = vsub.f32 %v10517, %v10518
      %v10520 = vand.u32 %v10519, 4294901760
      %10521 = vmatmul.mubr.f32.gmra.mxu0 %v10520
      %v10522 = vpop.f32.mrf.mxu0
      %v10523 = vadd.f32 %v10153, %v10522
      %v10524 = vpop.f32.mrf.mxu0
      %10525 = vmatprep.mubr.f32.mxu0 0.0
      %v10526 = vand.u32 %v10337, 4294901760
      %v10527 = vsub.f32 %v10337, %v10526
      %v10528 = vand.u32 %v10527, 4294901760
      %v10529 = vsub.f32 %v10527, %v10528
      %v10530 = vand.u32 %v10529, 4294901760
      %10531 = vmatmul.mubr.f32.gmra.mxu0 %v10530
      %v10532 = vpop.f32.mrf.mxu0
      %v10533 = vadd.f32 %v10159, %v10532
      %v10534 = vpop.f32.mrf.mxu0
      %10535 = vmatprep.mubr.f32.mxu0 0.0
      %v10536 = vand.u32 %v10340, 4294901760
      %v10537 = vsub.f32 %v10340, %v10536
      %v10538 = vand.u32 %v10537, 4294901760
      %v10539 = vsub.f32 %v10537, %v10538
      %v10540 = vand.u32 %v10539, 4294901760
      %10541 = vmatmul.mubr.f32.gmra.mxu0 %v10540
      %v10542 = vpop.f32.mrf.mxu0
      %v10543 = vadd.f32 %v10165, %v10542
      %v10544 = vpop.f32.mrf.mxu0
      %10545 = vmatprep.mubr.f32.mxu0 0.0
      %v10546 = vand.u32 %v10343, 4294901760
      %v10547 = vsub.f32 %v10343, %v10546
      %v10548 = vand.u32 %v10547, 4294901760
      %v10549 = vsub.f32 %v10547, %v10548
      %v10550 = vand.u32 %v10549, 4294901760
      %10551 = vmatmul.mubr.f32.gmra.mxu0 %v10550
      %v10552 = vpop.f32.mrf.mxu0
      %v10553 = vadd.f32 %v10171, %v10552
      %v10554 = vpop.f32.mrf.mxu0
      %10555 = vmatprep.mubr.f32.mxu0 0.0
      %v10556 = vand.u32 %v10346, 4294901760
      %v10557 = vsub.f32 %v10346, %v10556
      %v10558 = vand.u32 %v10557, 4294901760
      %v10559 = vsub.f32 %v10557, %v10558
      %v10560 = vand.u32 %v10559, 4294901760
      %10561 = vmatmul.mubr.f32.gmra.mxu0 %v10560
      %v10562 = vpop.f32.mrf.mxu0
      %v10563 = vadd.f32 %v10177, %v10562
      %v10564 = vpop.f32.mrf.mxu0
      %10565 = vmatprep.mubr.f32.mxu0 0.0
      %v10566 = vand.u32 %v10349, 4294901760
      %v10567 = vsub.f32 %v10349, %v10566
      %v10568 = vand.u32 %v10567, 4294901760
      %v10569 = vsub.f32 %v10567, %v10568
      %v10570 = vand.u32 %v10569, 4294901760
      %10571 = vmatmul.mubr.f32.gmra.mxu0 %v10570
      %v10572 = vpop.f32.mrf.mxu0
      %v10573 = vadd.f32 %v10183, %v10572
      %v10574 = vpop.f32.mrf.mxu0
      %10575 = vmatprep.mubr.f32.mxu0 0.0
      %v10576 = vand.u32 %v10352, 4294901760
      %v10577 = vsub.f32 %v10352, %v10576
      %v10578 = vand.u32 %v10577, 4294901760
      %v10579 = vsub.f32 %v10577, %v10578
      %v10580 = vand.u32 %v10579, 4294901760
      %10581 = vmatmul.mubr.f32.gmra.mxu0 %v10580
      %v10582 = vpop.f32.mrf.mxu0
      %v10583 = vadd.f32 %v10189, %v10582
      %v10584 = vpop.f32.mrf.mxu0
      %10585 = vmatprep.mubr.f32.mxu0 0.0
      %v10586 = vand.u32 %v10355, 4294901760
      %v10587 = vsub.f32 %v10355, %v10586
      %v10588 = vand.u32 %v10587, 4294901760
      %v10589 = vsub.f32 %v10587, %v10588
      %v10590 = vand.u32 %v10589, 4294901760
      %10591 = vmatmul.mubr.f32.gmra.mxu0 %v10590
      %v10592 = vpop.f32.mrf.mxu0
      %v10593 = vadd.f32 %v10195, %v10592
      %v10594 = vpop.f32.mrf.mxu0
      %10595 = vmatprep.mubr.f32.mxu0 0.0
      %v10596 = vand.u32 %v10358, 4294901760
      %v10597 = vsub.f32 %v10358, %v10596
      %v10598 = vand.u32 %v10597, 4294901760
      %v10599 = vsub.f32 %v10597, %v10598
      %v10600 = vand.u32 %v10599, 4294901760
      %10601 = vmatmul.mubr.f32.gmra.mxu0 %v10600
      %v10602 = vpop.f32.mrf.mxu0
      %v10603 = vadd.f32 %v10201, %v10602
      %v10604 = vpop.f32.mrf.mxu0
      %10605 = vmatprep.mubr.f32.mxu0 0.0
      %v10606 = vand.u32 %v10361, 4294901760
      %v10607 = vsub.f32 %v10361, %v10606
      %v10608 = vand.u32 %v10607, 4294901760
      %v10609 = vsub.f32 %v10607, %v10608
      %v10610 = vand.u32 %v10609, 4294901760
      %10611 = vmatmul.mubr.f32.gmra.mxu0 %v10610
      %v10612 = vpop.f32.mrf.mxu0
      %v10613 = vadd.f32 %v10207, %v10612
      %v10614 = vpop.f32.mrf.mxu0
      %10615 = vmatprep.mubr.f32.mxu0 0.0
      %v10616 = vand.u32 %v10364, 4294901760
      %v10617 = vsub.f32 %v10364, %v10616
      %v10618 = vand.u32 %v10617, 4294901760
      %v10619 = vsub.f32 %v10617, %v10618
      %v10620 = vand.u32 %v10619, 4294901760
      %10621 = vmatmul.mubr.f32.gmra.mxu0 %v10620
      %v10622 = vpop.f32.mrf.mxu0
      %v10623 = vadd.f32 %v10213, %v10622
      %v10624 = vpop.f32.mrf.mxu0
      %10625 = vmatprep.mubr.f32.mxu0 0.0
      %v10626 = vand.u32 %v10367, 4294901760
      %v10627 = vsub.f32 %v10367, %v10626
      %v10628 = vand.u32 %v10627, 4294901760
      %v10629 = vsub.f32 %v10627, %v10628
      %v10630 = vand.u32 %v10629, 4294901760
      %10631 = vmatmul.mubr.f32.gmra.mxu0 %v10630
      %v10632 = vpop.f32.mrf.mxu0
      %v10633 = vadd.f32 %v10219, %v10632
      %v10634 = vpop.f32.mrf.mxu0
      %10635 = vmatprep.mubr.f32.mxu0 0.0
      %v10636 = vand.u32 %v10370, 4294901760
      %v10637 = vsub.f32 %v10370, %v10636
      %v10638 = vand.u32 %v10637, 4294901760
      %v10639 = vsub.f32 %v10637, %v10638
      %v10640 = vand.u32 %v10639, 4294901760
      %10641 = vmatmul.mubr.f32.gmra.mxu0 %v10640
      %v10642 = vpop.f32.mrf.mxu0
      %v10643 = vadd.f32 %v10225, %v10642
      %v10644 = vpop.f32.mrf.mxu0
      %10645 = vmatprep.mubr.f32.mxu0 0.0
      %v10646 = vand.u32 %v10373, 4294901760
      %v10647 = vsub.f32 %v10373, %v10646
      %v10648 = vand.u32 %v10647, 4294901760
      %v10649 = vsub.f32 %v10647, %v10648
      %v10650 = vand.u32 %v10649, 4294901760
      %10651 = vmatmul.mubr.f32.gmra.mxu0 %v10650
      %v10652 = vpop.f32.mrf.mxu0
      %v10653 = vadd.f32 %v10231, %v10652
      %v10654 = vpop.f32.mrf.mxu0
      %10655 = vmatprep.mubr.f32.mxu0 0.0
      %v10656 = vand.u32 %v10376, 4294901760
      %v10657 = vsub.f32 %v10376, %v10656
      %v10658 = vand.u32 %v10657, 4294901760
      %v10659 = vsub.f32 %v10657, %v10658
      %v10660 = vand.u32 %v10659, 4294901760
      %10661 = vmatmul.mubr.f32.gmra.mxu0 %v10660
      %v10662 = vpop.f32.mrf.mxu0
      %v10663 = vadd.f32 %v10237, %v10662
      %v10664 = vpop.f32.mrf.mxu0
      %10665 = vmatprep.mubr.f32.mxu0 0.0
      %v10666 = vand.u32 %v10379, 4294901760
      %v10667 = vsub.f32 %v10379, %v10666
      %v10668 = vand.u32 %v10667, 4294901760
      %v10669 = vsub.f32 %v10667, %v10668
      %v10670 = vand.u32 %v10669, 4294901760
      %10671 = vmatmul.mubr.f32.gmra.mxu0 %v10670
      %v10672 = vpop.f32.mrf.mxu0
      %v10673 = vadd.f32 %v10243, %v10672
      %v10674 = vpop.f32.mrf.mxu0
      %10675 = vmatprep.mubr.f32.mxu0 0.0
      %v10676 = vand.u32 %v10382, 4294901760
      %v10677 = vsub.f32 %v10382, %v10676
      %v10678 = vand.u32 %v10677, 4294901760
      %v10679 = vsub.f32 %v10677, %v10678
      %v10680 = vand.u32 %v10679, 4294901760
      %10681 = vmatmul.mubr.f32.gmra.mxu0 %v10680
      %v10682 = vpop.f32.mrf.mxu0
      %v10683 = vadd.f32 %v10249, %v10682
      %v10684 = vpop.f32.mrf.mxu0
      %10685 = vmatprep.mubr.f32.mxu0 0.0
      %v10686 = vand.u32 %v10385, 4294901760
      %v10687 = vsub.f32 %v10385, %v10686
      %v10688 = vand.u32 %v10687, 4294901760
      %v10689 = vsub.f32 %v10687, %v10688
      %v10690 = vand.u32 %v10689, 4294901760
      %10691 = vmatmul.mubr.f32.gmra.mxu0 %v10690
      %v10692 = vpop.f32.mrf.mxu0
      %v10693 = vadd.f32 %v10255, %v10692
      %v10694 = vpop.f32.mrf.mxu0
      %10695 = vmatprep.mubr.f32.mxu0 0.0
      %v10696 = vand.u32 %v10388, 4294901760
      %v10697 = vsub.f32 %v10388, %v10696
      %v10698 = vand.u32 %v10697, 4294901760
      %v10699 = vsub.f32 %v10697, %v10698
      %v10700 = vand.u32 %v10699, 4294901760
      %10701 = vmatmul.mubr.f32.gmra.mxu0 %v10700
      %v10702 = vpop.f32.mrf.mxu0
      %v10703 = vadd.f32 %v10261, %v10702
      %v10704 = vpop.f32.mrf.mxu0
      %10705 = vmatprep.mubr.f32.mxu0 0.0
      %v10706 = vand.u32 %v10391, 4294901760
      %v10707 = vsub.f32 %v10391, %v10706
      %v10708 = vand.u32 %v10707, 4294901760
      %v10709 = vsub.f32 %v10707, %v10708
      %v10710 = vand.u32 %v10709, 4294901760
      %10711 = vmatmul.mubr.f32.gmra.mxu0 %v10710
      %v10712 = vpop.f32.mrf.mxu0
      %v10713 = vadd.f32 %v10267, %v10712
      %v10714 = vpop.f32.mrf.mxu0
      %10715 = vmatprep.mubr.f32.mxu0 0.0
      %v10716 = vand.u32 %v10394, 4294901760
      %v10717 = vsub.f32 %v10394, %v10716
      %v10718 = vand.u32 %v10717, 4294901760
      %v10719 = vsub.f32 %v10717, %v10718
      %v10720 = vand.u32 %v10719, 4294901760
      %10721 = vmatmul.mubr.f32.gmra.mxu0 %v10720
      %v10722 = vpop.f32.mrf.mxu0
      %v10723 = vadd.f32 %v10273, %v10722
      %v10724 = vpop.f32.mrf.mxu0
      %10725 = vmatprep.mubr.f32.mxu0 0.0
      %v10726 = vand.u32 %v10397, 4294901760
      %v10727 = vsub.f32 %v10397, %v10726
      %v10728 = vand.u32 %v10727, 4294901760
      %v10729 = vsub.f32 %v10727, %v10728
      %v10730 = vand.u32 %v10729, 4294901760
      %10731 = vmatmul.mubr.f32.gmra.mxu0 %v10730
      %v10732 = vpop.f32.mrf.mxu0
      %v10733 = vadd.f32 %v10279, %v10732
      %v10734 = vpop.f32.mrf.mxu0
      %10735 = vmatprep.mubr.f32.mxu0 0.0
      %v10736 = vand.u32 %v10400, 4294901760
      %v10737 = vsub.f32 %v10400, %v10736
      %v10738 = vand.u32 %v10737, 4294901760
      %v10739 = vsub.f32 %v10737, %v10738
      %v10740 = vand.u32 %v10739, 4294901760
      %10741 = vmatmul.mubr.f32.gmra.mxu0 %v10740
      %v10742 = vpop.f32.mrf.mxu0
      %v10743 = vadd.f32 %v10285, %v10742
      %v10744 = vpop.f32.mrf.mxu0
      %10745 = vmatprep.mubr.f32.mxu0 0.0
      %v10746 = vand.u32 %v10403, 4294901760
      %v10747 = vsub.f32 %v10403, %v10746
      %v10748 = vand.u32 %v10747, 4294901760
      %v10749 = vsub.f32 %v10747, %v10748
      %v10750 = vand.u32 %v10749, 4294901760
      %10751 = vmatmul.mubr.f32.gmra.mxu0 %v10750
      %v10752 = vpop.f32.mrf.mxu0
      %v10753 = vadd.f32 %v10291, %v10752
      %v10754 = vpop.f32.mrf.mxu0
      %10755 = vmatprep.mubr.f32.mxu0 0.0
      %v10756 = vand.u32 %v10406, 4294901760
      %v10757 = vsub.f32 %v10406, %v10756
      %v10758 = vand.u32 %v10757, 4294901760
      %v10759 = vsub.f32 %v10757, %v10758
      %v10760 = vand.u32 %v10759, 4294901760
      %10761 = vmatmul.mubr.f32.gmra.mxu0 %v10760
      %v10762 = vpop.f32.mrf.mxu0
      %v10763 = vadd.f32 %v10297, %v10762
      %v10764 = vpop.f32.mrf.mxu0
      %10765 = vmatprep.mubr.f32.mxu0 0.0
      %v10766 = vand.u32 %v10409, 4294901760
      %v10767 = vsub.f32 %v10409, %v10766
      %v10768 = vand.u32 %v10767, 4294901760
      %v10769 = vsub.f32 %v10767, %v10768
      %v10770 = vand.u32 %v10769, 4294901760
      %10771 = vmatmul.mubr.f32.gmra.mxu0 %v10770
      %v10772 = vpop.f32.mrf.mxu0
      %v10773 = vadd.f32 %v10303, %v10772
      %v10774 = vpop.f32.mrf.mxu0
      %10775 = vmatprep.mubr.f32.mxu0 0.0
      %v10776 = vand.u32 %v10412, 4294901760
      %v10777 = vsub.f32 %v10412, %v10776
      %v10778 = vand.u32 %v10777, 4294901760
      %v10779 = vsub.f32 %v10777, %v10778
      %v10780 = vand.u32 %v10779, 4294901760
      %10781 = vmatmul.mubr.f32.gmra.mxu0 %v10780
      %v10782 = vpop.f32.mrf.mxu0
      %v10783 = vadd.f32 %v10309, %v10782
      %v10784 = vpop.f32.mrf.mxu0
      %10785 = vmatprep.mubr.f32.mxu0 0.0
      %v10786 = vand.u32 %v10415, 4294901760
      %v10787 = vsub.f32 %v10415, %v10786
      %v10788 = vand.u32 %v10787, 4294901760
      %v10789 = vsub.f32 %v10787, %v10788
      %v10790 = vand.u32 %v10789, 4294901760
      %10791 = vmatmul.mubr.f32.gmra.mxu0 %v10790
      %v10792 = vpop.f32.mrf.mxu0
      %v10793 = vadd.f32 %v10315, %v10792
      %v10794 = vpop.f32.mrf.mxu0
      %10795 = vmatprep.mubr.f32.mxu0 0.0
      %v10796 = vand.u32 %v10418, 4294901760
      %v10797 = vsub.f32 %v10418, %v10796
      %v10798 = vand.u32 %v10797, 4294901760
      %v10799 = vsub.f32 %v10797, %v10798
      %v10800 = vand.u32 %v10799, 4294901760
      %10801 = vmatmul.mubr.f32.gmra.mxu0 %v10800
      %v10802 = vpop.f32.mrf.mxu0
      %v10803 = vadd.f32 %v10321, %v10802
      %v10804 = vpop.f32.mrf.mxu0
      %10805 = vdwg.mxu0
      %10806 = vmatprep.subr.mxu0 0.0
      %10807 = vmatpush1.msra.mxu0 0.0
      %10808 = vmatprep.subr.mxu0 0.0
      %10809 = vmatpush1.msra.mxu0 0.0
      %10810 = vmatprep.subr.mxu0 0.0
      %10811 = vmatpush1.msra.mxu0 0.0
      %10812 = vmatprep.subr.mxu0 0.0
      %10813 = vmatpush1.msra.mxu0 0.0
      %10814 = vmatprep.subr.mxu0 0.0
      %10815 = vmatpush1.msra.mxu0 0.0
      %10816 = vmatprep.subr.mxu0 0.0
      %10817 = vmatpush1.msra.mxu0 0.0
      %10818 = vmatprep.subr.mxu0 0.0
      %10819 = vmatpush1.msra.mxu0 0.0
      %10820 = vmatprep.subr.mxu0 0.0
      %10821 = vmatpush1.msra.mxu0 0.0
      %10822 = vmatprep.subr.mxu0 0.0
      %10823 = vmatpush1.msra.mxu0 0.0
      %10824 = vmatprep.subr.mxu0 0.0
      %10825 = vmatpush1.msra.mxu0 0.0
      %10826 = vmatprep.subr.mxu0 0.0
      %10827 = vmatpush1.msra.mxu0 0.0
      %10828 = vmatprep.subr.mxu0 0.0
      %10829 = vmatpush1.msra.mxu0 0.0
      %10830 = vmatprep.subr.mxu0 0.0
      %10831 = vmatpush1.msra.mxu0 0.0
      %10832 = vmatprep.subr.mxu0 0.0
      %10833 = vmatpush1.msra.mxu0 0.0
      %10834 = vmatprep.subr.mxu0 0.0
      %10835 = vmatpush1.msra.mxu0 0.0
      %10836 = vmatprep.subr.mxu0 0.0
      %v10837 = vand.u32 %v8446, 4294901760
      %v10838 = vsub.f32 %v8446, %v10837
      %v10839 = vand.u32 %v10838, 4294901760
      %v10840 = vsub.f32 %v10838, %v10839
      %v10841 = vand.u32 %v10840, 4294901760
      %10842 = vmatpush1.msra.mxu0 %v10841
      %10843 = vmatprep.subr.mxu0 0.0
      %10844 = vmatpush2.msra.mxu0 0.0
      %10845 = vmatprep.subr.mxu0 0.0
      %10846 = vmatpush2.msra.mxu0 0.0
      %10847 = vmatprep.subr.mxu0 0.0
      %10848 = vmatpush2.msra.mxu0 0.0
      %10849 = vmatprep.subr.mxu0 0.0
      %10850 = vmatpush2.msra.mxu0 0.0
      %10851 = vmatprep.subr.mxu0 0.0
      %10852 = vmatpush2.msra.mxu0 0.0
      %10853 = vmatprep.subr.mxu0 0.0
      %10854 = vmatpush2.msra.mxu0 0.0
      %10855 = vmatprep.subr.mxu0 0.0
      %10856 = vmatpush2.msra.mxu0 0.0
      %10857 = vmatprep.subr.mxu0 0.0
      %10858 = vmatpush2.msra.mxu0 0.0
      %10859 = vmatprep.subr.mxu0 0.0
      %10860 = vmatpush2.msra.mxu0 0.0
      %10861 = vmatprep.subr.mxu0 0.0
      %10862 = vmatpush2.msra.mxu0 0.0
      %10863 = vmatprep.subr.mxu0 0.0
      %10864 = vmatpush2.msra.mxu0 0.0
      %10865 = vmatprep.subr.mxu0 0.0
      %10866 = vmatpush2.msra.mxu0 0.0
      %10867 = vmatprep.subr.mxu0 0.0
      %10868 = vmatpush2.msra.mxu0 0.0
      %10869 = vmatprep.subr.mxu0 0.0
      %10870 = vmatpush2.msra.mxu0 0.0
      %10871 = vmatprep.subr.mxu0 0.0
      %10872 = vmatpush2.msra.mxu0 0.0
      %10873 = vmatprep.subr.mxu0 0.0
      %10874 = vmatpush2.msra.mxu0 0.0
      %10875 = vmatprep.mubr.f32.mxu0 0.0
      %v10876 = vand.u32 %v10325, 4294901760
      %10877 = vmatmul.mubr.f32.gmra.mxu0 %v10876
      %v10878 = vpop.f32.mrf.mxu0
      %v10879 = vadd.f32 %v10493, %v10878
      %v10880 = vpop.f32.mrf.mxu0
      %10881 = vmatprep.mubr.f32.mxu0 0.0
      %v10882 = vand.u32 %v10328, 4294901760
      %10883 = vmatmul.mubr.f32.gmra.mxu0 %v10882
      %v10884 = vpop.f32.mrf.mxu0
      %v10885 = vadd.f32 %v10503, %v10884
      %v10886 = vpop.f32.mrf.mxu0
      %10887 = vmatprep.mubr.f32.mxu0 0.0
      %v10888 = vand.u32 %v10331, 4294901760
      %10889 = vmatmul.mubr.f32.gmra.mxu0 %v10888
      %v10890 = vpop.f32.mrf.mxu0
      %v10891 = vadd.f32 %v10513, %v10890
      %v10892 = vpop.f32.mrf.mxu0
      %10893 = vmatprep.mubr.f32.mxu0 0.0
      %v10894 = vand.u32 %v10334, 4294901760
      %10895 = vmatmul.mubr.f32.gmra.mxu0 %v10894
      %v10896 = vpop.f32.mrf.mxu0
      %v10897 = vadd.f32 %v10523, %v10896
      %v10898 = vpop.f32.mrf.mxu0
      %10899 = vmatprep.mubr.f32.mxu0 0.0
      %v10900 = vand.u32 %v10337, 4294901760
      %10901 = vmatmul.mubr.f32.gmra.mxu0 %v10900
      %v10902 = vpop.f32.mrf.mxu0
      %v10903 = vadd.f32 %v10533, %v10902
      %v10904 = vpop.f32.mrf.mxu0
      %10905 = vmatprep.mubr.f32.mxu0 0.0
      %v10906 = vand.u32 %v10340, 4294901760
      %10907 = vmatmul.mubr.f32.gmra.mxu0 %v10906
      %v10908 = vpop.f32.mrf.mxu0
      %v10909 = vadd.f32 %v10543, %v10908
      %v10910 = vpop.f32.mrf.mxu0
      %10911 = vmatprep.mubr.f32.mxu0 0.0
      %v10912 = vand.u32 %v10343, 4294901760
      %10913 = vmatmul.mubr.f32.gmra.mxu0 %v10912
      %v10914 = vpop.f32.mrf.mxu0
      %v10915 = vadd.f32 %v10553, %v10914
      %v10916 = vpop.f32.mrf.mxu0
      %10917 = vmatprep.mubr.f32.mxu0 0.0
      %v10918 = vand.u32 %v10346, 4294901760
      %10919 = vmatmul.mubr.f32.gmra.mxu0 %v10918
      %v10920 = vpop.f32.mrf.mxu0
      %v10921 = vadd.f32 %v10563, %v10920
      %v10922 = vpop.f32.mrf.mxu0
      %10923 = vmatprep.mubr.f32.mxu0 0.0
      %v10924 = vand.u32 %v10349, 4294901760
      %10925 = vmatmul.mubr.f32.gmra.mxu0 %v10924
      %v10926 = vpop.f32.mrf.mxu0
      %v10927 = vadd.f32 %v10573, %v10926
      %v10928 = vpop.f32.mrf.mxu0
      %10929 = vmatprep.mubr.f32.mxu0 0.0
      %v10930 = vand.u32 %v10352, 4294901760
      %10931 = vmatmul.mubr.f32.gmra.mxu0 %v10930
      %v10932 = vpop.f32.mrf.mxu0
      %v10933 = vadd.f32 %v10583, %v10932
      %v10934 = vpop.f32.mrf.mxu0
      %10935 = vmatprep.mubr.f32.mxu0 0.0
      %v10936 = vand.u32 %v10355, 4294901760
      %10937 = vmatmul.mubr.f32.gmra.mxu0 %v10936
      %v10938 = vpop.f32.mrf.mxu0
      %v10939 = vadd.f32 %v10593, %v10938
      %v10940 = vpop.f32.mrf.mxu0
      %10941 = vmatprep.mubr.f32.mxu0 0.0
      %v10942 = vand.u32 %v10358, 4294901760
      %10943 = vmatmul.mubr.f32.gmra.mxu0 %v10942
      %v10944 = vpop.f32.mrf.mxu0
      %v10945 = vadd.f32 %v10603, %v10944
      %v10946 = vpop.f32.mrf.mxu0
      %10947 = vmatprep.mubr.f32.mxu0 0.0
      %v10948 = vand.u32 %v10361, 4294901760
      %10949 = vmatmul.mubr.f32.gmra.mxu0 %v10948
      %v10950 = vpop.f32.mrf.mxu0
      %v10951 = vadd.f32 %v10613, %v10950
      %v10952 = vpop.f32.mrf.mxu0
      %10953 = vmatprep.mubr.f32.mxu0 0.0
      %v10954 = vand.u32 %v10364, 4294901760
      %10955 = vmatmul.mubr.f32.gmra.mxu0 %v10954
      %v10956 = vpop.f32.mrf.mxu0
      %v10957 = vadd.f32 %v10623, %v10956
      %v10958 = vpop.f32.mrf.mxu0
      %10959 = vmatprep.mubr.f32.mxu0 0.0
      %v10960 = vand.u32 %v10367, 4294901760
      %10961 = vmatmul.mubr.f32.gmra.mxu0 %v10960
      %v10962 = vpop.f32.mrf.mxu0
      %v10963 = vadd.f32 %v10633, %v10962
      %v10964 = vpop.f32.mrf.mxu0
      %10965 = vmatprep.mubr.f32.mxu0 0.0
      %v10966 = vand.u32 %v10370, 4294901760
      %10967 = vmatmul.mubr.f32.gmra.mxu0 %v10966
      %v10968 = vpop.f32.mrf.mxu0
      %v10969 = vadd.f32 %v10643, %v10968
      %v10970 = vpop.f32.mrf.mxu0
      %10971 = vmatprep.mubr.f32.mxu0 0.0
      %v10972 = vand.u32 %v10373, 4294901760
      %10973 = vmatmul.mubr.f32.gmra.mxu0 %v10972
      %v10974 = vpop.f32.mrf.mxu0
      %v10975 = vadd.f32 %v10653, %v10974
      %v10976 = vpop.f32.mrf.mxu0
      %10977 = vmatprep.mubr.f32.mxu0 0.0
      %v10978 = vand.u32 %v10376, 4294901760
      %10979 = vmatmul.mubr.f32.gmra.mxu0 %v10978
      %v10980 = vpop.f32.mrf.mxu0
      %v10981 = vadd.f32 %v10663, %v10980
      %v10982 = vpop.f32.mrf.mxu0
      %10983 = vmatprep.mubr.f32.mxu0 0.0
      %v10984 = vand.u32 %v10379, 4294901760
      %10985 = vmatmul.mubr.f32.gmra.mxu0 %v10984
      %v10986 = vpop.f32.mrf.mxu0
      %v10987 = vadd.f32 %v10673, %v10986
      %v10988 = vpop.f32.mrf.mxu0
      %10989 = vmatprep.mubr.f32.mxu0 0.0
      %v10990 = vand.u32 %v10382, 4294901760
      %10991 = vmatmul.mubr.f32.gmra.mxu0 %v10990
      %v10992 = vpop.f32.mrf.mxu0
      %v10993 = vadd.f32 %v10683, %v10992
      %v10994 = vpop.f32.mrf.mxu0
      %10995 = vmatprep.mubr.f32.mxu0 0.0
      %v10996 = vand.u32 %v10385, 4294901760
      %10997 = vmatmul.mubr.f32.gmra.mxu0 %v10996
      %v10998 = vpop.f32.mrf.mxu0
      %v10999 = vadd.f32 %v10693, %v10998
      %v11000 = vpop.f32.mrf.mxu0
      %11001 = vmatprep.mubr.f32.mxu0 0.0
      %v11002 = vand.u32 %v10388, 4294901760
      %11003 = vmatmul.mubr.f32.gmra.mxu0 %v11002
      %v11004 = vpop.f32.mrf.mxu0
      %v11005 = vadd.f32 %v10703, %v11004
      %v11006 = vpop.f32.mrf.mxu0
      %11007 = vmatprep.mubr.f32.mxu0 0.0
      %v11008 = vand.u32 %v10391, 4294901760
      %11009 = vmatmul.mubr.f32.gmra.mxu0 %v11008
      %v11010 = vpop.f32.mrf.mxu0
      %v11011 = vadd.f32 %v10713, %v11010
      %v11012 = vpop.f32.mrf.mxu0
      %11013 = vmatprep.mubr.f32.mxu0 0.0
      %v11014 = vand.u32 %v10394, 4294901760
      %11015 = vmatmul.mubr.f32.gmra.mxu0 %v11014
      %v11016 = vpop.f32.mrf.mxu0
      %v11017 = vadd.f32 %v10723, %v11016
      %v11018 = vpop.f32.mrf.mxu0
      %11019 = vmatprep.mubr.f32.mxu0 0.0
      %v11020 = vand.u32 %v10397, 4294901760
      %11021 = vmatmul.mubr.f32.gmra.mxu0 %v11020
      %v11022 = vpop.f32.mrf.mxu0
      %v11023 = vadd.f32 %v10733, %v11022
      %v11024 = vpop.f32.mrf.mxu0
      %11025 = vmatprep.mubr.f32.mxu0 0.0
      %v11026 = vand.u32 %v10400, 4294901760
      %11027 = vmatmul.mubr.f32.gmra.mxu0 %v11026
      %v11028 = vpop.f32.mrf.mxu0
      %v11029 = vadd.f32 %v10743, %v11028
      %v11030 = vpop.f32.mrf.mxu0
      %11031 = vmatprep.mubr.f32.mxu0 0.0
      %v11032 = vand.u32 %v10403, 4294901760
      %11033 = vmatmul.mubr.f32.gmra.mxu0 %v11032
      %v11034 = vpop.f32.mrf.mxu0
      %v11035 = vadd.f32 %v10753, %v11034
      %v11036 = vpop.f32.mrf.mxu0
      %11037 = vmatprep.mubr.f32.mxu0 0.0
      %v11038 = vand.u32 %v10406, 4294901760
      %11039 = vmatmul.mubr.f32.gmra.mxu0 %v11038
      %v11040 = vpop.f32.mrf.mxu0
      %v11041 = vadd.f32 %v10763, %v11040
      %v11042 = vpop.f32.mrf.mxu0
      %11043 = vmatprep.mubr.f32.mxu0 0.0
      %v11044 = vand.u32 %v10409, 4294901760
      %11045 = vmatmul.mubr.f32.gmra.mxu0 %v11044
      %v11046 = vpop.f32.mrf.mxu0
      %v11047 = vadd.f32 %v10773, %v11046
      %v11048 = vpop.f32.mrf.mxu0
      %11049 = vmatprep.mubr.f32.mxu0 0.0
      %v11050 = vand.u32 %v10412, 4294901760
      %11051 = vmatmul.mubr.f32.gmra.mxu0 %v11050
      %v11052 = vpop.f32.mrf.mxu0
      %v11053 = vadd.f32 %v10783, %v11052
      %v11054 = vpop.f32.mrf.mxu0
      %11055 = vmatprep.mubr.f32.mxu0 0.0
      %v11056 = vand.u32 %v10415, 4294901760
      %11057 = vmatmul.mubr.f32.gmra.mxu0 %v11056
      %v11058 = vpop.f32.mrf.mxu0
      %v11059 = vadd.f32 %v10793, %v11058
      %v11060 = vpop.f32.mrf.mxu0
      %11061 = vmatprep.mubr.f32.mxu0 0.0
      %v11062 = vand.u32 %v10418, 4294901760
      %11063 = vmatmul.mubr.f32.gmra.mxu0 %v11062
      %v11064 = vpop.f32.mrf.mxu0
      %v11065 = vadd.f32 %v10803, %v11064
      %v11066 = vpop.f32.mrf.mxu0
      %11067 = vdwg.mxu0
      %11068 = vmatprep.subr.mxu0 0.0
      %11069 = vmatpush1.msra.mxu0 0.0
      %11070 = vmatprep.subr.mxu0 0.0
      %11071 = vmatpush1.msra.mxu0 0.0
      %11072 = vmatprep.subr.mxu0 0.0
      %11073 = vmatpush1.msra.mxu0 0.0
      %11074 = vmatprep.subr.mxu0 0.0
      %11075 = vmatpush1.msra.mxu0 0.0
      %11076 = vmatprep.subr.mxu0 0.0
      %11077 = vmatpush1.msra.mxu0 0.0
      %11078 = vmatprep.subr.mxu0 0.0
      %11079 = vmatpush1.msra.mxu0 0.0
      %11080 = vmatprep.subr.mxu0 0.0
      %11081 = vmatpush1.msra.mxu0 0.0
      %11082 = vmatprep.subr.mxu0 0.0
      %11083 = vmatpush1.msra.mxu0 0.0
      %11084 = vmatprep.subr.mxu0 0.0
      %11085 = vmatpush1.msra.mxu0 0.0
      %11086 = vmatprep.subr.mxu0 0.0
      %11087 = vmatpush1.msra.mxu0 0.0
      %11088 = vmatprep.subr.mxu0 0.0
      %11089 = vmatpush1.msra.mxu0 0.0
      %11090 = vmatprep.subr.mxu0 0.0
      %11091 = vmatpush1.msra.mxu0 0.0
      %11092 = vmatprep.subr.mxu0 0.0
      %11093 = vmatpush1.msra.mxu0 0.0
      %11094 = vmatprep.subr.mxu0 0.0
      %11095 = vmatpush1.msra.mxu0 0.0
      %11096 = vmatprep.subr.mxu0 0.0
      %11097 = vmatpush1.msra.mxu0 0.0
      %11098 = vmatprep.subr.mxu0 0.0
      %v11099 = vand.u32 %v8446, 4294901760
      %v11100 = vsub.f32 %v8446, %v11099
      %11101 = vmatpush1.msra.mxu0 %v11100
      %11102 = vmatprep.subr.mxu0 0.0
      %11103 = vmatpush2.msra.mxu0 0.0
      %11104 = vmatprep.subr.mxu0 0.0
      %11105 = vmatpush2.msra.mxu0 0.0
      %11106 = vmatprep.subr.mxu0 0.0
      %11107 = vmatpush2.msra.mxu0 0.0
      %11108 = vmatprep.subr.mxu0 0.0
      %11109 = vmatpush2.msra.mxu0 0.0
      %11110 = vmatprep.subr.mxu0 0.0
      %11111 = vmatpush2.msra.mxu0 0.0
      %11112 = vmatprep.subr.mxu0 0.0
      %11113 = vmatpush2.msra.mxu0 0.0
      %11114 = vmatprep.subr.mxu0 0.0
      %11115 = vmatpush2.msra.mxu0 0.0
      %11116 = vmatprep.subr.mxu0 0.0
      %11117 = vmatpush2.msra.mxu0 0.0
      %11118 = vmatprep.subr.mxu0 0.0
      %11119 = vmatpush2.msra.mxu0 0.0
      %11120 = vmatprep.subr.mxu0 0.0
      %11121 = vmatpush2.msra.mxu0 0.0
      %11122 = vmatprep.subr.mxu0 0.0
      %11123 = vmatpush2.msra.mxu0 0.0
      %11124 = vmatprep.subr.mxu0 0.0
      %11125 = vmatpush2.msra.mxu0 0.0
      %11126 = vmatprep.subr.mxu0 0.0
      %11127 = vmatpush2.msra.mxu0 0.0
      %11128 = vmatprep.subr.mxu0 0.0
      %11129 = vmatpush2.msra.mxu0 0.0
      %11130 = vmatprep.subr.mxu0 0.0
      %11131 = vmatpush2.msra.mxu0 0.0
      %11132 = vmatprep.subr.mxu0 0.0
      %11133 = vmatpush2.msra.mxu0 0.0
      %11134 = vmatprep.mubr.f32.mxu0 0.0
      %v11135 = vand.u32 %v10325, 4294901760
      %v11136 = vsub.f32 %v10325, %v11135
      %11137 = vmatmul.mubr.f32.gmra.mxu0 %v11136
      %v11138 = vpop.f32.mrf.mxu0
      %v11139 = vadd.f32 %v10879, %v11138
      %v11140 = vpop.f32.mrf.mxu0
      %11141 = vmatprep.mubr.f32.mxu0 0.0
      %v11142 = vand.u32 %v10328, 4294901760
      %v11143 = vsub.f32 %v10328, %v11142
      %11144 = vmatmul.mubr.f32.gmra.mxu0 %v11143
      %v11145 = vpop.f32.mrf.mxu0
      %v11146 = vadd.f32 %v10885, %v11145
      %v11147 = vpop.f32.mrf.mxu0
      %11148 = vmatprep.mubr.f32.mxu0 0.0
      %v11149 = vand.u32 %v10331, 4294901760
      %v11150 = vsub.f32 %v10331, %v11149
      %11151 = vmatmul.mubr.f32.gmra.mxu0 %v11150
      %v11152 = vpop.f32.mrf.mxu0
      %v11153 = vadd.f32 %v10891, %v11152
      %v11154 = vpop.f32.mrf.mxu0
      %11155 = vmatprep.mubr.f32.mxu0 0.0
      %v11156 = vand.u32 %v10334, 4294901760
      %v11157 = vsub.f32 %v10334, %v11156
      %11158 = vmatmul.mubr.f32.gmra.mxu0 %v11157
      %v11159 = vpop.f32.mrf.mxu0
      %v11160 = vadd.f32 %v10897, %v11159
      %v11161 = vpop.f32.mrf.mxu0
      %11162 = vmatprep.mubr.f32.mxu0 0.0
      %v11163 = vand.u32 %v10337, 4294901760
      %v11164 = vsub.f32 %v10337, %v11163
      %11165 = vmatmul.mubr.f32.gmra.mxu0 %v11164
      %v11166 = vpop.f32.mrf.mxu0
      %v11167 = vadd.f32 %v10903, %v11166
      %v11168 = vpop.f32.mrf.mxu0
      %11169 = vmatprep.mubr.f32.mxu0 0.0
      %v11170 = vand.u32 %v10340, 4294901760
      %v11171 = vsub.f32 %v10340, %v11170
      %11172 = vmatmul.mubr.f32.gmra.mxu0 %v11171
      %v11173 = vpop.f32.mrf.mxu0
      %v11174 = vadd.f32 %v10909, %v11173
      %v11175 = vpop.f32.mrf.mxu0
      %11176 = vmatprep.mubr.f32.mxu0 0.0
      %v11177 = vand.u32 %v10343, 4294901760
      %v11178 = vsub.f32 %v10343, %v11177
      %11179 = vmatmul.mubr.f32.gmra.mxu0 %v11178
      %v11180 = vpop.f32.mrf.mxu0
      %v11181 = vadd.f32 %v10915, %v11180
      %v11182 = vpop.f32.mrf.mxu0
      %11183 = vmatprep.mubr.f32.mxu0 0.0
      %v11184 = vand.u32 %v10346, 4294901760
      %v11185 = vsub.f32 %v10346, %v11184
      %11186 = vmatmul.mubr.f32.gmra.mxu0 %v11185
      %v11187 = vpop.f32.mrf.mxu0
      %v11188 = vadd.f32 %v10921, %v11187
      %v11189 = vpop.f32.mrf.mxu0
      %11190 = vmatprep.mubr.f32.mxu0 0.0
      %v11191 = vand.u32 %v10349, 4294901760
      %v11192 = vsub.f32 %v10349, %v11191
      %11193 = vmatmul.mubr.f32.gmra.mxu0 %v11192
      %v11194 = vpop.f32.mrf.mxu0
      %v11195 = vadd.f32 %v10927, %v11194
      %v11196 = vpop.f32.mrf.mxu0
      %11197 = vmatprep.mubr.f32.mxu0 0.0
      %v11198 = vand.u32 %v10352, 4294901760
      %v11199 = vsub.f32 %v10352, %v11198
      %11200 = vmatmul.mubr.f32.gmra.mxu0 %v11199
      %v11201 = vpop.f32.mrf.mxu0
      %v11202 = vadd.f32 %v10933, %v11201
      %v11203 = vpop.f32.mrf.mxu0
      %11204 = vmatprep.mubr.f32.mxu0 0.0
      %v11205 = vand.u32 %v10355, 4294901760
      %v11206 = vsub.f32 %v10355, %v11205
      %11207 = vmatmul.mubr.f32.gmra.mxu0 %v11206
      %v11208 = vpop.f32.mrf.mxu0
      %v11209 = vadd.f32 %v10939, %v11208
      %v11210 = vpop.f32.mrf.mxu0
      %11211 = vmatprep.mubr.f32.mxu0 0.0
      %v11212 = vand.u32 %v10358, 4294901760
      %v11213 = vsub.f32 %v10358, %v11212
      %11214 = vmatmul.mubr.f32.gmra.mxu0 %v11213
      %v11215 = vpop.f32.mrf.mxu0
      %v11216 = vadd.f32 %v10945, %v11215
      %v11217 = vpop.f32.mrf.mxu0
      %11218 = vmatprep.mubr.f32.mxu0 0.0
      %v11219 = vand.u32 %v10361, 4294901760
      %v11220 = vsub.f32 %v10361, %v11219
      %11221 = vmatmul.mubr.f32.gmra.mxu0 %v11220
      %v11222 = vpop.f32.mrf.mxu0
      %v11223 = vadd.f32 %v10951, %v11222
      %v11224 = vpop.f32.mrf.mxu0
      %11225 = vmatprep.mubr.f32.mxu0 0.0
      %v11226 = vand.u32 %v10364, 4294901760
      %v11227 = vsub.f32 %v10364, %v11226
      %11228 = vmatmul.mubr.f32.gmra.mxu0 %v11227
      %v11229 = vpop.f32.mrf.mxu0
      %v11230 = vadd.f32 %v10957, %v11229
      %v11231 = vpop.f32.mrf.mxu0
      %11232 = vmatprep.mubr.f32.mxu0 0.0
      %v11233 = vand.u32 %v10367, 4294901760
      %v11234 = vsub.f32 %v10367, %v11233
      %11235 = vmatmul.mubr.f32.gmra.mxu0 %v11234
      %v11236 = vpop.f32.mrf.mxu0
      %v11237 = vadd.f32 %v10963, %v11236
      %v11238 = vpop.f32.mrf.mxu0
      %11239 = vmatprep.mubr.f32.mxu0 0.0
      %v11240 = vand.u32 %v10370, 4294901760
      %v11241 = vsub.f32 %v10370, %v11240
      %11242 = vmatmul.mubr.f32.gmra.mxu0 %v11241
      %v11243 = vpop.f32.mrf.mxu0
      %v11244 = vadd.f32 %v10969, %v11243
      %v11245 = vpop.f32.mrf.mxu0
      %11246 = vmatprep.mubr.f32.mxu0 0.0
      %v11247 = vand.u32 %v10373, 4294901760
      %v11248 = vsub.f32 %v10373, %v11247
      %11249 = vmatmul.mubr.f32.gmra.mxu0 %v11248
      %v11250 = vpop.f32.mrf.mxu0
      %v11251 = vadd.f32 %v10975, %v11250
      %v11252 = vpop.f32.mrf.mxu0
      %11253 = vmatprep.mubr.f32.mxu0 0.0
      %v11254 = vand.u32 %v10376, 4294901760
      %v11255 = vsub.f32 %v10376, %v11254
      %11256 = vmatmul.mubr.f32.gmra.mxu0 %v11255
      %v11257 = vpop.f32.mrf.mxu0
      %v11258 = vadd.f32 %v10981, %v11257
      %v11259 = vpop.f32.mrf.mxu0
      %11260 = vmatprep.mubr.f32.mxu0 0.0
      %v11261 = vand.u32 %v10379, 4294901760
      %v11262 = vsub.f32 %v10379, %v11261
      %11263 = vmatmul.mubr.f32.gmra.mxu0 %v11262
      %v11264 = vpop.f32.mrf.mxu0
      %v11265 = vadd.f32 %v10987, %v11264
      %v11266 = vpop.f32.mrf.mxu0
      %11267 = vmatprep.mubr.f32.mxu0 0.0
      %v11268 = vand.u32 %v10382, 4294901760
      %v11269 = vsub.f32 %v10382, %v11268
      %11270 = vmatmul.mubr.f32.gmra.mxu0 %v11269
      %v11271 = vpop.f32.mrf.mxu0
      %v11272 = vadd.f32 %v10993, %v11271
      %v11273 = vpop.f32.mrf.mxu0
      %11274 = vmatprep.mubr.f32.mxu0 0.0
      %v11275 = vand.u32 %v10385, 4294901760
      %v11276 = vsub.f32 %v10385, %v11275
      %11277 = vmatmul.mubr.f32.gmra.mxu0 %v11276
      %v11278 = vpop.f32.mrf.mxu0
      %v11279 = vadd.f32 %v10999, %v11278
      %v11280 = vpop.f32.mrf.mxu0
      %11281 = vmatprep.mubr.f32.mxu0 0.0
      %v11282 = vand.u32 %v10388, 4294901760
      %v11283 = vsub.f32 %v10388, %v11282
      %11284 = vmatmul.mubr.f32.gmra.mxu0 %v11283
      %v11285 = vpop.f32.mrf.mxu0
      %v11286 = vadd.f32 %v11005, %v11285
      %v11287 = vpop.f32.mrf.mxu0
      %11288 = vmatprep.mubr.f32.mxu0 0.0
      %v11289 = vand.u32 %v10391, 4294901760
      %v11290 = vsub.f32 %v10391, %v11289
      %11291 = vmatmul.mubr.f32.gmra.mxu0 %v11290
      %v11292 = vpop.f32.mrf.mxu0
      %v11293 = vadd.f32 %v11011, %v11292
      %v11294 = vpop.f32.mrf.mxu0
      %11295 = vmatprep.mubr.f32.mxu0 0.0
      %v11296 = vand.u32 %v10394, 4294901760
      %v11297 = vsub.f32 %v10394, %v11296
      %11298 = vmatmul.mubr.f32.gmra.mxu0 %v11297
      %v11299 = vpop.f32.mrf.mxu0
      %v11300 = vadd.f32 %v11017, %v11299
      %v11301 = vpop.f32.mrf.mxu0
      %11302 = vmatprep.mubr.f32.mxu0 0.0
      %v11303 = vand.u32 %v10397, 4294901760
      %v11304 = vsub.f32 %v10397, %v11303
      %11305 = vmatmul.mubr.f32.gmra.mxu0 %v11304
      %v11306 = vpop.f32.mrf.mxu0
      %v11307 = vadd.f32 %v11023, %v11306
      %v11308 = vpop.f32.mrf.mxu0
      %11309 = vmatprep.mubr.f32.mxu0 0.0
      %v11310 = vand.u32 %v10400, 4294901760
      %v11311 = vsub.f32 %v10400, %v11310
      %11312 = vmatmul.mubr.f32.gmra.mxu0 %v11311
      %v11313 = vpop.f32.mrf.mxu0
      %v11314 = vadd.f32 %v11029, %v11313
      %v11315 = vpop.f32.mrf.mxu0
      %11316 = vmatprep.mubr.f32.mxu0 0.0
      %v11317 = vand.u32 %v10403, 4294901760
      %v11318 = vsub.f32 %v10403, %v11317
      %11319 = vmatmul.mubr.f32.gmra.mxu0 %v11318
      %v11320 = vpop.f32.mrf.mxu0
      %v11321 = vadd.f32 %v11035, %v11320
      %v11322 = vpop.f32.mrf.mxu0
      %11323 = vmatprep.mubr.f32.mxu0 0.0
      %v11324 = vand.u32 %v10406, 4294901760
      %v11325 = vsub.f32 %v10406, %v11324
      %11326 = vmatmul.mubr.f32.gmra.mxu0 %v11325
      %v11327 = vpop.f32.mrf.mxu0
      %v11328 = vadd.f32 %v11041, %v11327
      %v11329 = vpop.f32.mrf.mxu0
      %11330 = vmatprep.mubr.f32.mxu0 0.0
      %v11331 = vand.u32 %v10409, 4294901760
      %v11332 = vsub.f32 %v10409, %v11331
      %11333 = vmatmul.mubr.f32.gmra.mxu0 %v11332
      %v11334 = vpop.f32.mrf.mxu0
      %v11335 = vadd.f32 %v11047, %v11334
      %v11336 = vpop.f32.mrf.mxu0
      %11337 = vmatprep.mubr.f32.mxu0 0.0
      %v11338 = vand.u32 %v10412, 4294901760
      %v11339 = vsub.f32 %v10412, %v11338
      %11340 = vmatmul.mubr.f32.gmra.mxu0 %v11339
      %v11341 = vpop.f32.mrf.mxu0
      %v11342 = vadd.f32 %v11053, %v11341
      %v11343 = vpop.f32.mrf.mxu0
      %11344 = vmatprep.mubr.f32.mxu0 0.0
      %v11345 = vand.u32 %v10415, 4294901760
      %v11346 = vsub.f32 %v10415, %v11345
      %11347 = vmatmul.mubr.f32.gmra.mxu0 %v11346
      %v11348 = vpop.f32.mrf.mxu0
      %v11349 = vadd.f32 %v11059, %v11348
      %v11350 = vpop.f32.mrf.mxu0
      %11351 = vmatprep.mubr.f32.mxu0 0.0
      %v11352 = vand.u32 %v10418, 4294901760
      %v11353 = vsub.f32 %v10418, %v11352
      %11354 = vmatmul.mubr.f32.gmra.mxu0 %v11353
      %v11355 = vpop.f32.mrf.mxu0
      %v11356 = vadd.f32 %v11065, %v11355
      %v11357 = vpop.f32.mrf.mxu0
      %11358 = vdwg.mxu0
      %11359 = vmatprep.subr.mxu0 0.0
      %11360 = vmatpush1.msra.mxu0 0.0
      %11361 = vmatprep.subr.mxu0 0.0
      %11362 = vmatpush1.msra.mxu0 0.0
      %11363 = vmatprep.subr.mxu0 0.0
      %11364 = vmatpush1.msra.mxu0 0.0
      %11365 = vmatprep.subr.mxu0 0.0
      %11366 = vmatpush1.msra.mxu0 0.0
      %11367 = vmatprep.subr.mxu0 0.0
      %11368 = vmatpush1.msra.mxu0 0.0
      %11369 = vmatprep.subr.mxu0 0.0
      %11370 = vmatpush1.msra.mxu0 0.0
      %11371 = vmatprep.subr.mxu0 0.0
      %11372 = vmatpush1.msra.mxu0 0.0
      %11373 = vmatprep.subr.mxu0 0.0
      %11374 = vmatpush1.msra.mxu0 0.0
      %11375 = vmatprep.subr.mxu0 0.0
      %11376 = vmatpush1.msra.mxu0 0.0
      %11377 = vmatprep.subr.mxu0 0.0
      %11378 = vmatpush1.msra.mxu0 0.0
      %11379 = vmatprep.subr.mxu0 0.0
      %11380 = vmatpush1.msra.mxu0 0.0
      %11381 = vmatprep.subr.mxu0 0.0
      %11382 = vmatpush1.msra.mxu0 0.0
      %11383 = vmatprep.subr.mxu0 0.0
      %11384 = vmatpush1.msra.mxu0 0.0
      %11385 = vmatprep.subr.mxu0 0.0
      %11386 = vmatpush1.msra.mxu0 0.0
      %11387 = vmatprep.subr.mxu0 0.0
      %11388 = vmatpush1.msra.mxu0 0.0
      %11389 = vmatprep.subr.mxu0 0.0
      %v11390 = vand.u32 %v8446, 4294901760
      %11391 = vmatpush1.msra.mxu0 %v11390
      %11392 = vmatprep.subr.mxu0 0.0
      %11393 = vmatpush2.msra.mxu0 0.0
      %11394 = vmatprep.subr.mxu0 0.0
      %11395 = vmatpush2.msra.mxu0 0.0
      %11396 = vmatprep.subr.mxu0 0.0
      %11397 = vmatpush2.msra.mxu0 0.0
      %11398 = vmatprep.subr.mxu0 0.0
      %11399 = vmatpush2.msra.mxu0 0.0
      %11400 = vmatprep.subr.mxu0 0.0
      %11401 = vmatpush2.msra.mxu0 0.0
      %11402 = vmatprep.subr.mxu0 0.0
      %11403 = vmatpush2.msra.mxu0 0.0
      %11404 = vmatprep.subr.mxu0 0.0
      %11405 = vmatpush2.msra.mxu0 0.0
      %11406 = vmatprep.subr.mxu0 0.0
      %11407 = vmatpush2.msra.mxu0 0.0
      %11408 = vmatprep.subr.mxu0 0.0
      %11409 = vmatpush2.msra.mxu0 0.0
      %11410 = vmatprep.subr.mxu0 0.0
      %11411 = vmatpush2.msra.mxu0 0.0
      %11412 = vmatprep.subr.mxu0 0.0
      %11413 = vmatpush2.msra.mxu0 0.0
      %11414 = vmatprep.subr.mxu0 0.0
      %11415 = vmatpush2.msra.mxu0 0.0
      %11416 = vmatprep.subr.mxu0 0.0
      %11417 = vmatpush2.msra.mxu0 0.0
      %11418 = vmatprep.subr.mxu0 0.0
      %11419 = vmatpush2.msra.mxu0 0.0
      %11420 = vmatprep.subr.mxu0 0.0
      %11421 = vmatpush2.msra.mxu0 0.0
      %11422 = vmatprep.subr.mxu0 0.0
      %11423 = vmatpush2.msra.mxu0 0.0
      %11424 = vmatprep.mubr.f32.mxu0 0.0
      %v11425 = vand.u32 %v10325, 4294901760
      %v11426 = vsub.f32 %v10325, %v11425
      %v11427 = vand.u32 %v11426, 4294901760
      %11428 = vmatmul.mubr.f32.gmra.mxu0 %v11427
      %v11429 = vpop.f32.mrf.mxu0
      %v11430 = vadd.f32 %v11139, %v11429
      %v11431 = vpop.f32.mrf.mxu0
      %11432 = vmatprep.mubr.f32.mxu0 0.0
      %v11433 = vand.u32 %v10328, 4294901760
      %v11434 = vsub.f32 %v10328, %v11433
      %v11435 = vand.u32 %v11434, 4294901760
      %11436 = vmatmul.mubr.f32.gmra.mxu0 %v11435
      %v11437 = vpop.f32.mrf.mxu0
      %v11438 = vadd.f32 %v11146, %v11437
      %v11439 = vpop.f32.mrf.mxu0
      %11440 = vmatprep.mubr.f32.mxu0 0.0
      %v11441 = vand.u32 %v10331, 4294901760
      %v11442 = vsub.f32 %v10331, %v11441
      %v11443 = vand.u32 %v11442, 4294901760
      %11444 = vmatmul.mubr.f32.gmra.mxu0 %v11443
      %v11445 = vpop.f32.mrf.mxu0
      %v11446 = vadd.f32 %v11153, %v11445
      %v11447 = vpop.f32.mrf.mxu0
      %11448 = vmatprep.mubr.f32.mxu0 0.0
      %v11449 = vand.u32 %v10334, 4294901760
      %v11450 = vsub.f32 %v10334, %v11449
      %v11451 = vand.u32 %v11450, 4294901760
      %11452 = vmatmul.mubr.f32.gmra.mxu0 %v11451
      %v11453 = vpop.f32.mrf.mxu0
      %v11454 = vadd.f32 %v11160, %v11453
      %v11455 = vpop.f32.mrf.mxu0
      %11456 = vmatprep.mubr.f32.mxu0 0.0
      %v11457 = vand.u32 %v10337, 4294901760
      %v11458 = vsub.f32 %v10337, %v11457
      %v11459 = vand.u32 %v11458, 4294901760
      %11460 = vmatmul.mubr.f32.gmra.mxu0 %v11459
      %v11461 = vpop.f32.mrf.mxu0
      %v11462 = vadd.f32 %v11167, %v11461
      %v11463 = vpop.f32.mrf.mxu0
      %11464 = vmatprep.mubr.f32.mxu0 0.0
      %v11465 = vand.u32 %v10340, 4294901760
      %v11466 = vsub.f32 %v10340, %v11465
      %v11467 = vand.u32 %v11466, 4294901760
      %11468 = vmatmul.mubr.f32.gmra.mxu0 %v11467
      %v11469 = vpop.f32.mrf.mxu0
      %v11470 = vadd.f32 %v11174, %v11469
      %v11471 = vpop.f32.mrf.mxu0
      %11472 = vmatprep.mubr.f32.mxu0 0.0
      %v11473 = vand.u32 %v10343, 4294901760
      %v11474 = vsub.f32 %v10343, %v11473
      %v11475 = vand.u32 %v11474, 4294901760
      %11476 = vmatmul.mubr.f32.gmra.mxu0 %v11475
      %v11477 = vpop.f32.mrf.mxu0
      %v11478 = vadd.f32 %v11181, %v11477
      %v11479 = vpop.f32.mrf.mxu0
      %11480 = vmatprep.mubr.f32.mxu0 0.0
      %v11481 = vand.u32 %v10346, 4294901760
      %v11482 = vsub.f32 %v10346, %v11481
      %v11483 = vand.u32 %v11482, 4294901760
      %11484 = vmatmul.mubr.f32.gmra.mxu0 %v11483
      %v11485 = vpop.f32.mrf.mxu0
      %v11486 = vadd.f32 %v11188, %v11485
      %v11487 = vpop.f32.mrf.mxu0
      %11488 = vmatprep.mubr.f32.mxu0 0.0
      %v11489 = vand.u32 %v10349, 4294901760
      %v11490 = vsub.f32 %v10349, %v11489
      %v11491 = vand.u32 %v11490, 4294901760
      %11492 = vmatmul.mubr.f32.gmra.mxu0 %v11491
      %v11493 = vpop.f32.mrf.mxu0
      %v11494 = vadd.f32 %v11195, %v11493
      %v11495 = vpop.f32.mrf.mxu0
      %11496 = vmatprep.mubr.f32.mxu0 0.0
      %v11497 = vand.u32 %v10352, 4294901760
      %v11498 = vsub.f32 %v10352, %v11497
      %v11499 = vand.u32 %v11498, 4294901760
      %11500 = vmatmul.mubr.f32.gmra.mxu0 %v11499
      %v11501 = vpop.f32.mrf.mxu0
      %v11502 = vadd.f32 %v11202, %v11501
      %v11503 = vpop.f32.mrf.mxu0
      %11504 = vmatprep.mubr.f32.mxu0 0.0
      %v11505 = vand.u32 %v10355, 4294901760
      %v11506 = vsub.f32 %v10355, %v11505
      %v11507 = vand.u32 %v11506, 4294901760
      %11508 = vmatmul.mubr.f32.gmra.mxu0 %v11507
      %v11509 = vpop.f32.mrf.mxu0
      %v11510 = vadd.f32 %v11209, %v11509
      %v11511 = vpop.f32.mrf.mxu0
      %11512 = vmatprep.mubr.f32.mxu0 0.0
      %v11513 = vand.u32 %v10358, 4294901760
      %v11514 = vsub.f32 %v10358, %v11513
      %v11515 = vand.u32 %v11514, 4294901760
      %11516 = vmatmul.mubr.f32.gmra.mxu0 %v11515
      %v11517 = vpop.f32.mrf.mxu0
      %v11518 = vadd.f32 %v11216, %v11517
      %v11519 = vpop.f32.mrf.mxu0
      %11520 = vmatprep.mubr.f32.mxu0 0.0
      %v11521 = vand.u32 %v10361, 4294901760
      %v11522 = vsub.f32 %v10361, %v11521
      %v11523 = vand.u32 %v11522, 4294901760
      %11524 = vmatmul.mubr.f32.gmra.mxu0 %v11523
      %v11525 = vpop.f32.mrf.mxu0
      %v11526 = vadd.f32 %v11223, %v11525
      %v11527 = vpop.f32.mrf.mxu0
      %11528 = vmatprep.mubr.f32.mxu0 0.0
      %v11529 = vand.u32 %v10364, 4294901760
      %v11530 = vsub.f32 %v10364, %v11529
      %v11531 = vand.u32 %v11530, 4294901760
      %11532 = vmatmul.mubr.f32.gmra.mxu0 %v11531
      %v11533 = vpop.f32.mrf.mxu0
      %v11534 = vadd.f32 %v11230, %v11533
      %v11535 = vpop.f32.mrf.mxu0
      %11536 = vmatprep.mubr.f32.mxu0 0.0
      %v11537 = vand.u32 %v10367, 4294901760
      %v11538 = vsub.f32 %v10367, %v11537
      %v11539 = vand.u32 %v11538, 4294901760
      %11540 = vmatmul.mubr.f32.gmra.mxu0 %v11539
      %v11541 = vpop.f32.mrf.mxu0
      %v11542 = vadd.f32 %v11237, %v11541
      %v11543 = vpop.f32.mrf.mxu0
      %11544 = vmatprep.mubr.f32.mxu0 0.0
      %v11545 = vand.u32 %v10370, 4294901760
      %v11546 = vsub.f32 %v10370, %v11545
      %v11547 = vand.u32 %v11546, 4294901760
      %11548 = vmatmul.mubr.f32.gmra.mxu0 %v11547
      %v11549 = vpop.f32.mrf.mxu0
      %v11550 = vadd.f32 %v11244, %v11549
      %v11551 = vpop.f32.mrf.mxu0
      %11552 = vmatprep.mubr.f32.mxu0 0.0
      %v11553 = vand.u32 %v10373, 4294901760
      %v11554 = vsub.f32 %v10373, %v11553
      %v11555 = vand.u32 %v11554, 4294901760
      %11556 = vmatmul.mubr.f32.gmra.mxu0 %v11555
      %v11557 = vpop.f32.mrf.mxu0
      %v11558 = vadd.f32 %v11251, %v11557
      %v11559 = vpop.f32.mrf.mxu0
      %11560 = vmatprep.mubr.f32.mxu0 0.0
      %v11561 = vand.u32 %v10376, 4294901760
      %v11562 = vsub.f32 %v10376, %v11561
      %v11563 = vand.u32 %v11562, 4294901760
      %11564 = vmatmul.mubr.f32.gmra.mxu0 %v11563
      %v11565 = vpop.f32.mrf.mxu0
      %v11566 = vadd.f32 %v11258, %v11565
      %v11567 = vpop.f32.mrf.mxu0
      %11568 = vmatprep.mubr.f32.mxu0 0.0
      %v11569 = vand.u32 %v10379, 4294901760
      %v11570 = vsub.f32 %v10379, %v11569
      %v11571 = vand.u32 %v11570, 4294901760
      %11572 = vmatmul.mubr.f32.gmra.mxu0 %v11571
      %v11573 = vpop.f32.mrf.mxu0
      %v11574 = vadd.f32 %v11265, %v11573
      %v11575 = vpop.f32.mrf.mxu0
      %11576 = vmatprep.mubr.f32.mxu0 0.0
      %v11577 = vand.u32 %v10382, 4294901760
      %v11578 = vsub.f32 %v10382, %v11577
      %v11579 = vand.u32 %v11578, 4294901760
      %11580 = vmatmul.mubr.f32.gmra.mxu0 %v11579
      %v11581 = vpop.f32.mrf.mxu0
      %v11582 = vadd.f32 %v11272, %v11581
      %v11583 = vpop.f32.mrf.mxu0
      %11584 = vmatprep.mubr.f32.mxu0 0.0
      %v11585 = vand.u32 %v10385, 4294901760
      %v11586 = vsub.f32 %v10385, %v11585
      %v11587 = vand.u32 %v11586, 4294901760
      %11588 = vmatmul.mubr.f32.gmra.mxu0 %v11587
      %v11589 = vpop.f32.mrf.mxu0
      %v11590 = vadd.f32 %v11279, %v11589
      %v11591 = vpop.f32.mrf.mxu0
      %11592 = vmatprep.mubr.f32.mxu0 0.0
      %v11593 = vand.u32 %v10388, 4294901760
      %v11594 = vsub.f32 %v10388, %v11593
      %v11595 = vand.u32 %v11594, 4294901760
      %11596 = vmatmul.mubr.f32.gmra.mxu0 %v11595
      %v11597 = vpop.f32.mrf.mxu0
      %v11598 = vadd.f32 %v11286, %v11597
      %v11599 = vpop.f32.mrf.mxu0
      %11600 = vmatprep.mubr.f32.mxu0 0.0
      %v11601 = vand.u32 %v10391, 4294901760
      %v11602 = vsub.f32 %v10391, %v11601
      %v11603 = vand.u32 %v11602, 4294901760
      %11604 = vmatmul.mubr.f32.gmra.mxu0 %v11603
      %v11605 = vpop.f32.mrf.mxu0
      %v11606 = vadd.f32 %v11293, %v11605
      %v11607 = vpop.f32.mrf.mxu0
      %11608 = vmatprep.mubr.f32.mxu0 0.0
      %v11609 = vand.u32 %v10394, 4294901760
      %v11610 = vsub.f32 %v10394, %v11609
      %v11611 = vand.u32 %v11610, 4294901760
      %11612 = vmatmul.mubr.f32.gmra.mxu0 %v11611
      %v11613 = vpop.f32.mrf.mxu0
      %v11614 = vadd.f32 %v11300, %v11613
      %v11615 = vpop.f32.mrf.mxu0
      %11616 = vmatprep.mubr.f32.mxu0 0.0
      %v11617 = vand.u32 %v10397, 4294901760
      %v11618 = vsub.f32 %v10397, %v11617
      %v11619 = vand.u32 %v11618, 4294901760
      %11620 = vmatmul.mubr.f32.gmra.mxu0 %v11619
      %v11621 = vpop.f32.mrf.mxu0
      %v11622 = vadd.f32 %v11307, %v11621
      %v11623 = vpop.f32.mrf.mxu0
      %11624 = vmatprep.mubr.f32.mxu0 0.0
      %v11625 = vand.u32 %v10400, 4294901760
      %v11626 = vsub.f32 %v10400, %v11625
      %v11627 = vand.u32 %v11626, 4294901760
      %11628 = vmatmul.mubr.f32.gmra.mxu0 %v11627
      %v11629 = vpop.f32.mrf.mxu0
      %v11630 = vadd.f32 %v11314, %v11629
      %v11631 = vpop.f32.mrf.mxu0
      %11632 = vmatprep.mubr.f32.mxu0 0.0
      %v11633 = vand.u32 %v10403, 4294901760
      %v11634 = vsub.f32 %v10403, %v11633
      %v11635 = vand.u32 %v11634, 4294901760
      %11636 = vmatmul.mubr.f32.gmra.mxu0 %v11635
      %v11637 = vpop.f32.mrf.mxu0
      %v11638 = vadd.f32 %v11321, %v11637
      %v11639 = vpop.f32.mrf.mxu0
      %11640 = vmatprep.mubr.f32.mxu0 0.0
      %v11641 = vand.u32 %v10406, 4294901760
      %v11642 = vsub.f32 %v10406, %v11641
      %v11643 = vand.u32 %v11642, 4294901760
      %11644 = vmatmul.mubr.f32.gmra.mxu0 %v11643
      %v11645 = vpop.f32.mrf.mxu0
      %v11646 = vadd.f32 %v11328, %v11645
      %v11647 = vpop.f32.mrf.mxu0
      %11648 = vmatprep.mubr.f32.mxu0 0.0
      %v11649 = vand.u32 %v10409, 4294901760
      %v11650 = vsub.f32 %v10409, %v11649
      %v11651 = vand.u32 %v11650, 4294901760
      %11652 = vmatmul.mubr.f32.gmra.mxu0 %v11651
      %v11653 = vpop.f32.mrf.mxu0
      %v11654 = vadd.f32 %v11335, %v11653
      %v11655 = vpop.f32.mrf.mxu0
      %11656 = vmatprep.mubr.f32.mxu0 0.0
      %v11657 = vand.u32 %v10412, 4294901760
      %v11658 = vsub.f32 %v10412, %v11657
      %v11659 = vand.u32 %v11658, 4294901760
      %11660 = vmatmul.mubr.f32.gmra.mxu0 %v11659
      %v11661 = vpop.f32.mrf.mxu0
      %v11662 = vadd.f32 %v11342, %v11661
      %v11663 = vpop.f32.mrf.mxu0
      %11664 = vmatprep.mubr.f32.mxu0 0.0
      %v11665 = vand.u32 %v10415, 4294901760
      %v11666 = vsub.f32 %v10415, %v11665
      %v11667 = vand.u32 %v11666, 4294901760
      %11668 = vmatmul.mubr.f32.gmra.mxu0 %v11667
      %v11669 = vpop.f32.mrf.mxu0
      %v11670 = vadd.f32 %v11349, %v11669
      %v11671 = vpop.f32.mrf.mxu0
      %11672 = vmatprep.mubr.f32.mxu0 0.0
      %v11673 = vand.u32 %v10418, 4294901760
      %v11674 = vsub.f32 %v10418, %v11673
      %v11675 = vand.u32 %v11674, 4294901760
      %11676 = vmatmul.mubr.f32.gmra.mxu0 %v11675
      %v11677 = vpop.f32.mrf.mxu0
      %v11678 = vadd.f32 %v11356, %v11677
      %v11679 = vpop.f32.mrf.mxu0
      %11680 = vdwg.mxu0
      %11681 = vmatprep.subr.mxu0 0.0
      %11682 = vmatpush1.msra.mxu0 0.0
      %11683 = vmatprep.subr.mxu0 0.0
      %11684 = vmatpush1.msra.mxu0 0.0
      %11685 = vmatprep.subr.mxu0 0.0
      %11686 = vmatpush1.msra.mxu0 0.0
      %11687 = vmatprep.subr.mxu0 0.0
      %11688 = vmatpush1.msra.mxu0 0.0
      %11689 = vmatprep.subr.mxu0 0.0
      %11690 = vmatpush1.msra.mxu0 0.0
      %11691 = vmatprep.subr.mxu0 0.0
      %11692 = vmatpush1.msra.mxu0 0.0
      %11693 = vmatprep.subr.mxu0 0.0
      %11694 = vmatpush1.msra.mxu0 0.0
      %11695 = vmatprep.subr.mxu0 0.0
      %11696 = vmatpush1.msra.mxu0 0.0
      %11697 = vmatprep.subr.mxu0 0.0
      %11698 = vmatpush1.msra.mxu0 0.0
      %11699 = vmatprep.subr.mxu0 0.0
      %11700 = vmatpush1.msra.mxu0 0.0
      %11701 = vmatprep.subr.mxu0 0.0
      %11702 = vmatpush1.msra.mxu0 0.0
      %11703 = vmatprep.subr.mxu0 0.0
      %11704 = vmatpush1.msra.mxu0 0.0
      %11705 = vmatprep.subr.mxu0 0.0
      %11706 = vmatpush1.msra.mxu0 0.0
      %11707 = vmatprep.subr.mxu0 0.0
      %11708 = vmatpush1.msra.mxu0 0.0
      %11709 = vmatprep.subr.mxu0 0.0
      %11710 = vmatpush1.msra.mxu0 0.0
      %11711 = vmatprep.subr.mxu0 0.0
      %v11712 = vand.u32 %v8446, 4294901760
      %v11713 = vsub.f32 %v8446, %v11712
      %v11714 = vand.u32 %v11713, 4294901760
      %11715 = vmatpush1.msra.mxu0 %v11714
      %11716 = vmatprep.subr.mxu0 0.0
      %11717 = vmatpush2.msra.mxu0 0.0
      %11718 = vmatprep.subr.mxu0 0.0
      %11719 = vmatpush2.msra.mxu0 0.0
      %11720 = vmatprep.subr.mxu0 0.0
      %11721 = vmatpush2.msra.mxu0 0.0
      %11722 = vmatprep.subr.mxu0 0.0
      %11723 = vmatpush2.msra.mxu0 0.0
      %11724 = vmatprep.subr.mxu0 0.0
      %11725 = vmatpush2.msra.mxu0 0.0
      %11726 = vmatprep.subr.mxu0 0.0
      %11727 = vmatpush2.msra.mxu0 0.0
      %11728 = vmatprep.subr.mxu0 0.0
      %11729 = vmatpush2.msra.mxu0 0.0
      %11730 = vmatprep.subr.mxu0 0.0
      %11731 = vmatpush2.msra.mxu0 0.0
      %11732 = vmatprep.subr.mxu0 0.0
      %11733 = vmatpush2.msra.mxu0 0.0
      %11734 = vmatprep.subr.mxu0 0.0
      %11735 = vmatpush2.msra.mxu0 0.0
      %11736 = vmatprep.subr.mxu0 0.0
      %11737 = vmatpush2.msra.mxu0 0.0
      %11738 = vmatprep.subr.mxu0 0.0
      %11739 = vmatpush2.msra.mxu0 0.0
      %11740 = vmatprep.subr.mxu0 0.0
      %11741 = vmatpush2.msra.mxu0 0.0
      %11742 = vmatprep.subr.mxu0 0.0
      %11743 = vmatpush2.msra.mxu0 0.0
      %11744 = vmatprep.subr.mxu0 0.0
      %11745 = vmatpush2.msra.mxu0 0.0
      %11746 = vmatprep.subr.mxu0 0.0
      %11747 = vmatpush2.msra.mxu0 0.0
      %11748 = vmatprep.mubr.f32.mxu0 0.0
      %v11749 = vand.u32 %v10325, 4294901760
      %11750 = vmatmul.mubr.f32.gmra.mxu0 %v11749
      %v11751 = vpop.f32.mrf.mxu0
      %v11752 = vadd.f32 %v11430, %v11751
      %v11753 = vpop.f32.mrf.mxu0
      %11754 = vmatprep.mubr.f32.mxu0 0.0
      %v11755 = vand.u32 %v10328, 4294901760
      %11756 = vmatmul.mubr.f32.gmra.mxu0 %v11755
      %v11757 = vpop.f32.mrf.mxu0
      %v11758 = vadd.f32 %v11438, %v11757
      %v11759 = vpop.f32.mrf.mxu0
      %11760 = vmatprep.mubr.f32.mxu0 0.0
      %v11761 = vand.u32 %v10331, 4294901760
      %11762 = vmatmul.mubr.f32.gmra.mxu0 %v11761
      %v11763 = vpop.f32.mrf.mxu0
      %v11764 = vadd.f32 %v11446, %v11763
      %v11765 = vpop.f32.mrf.mxu0
      %11766 = vmatprep.mubr.f32.mxu0 0.0
      %v11767 = vand.u32 %v10334, 4294901760
      %11768 = vmatmul.mubr.f32.gmra.mxu0 %v11767
      %v11769 = vpop.f32.mrf.mxu0
      %v11770 = vadd.f32 %v11454, %v11769
      %v11771 = vpop.f32.mrf.mxu0
      %11772 = vmatprep.mubr.f32.mxu0 0.0
      %v11773 = vand.u32 %v10337, 4294901760
      %11774 = vmatmul.mubr.f32.gmra.mxu0 %v11773
      %v11775 = vpop.f32.mrf.mxu0
      %v11776 = vadd.f32 %v11462, %v11775
      %v11777 = vpop.f32.mrf.mxu0
      %11778 = vmatprep.mubr.f32.mxu0 0.0
      %v11779 = vand.u32 %v10340, 4294901760
      %11780 = vmatmul.mubr.f32.gmra.mxu0 %v11779
      %v11781 = vpop.f32.mrf.mxu0
      %v11782 = vadd.f32 %v11470, %v11781
      %v11783 = vpop.f32.mrf.mxu0
      %11784 = vmatprep.mubr.f32.mxu0 0.0
      %v11785 = vand.u32 %v10343, 4294901760
      %11786 = vmatmul.mubr.f32.gmra.mxu0 %v11785
      %v11787 = vpop.f32.mrf.mxu0
      %v11788 = vadd.f32 %v11478, %v11787
      %v11789 = vpop.f32.mrf.mxu0
      %11790 = vmatprep.mubr.f32.mxu0 0.0
      %v11791 = vand.u32 %v10346, 4294901760
      %11792 = vmatmul.mubr.f32.gmra.mxu0 %v11791
      %v11793 = vpop.f32.mrf.mxu0
      %v11794 = vadd.f32 %v11486, %v11793
      %v11795 = vpop.f32.mrf.mxu0
      %11796 = vmatprep.mubr.f32.mxu0 0.0
      %v11797 = vand.u32 %v10349, 4294901760
      %11798 = vmatmul.mubr.f32.gmra.mxu0 %v11797
      %v11799 = vpop.f32.mrf.mxu0
      %v11800 = vadd.f32 %v11494, %v11799
      %v11801 = vpop.f32.mrf.mxu0
      %11802 = vmatprep.mubr.f32.mxu0 0.0
      %v11803 = vand.u32 %v10352, 4294901760
      %11804 = vmatmul.mubr.f32.gmra.mxu0 %v11803
      %v11805 = vpop.f32.mrf.mxu0
      %v11806 = vadd.f32 %v11502, %v11805
      %v11807 = vpop.f32.mrf.mxu0
      %11808 = vmatprep.mubr.f32.mxu0 0.0
      %v11809 = vand.u32 %v10355, 4294901760
      %11810 = vmatmul.mubr.f32.gmra.mxu0 %v11809
      %v11811 = vpop.f32.mrf.mxu0
      %v11812 = vadd.f32 %v11510, %v11811
      %v11813 = vpop.f32.mrf.mxu0
      %11814 = vmatprep.mubr.f32.mxu0 0.0
      %v11815 = vand.u32 %v10358, 4294901760
      %11816 = vmatmul.mubr.f32.gmra.mxu0 %v11815
      %v11817 = vpop.f32.mrf.mxu0
      %v11818 = vadd.f32 %v11518, %v11817
      %v11819 = vpop.f32.mrf.mxu0
      %11820 = vmatprep.mubr.f32.mxu0 0.0
      %v11821 = vand.u32 %v10361, 4294901760
      %11822 = vmatmul.mubr.f32.gmra.mxu0 %v11821
      %v11823 = vpop.f32.mrf.mxu0
      %v11824 = vadd.f32 %v11526, %v11823
      %v11825 = vpop.f32.mrf.mxu0
      %11826 = vmatprep.mubr.f32.mxu0 0.0
      %v11827 = vand.u32 %v10364, 4294901760
      %11828 = vmatmul.mubr.f32.gmra.mxu0 %v11827
      %v11829 = vpop.f32.mrf.mxu0
      %v11830 = vadd.f32 %v11534, %v11829
      %v11831 = vpop.f32.mrf.mxu0
      %11832 = vmatprep.mubr.f32.mxu0 0.0
      %v11833 = vand.u32 %v10367, 4294901760
      %11834 = vmatmul.mubr.f32.gmra.mxu0 %v11833
      %v11835 = vpop.f32.mrf.mxu0
      %v11836 = vadd.f32 %v11542, %v11835
      %v11837 = vpop.f32.mrf.mxu0
      %11838 = vmatprep.mubr.f32.mxu0 0.0
      %v11839 = vand.u32 %v10370, 4294901760
      %11840 = vmatmul.mubr.f32.gmra.mxu0 %v11839
      %v11841 = vpop.f32.mrf.mxu0
      %v11842 = vadd.f32 %v11550, %v11841
      %v11843 = vpop.f32.mrf.mxu0
      %11844 = vmatprep.mubr.f32.mxu0 0.0
      %v11845 = vand.u32 %v10373, 4294901760
      %11846 = vmatmul.mubr.f32.gmra.mxu0 %v11845
      %v11847 = vpop.f32.mrf.mxu0
      %v11848 = vadd.f32 %v11558, %v11847
      %v11849 = vpop.f32.mrf.mxu0
      %11850 = vmatprep.mubr.f32.mxu0 0.0
      %v11851 = vand.u32 %v10376, 4294901760
      %11852 = vmatmul.mubr.f32.gmra.mxu0 %v11851
      %v11853 = vpop.f32.mrf.mxu0
      %v11854 = vadd.f32 %v11566, %v11853
      %v11855 = vpop.f32.mrf.mxu0
      %11856 = vmatprep.mubr.f32.mxu0 0.0
      %v11857 = vand.u32 %v10379, 4294901760
      %11858 = vmatmul.mubr.f32.gmra.mxu0 %v11857
      %v11859 = vpop.f32.mrf.mxu0
      %v11860 = vadd.f32 %v11574, %v11859
      %v11861 = vpop.f32.mrf.mxu0
      %11862 = vmatprep.mubr.f32.mxu0 0.0
      %v11863 = vand.u32 %v10382, 4294901760
      %11864 = vmatmul.mubr.f32.gmra.mxu0 %v11863
      %v11865 = vpop.f32.mrf.mxu0
      %v11866 = vadd.f32 %v11582, %v11865
      %v11867 = vpop.f32.mrf.mxu0
      %11868 = vmatprep.mubr.f32.mxu0 0.0
      %v11869 = vand.u32 %v10385, 4294901760
      %11870 = vmatmul.mubr.f32.gmra.mxu0 %v11869
      %v11871 = vpop.f32.mrf.mxu0
      %v11872 = vadd.f32 %v11590, %v11871
      %v11873 = vpop.f32.mrf.mxu0
      %11874 = vmatprep.mubr.f32.mxu0 0.0
      %v11875 = vand.u32 %v10388, 4294901760
      %11876 = vmatmul.mubr.f32.gmra.mxu0 %v11875
      %v11877 = vpop.f32.mrf.mxu0
      %v11878 = vadd.f32 %v11598, %v11877
      %v11879 = vpop.f32.mrf.mxu0
      %11880 = vmatprep.mubr.f32.mxu0 0.0
      %v11881 = vand.u32 %v10391, 4294901760
      %11882 = vmatmul.mubr.f32.gmra.mxu0 %v11881
      %v11883 = vpop.f32.mrf.mxu0
      %v11884 = vadd.f32 %v11606, %v11883
      %v11885 = vpop.f32.mrf.mxu0
      %11886 = vmatprep.mubr.f32.mxu0 0.0
      %v11887 = vand.u32 %v10394, 4294901760
      %11888 = vmatmul.mubr.f32.gmra.mxu0 %v11887
      %v11889 = vpop.f32.mrf.mxu0
      %v11890 = vadd.f32 %v11614, %v11889
      %v11891 = vpop.f32.mrf.mxu0
      %11892 = vmatprep.mubr.f32.mxu0 0.0
      %v11893 = vand.u32 %v10397, 4294901760
      %11894 = vmatmul.mubr.f32.gmra.mxu0 %v11893
      %v11895 = vpop.f32.mrf.mxu0
      %v11896 = vadd.f32 %v11622, %v11895
      %v11897 = vpop.f32.mrf.mxu0
      %11898 = vmatprep.mubr.f32.mxu0 0.0
      %v11899 = vand.u32 %v10400, 4294901760
      %11900 = vmatmul.mubr.f32.gmra.mxu0 %v11899
      %v11901 = vpop.f32.mrf.mxu0
      %v11902 = vadd.f32 %v11630, %v11901
      %v11903 = vpop.f32.mrf.mxu0
      %11904 = vmatprep.mubr.f32.mxu0 0.0
      %v11905 = vand.u32 %v10403, 4294901760
      %11906 = vmatmul.mubr.f32.gmra.mxu0 %v11905
      %v11907 = vpop.f32.mrf.mxu0
      %v11908 = vadd.f32 %v11638, %v11907
      %v11909 = vpop.f32.mrf.mxu0
      %11910 = vmatprep.mubr.f32.mxu0 0.0
      %v11911 = vand.u32 %v10406, 4294901760
      %11912 = vmatmul.mubr.f32.gmra.mxu0 %v11911
      %v11913 = vpop.f32.mrf.mxu0
      %v11914 = vadd.f32 %v11646, %v11913
      %v11915 = vpop.f32.mrf.mxu0
      %11916 = vmatprep.mubr.f32.mxu0 0.0
      %v11917 = vand.u32 %v10409, 4294901760
      %11918 = vmatmul.mubr.f32.gmra.mxu0 %v11917
      %v11919 = vpop.f32.mrf.mxu0
      %v11920 = vadd.f32 %v11654, %v11919
      %v11921 = vpop.f32.mrf.mxu0
      %11922 = vmatprep.mubr.f32.mxu0 0.0
      %v11923 = vand.u32 %v10412, 4294901760
      %11924 = vmatmul.mubr.f32.gmra.mxu0 %v11923
      %v11925 = vpop.f32.mrf.mxu0
      %v11926 = vadd.f32 %v11662, %v11925
      %v11927 = vpop.f32.mrf.mxu0
      %11928 = vmatprep.mubr.f32.mxu0 0.0
      %v11929 = vand.u32 %v10415, 4294901760
      %11930 = vmatmul.mubr.f32.gmra.mxu0 %v11929
      %v11931 = vpop.f32.mrf.mxu0
      %v11932 = vadd.f32 %v11670, %v11931
      %v11933 = vpop.f32.mrf.mxu0
      %11934 = vmatprep.mubr.f32.mxu0 0.0
      %v11935 = vand.u32 %v10418, 4294901760
      %11936 = vmatmul.mubr.f32.gmra.mxu0 %v11935
      %v11937 = vpop.f32.mrf.mxu0
      %v11938 = vadd.f32 %v11678, %v11937
      %v11939 = vpop.f32.mrf.mxu0
      %11940 = vdwg.mxu0
      %11941 = vmatprep.subr.mxu0 0.0
      %11942 = vmatpush1.msra.mxu0 0.0
      %11943 = vmatprep.subr.mxu0 0.0
      %11944 = vmatpush1.msra.mxu0 0.0
      %11945 = vmatprep.subr.mxu0 0.0
      %11946 = vmatpush1.msra.mxu0 0.0
      %11947 = vmatprep.subr.mxu0 0.0
      %11948 = vmatpush1.msra.mxu0 0.0
      %11949 = vmatprep.subr.mxu0 0.0
      %11950 = vmatpush1.msra.mxu0 0.0
      %11951 = vmatprep.subr.mxu0 0.0
      %11952 = vmatpush1.msra.mxu0 0.0
      %11953 = vmatprep.subr.mxu0 0.0
      %11954 = vmatpush1.msra.mxu0 0.0
      %11955 = vmatprep.subr.mxu0 0.0
      %11956 = vmatpush1.msra.mxu0 0.0
      %11957 = vmatprep.subr.mxu0 0.0
      %11958 = vmatpush1.msra.mxu0 0.0
      %11959 = vmatprep.subr.mxu0 0.0
      %11960 = vmatpush1.msra.mxu0 0.0
      %11961 = vmatprep.subr.mxu0 0.0
      %11962 = vmatpush1.msra.mxu0 0.0
      %11963 = vmatprep.subr.mxu0 0.0
      %11964 = vmatpush1.msra.mxu0 0.0
      %11965 = vmatprep.subr.mxu0 0.0
      %11966 = vmatpush1.msra.mxu0 0.0
      %11967 = vmatprep.subr.mxu0 0.0
      %11968 = vmatpush1.msra.mxu0 0.0
      %11969 = vmatprep.subr.mxu0 0.0
      %11970 = vmatpush1.msra.mxu0 0.0
      %11971 = vmatprep.subr.mxu0 0.0
      %v11972 = vand.u32 %v8446, 4294901760
      %11973 = vmatpush1.msra.mxu0 %v11972
      %11974 = vmatprep.subr.mxu0 0.0
      %11975 = vmatpush2.msra.mxu0 0.0
      %11976 = vmatprep.subr.mxu0 0.0
      %11977 = vmatpush2.msra.mxu0 0.0
      %11978 = vmatprep.subr.mxu0 0.0
      %11979 = vmatpush2.msra.mxu0 0.0
      %11980 = vmatprep.subr.mxu0 0.0
      %11981 = vmatpush2.msra.mxu0 0.0
      %11982 = vmatprep.subr.mxu0 0.0
      %11983 = vmatpush2.msra.mxu0 0.0
      %11984 = vmatprep.subr.mxu0 0.0
      %11985 = vmatpush2.msra.mxu0 0.0
      %11986 = vmatprep.subr.mxu0 0.0
      %11987 = vmatpush2.msra.mxu0 0.0
      %11988 = vmatprep.subr.mxu0 0.0
      %11989 = vmatpush2.msra.mxu0 0.0
      %11990 = vmatprep.subr.mxu0 0.0
      %11991 = vmatpush2.msra.mxu0 0.0
      %11992 = vmatprep.subr.mxu0 0.0
      %11993 = vmatpush2.msra.mxu0 0.0
      %11994 = vmatprep.subr.mxu0 0.0
      %11995 = vmatpush2.msra.mxu0 0.0
      %11996 = vmatprep.subr.mxu0 0.0
      %11997 = vmatpush2.msra.mxu0 0.0
      %11998 = vmatprep.subr.mxu0 0.0
      %11999 = vmatpush2.msra.mxu0 0.0
      %12000 = vmatprep.subr.mxu0 0.0
      %12001 = vmatpush2.msra.mxu0 0.0
      %12002 = vmatprep.subr.mxu0 0.0
      %12003 = vmatpush2.msra.mxu0 0.0
      %12004 = vmatprep.subr.mxu0 0.0
      %12005 = vmatpush2.msra.mxu0 0.0
      %12006 = vmatprep.mubr.f32.mxu0 0.0
      %v12007 = vand.u32 %v10325, 4294901760
      %12008 = vmatmul.mubr.f32.gmra.mxu0 %v12007
      %v12009 = vpop.f32.mrf.mxu0
      %v12010 = vadd.f32 %v11752, %v12009
      %v12011 = vpop.f32.mrf.mxu0
      %12012 = vmatprep.mubr.f32.mxu0 0.0
      %v12013 = vand.u32 %v10328, 4294901760
      %12014 = vmatmul.mubr.f32.gmra.mxu0 %v12013
      %v12015 = vpop.f32.mrf.mxu0
      %v12016 = vadd.f32 %v11758, %v12015
      %v12017 = vpop.f32.mrf.mxu0
      %12018 = vmatprep.mubr.f32.mxu0 0.0
      %v12019 = vand.u32 %v10331, 4294901760
      %12020 = vmatmul.mubr.f32.gmra.mxu0 %v12019
      %v12021 = vpop.f32.mrf.mxu0
      %v12022 = vadd.f32 %v11764, %v12021
      %v12023 = vpop.f32.mrf.mxu0
      %12024 = vmatprep.mubr.f32.mxu0 0.0
      %v12025 = vand.u32 %v10334, 4294901760
      %12026 = vmatmul.mubr.f32.gmra.mxu0 %v12025
      %v12027 = vpop.f32.mrf.mxu0
      %v12028 = vadd.f32 %v11770, %v12027
      %v12029 = vpop.f32.mrf.mxu0
      %12030 = vmatprep.mubr.f32.mxu0 0.0
      %v12031 = vand.u32 %v10337, 4294901760
      %12032 = vmatmul.mubr.f32.gmra.mxu0 %v12031
      %v12033 = vpop.f32.mrf.mxu0
      %v12034 = vadd.f32 %v11776, %v12033
      %v12035 = vpop.f32.mrf.mxu0
      %12036 = vmatprep.mubr.f32.mxu0 0.0
      %v12037 = vand.u32 %v10340, 4294901760
      %12038 = vmatmul.mubr.f32.gmra.mxu0 %v12037
      %v12039 = vpop.f32.mrf.mxu0
      %v12040 = vadd.f32 %v11782, %v12039
      %v12041 = vpop.f32.mrf.mxu0
      %12042 = vmatprep.mubr.f32.mxu0 0.0
      %v12043 = vand.u32 %v10343, 4294901760
      %12044 = vmatmul.mubr.f32.gmra.mxu0 %v12043
      %v12045 = vpop.f32.mrf.mxu0
      %v12046 = vadd.f32 %v11788, %v12045
      %v12047 = vpop.f32.mrf.mxu0
      %12048 = vmatprep.mubr.f32.mxu0 0.0
      %v12049 = vand.u32 %v10346, 4294901760
      %12050 = vmatmul.mubr.f32.gmra.mxu0 %v12049
      %v12051 = vpop.f32.mrf.mxu0
      %v12052 = vadd.f32 %v11794, %v12051
      %v12053 = vpop.f32.mrf.mxu0
      %12054 = vmatprep.mubr.f32.mxu0 0.0
      %v12055 = vand.u32 %v10349, 4294901760
      %12056 = vmatmul.mubr.f32.gmra.mxu0 %v12055
      %v12057 = vpop.f32.mrf.mxu0
      %v12058 = vadd.f32 %v11800, %v12057
      %v12059 = vpop.f32.mrf.mxu0
      %12060 = vmatprep.mubr.f32.mxu0 0.0
      %v12061 = vand.u32 %v10352, 4294901760
      %12062 = vmatmul.mubr.f32.gmra.mxu0 %v12061
      %v12063 = vpop.f32.mrf.mxu0
      %v12064 = vadd.f32 %v11806, %v12063
      %v12065 = vpop.f32.mrf.mxu0
      %12066 = vmatprep.mubr.f32.mxu0 0.0
      %v12067 = vand.u32 %v10355, 4294901760
      %12068 = vmatmul.mubr.f32.gmra.mxu0 %v12067
      %v12069 = vpop.f32.mrf.mxu0
      %v12070 = vadd.f32 %v11812, %v12069
      %v12071 = vpop.f32.mrf.mxu0
      %12072 = vmatprep.mubr.f32.mxu0 0.0
      %v12073 = vand.u32 %v10358, 4294901760
      %12074 = vmatmul.mubr.f32.gmra.mxu0 %v12073
      %v12075 = vpop.f32.mrf.mxu0
      %v12076 = vadd.f32 %v11818, %v12075
      %v12077 = vpop.f32.mrf.mxu0
      %12078 = vmatprep.mubr.f32.mxu0 0.0
      %v12079 = vand.u32 %v10361, 4294901760
      %12080 = vmatmul.mubr.f32.gmra.mxu0 %v12079
      %v12081 = vpop.f32.mrf.mxu0
      %v12082 = vadd.f32 %v11824, %v12081
      %v12083 = vpop.f32.mrf.mxu0
      %12084 = vmatprep.mubr.f32.mxu0 0.0
      %v12085 = vand.u32 %v10364, 4294901760
      %12086 = vmatmul.mubr.f32.gmra.mxu0 %v12085
      %v12087 = vpop.f32.mrf.mxu0
      %v12088 = vadd.f32 %v11830, %v12087
      %v12089 = vpop.f32.mrf.mxu0
      %12090 = vmatprep.mubr.f32.mxu0 0.0
      %v12091 = vand.u32 %v10367, 4294901760
      %12092 = vmatmul.mubr.f32.gmra.mxu0 %v12091
      %v12093 = vpop.f32.mrf.mxu0
      %v12094 = vadd.f32 %v11836, %v12093
      %v12095 = vpop.f32.mrf.mxu0
      %12096 = vmatprep.mubr.f32.mxu0 0.0
      %v12097 = vand.u32 %v10370, 4294901760
      %12098 = vmatmul.mubr.f32.gmra.mxu0 %v12097
      %v12099 = vpop.f32.mrf.mxu0
      %v12100 = vadd.f32 %v11842, %v12099
      %v12101 = vpop.f32.mrf.mxu0
      %12102 = vmatprep.mubr.f32.mxu0 0.0
      %v12103 = vand.u32 %v10373, 4294901760
      %12104 = vmatmul.mubr.f32.gmra.mxu0 %v12103
      %v12105 = vpop.f32.mrf.mxu0
      %v12106 = vadd.f32 %v11848, %v12105
      %v12107 = vpop.f32.mrf.mxu0
      %12108 = vmatprep.mubr.f32.mxu0 0.0
      %v12109 = vand.u32 %v10376, 4294901760
      %12110 = vmatmul.mubr.f32.gmra.mxu0 %v12109
      %v12111 = vpop.f32.mrf.mxu0
      %v12112 = vadd.f32 %v11854, %v12111
      %v12113 = vpop.f32.mrf.mxu0
      %12114 = vmatprep.mubr.f32.mxu0 0.0
      %v12115 = vand.u32 %v10379, 4294901760
      %12116 = vmatmul.mubr.f32.gmra.mxu0 %v12115
      %v12117 = vpop.f32.mrf.mxu0
      %v12118 = vadd.f32 %v11860, %v12117
      %v12119 = vpop.f32.mrf.mxu0
      %12120 = vmatprep.mubr.f32.mxu0 0.0
      %v12121 = vand.u32 %v10382, 4294901760
      %12122 = vmatmul.mubr.f32.gmra.mxu0 %v12121
      %v12123 = vpop.f32.mrf.mxu0
      %v12124 = vadd.f32 %v11866, %v12123
      %v12125 = vpop.f32.mrf.mxu0
      %12126 = vmatprep.mubr.f32.mxu0 0.0
      %v12127 = vand.u32 %v10385, 4294901760
      %12128 = vmatmul.mubr.f32.gmra.mxu0 %v12127
      %v12129 = vpop.f32.mrf.mxu0
      %v12130 = vadd.f32 %v11872, %v12129
      %v12131 = vpop.f32.mrf.mxu0
      %12132 = vmatprep.mubr.f32.mxu0 0.0
      %v12133 = vand.u32 %v10388, 4294901760
      %12134 = vmatmul.mubr.f32.gmra.mxu0 %v12133
      %v12135 = vpop.f32.mrf.mxu0
      %v12136 = vadd.f32 %v11878, %v12135
      %v12137 = vpop.f32.mrf.mxu0
      %12138 = vmatprep.mubr.f32.mxu0 0.0
      %v12139 = vand.u32 %v10391, 4294901760
      %12140 = vmatmul.mubr.f32.gmra.mxu0 %v12139
      %v12141 = vpop.f32.mrf.mxu0
      %v12142 = vadd.f32 %v11884, %v12141
      %v12143 = vpop.f32.mrf.mxu0
      %12144 = vmatprep.mubr.f32.mxu0 0.0
      %v12145 = vand.u32 %v10394, 4294901760
      %12146 = vmatmul.mubr.f32.gmra.mxu0 %v12145
      %v12147 = vpop.f32.mrf.mxu0
      %v12148 = vadd.f32 %v11890, %v12147
      %v12149 = vpop.f32.mrf.mxu0
      %12150 = vmatprep.mubr.f32.mxu0 0.0
      %v12151 = vand.u32 %v10397, 4294901760
      %12152 = vmatmul.mubr.f32.gmra.mxu0 %v12151
      %v12153 = vpop.f32.mrf.mxu0
      %v12154 = vadd.f32 %v11896, %v12153
      %v12155 = vpop.f32.mrf.mxu0
      %12156 = vmatprep.mubr.f32.mxu0 0.0
      %v12157 = vand.u32 %v10400, 4294901760
      %12158 = vmatmul.mubr.f32.gmra.mxu0 %v12157
      %v12159 = vpop.f32.mrf.mxu0
      %v12160 = vadd.f32 %v11902, %v12159
      %v12161 = vpop.f32.mrf.mxu0
      %12162 = vmatprep.mubr.f32.mxu0 0.0
      %v12163 = vand.u32 %v10403, 4294901760
      %12164 = vmatmul.mubr.f32.gmra.mxu0 %v12163
      %v12165 = vpop.f32.mrf.mxu0
      %v12166 = vadd.f32 %v11908, %v12165
      %v12167 = vpop.f32.mrf.mxu0
      %12168 = vmatprep.mubr.f32.mxu0 0.0
      %v12169 = vand.u32 %v10406, 4294901760
      %12170 = vmatmul.mubr.f32.gmra.mxu0 %v12169
      %v12171 = vpop.f32.mrf.mxu0
      %v12172 = vadd.f32 %v11914, %v12171
      %v12173 = vpop.f32.mrf.mxu0
      %12174 = vmatprep.mubr.f32.mxu0 0.0
      %v12175 = vand.u32 %v10409, 4294901760
      %12176 = vmatmul.mubr.f32.gmra.mxu0 %v12175
      %v12177 = vpop.f32.mrf.mxu0
      %v12178 = vadd.f32 %v11920, %v12177
      %v12179 = vpop.f32.mrf.mxu0
      %12180 = vmatprep.mubr.f32.mxu0 0.0
      %v12181 = vand.u32 %v10412, 4294901760
      %12182 = vmatmul.mubr.f32.gmra.mxu0 %v12181
      %v12183 = vpop.f32.mrf.mxu0
      %v12184 = vadd.f32 %v11926, %v12183
      %v12185 = vpop.f32.mrf.mxu0
      %12186 = vmatprep.mubr.f32.mxu0 0.0
      %v12187 = vand.u32 %v10415, 4294901760
      %12188 = vmatmul.mubr.f32.gmra.mxu0 %v12187
      %v12189 = vpop.f32.mrf.mxu0
      %v12190 = vadd.f32 %v11932, %v12189
      %v12191 = vpop.f32.mrf.mxu0
      %12192 = vmatprep.mubr.f32.mxu0 0.0
      %v12193 = vand.u32 %v10418, 4294901760
      %12194 = vmatmul.mubr.f32.gmra.mxu0 %v12193
      %v12195 = vpop.f32.mrf.mxu0
      %v12196 = vadd.f32 %v11938, %v12195
      %v12197 = vpop.f32.mrf.mxu0
      %12198 = vdwg.mxu0
      %v12199 = vld [vmem:[%s4] sm:$0x1]
      %v12201 = vlaneseq
      %v12202 = vshrl.u32 %v12201, 7
      %v12203 = vsub.s32 0, %v12202
      %v12204 = vrot.slane %v12199, %v12203
      %v12206 = vadd.f32 %v12010, %v12204
      %v12207 = vadd.f32 %v12016, %v12204
      %v12208 = vadd.f32 %v12022, %v12204
      %v12209 = vadd.f32 %v12028, %v12204
      %v12210 = vadd.f32 %v12034, %v12204
      %v12211 = vadd.f32 %v12040, %v12204
      %v12212 = vadd.f32 %v12046, %v12204
      %v12213 = vadd.f32 %v12052, %v12204
      %v12214 = vadd.f32 %v12058, %v12204
      %v12215 = vadd.f32 %v12064, %v12204
      %v12216 = vadd.f32 %v12070, %v12204
      %v12217 = vadd.f32 %v12076, %v12204
      %v12218 = vadd.f32 %v12082, %v12204
      %v12219 = vadd.f32 %v12088, %v12204
      %v12220 = vadd.f32 %v12094, %v12204
      %v12221 = vadd.f32 %v12100, %v12204
      %v12222 = vadd.f32 %v12106, %v12204
      %v12223 = vadd.f32 %v12112, %v12204
      %v12224 = vadd.f32 %v12118, %v12204
      %v12225 = vadd.f32 %v12124, %v12204
      %v12226 = vadd.f32 %v12130, %v12204
      %v12227 = vadd.f32 %v12136, %v12204
      %v12228 = vadd.f32 %v12142, %v12204
      %v12229 = vadd.f32 %v12148, %v12204
      %v12230 = vadd.f32 %v12154, %v12204
      %v12231 = vadd.f32 %v12160, %v12204
      %v12232 = vadd.f32 %v12166, %v12204
      %v12233 = vadd.f32 %v12172, %v12204
      %v12234 = vadd.f32 %v12178, %v12204
      %v12235 = vadd.f32 %v12184, %v12204
      %v12236 = vadd.f32 %v12190, %v12204
      %v12237 = vadd.f32 %v12196, %v12204
      %vm12238 = vcmask 261120
      %12239 = vst.msk [vmem:[%s251] sm:$0xff] %vm12238, %v12206
      %12240 = vst.msk [vmem:[%s251 + $0x8] sm:$0xff] %vm12238, %v12207
      %12241 = vst.msk [vmem:[%s251 + $0x10] sm:$0xff] %vm12238, %v12208
      %12242 = vst.msk [vmem:[%s251 + $0x18] sm:$0xff] %vm12238, %v12209
      %12243 = vst.msk [vmem:[%s251 + $0x20] sm:$0xff] %vm12238, %v12210
      %12244 = vst.msk [vmem:[%s251 + $0x28] sm:$0xff] %vm12238, %v12211
      %12245 = vst.msk [vmem:[%s251 + $0x30] sm:$0xff] %vm12238, %v12212
      %12246 = vst.msk [vmem:[%s251 + $0x38] sm:$0xff] %vm12238, %v12213
      %12247 = vst.msk [vmem:[%s251 + $0x40] sm:$0xff] %vm12238, %v12214
      %12248 = vst.msk [vmem:[%s251 + $0x48] sm:$0xff] %vm12238, %v12215
      %12249 = vst.msk [vmem:[%s251 + $0x50] sm:$0xff] %vm12238, %v12216
      %12250 = vst.msk [vmem:[%s251 + $0x58] sm:$0xff] %vm12238, %v12217
      %12251 = vst.msk [vmem:[%s251 + $0x60] sm:$0xff] %vm12238, %v12218
      %12252 = vst.msk [vmem:[%s251 + $0x68] sm:$0xff] %vm12238, %v12219
      %12253 = vst.msk [vmem:[%s251 + $0x70] sm:$0xff] %vm12238, %v12220
      %12254 = vst.msk [vmem:[%s251 + $0x78] sm:$0xff] %vm12238, %v12221
      %12255 = vst.msk [vmem:[%s251 + $0x80] sm:$0xff] %vm12238, %v12222
      %12256 = vst.msk [vmem:[%s251 + $0x88] sm:$0xff] %vm12238, %v12223
      %12257 = vst.msk [vmem:[%s251 + $0x90] sm:$0xff] %vm12238, %v12224
      %12258 = vst.msk [vmem:[%s251 + $0x98] sm:$0xff] %vm12238, %v12225
      %12259 = vst.msk [vmem:[%s251 + $0xa0] sm:$0xff] %vm12238, %v12226
      %12260 = vst.msk [vmem:[%s251 + $0xa8] sm:$0xff] %vm12238, %v12227
      %12261 = vst.msk [vmem:[%s251 + $0xb0] sm:$0xff] %vm12238, %v12228
      %12262 = vst.msk [vmem:[%s251 + $0xb8] sm:$0xff] %vm12238, %v12229
      %12263 = vst.msk [vmem:[%s251 + $0xc0] sm:$0xff] %vm12238, %v12230
      %12264 = vst.msk [vmem:[%s251 + $0xc8] sm:$0xff] %vm12238, %v12231
      %12265 = vst.msk [vmem:[%s251 + $0xd0] sm:$0xff] %vm12238, %v12232
      %12266 = vst.msk [vmem:[%s251 + $0xd8] sm:$0xff] %vm12238, %v12233
      %12267 = vst.msk [vmem:[%s251 + $0xe0] sm:$0xff] %vm12238, %v12234
      %12268 = vst.msk [vmem:[%s251 + $0xe8] sm:$0xff] %vm12238, %v12235
      %12269 = vst.msk [vmem:[%s251 + $0xf0] sm:$0xff] %vm12238, %v12236
      %12270 = vst.msk [vmem:[%s251 + $0xf8] sm:$0xff] %vm12238, %v12237
      %s12271 = smul.u32 32, %s16
      %p12272 = scmp.lt.s32.totalorder %s12271, 63
      %s12273 = scalar_select %p12272, %s12271, 63
      %s12274 = smul.addr %s12273, 8
      %s12275 = scalar_lea.vmem %s5, %s12274
      // Predicated region
      $region41: #{tpu_custom_call.1} parent=39 // pred_check
        %p12276 = pneg %p149
      $region42: #{tpu_custom_call.1} parent=39 // pred_check_branch
        %12278 = sbr.rel (%p12276) target = $region44
      $region43: #{tpu_custom_call.1} parent=39 // pred_region
        %s12279 = smul.u32 32, %s16
      $region44: #{tpu_custom_call.1} parent=39 // pred_fallthru
        _
    $region40: #{tpu_custom_call.1} parent=5 // pred_fallthru
      _
    %p12280 = scmp.le.s32.totalorder 2, %s11
    // Predicated region
    $region45: #{tpu_custom_call.1} parent=5 // pred_check
      %p12281 = pneg %p12280
    $region46: #{tpu_custom_call.1} parent=5 // pred_check_branch
      %12283 = sbr.rel (%p12281) target = $region48
    $region47: #{tpu_custom_call.1} parent=5 // pred_region
      %s12284 = ssub.s32 %s11, 2
      // Predicated region
      $region49: #{tpu_custom_call.1} parent=47 // pred_check
        %p12285 = pneg %p155
      $region50: #{tpu_custom_call.1} parent=47 // pred_check_branch
        %12287 = sbr.rel (%p12285) target = $region52
      $region51: #{tpu_custom_call.1} parent=47 // pred_region
        %s12288 = smul.u32 32, %s17
        %p12289 = scmp.lt.s32.totalorder %s12288, 63
        %s12290 = scalar_select %p12289, %s12288, 63
        %s12291 = smul.addr %s12290, 8
        %s12292 = scalar_lea.vmem %s5, %s12291
      $region52: #{tpu_custom_call.1} parent=47 // pred_fallthru
        _
    $region48: #{tpu_custom_call.1} parent=5 // pred_fallthru
      _
  $region6: #{tpu_custom_call.1} parent=0 // loop_footer
    %s15 = sadd.s32 1, %s11
  $region7: #{tpu_custom_call.1} parent=0 // loop_footer_branch
    %10 = sbr.rel target = $region3
  $region8: #{tpu_custom_call.1} parent=0 // loop_exit
    _

</llo_original>
